<compile_context>
chip_gen: v7x
topology: tpu7x:2x2x1
jax: 0.10.0
libtpu: 0.0.40
codegen_flags: <defaults>
</compile_context>

<pallas_src>
import functools

import jax
import jax.numpy as jnp
import numpy as np
from jax.experimental import pallas as pl
from jax.experimental.pallas import tpu as pltpu


# ----------------------------------------------------------------------------
# Pallas kernel 1: conv1 as fused matmul + bias + ReLU on wrapper-built patches.
# ----------------------------------------------------------------------------
def _conv1_kernel(p_ref, w_ref, b_ref, o_ref):
    acc = jnp.dot(p_ref[...], w_ref[...], preferred_element_type=jnp.float32)
    o_ref[...] = jnp.maximum(acc + b_ref[...], 0.0).astype(o_ref.dtype)


def conv1_call(patches, w, b):
    m, k = patches.shape
    _, n = w.shape
    cost = pl.CostEstimate(
        flops=int(2 * m * k * n),
        transcendentals=0,
        bytes_accessed=int(patches.size * 2 + w.size * 2 + m * n * 2),
    )
    return pl.pallas_call(
        _conv1_kernel,
        out_shape=jax.ShapeDtypeStruct((m, n), jnp.bfloat16),
        grid=(1,),
        in_specs=[
            pl.BlockSpec((m, k), lambda i: (0, 0)),
            pl.BlockSpec((k, n), lambda i: (0, 0)),
            pl.BlockSpec((1, n), lambda i: (0, 0)),
        ],
        out_specs=pl.BlockSpec((m, n), lambda i: (0, 0)),
        compiler_params=pltpu.CompilerParams(dimension_semantics=("arbitrary",)),
        cost_estimate=cost,
    )(patches, w, b)


# ----------------------------------------------------------------------------
# Pallas kernel 2: fused conv2 + conv3 + fc4 + fc5.
#   grid=(7,): each step consumes one 448-row (= 7 spatial positions x 64 ch)
#   chunk of the pre-reordered fc4 weight, so its bf16 stream is pipelined.
# ----------------------------------------------------------------------------
def _fused_tail_kernel(p2_ref, w2_ref, b2_ref, w3_ref, b3_ref, rmap3_ref,
                       rmap4_ref, w4_ref, b4_ref, w5_ref, b5_ref,
                       out_ref, o3_ref, h4_ref, *, batch):
    m2 = batch * 81   # conv2 output rows, ordered (n, y, x)
    m3 = batch * 49   # conv3 output rows, ordered (n, i, j)
    k = pl.program_id(0)

    @pl.when(k == 0)
    def _init():
        # ---- conv2: relu(P2 @ W2 + b2) -> (m2, 15), stays in registers/VMEM ----
        o2 = jnp.dot(p2_ref[...], w2_ref[...], preferred_element_type=jnp.float32)
        o2 = jnp.maximum(o2 + b2_ref[...], 0.0).astype(jnp.bfloat16)

        # ---- conv3 (3x3, stride 1): in-kernel im2col via 0/1 selection matmuls ----
        col = jax.lax.broadcasted_iota(jnp.int32, (m3, m2), 1)
        base = rmap3_ref[...]                              # (m3, 1): n*81 + i*9 + j
        acc3 = jnp.zeros((m3, 64), jnp.float32) + b3_ref[...]
        for di in range(3):
            for dj in range(3):
                sel_mask = jnp.where(col == base + (di * 9 + dj), 1.0, 0.0)
                g = sel_mask.astype(jnp.bfloat16)          # (m3, m2) row-gather matrix
                taps = jnp.dot(g, o2, preferred_element_type=jnp.float32)
                acc3 += jnp.dot(taps.astype(jnp.bfloat16), w3_ref[di * 3 + dj],
                                preferred_element_type=jnp.float32)
        o3_ref[...] = jnp.maximum(acc3, 0.0).astype(o3_ref.dtype)

        # ---- fc4 accumulator starts at the bias ----
        h4_ref[...] = jnp.zeros((batch, 512), jnp.float32) + b4_ref[...]

    # ---- fc4 partial sum: this step covers spatial positions p = 7k .. 7k+6 ----
    col3 = jax.lax.broadcasted_iota(jnp.int32, (batch, m3), 1)
    nbase = rmap4_ref[...]                                 # (batch, 1): n*49
    o3 = o3_ref[...]                                       # (m3, 64) bf16
    acc = h4_ref[...]
    for p_loc in range(7):
        p = k * 7 + p_loc
        g = jnp.where(col3 == nbase + p, 1.0, 0.0).astype(jnp.bfloat16)  # (batch, m3)
        rows = jnp.dot(g, o3, preferred_element_type=jnp.float32)        # (batch, 64)
        wblk = w4_ref[p_loc * 64:(p_loc + 1) * 64, :]                    # (64, 512)
        acc += jnp.dot(rows.astype(jnp.bfloat16), wblk,
                       preferred_element_type=jnp.float32)
    h4_ref[...] = acc

    # ---- epilogue on the last step: ReLU -> fc5 -> write (batch, 5) ----
    @pl.when(k == pl.num_programs(0) - 1)
    def _finalize():
        h = jnp.maximum(h4_ref[...], 0.0)                  # f32 epilogue (v5e friendly)
        out = jnp.dot(h, w5_ref[...], preferred_element_type=jnp.float32) + b5_ref[...]
        out_ref[...] = out.astype(out_ref.dtype)


def fused_tail_call(p2, w2, b2, w3, b3, rmap3, rmap4, w4, b4, w5, b5, *, batch):
    m2 = batch * 81
    m3 = batch * 49
    grid = 7
    kchunk = 7 * 64   # 448 rows of the (3136, 512) fc4 weight per grid step
    kernel = functools.partial(_fused_tail_kernel, batch=batch)
    flops = 2 * (m2 * 480 * 15 + 9 * (m3 * m2 * 15 + m3 * 15 * 64)
                 + batch * 3136 * 512 + batch * 512 * 5)
    bytes_accessed = (p2.size * 2 + w2.size * 2 + w3.size * 2 + w4.size * 2
                      + w5.size * 4 + batch * 5 * 4)
    return pl.pallas_call(
        kernel,
        out_shape=jax.ShapeDtypeStruct((batch, 5), jnp.float32),
        grid=(grid,),
        in_specs=[
            pl.BlockSpec((m2, 480), lambda i: (0, 0)),        # conv2 patches
            pl.BlockSpec((480, 15), lambda i: (0, 0)),        # W2
            pl.BlockSpec((1, 15), lambda i: (0, 0)),          # b2
            pl.BlockSpec((9, 15, 64), lambda i: (0, 0, 0)),   # W3 per-tap
            pl.BlockSpec((1, 64), lambda i: (0, 0)),          # b3
            pl.BlockSpec((m3, 1), lambda i: (0, 0)),          # conv3 row map
            pl.BlockSpec((batch, 1), lambda i: (0, 0)),       # fc4 row map
            pl.BlockSpec((kchunk, 512), lambda i: (i, 0)),    # W4, streamed chunks
            pl.BlockSpec((1, 512), lambda i: (0, 0)),         # b4
            pl.BlockSpec((512, 5), lambda i: (0, 0)),         # W5
            pl.BlockSpec((1, 5), lambda i: (0, 0)),           # b5
        ],
        out_specs=pl.BlockSpec((batch, 5), lambda i: (0, 0)),
        scratch_shapes=[
            pltpu.VMEM((m3, 64), jnp.bfloat16),      # conv3 output (VMEM resident)
            pltpu.VMEM((batch, 512), jnp.float32),   # fc4 accumulator
        ],
        compiler_params=pltpu.CompilerParams(dimension_semantics=("arbitrary",)),
        cost_estimate=pl.CostEstimate(flops=int(flops), transcendentals=0,
                                      bytes_accessed=int(bytes_accessed)),
    )(p2, w2, b2, w3, b3, rmap3, rmap4, w4, b4, w5, b5)


# ----------------------------------------------------------------------------
# Cheap XLA glue: NHWC im2col (strided window extraction).
# ----------------------------------------------------------------------------
def _im2col(x_nhwc, k, stride):
    n, h, w, c = x_nhwc.shape
    ho = (h - k) // stride + 1
    wo = (w - k) // stride + 1
    cols = []
    for di in range(k):
        for dj in range(k):
            cols.append(x_nhwc[:, di:di + stride * ho:stride,
                               dj:dj + stride * wo:stride, :])
    patches = jnp.stack(cols, axis=3).reshape(n * ho * wo, k * k * c)
    return patches, ho, wo


# ----------------------------------------------------------------------------
# Parameters (deterministic, PyTorch-style uniform(-1/sqrt(fan_in), 1/sqrt(fan_in)))
# ----------------------------------------------------------------------------
def init_params(key):
    def u(k, shape, fan_in):
        bound = 1.0 / float(np.sqrt(fan_in))
        return jax.random.uniform(k, shape, jnp.float32, -bound, bound)

    ks = jax.random.split(key, 10)
    p = {}
    p["w1"] = u(ks[0], (30, 4, 8, 8), 4 * 8 * 8)
    p["b1"] = u(ks[1], (30,), 4 * 8 * 8)
    p["w2"] = u(ks[2], (15, 30, 4, 4), 30 * 4 * 4)
    p["b2"] = u(ks[3], (15,), 30 * 4 * 4)
    p["w3"] = u(ks[4], (64, 15, 3, 3), 15 * 3 * 3)
    p["b3"] = u(ks[5], (64,), 15 * 3 * 3)
    p["w4"] = u(ks[6], (512, 3136), 3136)     # PyTorch Linear: (out, in)
    p["b4"] = u(ks[7], (512,), 3136)
    p["w5"] = u(ks[8], (5, 512), 512)
    p["b5"] = u(ks[9], (5,), 512)
    return p


def prepare_params(p, batch):
    """One-time (init-side) weight reordering + bf16 cast for the kernels."""
    bf = jnp.bfloat16
    kp = {}
    kp["w1"] = jnp.transpose(p["w1"], (2, 3, 1, 0)).reshape(8 * 8 * 4, 30).astype(bf)
    kp["b1"] = p["b1"].reshape(1, 30).astype(jnp.float32)
    kp["w2"] = jnp.transpose(p["w2"], (2, 3, 1, 0)).reshape(4 * 4 * 30, 15).astype(bf)
    kp["b2"] = p["b2"].reshape(1, 15).astype(jnp.float32)
    kp["w3"] = jnp.transpose(p["w3"], (2, 3, 1, 0)).reshape(9, 15, 64).astype(bf)
    kp["b3"] = p["b3"].reshape(1, 64).astype(jnp.float32)
    # fc4: PyTorch flattens conv3's output as (C, H, W).  Re-order the weight's
    # input dim to (H, W, C) and pre-transpose so the NHWC conv3 output feeds it
    # directly: row index of kp["w4"] is (h*7 + w)*64 + c.
    w4 = p["w4"].reshape(512, 64, 7, 7)
    kp["w4"] = jnp.transpose(w4, (2, 3, 1, 0)).reshape(3136, 512).astype(bf)
    kp["b4"] = p["b4"].reshape(1, 512).astype(jnp.float32)
    kp["w5"] = jnp.transpose(p["w5"], (1, 0)).astype(jnp.float32)   # (512, 5)
    kp["b5"] = p["b5"].reshape(1, 5).astype(jnp.float32)
    # Constant row maps for the in-kernel selection matmuls.
    r = np.arange(batch * 49)
    n, rem = r // 49, r % 49
    kp["rmap3"] = jnp.asarray(
        (n * 81 + (rem // 7) * 9 + (rem % 7)).astype(np.int32).reshape(-1, 1))
    kp["rmap4"] = jnp.asarray((np.arange(batch) * 49).astype(np.int32).reshape(-1, 1))
    return kp


# ----------------------------------------------------------------------------
# Forward pass (matches NeuralNetwork.forward)
# ----------------------------------------------------------------------------
def forward(kp, x_nchw):
    batch = x_nchw.shape[0]
    x = jnp.transpose(x_nchw, (0, 2, 3, 1)).astype(jnp.bfloat16)    # NHWC
    p1, ho1, wo1 = _im2col(x, 8, 4)                                 # (N*400, 256)
    o1 = conv1_call(p1, kp["w1"], kp["b1"])                         # (N*400, 30) bf16
    h1 = o1.reshape(batch, ho1, wo1, 30)                            # (N, 20, 20, 30)
    p2, _, _ = _im2col(h1, 4, 2)                                    # (N*81, 480)
    return fused_tail_call(p2, kp["w2"], kp["b2"], kp["w3"], kp["b3"],
                           kp["rmap3"], kp["rmap4"], kp["w4"], kp["b4"],
                           kp["w5"], kp["b5"], batch=batch)


# Pure-JAX f32 reference for the sanity check.
def reference(params, x_nchw):
    def conv(x, w, b, s):
        y = jax.lax.conv_general_dilated(
            x, w, window_strides=(s, s), padding="VALID",
            dimension_numbers=("NCHW", "OIHW", "NCHW"))
        return y + b.reshape(1, -1, 1, 1)

    h = jax.nn.relu(conv(x_nchw, params["w1"], params["b1"], 4))
    h = jax.nn.relu(conv(h, params["w2"], params["b2"], 2))
    h = jax.nn.relu(conv(h, params["w3"], params["b3"], 1))
    h = h.reshape(h.shape[0], -1)
    h = jax.nn.relu(h @ params["w4"].T + params["b4"])
    return h @ params["w5"].T + params["b5"]


if __name__ == "__main__":
    key = jax.random.PRNGKey(0)
    k_param, k_x = jax.random.split(key)
    params = init_params(k_param)

    # fc4 (3136 = 64*7*7) pins the input to 4 channels at 84x84 spatial.
    BATCH = 2
    x = jax.random.normal(k_x, (BATCH, 4, 84, 84), dtype=jnp.float32)

    kparams = prepare_params(params, BATCH)          # one-time weight prep (bf16)

    out = jax.block_until_ready(jax.jit(forward)(kparams, x))
    assert out.shape == (BATCH, 5), out.shape

    ref = jax.block_until_ready(jax.jit(reference)(params, x))
    np.testing.assert_allclose(np.asarray(out), np.asarray(ref), rtol=2e-2, atol=2e-2)

    print("KERNEL_OK")
</pallas_src>

<mosaic_0001>
module attributes {stable_mosaic.version = 11 : i64} {
  func.func @_conv1_kernel(%arg0: i32, %arg1: memref<800x256xbf16, #tpu.memory_space<vmem>>, %arg2: memref<256x30xbf16, #tpu.memory_space<vmem>>, %arg3: memref<1x30xf32, #tpu.memory_space<vmem>>, %arg4: memref<800x30xbf16, #tpu.memory_space<vmem>>) attributes {dimension_semantics = [#tpu.dimension_semantics<arbitrary>], iteration_bounds = array<i64: 1>, scalar_prefetch = 0 : i64, scratch_operands = 0 : i64, tpu.core_type = #tpu.core_type<tc>, window_params = [{pipeline_mode = #tpu.pipeline_mode<synchronous>, transform_indices = @transform_0, window_bounds = array<i64: 800, 256>}, {pipeline_mode = #tpu.pipeline_mode<synchronous>, transform_indices = @transform_1, window_bounds = array<i64: 256, 30>}, {pipeline_mode = #tpu.pipeline_mode<synchronous>, transform_indices = @transform_2, window_bounds = array<i64: 1, 30>}, {pipeline_mode = #tpu.pipeline_mode<synchronous>, transform_indices = @transform_3, window_bounds = array<i64: 800, 30>}]} {
    %c0 = arith.constant 0 : index
    %c0_0 = arith.constant 0 : index
    %0 = vector.load %arg1[%c0, %c0_0] : memref<800x256xbf16, #tpu.memory_space<vmem>>, vector<800x256xbf16>
    %c0_1 = arith.constant 0 : index
    %c0_2 = arith.constant 0 : index
    %1 = vector.load %arg2[%c0_1, %c0_2] : memref<256x30xbf16, #tpu.memory_space<vmem>>, vector<256x30xbf16>
    %cst = arith.constant dense<0.000000e+00> : vector<800x30xf32>
    %2 = tpu.matmul %0, %1, %cst {dimension_numbers = #tpu.dot_dimension_numbers<[1], [0], [0], [1], [0, 0, 1, 1], [], []>} : vector<800x256xbf16>, vector<256x30xbf16>, vector<800x30xf32> -> vector<800x30xf32>
    %c0_3 = arith.constant 0 : index
    %c0_4 = arith.constant 0 : index
    %3 = vector.load %arg3[%c0_3, %c0_4] : memref<1x30xf32, #tpu.memory_space<vmem>>, vector<1x30xf32>
    %4 = vector.broadcast %3 : vector<1x30xf32> to vector<800x30xf32>
    %5 = arith.addf %2, %4 : vector<800x30xf32>
    %cst_5 = arith.constant 0.000000e+00 : f32
    %6 = vector.broadcast %cst_5 : f32 to vector<800x30xf32>
    %7 = arith.maximumf %5, %6 : vector<800x30xf32>
    %8 = arith.truncf %7 : vector<800x30xf32> to vector<800x30xbf16>
    %c0_6 = arith.constant 0 : index
    %c0_7 = arith.constant 0 : index
    %9 = vector.load %arg4[%c0_6, %c0_7] : memref<800x30xbf16, #tpu.memory_space<vmem>>, vector<800x30xbf16>
    tpu.vector_store %arg4[%c0_6, %c0_7], %8 {strides = array<i32>} : memref<800x30xbf16, #tpu.memory_space<vmem>>, vector<800x30xbf16>,
    return
  }
  func.func @transform_0(%arg0: i32) -> (i32, i32) {
    %c0_i32 = arith.constant 0 : i32
    %c0_i32_0 = arith.constant 0 : i32
    %c0_i32_1 = arith.constant 0 : i32
    return %c0_i32, %c0_i32_0 : i32, i32
  }
  func.func @transform_1(%arg0: i32) -> (i32, i32) {
    %c0_i32 = arith.constant 0 : i32
    %c0_i32_0 = arith.constant 0 : i32
    %c0_i32_1 = arith.constant 0 : i32
    return %c0_i32, %c0_i32_0 : i32, i32
  }
  func.func @transform_2(%arg0: i32) -> (i32, i32) {
    %c0_i32 = arith.constant 0 : i32
    %c0_i32_0 = arith.constant 0 : i32
    %c0_i32_1 = arith.constant 0 : i32
    return %c0_i32, %c0_i32_0 : i32, i32
  }
  func.func @transform_3(%arg0: i32) -> (i32, i32) {
    %c0_i32 = arith.constant 0 : i32
    %c0_i32_0 = arith.constant 0 : i32
    %c0_i32_1 = arith.constant 0 : i32
    return %c0_i32, %c0_i32_0 : i32, i32
  }
}

module attributes {stable_mosaic.version = 11 : i64} {
  func.func @_fused_tail_kernel(%arg0: i32, %arg1: memref<162x480xbf16, #tpu.memory_space<vmem>>, %arg2: memref<480x15xbf16, #tpu.memory_space<vmem>>, %arg3: memref<1x15xf32, #tpu.memory_space<vmem>>, %arg4: memref<9x15x64xbf16, #tpu.memory_space<vmem>>, %arg5: memref<1x64xf32, #tpu.memory_space<vmem>>, %arg6: memref<98x1xi32, #tpu.memory_space<vmem>>, %arg7: memref<2x1xi32, #tpu.memory_space<vmem>>, %arg8: memref<448x512xbf16, #tpu.memory_space<vmem>>, %arg9: memref<1x512xf32, #tpu.memory_space<vmem>>, %arg10: memref<512x5xf32, #tpu.memory_space<vmem>>, %arg11: memref<1x5xf32, #tpu.memory_space<vmem>>, %arg12: memref<2x5xf32, #tpu.memory_space<vmem>>, %arg13: memref<98x64xbf16, #tpu.memory_space<vmem>>, %arg14: memref<2x512xf32, #tpu.memory_space<vmem>>) attributes {dimension_semantics = [#tpu.dimension_semantics<arbitrary>], iteration_bounds = array<i64: 7>, scalar_prefetch = 0 : i64, scratch_operands = 2 : i64, tpu.core_type = #tpu.core_type<tc>, window_params = [{pipeline_mode = #tpu.pipeline_mode<synchronous>, transform_indices = @transform_0, window_bounds = array<i64: 162, 480>}, {pipeline_mode = #tpu.pipeline_mode<synchronous>, transform_indices = @transform_1, window_bounds = array<i64: 480, 15>}, {pipeline_mode = #tpu.pipeline_mode<synchronous>, transform_indices = @transform_2, window_bounds = array<i64: 1, 15>}, {pipeline_mode = #tpu.pipeline_mode<synchronous>, transform_indices = @transform_3, window_bounds = array<i64: 9, 15, 64>}, {pipeline_mode = #tpu.pipeline_mode<synchronous>, transform_indices = @transform_4, window_bounds = array<i64: 1, 64>}, {pipeline_mode = #tpu.pipeline_mode<synchronous>, transform_indices = @transform_5, window_bounds = array<i64: 98, 1>}, {pipeline_mode = #tpu.pipeline_mode<synchronous>, transform_indices = @transform_6, window_bounds = array<i64: 2, 1>}, {transform_indices = @transform_7, window_bounds = array<i64: 448, 512>}, {pipeline_mode = #tpu.pipeline_mode<synchronous>, transform_indices = @transform_8, window_bounds = array<i64: 1, 512>}, {pipeline_mode = #tpu.pipeline_mode<synchronous>, transform_indices = @transform_9, window_bounds = array<i64: 512, 5>}, {pipeline_mode = #tpu.pipeline_mode<synchronous>, transform_indices = @transform_10, window_bounds = array<i64: 1, 5>}, {pipeline_mode = #tpu.pipeline_mode<synchronous>, transform_indices = @transform_11, window_bounds = array<i64: 2, 5>}]} {
    %c0_i32 = arith.constant 0 : i32
    %0 = arith.cmpi eq, %arg0, %c0_i32 : i32
    %1 = arith.extui %0 : i1 to i32
    %c0_i32_0 = arith.constant 0 : i32
    %2 = arith.cmpi ne, %1, %c0_i32_0 : i32
    scf.if %2 {
      %c0_52 = arith.constant 0 : index
      %c0_53 = arith.constant 0 : index
      %116 = vector.load %arg1[%c0_52, %c0_53] : memref<162x480xbf16, #tpu.memory_space<vmem>>, vector<162x480xbf16>
      %c0_54 = arith.constant 0 : index
      %c0_55 = arith.constant 0 : index
      %117 = vector.load %arg2[%c0_54, %c0_55] : memref<480x15xbf16, #tpu.memory_space<vmem>>, vector<480x15xbf16>
      %cst_56 = arith.constant dense<0.000000e+00> : vector<162x15xf32>
      %118 = tpu.matmul %116, %117, %cst_56 {dimension_numbers = #tpu.dot_dimension_numbers<[1], [0], [0], [1], [0, 0, 1, 1], [], []>} : vector<162x480xbf16>, vector<480x15xbf16>, vector<162x15xf32> -> vector<162x15xf32>
      %c0_57 = arith.constant 0 : index
      %c0_58 = arith.constant 0 : index
      %119 = vector.load %arg3[%c0_57, %c0_58] : memref<1x15xf32, #tpu.memory_space<vmem>>, vector<1x15xf32>
      %120 = vector.broadcast %119 : vector<1x15xf32> to vector<162x15xf32>
      %121 = arith.addf %118, %120 : vector<162x15xf32>
      %cst_59 = arith.constant 0.000000e+00 : f32
      %122 = vector.broadcast %cst_59 : f32 to vector<162x15xf32>
      %123 = arith.maximumf %121, %122 : vector<162x15xf32>
      %124 = arith.truncf %123 : vector<162x15xf32> to vector<162x15xbf16>
      %125 = tpu.iota {dimensions = array<i32: 1>} : vector<98x162xi32>
      %c0_60 = arith.constant 0 : index
      %c0_61 = arith.constant 0 : index
      %126 = vector.load %arg6[%c0_60, %c0_61] : memref<98x1xi32, #tpu.memory_space<vmem>>, vector<98x1xi32>
      %cst_62 = arith.constant 0.000000e+00 : f32
      %127 = vector.broadcast %cst_62 : f32 to vector<98x64xf32>
      %c0_63 = arith.constant 0 : index
      %c0_64 = arith.constant 0 : index
      %128 = vector.load %arg5[%c0_63, %c0_64] : memref<1x64xf32, #tpu.memory_space<vmem>>, vector<1x64xf32>
      %129 = vector.broadcast %128 : vector<1x64xf32> to vector<98x64xf32>
      %130 = arith.addf %127, %129 : vector<98x64xf32>
      %c0_i32_65 = arith.constant 0 : i32
      %131 = vector.broadcast %c0_i32_65 : i32 to vector<98x1xi32>
      %132 = arith.addi %126, %131 : vector<98x1xi32>
      %133 = vector.broadcast %132 : vector<98x1xi32> to vector<98x162xi32>
      %134 = arith.cmpi eq, %125, %133 : vector<98x162xi32>
      %cst_66 = arith.constant 1.000000e+00 : f32
      %cst_67 = arith.constant 0.000000e+00 : f32
      %135 = vector.broadcast %cst_66 : f32 to vector<98x162xf32>
      %136 = vector.broadcast %cst_67 : f32 to vector<98x162xf32>
      %137 = arith.select %134, %135, %136 : vector<98x162xi1>, vector<98x162xf32>
      %138 = arith.truncf %137 : vector<98x162xf32> to vector<98x162xbf16>
      %cst_68 = arith.constant dense<0.000000e+00> : vector<98x15xf32>
      %139 = tpu.matmul %138, %124, %cst_68 {dimension_numbers = #tpu.dot_dimension_numbers<[1], [0], [0], [1], [0, 0, 1, 1], [], []>} : vector<98x162xbf16>, vector<162x15xbf16>, vector<98x15xf32> -> vector<98x15xf32>
      %140 = arith.truncf %139 : vector<98x15xf32> to vector<98x15xbf16>
      %c0_69 = arith.constant 0 : index
      %c0_70 = arith.constant 0 : index
      %c0_71 = arith.constant 0 : index
      %141 = vector.load %arg4[%c0_69, %c0_70, %c0_71] : memref<9x15x64xbf16, #tpu.memory_space<vmem>>, vector<1x15x64xbf16>
      %142 = vector.shape_cast %141 : vector<1x15x64xbf16> to vector<15x64xbf16>
      %cst_72 = arith.constant dense<0.000000e+00> : vector<98x64xf32>
      %143 = tpu.matmul %140, %142, %cst_72 {dimension_numbers = #tpu.dot_dimension_numbers<[1], [0], [0], [1], [0, 0, 1, 1], [], []>} : vector<98x15xbf16>, vector<15x64xbf16>, vector<98x64xf32> -> vector<98x64xf32>
      %144 = arith.addf %130, %143 : vector<98x64xf32>
      %c1_i32_73 = arith.constant 1 : i32
      %145 = vector.broadcast %c1_i32_73 : i32 to vector<98x1xi32>
      %146 = arith.addi %126, %145 : vector<98x1xi32>
      %147 = vector.broadcast %146 : vector<98x1xi32> to vector<98x162xi32>
      %148 = arith.cmpi eq, %125, %147 : vector<98x162xi32>
      %cst_74 = arith.constant 1.000000e+00 : f32
      %cst_75 = arith.constant 0.000000e+00 : f32
      %149 = vector.broadcast %cst_74 : f32 to vector<98x162xf32>
      %150 = vector.broadcast %cst_75 : f32 to vector<98x162xf32>
      %151 = arith.select %148, %149, %150 : vector<98x162xi1>, vector<98x162xf32>
      %152 = arith.truncf %151 : vector<98x162xf32> to vector<98x162xbf16>
      %cst_76 = arith.constant dense<0.000000e+00> : vector<98x15xf32>
      %153 = tpu.matmul %152, %124, %cst_76 {dimension_numbers = #tpu.dot_dimension_numbers<[1], [0], [0], [1], [0, 0, 1, 1], [], []>} : vector<98x162xbf16>, vector<162x15xbf16>, vector<98x15xf32> -> vector<98x15xf32>
      %154 = arith.truncf %153 : vector<98x15xf32> to vector<98x15xbf16>
      %c1 = arith.constant 1 : index
      %c0_77 = arith.constant 0 : index
      %c0_78 = arith.constant 0 : index
      %155 = vector.load %arg4[%c1, %c0_77, %c0_78] : memref<9x15x64xbf16, #tpu.memory_space<vmem>>, vector<1x15x64xbf16>
      %156 = vector.shape_cast %155 : vector<1x15x64xbf16> to vector<15x64xbf16>
      %cst_79 = arith.constant dense<0.000000e+00> : vector<98x64xf32>
      %157 = tpu.matmul %154, %156, %cst_79 {dimension_numbers = #tpu.dot_dimension_numbers<[1], [0], [0], [1], [0, 0, 1, 1], [], []>} : vector<98x15xbf16>, vector<15x64xbf16>, vector<98x64xf32> -> vector<98x64xf32>
      %158 = arith.addf %144, %157 : vector<98x64xf32>
      %c2_i32_80 = arith.constant 2 : i32
      %159 = vector.broadcast %c2_i32_80 : i32 to vector<98x1xi32>
      %160 = arith.addi %126, %159 : vector<98x1xi32>
      %161 = vector.broadcast %160 : vector<98x1xi32> to vector<98x162xi32>
      %162 = arith.cmpi eq, %125, %161 : vector<98x162xi32>
      %cst_81 = arith.constant 1.000000e+00 : f32
      %cst_82 = arith.constant 0.000000e+00 : f32
      %163 = vector.broadcast %cst_81 : f32 to vector<98x162xf32>
      %164 = vector.broadcast %cst_82 : f32 to vector<98x162xf32>
      %165 = arith.select %162, %163, %164 : vector<98x162xi1>, vector<98x162xf32>
      %166 = arith.truncf %165 : vector<98x162xf32> to vector<98x162xbf16>
      %cst_83 = arith.constant dense<0.000000e+00> : vector<98x15xf32>
      %167 = tpu.matmul %166, %124, %cst_83 {dimension_numbers = #tpu.dot_dimension_numbers<[1], [0], [0], [1], [0, 0, 1, 1], [], []>} : vector<98x162xbf16>, vector<162x15xbf16>, vector<98x15xf32> -> vector<98x15xf32>
      %168 = arith.truncf %167 : vector<98x15xf32> to vector<98x15xbf16>
      %c2 = arith.constant 2 : index
      %c0_84 = arith.constant 0 : index
      %c0_85 = arith.constant 0 : index
      %169 = vector.load %arg4[%c2, %c0_84, %c0_85] : memref<9x15x64xbf16, #tpu.memory_space<vmem>>, vector<1x15x64xbf16>
      %170 = vector.shape_cast %169 : vector<1x15x64xbf16> to vector<15x64xbf16>
      %cst_86 = arith.constant dense<0.000000e+00> : vector<98x64xf32>
      %171 = tpu.matmul %168, %170, %cst_86 {dimension_numbers = #tpu.dot_dimension_numbers<[1], [0], [0], [1], [0, 0, 1, 1], [], []>} : vector<98x15xbf16>, vector<15x64xbf16>, vector<98x64xf32> -> vector<98x64xf32>
      %172 = arith.addf %158, %171 : vector<98x64xf32>
      %c9_i32 = arith.constant 9 : i32
      %173 = vector.broadcast %c9_i32 : i32 to vector<98x1xi32>
      %174 = arith.addi %126, %173 : vector<98x1xi32>
      %175 = vector.broadcast %174 : vector<98x1xi32> to vector<98x162xi32>
      %176 = arith.cmpi eq, %125, %175 : vector<98x162xi32>
      %cst_87 = arith.constant 1.000000e+00 : f32
      %cst_88 = arith.constant 0.000000e+00 : f32
      %177 = vector.broadcast %cst_87 : f32 to vector<98x162xf32>
      %178 = vector.broadcast %cst_88 : f32 to vector<98x162xf32>
      %179 = arith.select %176, %177, %178 : vector<98x162xi1>, vector<98x162xf32>
      %180 = arith.truncf %179 : vector<98x162xf32> to vector<98x162xbf16>
      %cst_89 = arith.constant dense<0.000000e+00> : vector<98x15xf32>
      %181 = tpu.matmul %180, %124, %cst_89 {dimension_numbers = #tpu.dot_dimension_numbers<[1], [0], [0], [1], [0, 0, 1, 1], [], []>} : vector<98x162xbf16>, vector<162x15xbf16>, vector<98x15xf32> -> vector<98x15xf32>
      %182 = arith.truncf %181 : vector<98x15xf32> to vector<98x15xbf16>
      %c3 = arith.constant 3 : index
      %c0_90 = arith.constant 0 : index
      %c0_91 = arith.constant 0 : index
      %183 = vector.load %arg4[%c3, %c0_90, %c0_91] : memref<9x15x64xbf16, #tpu.memory_space<vmem>>, vector<1x15x64xbf16>
      %184 = vector.shape_cast %183 : vector<1x15x64xbf16> to vector<15x64xbf16>
      %cst_92 = arith.constant dense<0.000000e+00> : vector<98x64xf32>
      %185 = tpu.matmul %182, %184, %cst_92 {dimension_numbers = #tpu.dot_dimension_numbers<[1], [0], [0], [1], [0, 0, 1, 1], [], []>} : vector<98x15xbf16>, vector<15x64xbf16>, vector<98x64xf32> -> vector<98x64xf32>
      %186 = arith.addf %172, %185 : vector<98x64xf32>
      %c10_i32 = arith.constant 10 : i32
      %187 = vector.broadcast %c10_i32 : i32 to vector<98x1xi32>
      %188 = arith.addi %126, %187 : vector<98x1xi32>
      %189 = vector.broadcast %188 : vector<98x1xi32> to vector<98x162xi32>
      %190 = arith.cmpi eq, %125, %189 : vector<98x162xi32>
      %cst_93 = arith.constant 1.000000e+00 : f32
      %cst_94 = arith.constant 0.000000e+00 : f32
      %191 = vector.broadcast %cst_93 : f32 to vector<98x162xf32>
      %192 = vector.broadcast %cst_94 : f32 to vector<98x162xf32>
      %193 = arith.select %190, %191, %192 : vector<98x162xi1>, vector<98x162xf32>
      %194 = arith.truncf %193 : vector<98x162xf32> to vector<98x162xbf16>
      %cst_95 = arith.constant dense<0.000000e+00> : vector<98x15xf32>
      %195 = tpu.matmul %194, %124, %cst_95 {dimension_numbers = #tpu.dot_dimension_numbers<[1], [0], [0], [1], [0, 0, 1, 1], [], []>} : vector<98x162xbf16>, vector<162x15xbf16>, vector<98x15xf32> -> vector<98x15xf32>
      %196 = arith.truncf %195 : vector<98x15xf32> to vector<98x15xbf16>
      %c4 = arith.constant 4 : index
      %c0_96 = arith.constant 0 : index
      %c0_97 = arith.constant 0 : index
      %197 = vector.load %arg4[%c4, %c0_96, %c0_97] : memref<9x15x64xbf16, #tpu.memory_space<vmem>>, vector<1x15x64xbf16>
      %198 = vector.shape_cast %197 : vector<1x15x64xbf16> to vector<15x64xbf16>
      %cst_98 = arith.constant dense<0.000000e+00> : vector<98x64xf32>
      %199 = tpu.matmul %196, %198, %cst_98 {dimension_numbers = #tpu.dot_dimension_numbers<[1], [0], [0], [1], [0, 0, 1, 1], [], []>} : vector<98x15xbf16>, vector<15x64xbf16>, vector<98x64xf32> -> vector<98x64xf32>
      %200 = arith.addf %186, %199 : vector<98x64xf32>
      %c11_i32 = arith.constant 11 : i32
      %201 = vector.broadcast %c11_i32 : i32 to vector<98x1xi32>
      %202 = arith.addi %126, %201 : vector<98x1xi32>
      %203 = vector.broadcast %202 : vector<98x1xi32> to vector<98x162xi32>
      %204 = arith.cmpi eq, %125, %203 : vector<98x162xi32>
      %cst_99 = arith.constant 1.000000e+00 : f32
      %cst_100 = arith.constant 0.000000e+00 : f32
      %205 = vector.broadcast %cst_99 : f32 to vector<98x162xf32>
      %206 = vector.broadcast %cst_100 : f32 to vector<98x162xf32>
      %207 = arith.select %204, %205, %206 : vector<98x162xi1>, vector<98x162xf32>
      %208 = arith.truncf %207 : vector<98x162xf32> to vector<98x162xbf16>
      %cst_101 = arith.constant dense<0.000000e+00> : vector<98x15xf32>
      %209 = tpu.matmul %208, %124, %cst_101 {dimension_numbers = #tpu.dot_dimension_numbers<[1], [0], [0], [1], [0, 0, 1, 1], [], []>} : vector<98x162xbf16>, vector<162x15xbf16>, vector<98x15xf32> -> vector<98x15xf32>
      %210 = arith.truncf %209 : vector<98x15xf32> to vector<98x15xbf16>
      %c5 = arith.constant 5 : index
      %c0_102 = arith.constant 0 : index
      %c0_103 = arith.constant 0 : index
      %211 = vector.load %arg4[%c5, %c0_102, %c0_103] : memref<9x15x64xbf16, #tpu.memory_space<vmem>>, vector<1x15x64xbf16>
      %212 = vector.shape_cast %211 : vector<1x15x64xbf16> to vector<15x64xbf16>
      %cst_104 = arith.constant dense<0.000000e+00> : vector<98x64xf32>
      %213 = tpu.matmul %210, %212, %cst_104 {dimension_numbers = #tpu.dot_dimension_numbers<[1], [0], [0], [1], [0, 0, 1, 1], [], []>} : vector<98x15xbf16>, vector<15x64xbf16>, vector<98x64xf32> -> vector<98x64xf32>
      %214 = arith.addf %200, %213 : vector<98x64xf32>
      %c18_i32 = arith.constant 18 : i32
      %215 = vector.broadcast %c18_i32 : i32 to vector<98x1xi32>
      %216 = arith.addi %126, %215 : vector<98x1xi32>
      %217 = vector.broadcast %216 : vector<98x1xi32> to vector<98x162xi32>
      %218 = arith.cmpi eq, %125, %217 : vector<98x162xi32>
      %cst_105 = arith.constant 1.000000e+00 : f32
      %cst_106 = arith.constant 0.000000e+00 : f32
      %219 = vector.broadcast %cst_105 : f32 to vector<98x162xf32>
      %220 = vector.broadcast %cst_106 : f32 to vector<98x162xf32>
      %221 = arith.select %218, %219, %220 : vector<98x162xi1>, vector<98x162xf32>
      %222 = arith.truncf %221 : vector<98x162xf32> to vector<98x162xbf16>
      %cst_107 = arith.constant dense<0.000000e+00> : vector<98x15xf32>
      %223 = tpu.matmul %222, %124, %cst_107 {dimension_numbers = #tpu.dot_dimension_numbers<[1], [0], [0], [1], [0, 0, 1, 1], [], []>} : vector<98x162xbf16>, vector<162x15xbf16>, vector<98x15xf32> -> vector<98x15xf32>
      %224 = arith.truncf %223 : vector<98x15xf32> to vector<98x15xbf16>
      %c6 = arith.constant 6 : index
      %c0_108 = arith.constant 0 : index
      %c0_109 = arith.constant 0 : index
      %225 = vector.load %arg4[%c6, %c0_108, %c0_109] : memref<9x15x64xbf16, #tpu.memory_space<vmem>>, vector<1x15x64xbf16>
      %226 = vector.shape_cast %225 : vector<1x15x64xbf16> to vector<15x64xbf16>
      %cst_110 = arith.constant dense<0.000000e+00> : vector<98x64xf32>
      %227 = tpu.matmul %224, %226, %cst_110 {dimension_numbers = #tpu.dot_dimension_numbers<[1], [0], [0], [1], [0, 0, 1, 1], [], []>} : vector<98x15xbf16>, vector<15x64xbf16>, vector<98x64xf32> -> vector<98x64xf32>
      %228 = arith.addf %214, %227 : vector<98x64xf32>
      %c19_i32 = arith.constant 19 : i32
      %229 = vector.broadcast %c19_i32 : i32 to vector<98x1xi32>
      %230 = arith.addi %126, %229 : vector<98x1xi32>
      %231 = vector.broadcast %230 : vector<98x1xi32> to vector<98x162xi32>
      %232 = arith.cmpi eq, %125, %231 : vector<98x162xi32>
      %cst_111 = arith.constant 1.000000e+00 : f32
      %cst_112 = arith.constant 0.000000e+00 : f32
      %233 = vector.broadcast %cst_111 : f32 to vector<98x162xf32>
      %234 = vector.broadcast %cst_112 : f32 to vector<98x162xf32>
      %235 = arith.select %232, %233, %234 : vector<98x162xi1>, vector<98x162xf32>
      %236 = arith.truncf %235 : vector<98x162xf32> to vector<98x162xbf16>
      %cst_113 = arith.constant dense<0.000000e+00> : vector<98x15xf32>
      %237 = tpu.matmul %236, %124, %cst_113 {dimension_numbers = #tpu.dot_dimension_numbers<[1], [0], [0], [1], [0, 0, 1, 1], [], []>} : vector<98x162xbf16>, vector<162x15xbf16>, vector<98x15xf32> -> vector<98x15xf32>
      %238 = arith.truncf %237 : vector<98x15xf32> to vector<98x15xbf16>
      %c7 = arith.constant 7 : index
      %c0_114 = arith.constant 0 : index
      %c0_115 = arith.constant 0 : index
      %239 = vector.load %arg4[%c7, %c0_114, %c0_115] : memref<9x15x64xbf16, #tpu.memory_space<vmem>>, vector<1x15x64xbf16>
      %240 = vector.shape_cast %239 : vector<1x15x64xbf16> to vector<15x64xbf16>
      %cst_116 = arith.constant dense<0.000000e+00> : vector<98x64xf32>
      %241 = tpu.matmul %238, %240, %cst_116 {dimension_numbers = #tpu.dot_dimension_numbers<[1], [0], [0], [1], [0, 0, 1, 1], [], []>} : vector<98x15xbf16>, vector<15x64xbf16>, vector<98x64xf32> -> vector<98x64xf32>
      %242 = arith.addf %228, %241 : vector<98x64xf32>
      %c20_i32 = arith.constant 20 : i32
      %243 = vector.broadcast %c20_i32 : i32 to vector<98x1xi32>
      %244 = arith.addi %126, %243 : vector<98x1xi32>
      %245 = vector.broadcast %244 : vector<98x1xi32> to vector<98x162xi32>
      %246 = arith.cmpi eq, %125, %245 : vector<98x162xi32>
      %cst_117 = arith.constant 1.000000e+00 : f32
      %cst_118 = arith.constant 0.000000e+00 : f32
      %247 = vector.broadcast %cst_117 : f32 to vector<98x162xf32>
      %248 = vector.broadcast %cst_118 : f32 to vector<98x162xf32>
      %249 = arith.select %246, %247, %248 : vector<98x162xi1>, vector<98x162xf32>
      %250 = arith.truncf %249 : vector<98x162xf32> to vector<98x162xbf16>
      %cst_119 = arith.constant dense<0.000000e+00> : vector<98x15xf32>
      %251 = tpu.matmul %250, %124, %cst_119 {dimension_numbers = #tpu.dot_dimension_numbers<[1], [0], [0], [1], [0, 0, 1, 1], [], []>} : vector<98x162xbf16>, vector<162x15xbf16>, vector<98x15xf32> -> vector<98x15xf32>
      %252 = arith.truncf %251 : vector<98x15xf32> to vector<98x15xbf16>
      %c8 = arith.constant 8 : index
      %c0_120 = arith.constant 0 : index
      %c0_121 = arith.constant 0 : index
      %253 = vector.load %arg4[%c8, %c0_120, %c0_121] : memref<9x15x64xbf16, #tpu.memory_space<vmem>>, vector<1x15x64xbf16>
      %254 = vector.shape_cast %253 : vector<1x15x64xbf16> to vector<15x64xbf16>
      %cst_122 = arith.constant dense<0.000000e+00> : vector<98x64xf32>
      %255 = tpu.matmul %252, %254, %cst_122 {dimension_numbers = #tpu.dot_dimension_numbers<[1], [0], [0], [1], [0, 0, 1, 1], [], []>} : vector<98x15xbf16>, vector<15x64xbf16>, vector<98x64xf32> -> vector<98x64xf32>
      %256 = arith.addf %242, %255 : vector<98x64xf32>
      %cst_123 = arith.constant 0.000000e+00 : f32
      %257 = vector.broadcast %cst_123 : f32 to vector<98x64xf32>
      %258 = arith.maximumf %256, %257 : vector<98x64xf32>
      %259 = arith.truncf %258 : vector<98x64xf32> to vector<98x64xbf16>
      %c0_124 = arith.constant 0 : index
      %c0_125 = arith.constant 0 : index
      %260 = vector.load %arg13[%c0_124, %c0_125] : memref<98x64xbf16, #tpu.memory_space<vmem>>, vector<98x64xbf16>
      tpu.vector_store %arg13[%c0_124, %c0_125], %259 {strides = array<i32>} : memref<98x64xbf16, #tpu.memory_space<vmem>>, vector<98x64xbf16>,
      %cst_126 = arith.constant 0.000000e+00 : f32
      %261 = vector.broadcast %cst_126 : f32 to vector<2x512xf32>
      %c0_127 = arith.constant 0 : index
      %c0_128 = arith.constant 0 : index
      %262 = vector.load %arg9[%c0_127, %c0_128] : memref<1x512xf32, #tpu.memory_space<vmem>>, vector<1x512xf32>
      %263 = vector.broadcast %262 : vector<1x512xf32> to vector<2x512xf32>
      %264 = arith.addf %261, %263 : vector<2x512xf32>
      %c0_129 = arith.constant 0 : index
      %c0_130 = arith.constant 0 : index
      %265 = vector.load %arg14[%c0_129, %c0_130] : memref<2x512xf32, #tpu.memory_space<vmem>>, vector<2x512xf32>
      tpu.vector_store %arg14[%c0_129, %c0_130], %264 {strides = array<i32>} : memref<2x512xf32, #tpu.memory_space<vmem>>, vector<2x512xf32>,
    } else {
    }
    %3 = tpu.iota {dimensions = array<i32: 1>} : vector<2x98xi32>
    %c0 = arith.constant 0 : index
    %c0_1 = arith.constant 0 : index
    %4 = vector.load %arg7[%c0, %c0_1] : memref<2x1xi32, #tpu.memory_space<vmem>>, vector<2x1xi32>
    %c0_2 = arith.constant 0 : index
    %c0_3 = arith.constant 0 : index
    %5 = vector.load %arg13[%c0_2, %c0_3] : memref<98x64xbf16, #tpu.memory_space<vmem>>, vector<98x64xbf16>
    %c0_4 = arith.constant 0 : index
    %c0_5 = arith.constant 0 : index
    %6 = vector.load %arg14[%c0_4, %c0_5] : memref<2x512xf32, #tpu.memory_space<vmem>>, vector<2x512xf32>
    %c7_i32 = arith.constant 7 : i32
    %7 = arith.muli %arg0, %c7_i32 : i32
    %c0_i32_6 = arith.constant 0 : i32
    %8 = arith.addi %7, %c0_i32_6 : i32
    %9 = vector.broadcast %8 : i32 to vector<2x1xi32>
    %10 = arith.addi %4, %9 : vector<2x1xi32>
    %11 = vector.broadcast %10 : vector<2x1xi32> to vector<2x98xi32>
    %12 = arith.cmpi eq, %3, %11 : vector<2x98xi32>
    %cst = arith.constant 1.000000e+00 : f32
    %cst_7 = arith.constant 0.000000e+00 : f32
    %13 = vector.broadcast %cst : f32 to vector<2x98xf32>
    %14 = vector.broadcast %cst_7 : f32 to vector<2x98xf32>
    %15 = arith.select %12, %13, %14 : vector<2x98xi1>, vector<2x98xf32>
    %16 = arith.truncf %15 : vector<2x98xf32> to vector<2x98xbf16>
    %cst_8 = arith.constant dense<0.000000e+00> : vector<2x64xf32>
    %17 = tpu.matmul %16, %5, %cst_8 {dimension_numbers = #tpu.dot_dimension_numbers<[1], [0], [0], [1], [0, 0, 1, 1], [], []>} : vector<2x98xbf16>, vector<98x64xbf16>, vector<2x64xf32> -> vector<2x64xf32>
    %c0_9 = arith.constant 0 : index
    %c0_10 = arith.constant 0 : index
    %18 = vector.load %arg8[%c0_9, %c0_10] : memref<448x512xbf16, #tpu.memory_space<vmem>>, vector<64x512xbf16>
    %19 = arith.truncf %17 : vector<2x64xf32> to vector<2x64xbf16>
    %cst_11 = arith.constant dense<0.000000e+00> : vector<2x512xf32>
    %20 = tpu.matmul %19, %18, %cst_11 {dimension_numbers = #tpu.dot_dimension_numbers<[1], [0], [0], [1], [0, 0, 1, 1], [], []>} : vector<2x64xbf16>, vector<64x512xbf16>, vector<2x512xf32> -> vector<2x512xf32>
    %21 = arith.addf %6, %20 : vector<2x512xf32>
    %c7_i32_12 = arith.constant 7 : i32
    %22 = arith.muli %arg0, %c7_i32_12 : i32
    %c1_i32 = arith.constant 1 : i32
    %23 = arith.addi %22, %c1_i32 : i32
    %24 = vector.broadcast %23 : i32 to vector<2x1xi32>
    %25 = arith.addi %4, %24 : vector<2x1xi32>
    %26 = vector.broadcast %25 : vector<2x1xi32> to vector<2x98xi32>
    %27 = arith.cmpi eq, %3, %26 : vector<2x98xi32>
    %cst_13 = arith.constant 1.000000e+00 : f32
    %cst_14 = arith.constant 0.000000e+00 : f32
    %28 = vector.broadcast %cst_13 : f32 to vector<2x98xf32>
    %29 = vector.broadcast %cst_14 : f32 to vector<2x98xf32>
    %30 = arith.select %27, %28, %29 : vector<2x98xi1>, vector<2x98xf32>
    %31 = arith.truncf %30 : vector<2x98xf32> to vector<2x98xbf16>
    %cst_15 = arith.constant dense<0.000000e+00> : vector<2x64xf32>
    %32 = tpu.matmul %31, %5, %cst_15 {dimension_numbers = #tpu.dot_dimension_numbers<[1], [0], [0], [1], [0, 0, 1, 1], [], []>} : vector<2x98xbf16>, vector<98x64xbf16>, vector<2x64xf32> -> vector<2x64xf32>
    %c64 = arith.constant 64 : index
    %c0_16 = arith.constant 0 : index
    %33 = vector.load %arg8[%c64, %c0_16] : memref<448x512xbf16, #tpu.memory_space<vmem>>, vector<64x512xbf16>
    %34 = arith.truncf %32 : vector<2x64xf32> to vector<2x64xbf16>
    %cst_17 = arith.constant dense<0.000000e+00> : vector<2x512xf32>
    %35 = tpu.matmul %34, %33, %cst_17 {dimension_numbers = #tpu.dot_dimension_numbers<[1], [0], [0], [1], [0, 0, 1, 1], [], []>} : vector<2x64xbf16>, vector<64x512xbf16>, vector<2x512xf32> -> vector<2x512xf32>
    %36 = arith.addf %21, %35 : vector<2x512xf32>
    %c7_i32_18 = arith.constant 7 : i32
    %37 = arith.muli %arg0, %c7_i32_18 : i32
    %c2_i32 = arith.constant 2 : i32
    %38 = arith.addi %37, %c2_i32 : i32
    %39 = vector.broadcast %38 : i32 to vector<2x1xi32>
    %40 = arith.addi %4, %39 : vector<2x1xi32>
    %41 = vector.broadcast %40 : vector<2x1xi32> to vector<2x98xi32>
    %42 = arith.cmpi eq, %3, %41 : vector<2x98xi32>
    %cst_19 = arith.constant 1.000000e+00 : f32
    %cst_20 = arith.constant 0.000000e+00 : f32
    %43 = vector.broadcast %cst_19 : f32 to vector<2x98xf32>
    %44 = vector.broadcast %cst_20 : f32 to vector<2x98xf32>
    %45 = arith.select %42, %43, %44 : vector<2x98xi1>, vector<2x98xf32>
    %46 = arith.truncf %45 : vector<2x98xf32> to vector<2x98xbf16>
    %cst_21 = arith.constant dense<0.000000e+00> : vector<2x64xf32>
    %47 = tpu.matmul %46, %5, %cst_21 {dimension_numbers = #tpu.dot_dimension_numbers<[1], [0], [0], [1], [0, 0, 1, 1], [], []>} : vector<2x98xbf16>, vector<98x64xbf16>, vector<2x64xf32> -> vector<2x64xf32>
    %c128 = arith.constant 128 : index
    %c0_22 = arith.constant 0 : index
    %48 = vector.load %arg8[%c128, %c0_22] : memref<448x512xbf16, #tpu.memory_space<vmem>>, vector<64x512xbf16>
    %49 = arith.truncf %47 : vector<2x64xf32> to vector<2x64xbf16>
    %cst_23 = arith.constant dense<0.000000e+00> : vector<2x512xf32>
    %50 = tpu.matmul %49, %48, %cst_23 {dimension_numbers = #tpu.dot_dimension_numbers<[1], [0], [0], [1], [0, 0, 1, 1], [], []>} : vector<2x64xbf16>, vector<64x512xbf16>, vector<2x512xf32> -> vector<2x512xf32>
    %51 = arith.addf %36, %50 : vector<2x512xf32>
    %c7_i32_24 = arith.constant 7 : i32
    %52 = arith.muli %arg0, %c7_i32_24 : i32
    %c3_i32 = arith.constant 3 : i32
    %53 = arith.addi %52, %c3_i32 : i32
    %54 = vector.broadcast %53 : i32 to vector<2x1xi32>
    %55 = arith.addi %4, %54 : vector<2x1xi32>
    %56 = vector.broadcast %55 : vector<2x1xi32> to vector<2x98xi32>
    %57 = arith.cmpi eq, %3, %56 : vector<2x98xi32>
    %cst_25 = arith.constant 1.000000e+00 : f32
    %cst_26 = arith.constant 0.000000e+00 : f32
    %58 = vector.broadcast %cst_25 : f32 to vector<2x98xf32>
    %59 = vector.broadcast %cst_26 : f32 to vector<2x98xf32>
    %60 = arith.select %57, %58, %59 : vector<2x98xi1>, vector<2x98xf32>
    %61 = arith.truncf %60 : vector<2x98xf32> to vector<2x98xbf16>
    %cst_27 = arith.constant dense<0.000000e+00> : vector<2x64xf32>
    %62 = tpu.matmul %61, %5, %cst_27 {dimension_numbers = #tpu.dot_dimension_numbers<[1], [0], [0], [1], [0, 0, 1, 1], [], []>} : vector<2x98xbf16>, vector<98x64xbf16>, vector<2x64xf32> -> vector<2x64xf32>
    %c192 = arith.constant 192 : index
    %c0_28 = arith.constant 0 : index
    %63 = vector.load %arg8[%c192, %c0_28] : memref<448x512xbf16, #tpu.memory_space<vmem>>, vector<64x512xbf16>
    %64 = arith.truncf %62 : vector<2x64xf32> to vector<2x64xbf16>
    %cst_29 = arith.constant dense<0.000000e+00> : vector<2x512xf32>
    %65 = tpu.matmul %64, %63, %cst_29 {dimension_numbers = #tpu.dot_dimension_numbers<[1], [0], [0], [1], [0, 0, 1, 1], [], []>} : vector<2x64xbf16>, vector<64x512xbf16>, vector<2x512xf32> -> vector<2x512xf32>
    %66 = arith.addf %51, %65 : vector<2x512xf32>
    %c7_i32_30 = arith.constant 7 : i32
    %67 = arith.muli %arg0, %c7_i32_30 : i32
    %c4_i32 = arith.constant 4 : i32
    %68 = arith.addi %67, %c4_i32 : i32
    %69 = vector.broadcast %68 : i32 to vector<2x1xi32>
    %70 = arith.addi %4, %69 : vector<2x1xi32>
    %71 = vector.broadcast %70 : vector<2x1xi32> to vector<2x98xi32>
    %72 = arith.cmpi eq, %3, %71 : vector<2x98xi32>
    %cst_31 = arith.constant 1.000000e+00 : f32
    %cst_32 = arith.constant 0.000000e+00 : f32
    %73 = vector.broadcast %cst_31 : f32 to vector<2x98xf32>
    %74 = vector.broadcast %cst_32 : f32 to vector<2x98xf32>
    %75 = arith.select %72, %73, %74 : vector<2x98xi1>, vector<2x98xf32>
    %76 = arith.truncf %75 : vector<2x98xf32> to vector<2x98xbf16>
    %cst_33 = arith.constant dense<0.000000e+00> : vector<2x64xf32>
    %77 = tpu.matmul %76, %5, %cst_33 {dimension_numbers = #tpu.dot_dimension_numbers<[1], [0], [0], [1], [0, 0, 1, 1], [], []>} : vector<2x98xbf16>, vector<98x64xbf16>, vector<2x64xf32> -> vector<2x64xf32>
    %c256 = arith.constant 256 : index
    %c0_34 = arith.constant 0 : index
    %78 = vector.load %arg8[%c256, %c0_34] : memref<448x512xbf16, #tpu.memory_space<vmem>>, vector<64x512xbf16>
    %79 = arith.truncf %77 : vector<2x64xf32> to vector<2x64xbf16>
    %cst_35 = arith.constant dense<0.000000e+00> : vector<2x512xf32>
    %80 = tpu.matmul %79, %78, %cst_35 {dimension_numbers = #tpu.dot_dimension_numbers<[1], [0], [0], [1], [0, 0, 1, 1], [], []>} : vector<2x64xbf16>, vector<64x512xbf16>, vector<2x512xf32> -> vector<2x512xf32>
    %81 = arith.addf %66, %80 : vector<2x512xf32>
    %c7_i32_36 = arith.constant 7 : i32
    %82 = arith.muli %arg0, %c7_i32_36 : i32
    %c5_i32 = arith.constant 5 : i32
    %83 = arith.addi %82, %c5_i32 : i32
    %84 = vector.broadcast %83 : i32 to vector<2x1xi32>
    %85 = arith.addi %4, %84 : vector<2x1xi32>
    %86 = vector.broadcast %85 : vector<2x1xi32> to vector<2x98xi32>
    %87 = arith.cmpi eq, %3, %86 : vector<2x98xi32>
    %cst_37 = arith.constant 1.000000e+00 : f32
    %cst_38 = arith.constant 0.000000e+00 : f32
    %88 = vector.broadcast %cst_37 : f32 to vector<2x98xf32>
    %89 = vector.broadcast %cst_38 : f32 to vector<2x98xf32>
    %90 = arith.select %87, %88, %89 : vector<2x98xi1>, vector<2x98xf32>
    %91 = arith.truncf %90 : vector<2x98xf32> to vector<2x98xbf16>
    %cst_39 = arith.constant dense<0.000000e+00> : vector<2x64xf32>
    %92 = tpu.matmul %91, %5, %cst_39 {dimension_numbers = #tpu.dot_dimension_numbers<[1], [0], [0], [1], [0, 0, 1, 1], [], []>} : vector<2x98xbf16>, vector<98x64xbf16>, vector<2x64xf32> -> vector<2x64xf32>
    %c320 = arith.constant 320 : index
    %c0_40 = arith.constant 0 : index
    %93 = vector.load %arg8[%c320, %c0_40] : memref<448x512xbf16, #tpu.memory_space<vmem>>, vector<64x512xbf16>
    %94 = arith.truncf %92 : vector<2x64xf32> to vector<2x64xbf16>
    %cst_41 = arith.constant dense<0.000000e+00> : vector<2x512xf32>
    %95 = tpu.matmul %94, %93, %cst_41 {dimension_numbers = #tpu.dot_dimension_numbers<[1], [0], [0], [1], [0, 0, 1, 1], [], []>} : vector<2x64xbf16>, vector<64x512xbf16>, vector<2x512xf32> -> vector<2x512xf32>
    %96 = arith.addf %81, %95 : vector<2x512xf32>
    %c7_i32_42 = arith.constant 7 : i32
    %97 = arith.muli %arg0, %c7_i32_42 : i32
    %c6_i32 = arith.constant 6 : i32
    %98 = arith.addi %97, %c6_i32 : i32
    %99 = vector.broadcast %98 : i32 to vector<2x1xi32>
    %100 = arith.addi %4, %99 : vector<2x1xi32>
    %101 = vector.broadcast %100 : vector<2x1xi32> to vector<2x98xi32>
    %102 = arith.cmpi eq, %3, %101 : vector<2x98xi32>
    %cst_43 = arith.constant 1.000000e+00 : f32
    %cst_44 = arith.constant 0.000000e+00 : f32
    %103 = vector.broadcast %cst_43 : f32 to vector<2x98xf32>
    %104 = vector.broadcast %cst_44 : f32 to vector<2x98xf32>
    %105 = arith.select %102, %103, %104 : vector<2x98xi1>, vector<2x98xf32>
    %106 = arith.truncf %105 : vector<2x98xf32> to vector<2x98xbf16>
    %cst_45 = arith.constant dense<0.000000e+00> : vector<2x64xf32>
    %107 = tpu.matmul %106, %5, %cst_45 {dimension_numbers = #tpu.dot_dimension_numbers<[1], [0], [0], [1], [0, 0, 1, 1], [], []>} : vector<2x98xbf16>, vector<98x64xbf16>, vector<2x64xf32> -> vector<2x64xf32>
    %c384 = arith.constant 384 : index
    %c0_46 = arith.constant 0 : index
    %108 = vector.load %arg8[%c384, %c0_46] : memref<448x512xbf16, #tpu.memory_space<vmem>>, vector<64x512xbf16>
    %109 = arith.truncf %107 : vector<2x64xf32> to vector<2x64xbf16>
    %cst_47 = arith.constant dense<0.000000e+00> : vector<2x512xf32>
    %110 = tpu.matmul %109, %108, %cst_47 {dimension_numbers = #tpu.dot_dimension_numbers<[1], [0], [0], [1], [0, 0, 1, 1], [], []>} : vector<2x64xbf16>, vector<64x512xbf16>, vector<2x512xf32> -> vector<2x512xf32>
    %111 = arith.addf %96, %110 : vector<2x512xf32>
    %c0_48 = arith.constant 0 : index
    %c0_49 = arith.constant 0 : index
    %112 = vector.load %arg14[%c0_48, %c0_49] : memref<2x512xf32, #tpu.memory_space<vmem>>, vector<2x512xf32>
    tpu.vector_store %arg14[%c0_48, %c0_49], %111 {strides = array<i32>} : memref<2x512xf32, #tpu.memory_space<vmem>>, vector<2x512xf32>,
    %c6_i32_50 = arith.constant 6 : i32
    %113 = arith.cmpi eq, %arg0, %c6_i32_50 : i32
    %114 = arith.extui %113 : i1 to i32
    %c0_i32_51 = arith.constant 0 : i32
    %115 = arith.cmpi ne, %114, %c0_i32_51 : i32
    scf.if %115 {
      %c0_52 = arith.constant 0 : index
      %c0_53 = arith.constant 0 : index
      %116 = vector.load %arg14[%c0_52, %c0_53] : memref<2x512xf32, #tpu.memory_space<vmem>>, vector<2x512xf32>
      %cst_54 = arith.constant 0.000000e+00 : f32
      %117 = vector.broadcast %cst_54 : f32 to vector<2x512xf32>
      %118 = arith.maximumf %116, %117 : vector<2x512xf32>
      %c0_55 = arith.constant 0 : index
      %c0_56 = arith.constant 0 : index
      %119 = vector.load %arg10[%c0_55, %c0_56] : memref<512x5xf32, #tpu.memory_space<vmem>>, vector<512x5xf32>
      %cst_57 = arith.constant dense<0.000000e+00> : vector<2x5xf32>
      %120 = tpu.matmul %118, %119, %cst_57 {dimension_numbers = #tpu.dot_dimension_numbers<[1], [0], [0], [1], [0, 0, 1, 1], [], []>} : vector<2x512xf32>, vector<512x5xf32>, vector<2x5xf32> -> vector<2x5xf32>
      %c0_58 = arith.constant 0 : index
      %c0_59 = arith.constant 0 : index
      %121 = vector.load %arg11[%c0_58, %c0_59] : memref<1x5xf32, #tpu.memory_space<vmem>>, vector<1x5xf32>
      %122 = vector.broadcast %121 : vector<1x5xf32> to vector<2x5xf32>
      %123 = arith.addf %120, %122 : vector<2x5xf32>
      %c0_60 = arith.constant 0 : index
      %c0_61 = arith.constant 0 : index
      %124 = vector.load %arg12[%c0_60, %c0_61] : memref<2x5xf32, #tpu.memory_space<vmem>>, vector<2x5xf32>
      tpu.vector_store %arg12[%c0_60, %c0_61], %123 {strides = array<i32>} : memref<2x5xf32, #tpu.memory_space<vmem>>, vector<2x5xf32>,
    } else {
    }
    return
  }
  func.func @transform_0(%arg0: i32) -> (i32, i32) {
    %c0_i32 = arith.constant 0 : i32
    %c0_i32_0 = arith.constant 0 : i32
    %c0_i32_1 = arith.constant 0 : i32
    return %c0_i32, %c0_i32_0 : i32, i32
  }
  func.func @transform_1(%arg0: i32) -> (i32, i32) {
    %c0_i32 = arith.constant 0 : i32
    %c0_i32_0 = arith.constant 0 : i32
    %c0_i32_1 = arith.constant 0 : i32
    return %c0_i32, %c0_i32_0 : i32, i32
  }
  func.func @transform_2(%arg0: i32) -> (i32, i32) {
    %c0_i32 = arith.constant 0 : i32
    %c0_i32_0 = arith.constant 0 : i32
    %c0_i32_1 = arith.constant 0 : i32
    return %c0_i32, %c0_i32_0 : i32, i32
  }
  func.func @transform_3(%arg0: i32) -> (i32, i32, i32) {
    %c0_i32 = arith.constant 0 : i32
    %c0_i32_0 = arith.constant 0 : i32
    %c0_i32_1 = arith.constant 0 : i32
    %c0_i32_2 = arith.constant 0 : i32
    return %c0_i32, %c0_i32_0, %c0_i32_1 : i32, i32, i32
  }
  func.func @transform_4(%arg0: i32) -> (i32, i32) {
    %c0_i32 = arith.constant 0 : i32
    %c0_i32_0 = arith.constant 0 : i32
    %c0_i32_1 = arith.constant 0 : i32
    return %c0_i32, %c0_i32_0 : i32, i32
  }
  func.func @transform_5(%arg0: i32) -> (i32, i32) {
    %c0_i32 = arith.constant 0 : i32
    %c0_i32_0 = arith.constant 0 : i32
    %c0_i32_1 = arith.constant 0 : i32
    return %c0_i32, %c0_i32_0 : i32, i32
  }
  func.func @transform_6(%arg0: i32) -> (i32, i32) {
    %c0_i32 = arith.constant 0 : i32
    %c0_i32_0 = arith.constant 0 : i32
    %c0_i32_1 = arith.constant 0 : i32
    return %c0_i32, %c0_i32_0 : i32, i32
  }
  func.func @transform_7(%arg0: i32) -> (i32, i32) {
    %c0_i32 = arith.constant 0 : i32
    %c0_i32_0 = arith.constant 0 : i32
    return %arg0, %c0_i32 : i32, i32
  }
  func.func @transform_8(%arg0: i32) -> (i32, i32) {
    %c0_i32 = arith.constant 0 : i32
    %c0_i32_0 = arith.constant 0 : i32
    %c0_i32_1 = arith.constant 0 : i32
    return %c0_i32, %c0_i32_0 : i32, i32
  }
  func.func @transform_9(%arg0: i32) -> (i32, i32) {
    %c0_i32 = arith.constant 0 : i32
    %c0_i32_0 = arith.constant 0 : i32
    %c0_i32_1 = arith.constant 0 : i32
    return %c0_i32, %c0_i32_0 : i32, i32
  }
  func.func @transform_10(%arg0: i32) -> (i32, i32) {
    %c0_i32 = arith.constant 0 : i32
    %c0_i32_0 = arith.constant 0 : i32
    %c0_i32_1 = arith.constant 0 : i32
    return %c0_i32, %c0_i32_0 : i32, i32
  }
  func.func @transform_11(%arg0: i32) -> (i32, i32) {
    %c0_i32 = arith.constant 0 : i32
    %c0_i32_0 = arith.constant 0 : i32
    %c0_i32_1 = arith.constant 0 : i32
    return %c0_i32, %c0_i32_0 : i32, i32
  }
}

</mosaic_0001>

<llo_original>
// kernel: forward.2
$region0: #{forward.2}
  #allocation0 [shape = 'u32[]', space=smem, size = 0x4, offset = 0x4, fixed_abs, tag = 'smem constant byte address 0x4 - core index']
  #allocation1 [shape = 'u32[144,128]{1,0:T(1,128)}', space=vmem, size = 0x12000, scoped, tag = 'internal scratch']
  %s0 = inlined_call_operand.vmem [shape: bf16[800,256], index: 0, kind: input, shape index: {}]
  %s1 = inlined_call_operand.vmem [shape: bf16[256,30], index: 1, kind: input, shape index: {}]
  %s2 = inlined_call_operand.vmem [shape: f32[1,30], index: 2, kind: input, shape index: {}]
  %s3 = inlined_call_operand.vmem [shape: bf16[800,30], index: 3, kind: output, shape index: {}]
  %s4 = sld [smem:[#allocation0]]
  $region22: #{forward.2} parent=0
    _
  %s6 = ssub.s32 1, %s4
  %s7 = scalar_select 0, %s6, %s4
  // Predicated region
  $region2: #{forward.2} parent=0 // pred_check
    _
  $region3: #{forward.2} parent=0 // pred_check_branch
    %9 = sbr.rel (0) target = $region5
  $region4: #{forward.2} parent=0 // pred_region
    _
  $region5: #{forward.2} parent=0 // pred_fallthru
    _
  // Predicated region
  $region6: #{forward.2} parent=0 // pred_check
    _
  $region7: #{forward.2} parent=0 // pred_check_branch
    %11 = sbr.rel (0) target = $region9
  $region8: #{forward.2} parent=0 // pred_region
    _
  $region9: #{forward.2} parent=0 // pred_fallthru
    _
  // Predicated region
  $region10: #{forward.2} parent=0 // pred_check
    _
  $region11: #{forward.2} parent=0 // pred_check_branch
    %13 = sbr.rel (0) target = $region13
  $region12: #{forward.2} parent=0 // pred_region
    _
  $region13: #{forward.2} parent=0 // pred_fallthru
    _
  %v15 = vld [vmem:[%s0] sm:$0xff]
  %v16 = vld [vmem:[%s0 + $0x8] sm:$0xff]
  %v17 = vld [vmem:[%s0 + $0x10] sm:$0xff]
  %v18 = vld [vmem:[%s0 + $0x18] sm:$0xff]
  %v19 = vld [vmem:[%s0 + $0x20] sm:$0xff]
  %v20 = vld [vmem:[%s0 + $0x28] sm:$0xff]
  %v21 = vld [vmem:[%s0 + $0x30] sm:$0xff]
  %v22 = vld [vmem:[%s0 + $0x38] sm:$0xff]
  %v23 = vld [vmem:[%s0 + $0x40] sm:$0xff]
  %v24 = vld [vmem:[%s0 + $0x48] sm:$0xff]
  %v25 = vld [vmem:[%s0 + $0x50] sm:$0xff]
  %v26 = vld [vmem:[%s0 + $0x58] sm:$0xff]
  %v27 = vld [vmem:[%s0 + $0x60] sm:$0xff]
  %v28 = vld [vmem:[%s0 + $0x68] sm:$0xff]
  %v29 = vld [vmem:[%s0 + $0x70] sm:$0xff]
  %v30 = vld [vmem:[%s0 + $0x78] sm:$0xff]
  %v31 = vld [vmem:[%s0 + $0x80] sm:$0xff]
  %v32 = vld [vmem:[%s0 + $0x88] sm:$0xff]
  %v33 = vld [vmem:[%s0 + $0x90] sm:$0xff]
  %v34 = vld [vmem:[%s0 + $0x98] sm:$0xff]
  %v35 = vld [vmem:[%s0 + $0xa0] sm:$0xff]
  %v36 = vld [vmem:[%s0 + $0xa8] sm:$0xff]
  %v37 = vld [vmem:[%s0 + $0xb0] sm:$0xff]
  %v38 = vld [vmem:[%s0 + $0xb8] sm:$0xff]
  %v39 = vld [vmem:[%s0 + $0xc0] sm:$0xff]
  %v40 = vld [vmem:[%s0 + $0xc8] sm:$0xff]
  %v41 = vld [vmem:[%s0 + $0xd0] sm:$0xff]
  %v42 = vld [vmem:[%s0 + $0xd8] sm:$0xff]
  %v43 = vld [vmem:[%s0 + $0xe0] sm:$0xff]
  %v44 = vld [vmem:[%s0 + $0xe8] sm:$0xff]
  %v45 = vld [vmem:[%s0 + $0xf0] sm:$0xff]
  %v46 = vld [vmem:[%s0 + $0xf8] sm:$0xff]
  %v47 = vld [vmem:[%s0 + $0x100] sm:$0xff]
  %v48 = vld [vmem:[%s0 + $0x108] sm:$0xff]
  %v49 = vld [vmem:[%s0 + $0x110] sm:$0xff]
  %v50 = vld [vmem:[%s0 + $0x118] sm:$0xff]
  %v51 = vld [vmem:[%s0 + $0x120] sm:$0xff]
  %v52 = vld [vmem:[%s0 + $0x128] sm:$0xff]
  %v53 = vld [vmem:[%s0 + $0x130] sm:$0xff]
  %v54 = vld [vmem:[%s0 + $0x138] sm:$0xff]
  %v55 = vld [vmem:[%s0 + $0x140] sm:$0xff]
  %v56 = vld [vmem:[%s0 + $0x148] sm:$0xff]
  %v57 = vld [vmem:[%s0 + $0x150] sm:$0xff]
  %v58 = vld [vmem:[%s0 + $0x158] sm:$0xff]
  %v59 = vld [vmem:[%s0 + $0x160] sm:$0xff]
  %v60 = vld [vmem:[%s0 + $0x168] sm:$0xff]
  %v61 = vld [vmem:[%s0 + $0x170] sm:$0xff]
  %v62 = vld [vmem:[%s0 + $0x178] sm:$0xff]
  %v63 = vld [vmem:[%s0 + $0x180] sm:$0xff]
  %v64 = vld [vmem:[%s0 + $0x188] sm:$0xff]
  %v65 = vld [vmem:[%s0 + $0x190] sm:$0xff]
  %v66 = vld [vmem:[%s0 + $0x198] sm:$0xff]
  %v67 = vld [vmem:[%s0 + $0x1a0] sm:$0xff]
  %v68 = vld [vmem:[%s0 + $0x1a8] sm:$0xff]
  %v69 = vld [vmem:[%s0 + $0x1b0] sm:$0xff]
  %v70 = vld [vmem:[%s0 + $0x1b8] sm:$0xff]
  %v71 = vld [vmem:[%s0 + $0x1c0] sm:$0xff]
  %v72 = vld [vmem:[%s0 + $0x1c8] sm:$0xff]
  %v73 = vld [vmem:[%s0 + $0x1d0] sm:$0xff]
  %v74 = vld [vmem:[%s0 + $0x1d8] sm:$0xff]
  %v75 = vld [vmem:[%s0 + $0x1e0] sm:$0xff]
  %v76 = vld [vmem:[%s0 + $0x1e8] sm:$0xff]
  %v77 = vld [vmem:[%s0 + $0x1f0] sm:$0xff]
  %v78 = vld [vmem:[%s0 + $0x1f8] sm:$0xff]
  %v79 = vld [vmem:[%s0 + $0x200] sm:$0xff]
  %v80 = vld [vmem:[%s0 + $0x208] sm:$0xff]
  %v81 = vld [vmem:[%s0 + $0x210] sm:$0xff]
  %v82 = vld [vmem:[%s0 + $0x218] sm:$0xff]
  %v83 = vld [vmem:[%s0 + $0x220] sm:$0xff]
  %v84 = vld [vmem:[%s0 + $0x228] sm:$0xff]
  %v85 = vld [vmem:[%s0 + $0x230] sm:$0xff]
  %v86 = vld [vmem:[%s0 + $0x238] sm:$0xff]
  %v87 = vld [vmem:[%s0 + $0x240] sm:$0xff]
  %v88 = vld [vmem:[%s0 + $0x248] sm:$0xff]
  %v89 = vld [vmem:[%s0 + $0x250] sm:$0xff]
  %v90 = vld [vmem:[%s0 + $0x258] sm:$0xff]
  %v91 = vld [vmem:[%s0 + $0x260] sm:$0xff]
  %v92 = vld [vmem:[%s0 + $0x268] sm:$0xff]
  %v93 = vld [vmem:[%s0 + $0x270] sm:$0xff]
  %v94 = vld [vmem:[%s0 + $0x278] sm:$0xff]
  %v95 = vld [vmem:[%s0 + $0x280] sm:$0xff]
  %v96 = vld [vmem:[%s0 + $0x288] sm:$0xff]
  %v97 = vld [vmem:[%s0 + $0x290] sm:$0xff]
  %v98 = vld [vmem:[%s0 + $0x298] sm:$0xff]
  %v99 = vld [vmem:[%s0 + $0x2a0] sm:$0xff]
  %v100 = vld [vmem:[%s0 + $0x2a8] sm:$0xff]
  %v101 = vld [vmem:[%s0 + $0x2b0] sm:$0xff]
  %v102 = vld [vmem:[%s0 + $0x2b8] sm:$0xff]
  %v103 = vld [vmem:[%s0 + $0x2c0] sm:$0xff]
  %v104 = vld [vmem:[%s0 + $0x2c8] sm:$0xff]
  %v105 = vld [vmem:[%s0 + $0x2d0] sm:$0xff]
  %v106 = vld [vmem:[%s0 + $0x2d8] sm:$0xff]
  %v107 = vld [vmem:[%s0 + $0x2e0] sm:$0xff]
  %v108 = vld [vmem:[%s0 + $0x2e8] sm:$0xff]
  %v109 = vld [vmem:[%s0 + $0x2f0] sm:$0xff]
  %v110 = vld [vmem:[%s0 + $0x2f8] sm:$0xff]
  %v111 = vld [vmem:[%s0 + $0x300] sm:$0xff]
  %v112 = vld [vmem:[%s0 + $0x308] sm:$0xff]
  %v113 = vld [vmem:[%s0 + $0x310] sm:$0xff]
  %v114 = vld [vmem:[%s0 + $0x318] sm:$0xff]
  %v115 = vld [vmem:[%s1] sm:$0xf]
  %v116 = vld [vmem:[%s1 + $0x4] sm:$0xf]
  %v117 = vld [vmem:[%s1 + $0x8] sm:$0xf]
  %v118 = vld [vmem:[%s1 + $0xc] sm:$0xf]
  %v119 = vld [vmem:[%s1 + $0x10] sm:$0xf]
  %v120 = vld [vmem:[%s1 + $0x14] sm:$0xf]
  %v121 = vld [vmem:[%s1 + $0x18] sm:$0xf]
  %v122 = vld [vmem:[%s1 + $0x1c] sm:$0xf]
  %v123 = vld [vmem:[%s1 + $0x20] sm:$0xf]
  %v124 = vld [vmem:[%s1 + $0x24] sm:$0xf]
  %v125 = vld [vmem:[%s1 + $0x28] sm:$0xf]
  %v126 = vld [vmem:[%s1 + $0x2c] sm:$0xf]
  %v127 = vld [vmem:[%s1 + $0x30] sm:$0xf]
  %v128 = vld [vmem:[%s1 + $0x34] sm:$0xf]
  %v129 = vld [vmem:[%s1 + $0x38] sm:$0xf]
  %v130 = vld [vmem:[%s1 + $0x3c] sm:$0xf]
  %v131 = vld [vmem:[%s1 + $0x40] sm:$0xf]
  %v132 = vld [vmem:[%s1 + $0x44] sm:$0xf]
  %v133 = vld [vmem:[%s1 + $0x48] sm:$0xf]
  %v134 = vld [vmem:[%s1 + $0x4c] sm:$0xf]
  %v135 = vld [vmem:[%s1 + $0x50] sm:$0xf]
  %v136 = vld [vmem:[%s1 + $0x54] sm:$0xf]
  %v137 = vld [vmem:[%s1 + $0x58] sm:$0xf]
  %v138 = vld [vmem:[%s1 + $0x5c] sm:$0xf]
  %v139 = vld [vmem:[%s1 + $0x60] sm:$0xf]
  %v140 = vld [vmem:[%s1 + $0x64] sm:$0xf]
  %v141 = vld [vmem:[%s1 + $0x68] sm:$0xf]
  %v142 = vld [vmem:[%s1 + $0x6c] sm:$0xf]
  %v143 = vld [vmem:[%s1 + $0x70] sm:$0xf]
  %v144 = vld [vmem:[%s1 + $0x74] sm:$0xf]
  %v145 = vld [vmem:[%s1 + $0x78] sm:$0xf]
  %v146 = vld [vmem:[%s1 + $0x7c] sm:$0xf]
  %v147 = vld [vmem:[%s2] sm:$0x1]
  %v149 = vlaneseq
  %v150 = vshrl.u32 %v149, 7
  %v151 = vsub.s32 0, %v150
  %v152 = vrot.slane %v147, %v151
  %v254 = vunpack.c.l.b16 %v15
  %v255 = vunpack.c.h.b16 %v15
  %v256 = vunpack.c.l.b16 %v16
  %v257 = vunpack.c.h.b16 %v16
  %v258 = vunpack.c.l.b16 %v17
  %v259 = vunpack.c.h.b16 %v17
  %v260 = vunpack.c.l.b16 %v18
  %v261 = vunpack.c.h.b16 %v18
  %v262 = vunpack.c.l.b16 %v19
  %v263 = vunpack.c.h.b16 %v19
  %v264 = vunpack.c.l.b16 %v20
  %v265 = vunpack.c.h.b16 %v20
  %v266 = vunpack.c.l.b16 %v21
  %v267 = vunpack.c.h.b16 %v21
  %v268 = vunpack.c.l.b16 %v22
  %v269 = vunpack.c.h.b16 %v22
  %v270 = vunpack.c.l.b16 %v23
  %v271 = vunpack.c.h.b16 %v23
  %v272 = vunpack.c.l.b16 %v24
  %v273 = vunpack.c.h.b16 %v24
  %v274 = vunpack.c.l.b16 %v25
  %v275 = vunpack.c.h.b16 %v25
  %v276 = vunpack.c.l.b16 %v26
  %v277 = vunpack.c.h.b16 %v26
  %v278 = vunpack.c.l.b16 %v27
  %v279 = vunpack.c.h.b16 %v27
  %v280 = vunpack.c.l.b16 %v28
  %v281 = vunpack.c.h.b16 %v28
  %v282 = vunpack.c.l.b16 %v29
  %v283 = vunpack.c.h.b16 %v29
  %v284 = vunpack.c.l.b16 %v30
  %v285 = vunpack.c.h.b16 %v30
  %v286 = vunpack.c.l.b16 %v31
  %v287 = vunpack.c.h.b16 %v31
  %v288 = vunpack.c.l.b16 %v32
  %v289 = vunpack.c.h.b16 %v32
  %v290 = vunpack.c.l.b16 %v33
  %v291 = vunpack.c.h.b16 %v33
  %v292 = vunpack.c.l.b16 %v34
  %v293 = vunpack.c.h.b16 %v34
  %v294 = vunpack.c.l.b16 %v35
  %v295 = vunpack.c.h.b16 %v35
  %v296 = vunpack.c.l.b16 %v36
  %v297 = vunpack.c.h.b16 %v36
  %v298 = vunpack.c.l.b16 %v37
  %v299 = vunpack.c.h.b16 %v37
  %v300 = vunpack.c.l.b16 %v38
  %v301 = vunpack.c.h.b16 %v38
  %v302 = vunpack.c.l.b16 %v39
  %v303 = vunpack.c.h.b16 %v39
  %v304 = vunpack.c.l.b16 %v40
  %v305 = vunpack.c.h.b16 %v40
  %v306 = vunpack.c.l.b16 %v41
  %v307 = vunpack.c.h.b16 %v41
  %v308 = vunpack.c.l.b16 %v42
  %v309 = vunpack.c.h.b16 %v42
  %v310 = vunpack.c.l.b16 %v43
  %v311 = vunpack.c.h.b16 %v43
  %v312 = vunpack.c.l.b16 %v44
  %v313 = vunpack.c.h.b16 %v44
  %v314 = vunpack.c.l.b16 %v45
  %v315 = vunpack.c.h.b16 %v45
  %v316 = vunpack.c.l.b16 %v46
  %v317 = vunpack.c.h.b16 %v46
  %v318 = vunpack.c.l.b16 %v47
  %v319 = vunpack.c.h.b16 %v47
  %v320 = vunpack.c.l.b16 %v48
  %v321 = vunpack.c.h.b16 %v48
  %v322 = vunpack.c.l.b16 %v49
  %v323 = vunpack.c.h.b16 %v49
  %v324 = vunpack.c.l.b16 %v50
  %v325 = vunpack.c.h.b16 %v50
  %v326 = vunpack.c.l.b16 %v51
  %v327 = vunpack.c.h.b16 %v51
  %v328 = vunpack.c.l.b16 %v52
  %v329 = vunpack.c.h.b16 %v52
  %v330 = vunpack.c.l.b16 %v53
  %v331 = vunpack.c.h.b16 %v53
  %v332 = vunpack.c.l.b16 %v54
  %v333 = vunpack.c.h.b16 %v54
  %v334 = vunpack.c.l.b16 %v55
  %v335 = vunpack.c.h.b16 %v55
  %v336 = vunpack.c.l.b16 %v56
  %v337 = vunpack.c.h.b16 %v56
  %v338 = vunpack.c.l.b16 %v57
  %v339 = vunpack.c.h.b16 %v57
  %v340 = vunpack.c.l.b16 %v58
  %v341 = vunpack.c.h.b16 %v58
  %v342 = vunpack.c.l.b16 %v59
  %v343 = vunpack.c.h.b16 %v59
  %v344 = vunpack.c.l.b16 %v60
  %v345 = vunpack.c.h.b16 %v60
  %v346 = vunpack.c.l.b16 %v61
  %v347 = vunpack.c.h.b16 %v61
  %v348 = vunpack.c.l.b16 %v62
  %v349 = vunpack.c.h.b16 %v62
  %v350 = vunpack.c.l.b16 %v63
  %v351 = vunpack.c.h.b16 %v63
  %v352 = vunpack.c.l.b16 %v64
  %v353 = vunpack.c.h.b16 %v64
  %v354 = vunpack.c.l.b16 %v65
  %v355 = vunpack.c.h.b16 %v65
  %v356 = vunpack.c.l.b16 %v66
  %v357 = vunpack.c.h.b16 %v66
  %v358 = vunpack.c.l.b16 %v67
  %v359 = vunpack.c.h.b16 %v67
  %v360 = vunpack.c.l.b16 %v68
  %v361 = vunpack.c.h.b16 %v68
  %v362 = vunpack.c.l.b16 %v69
  %v363 = vunpack.c.h.b16 %v69
  %v364 = vunpack.c.l.b16 %v70
  %v365 = vunpack.c.h.b16 %v70
  %v366 = vunpack.c.l.b16 %v71
  %v367 = vunpack.c.h.b16 %v71
  %v368 = vunpack.c.l.b16 %v72
  %v369 = vunpack.c.h.b16 %v72
  %v370 = vunpack.c.l.b16 %v73
  %v371 = vunpack.c.h.b16 %v73
  %v372 = vunpack.c.l.b16 %v74
  %v373 = vunpack.c.h.b16 %v74
  %v374 = vunpack.c.l.b16 %v75
  %v375 = vunpack.c.h.b16 %v75
  %v376 = vunpack.c.l.b16 %v76
  %v377 = vunpack.c.h.b16 %v76
  %v378 = vunpack.c.l.b16 %v77
  %v379 = vunpack.c.h.b16 %v77
  %v380 = vunpack.c.l.b16 %v78
  %v381 = vunpack.c.h.b16 %v78
  %v382 = vunpack.c.l.b16 %v79
  %v383 = vunpack.c.h.b16 %v79
  %v384 = vunpack.c.l.b16 %v80
  %v385 = vunpack.c.h.b16 %v80
  %v386 = vunpack.c.l.b16 %v81
  %v387 = vunpack.c.h.b16 %v81
  %v388 = vunpack.c.l.b16 %v82
  %v389 = vunpack.c.h.b16 %v82
  %v390 = vunpack.c.l.b16 %v83
  %v391 = vunpack.c.h.b16 %v83
  %v392 = vunpack.c.l.b16 %v84
  %v393 = vunpack.c.h.b16 %v84
  %v394 = vunpack.c.l.b16 %v85
  %v395 = vunpack.c.h.b16 %v85
  %v396 = vunpack.c.l.b16 %v86
  %v397 = vunpack.c.h.b16 %v86
  %v398 = vunpack.c.l.b16 %v87
  %v399 = vunpack.c.h.b16 %v87
  %v400 = vunpack.c.l.b16 %v88
  %v401 = vunpack.c.h.b16 %v88
  %v402 = vunpack.c.l.b16 %v89
  %v403 = vunpack.c.h.b16 %v89
  %v404 = vunpack.c.l.b16 %v90
  %v405 = vunpack.c.h.b16 %v90
  %v406 = vunpack.c.l.b16 %v91
  %v407 = vunpack.c.h.b16 %v91
  %v408 = vunpack.c.l.b16 %v92
  %v409 = vunpack.c.h.b16 %v92
  %v410 = vunpack.c.l.b16 %v93
  %v411 = vunpack.c.h.b16 %v93
  %v412 = vunpack.c.l.b16 %v94
  %v413 = vunpack.c.h.b16 %v94
  %v414 = vunpack.c.l.b16 %v95
  %v415 = vunpack.c.h.b16 %v95
  %v416 = vunpack.c.l.b16 %v96
  %v417 = vunpack.c.h.b16 %v96
  %v418 = vunpack.c.l.b16 %v97
  %v419 = vunpack.c.h.b16 %v97
  %v420 = vunpack.c.l.b16 %v98
  %v421 = vunpack.c.h.b16 %v98
  %v422 = vunpack.c.l.b16 %v99
  %v423 = vunpack.c.h.b16 %v99
  %v424 = vunpack.c.l.b16 %v100
  %v425 = vunpack.c.h.b16 %v100
  %v426 = vunpack.c.l.b16 %v101
  %v427 = vunpack.c.h.b16 %v101
  %v428 = vunpack.c.l.b16 %v102
  %v429 = vunpack.c.h.b16 %v102
  %v430 = vunpack.c.l.b16 %v103
  %v431 = vunpack.c.h.b16 %v103
  %v432 = vunpack.c.l.b16 %v104
  %v433 = vunpack.c.h.b16 %v104
  %v434 = vunpack.c.l.b16 %v105
  %v435 = vunpack.c.h.b16 %v105
  %v436 = vunpack.c.l.b16 %v106
  %v437 = vunpack.c.h.b16 %v106
  %v438 = vunpack.c.l.b16 %v107
  %v439 = vunpack.c.h.b16 %v107
  %v440 = vunpack.c.l.b16 %v108
  %v441 = vunpack.c.h.b16 %v108
  %v442 = vunpack.c.l.b16 %v109
  %v443 = vunpack.c.h.b16 %v109
  %v444 = vunpack.c.l.b16 %v110
  %v445 = vunpack.c.h.b16 %v110
  %v446 = vunpack.c.l.b16 %v111
  %v447 = vunpack.c.h.b16 %v111
  %v448 = vunpack.c.l.b16 %v112
  %v449 = vunpack.c.h.b16 %v112
  %v450 = vunpack.c.l.b16 %v113
  %v451 = vunpack.c.h.b16 %v113
  %v452 = vunpack.c.l.b16 %v114
  %v453 = vunpack.c.h.b16 %v114
  %v454 = vpack.c.b16 %v256, %v254
  %v455 = vpack.c.b16 %v257, %v255
  %v456 = vpack.c.b16 %v260, %v258
  %v457 = vpack.c.b16 %v261, %v259
  %v458 = vpack.c.b16 %v264, %v262
  %v459 = vpack.c.b16 %v265, %v263
  %v460 = vpack.c.b16 %v268, %v266
  %v461 = vpack.c.b16 %v269, %v267
  %v462 = vpack.c.b16 %v272, %v270
  %v463 = vpack.c.b16 %v273, %v271
  %v464 = vpack.c.b16 %v276, %v274
  %v465 = vpack.c.b16 %v277, %v275
  %v466 = vpack.c.b16 %v280, %v278
  %v467 = vpack.c.b16 %v281, %v279
  %v468 = vpack.c.b16 %v284, %v282
  %v469 = vpack.c.b16 %v285, %v283
  %v470 = vpack.c.b16 %v288, %v286
  %v471 = vpack.c.b16 %v289, %v287
  %v472 = vpack.c.b16 %v292, %v290
  %v473 = vpack.c.b16 %v293, %v291
  %v474 = vpack.c.b16 %v296, %v294
  %v475 = vpack.c.b16 %v297, %v295
  %v476 = vpack.c.b16 %v300, %v298
  %v477 = vpack.c.b16 %v301, %v299
  %v478 = vpack.c.b16 %v304, %v302
  %v479 = vpack.c.b16 %v305, %v303
  %v480 = vpack.c.b16 %v308, %v306
  %v481 = vpack.c.b16 %v309, %v307
  %v482 = vpack.c.b16 %v312, %v310
  %v483 = vpack.c.b16 %v313, %v311
  %v484 = vpack.c.b16 %v316, %v314
  %v485 = vpack.c.b16 %v317, %v315
  %v486 = vpack.c.b16 %v320, %v318
  %v487 = vpack.c.b16 %v321, %v319
  %v488 = vpack.c.b16 %v324, %v322
  %v489 = vpack.c.b16 %v325, %v323
  %v490 = vpack.c.b16 %v328, %v326
  %v491 = vpack.c.b16 %v329, %v327
  %v492 = vpack.c.b16 %v332, %v330
  %v493 = vpack.c.b16 %v333, %v331
  %v494 = vpack.c.b16 %v336, %v334
  %v495 = vpack.c.b16 %v337, %v335
  %v496 = vpack.c.b16 %v340, %v338
  %v497 = vpack.c.b16 %v341, %v339
  %v498 = vpack.c.b16 %v344, %v342
  %v499 = vpack.c.b16 %v345, %v343
  %v500 = vpack.c.b16 %v348, %v346
  %v501 = vpack.c.b16 %v349, %v347
  %v502 = vpack.c.b16 %v352, %v350
  %v503 = vpack.c.b16 %v353, %v351
  %v504 = vpack.c.b16 %v356, %v354
  %v505 = vpack.c.b16 %v357, %v355
  %v506 = vpack.c.b16 %v360, %v358
  %v507 = vpack.c.b16 %v361, %v359
  %v508 = vpack.c.b16 %v364, %v362
  %v509 = vpack.c.b16 %v365, %v363
  %v510 = vpack.c.b16 %v368, %v366
  %v511 = vpack.c.b16 %v369, %v367
  %v512 = vpack.c.b16 %v372, %v370
  %v513 = vpack.c.b16 %v373, %v371
  %v514 = vpack.c.b16 %v376, %v374
  %v515 = vpack.c.b16 %v377, %v375
  %v516 = vpack.c.b16 %v380, %v378
  %v517 = vpack.c.b16 %v381, %v379
  %v518 = vpack.c.b16 %v384, %v382
  %v519 = vpack.c.b16 %v385, %v383
  %v520 = vpack.c.b16 %v388, %v386
  %v521 = vpack.c.b16 %v389, %v387
  %v522 = vpack.c.b16 %v392, %v390
  %v523 = vpack.c.b16 %v393, %v391
  %v524 = vpack.c.b16 %v396, %v394
  %v525 = vpack.c.b16 %v397, %v395
  %v526 = vpack.c.b16 %v400, %v398
  %v527 = vpack.c.b16 %v401, %v399
  %v528 = vpack.c.b16 %v404, %v402
  %v529 = vpack.c.b16 %v405, %v403
  %v530 = vpack.c.b16 %v408, %v406
  %v531 = vpack.c.b16 %v409, %v407
  %v532 = vpack.c.b16 %v412, %v410
  %v533 = vpack.c.b16 %v413, %v411
  %v534 = vpack.c.b16 %v416, %v414
  %v535 = vpack.c.b16 %v417, %v415
  %v536 = vpack.c.b16 %v420, %v418
  %v537 = vpack.c.b16 %v421, %v419
  %v538 = vpack.c.b16 %v424, %v422
  %v539 = vpack.c.b16 %v425, %v423
  %v540 = vpack.c.b16 %v428, %v426
  %v541 = vpack.c.b16 %v429, %v427
  %v542 = vpack.c.b16 %v432, %v430
  %v543 = vpack.c.b16 %v433, %v431
  %v544 = vpack.c.b16 %v436, %v434
  %v545 = vpack.c.b16 %v437, %v435
  %v546 = vpack.c.b16 %v440, %v438
  %v547 = vpack.c.b16 %v441, %v439
  %v548 = vpack.c.b16 %v444, %v442
  %v549 = vpack.c.b16 %v445, %v443
  %v550 = vpack.c.b16 %v448, %v446
  %v551 = vpack.c.b16 %v449, %v447
  %v552 = vpack.c.b16 %v452, %v450
  %v553 = vpack.c.b16 %v453, %v451
  %v686 = vunpack.c.l.b16 %v115
  %v687 = vunpack.c.l.b16 %v116
  %v688 = vunpack.c.l.b16 %v117
  %v689 = vunpack.c.l.b16 %v118
  %v690 = vunpack.c.l.b16 %v119
  %v691 = vunpack.c.l.b16 %v120
  %v692 = vunpack.c.l.b16 %v121
  %v693 = vunpack.c.l.b16 %v122
  %v694 = vunpack.c.l.b16 %v123
  %v695 = vunpack.c.l.b16 %v124
  %v696 = vunpack.c.l.b16 %v125
  %v697 = vunpack.c.l.b16 %v126
  %v698 = vunpack.c.l.b16 %v127
  %v699 = vunpack.c.l.b16 %v128
  %v700 = vunpack.c.l.b16 %v129
  %v701 = vunpack.c.l.b16 %v130
  %v702 = vunpack.c.l.b16 %v131
  %v703 = vunpack.c.l.b16 %v132
  %v704 = vunpack.c.l.b16 %v133
  %v705 = vunpack.c.l.b16 %v134
  %v706 = vunpack.c.l.b16 %v135
  %v707 = vunpack.c.l.b16 %v136
  %v708 = vunpack.c.l.b16 %v137
  %v709 = vunpack.c.l.b16 %v138
  %v710 = vunpack.c.l.b16 %v139
  %v711 = vunpack.c.l.b16 %v140
  %v712 = vunpack.c.l.b16 %v141
  %v713 = vunpack.c.l.b16 %v142
  %v714 = vunpack.c.l.b16 %v143
  %v715 = vunpack.c.l.b16 %v144
  %v716 = vunpack.c.l.b16 %v145
  %v717 = vunpack.c.l.b16 %v146
  %v718 = vpack.c.b16 %v687, %v686
  %v719 = vpack.c.b16 %v689, %v688
  %v720 = vpack.c.b16 %v691, %v690
  %v721 = vpack.c.b16 %v693, %v692
  %v722 = vpack.c.b16 %v695, %v694
  %v723 = vpack.c.b16 %v697, %v696
  %v724 = vpack.c.b16 %v699, %v698
  %v725 = vpack.c.b16 %v701, %v700
  %v726 = vpack.c.b16 %v703, %v702
  %v727 = vpack.c.b16 %v705, %v704
  %v728 = vpack.c.b16 %v707, %v706
  %v729 = vpack.c.b16 %v709, %v708
  %v730 = vpack.c.b16 %v711, %v710
  %v731 = vpack.c.b16 %v713, %v712
  %v732 = vpack.c.b16 %v715, %v714
  %v733 = vpack.c.b16 %v717, %v716
  %750 = vmatprep.subr.bf16.mxu0 0
  %751 = vmatpush1.bf16.msra.mxu0 %v718
  %752 = vmatprep.subr.bf16.mxu0 0
  %753 = vmatpush1.bf16.msra.mxu0 %v719
  %754 = vmatprep.subr.bf16.mxu0 0
  %755 = vmatpush1.bf16.msra.mxu0 %v720
  %756 = vmatprep.subr.bf16.mxu0 0
  %757 = vmatpush1.bf16.msra.mxu0 %v721
  %758 = vmatprep.subr.bf16.mxu0 0
  %759 = vmatpush1.bf16.msra.mxu0 %v722
  %760 = vmatprep.subr.bf16.mxu0 0
  %761 = vmatpush1.bf16.msra.mxu0 %v723
  %762 = vmatprep.subr.bf16.mxu0 0
  %763 = vmatpush1.bf16.msra.mxu0 %v724
  %764 = vmatprep.subr.bf16.mxu0 0
  %765 = vmatpush1.bf16.msra.mxu0 %v725
  %766 = vmatprep.subr.bf16.mxu0 0
  %767 = vmatpush1.bf16.msra.mxu0 %v726
  %768 = vmatprep.subr.bf16.mxu0 0
  %769 = vmatpush1.bf16.msra.mxu0 %v727
  %770 = vmatprep.subr.bf16.mxu0 0
  %771 = vmatpush1.bf16.msra.mxu0 %v728
  %772 = vmatprep.subr.bf16.mxu0 0
  %773 = vmatpush1.bf16.msra.mxu0 %v729
  %774 = vmatprep.subr.bf16.mxu0 0
  %775 = vmatpush1.bf16.msra.mxu0 %v730
  %776 = vmatprep.subr.bf16.mxu0 0
  %777 = vmatpush1.bf16.msra.mxu0 %v731
  %778 = vmatprep.subr.bf16.mxu0 0
  %779 = vmatpush1.bf16.msra.mxu0 %v732
  %780 = vmatprep.subr.bf16.mxu0 0
  %781 = vmatpush1.bf16.msra.mxu0 %v733
  %782 = vmatprep.mubr.bf16.mxu0 %v455
  %783 = vmatmul.mubr.bf16.gmra.mrb[0].mxu0 %v454
  %v784 = vpop.f32.mrb[0].mxu0
  %v785 = vadd.f32 %v152, %v784
  %v786 = vpop.f32.mrb[0].mxu0
  %v787 = vpop.f32.mrb[0].mxu0
  %v788 = vadd.f32 %v152, %v787
  %v789 = vpop.f32.mrb[0].mxu0
  %790 = vmatprep.mubr.bf16.mxu0 %v457
  %791 = vmatmul.mubr.bf16.gmra.mrb[0].mxu0 %v456
  %v792 = vpop.f32.mrb[0].mxu0
  %v793 = vadd.f32 %v152, %v792
  %v794 = vpop.f32.mrb[0].mxu0
  %v795 = vpop.f32.mrb[0].mxu0
  %v796 = vadd.f32 %v152, %v795
  %v797 = vpop.f32.mrb[0].mxu0
  %798 = vmatprep.mubr.bf16.mxu0 %v459
  %799 = vmatmul.mubr.bf16.gmra.mrb[0].mxu0 %v458
  %v800 = vpop.f32.mrb[0].mxu0
  %v801 = vadd.f32 %v152, %v800
  %v802 = vpop.f32.mrb[0].mxu0
  %v803 = vpop.f32.mrb[0].mxu0
  %v804 = vadd.f32 %v152, %v803
  %v805 = vpop.f32.mrb[0].mxu0
  %806 = vmatprep.mubr.bf16.mxu0 %v461
  %807 = vmatmul.mubr.bf16.gmra.mrb[0].mxu0 %v460
  %v808 = vpop.f32.mrb[0].mxu0
  %v809 = vadd.f32 %v152, %v808
  %v810 = vpop.f32.mrb[0].mxu0
  %v811 = vpop.f32.mrb[0].mxu0
  %v812 = vadd.f32 %v152, %v811
  %v813 = vpop.f32.mrb[0].mxu0
  %814 = vmatprep.mubr.bf16.mxu0 %v463
  %815 = vmatmul.mubr.bf16.gmra.mrb[0].mxu0 %v462
  %v816 = vpop.f32.mrb[0].mxu0
  %v817 = vadd.f32 %v152, %v816
  %v818 = vpop.f32.mrb[0].mxu0
  %v819 = vpop.f32.mrb[0].mxu0
  %v820 = vadd.f32 %v152, %v819
  %v821 = vpop.f32.mrb[0].mxu0
  %822 = vmatprep.mubr.bf16.mxu0 %v465
  %823 = vmatmul.mubr.bf16.gmra.mrb[0].mxu0 %v464
  %v824 = vpop.f32.mrb[0].mxu0
  %v825 = vadd.f32 %v152, %v824
  %v826 = vpop.f32.mrb[0].mxu0
  %v827 = vpop.f32.mrb[0].mxu0
  %v828 = vadd.f32 %v152, %v827
  %v829 = vpop.f32.mrb[0].mxu0
  %830 = vmatprep.mubr.bf16.mxu0 %v467
  %831 = vmatmul.mubr.bf16.gmra.mrb[0].mxu0 %v466
  %v832 = vpop.f32.mrb[0].mxu0
  %v833 = vadd.f32 %v152, %v832
  %v834 = vpop.f32.mrb[0].mxu0
  %v835 = vpop.f32.mrb[0].mxu0
  %v836 = vadd.f32 %v152, %v835
  %v837 = vpop.f32.mrb[0].mxu0
  %838 = vmatprep.mubr.bf16.mxu0 %v469
  %839 = vmatmul.mubr.bf16.gmra.mrb[0].mxu0 %v468
  %v840 = vpop.f32.mrb[0].mxu0
  %v841 = vadd.f32 %v152, %v840
  %v842 = vpop.f32.mrb[0].mxu0
  %v843 = vpop.f32.mrb[0].mxu0
  %v844 = vadd.f32 %v152, %v843
  %v845 = vpop.f32.mrb[0].mxu0
  %846 = vmatprep.mubr.bf16.mxu0 %v471
  %847 = vmatmul.mubr.bf16.gmra.mrb[0].mxu0 %v470
  %v848 = vpop.f32.mrb[0].mxu0
  %v849 = vadd.f32 %v152, %v848
  %v850 = vpop.f32.mrb[0].mxu0
  %v851 = vpop.f32.mrb[0].mxu0
  %v852 = vadd.f32 %v152, %v851
  %v853 = vpop.f32.mrb[0].mxu0
  %854 = vmatprep.mubr.bf16.mxu0 %v473
  %855 = vmatmul.mubr.bf16.gmra.mrb[0].mxu0 %v472
  %v856 = vpop.f32.mrb[0].mxu0
  %v857 = vadd.f32 %v152, %v856
  %v858 = vpop.f32.mrb[0].mxu0
  %v859 = vpop.f32.mrb[0].mxu0
  %v860 = vadd.f32 %v152, %v859
  %v861 = vpop.f32.mrb[0].mxu0
  %862 = vmatprep.mubr.bf16.mxu0 %v475
  %863 = vmatmul.mubr.bf16.gmra.mrb[0].mxu0 %v474
  %v864 = vpop.f32.mrb[0].mxu0
  %v865 = vadd.f32 %v152, %v864
  %v866 = vpop.f32.mrb[0].mxu0
  %v867 = vpop.f32.mrb[0].mxu0
  %v868 = vadd.f32 %v152, %v867
  %v869 = vpop.f32.mrb[0].mxu0
  %870 = vmatprep.mubr.bf16.mxu0 %v477
  %871 = vmatmul.mubr.bf16.gmra.mrb[0].mxu0 %v476
  %v872 = vpop.f32.mrb[0].mxu0
  %v873 = vadd.f32 %v152, %v872
  %v874 = vpop.f32.mrb[0].mxu0
  %v875 = vpop.f32.mrb[0].mxu0
  %v876 = vadd.f32 %v152, %v875
  %v877 = vpop.f32.mrb[0].mxu0
  %878 = vmatprep.mubr.bf16.mxu0 %v479
  %879 = vmatmul.mubr.bf16.gmra.mrb[0].mxu0 %v478
  %v880 = vpop.f32.mrb[0].mxu0
  %v881 = vadd.f32 %v152, %v880
  %v882 = vpop.f32.mrb[0].mxu0
  %v883 = vpop.f32.mrb[0].mxu0
  %v884 = vadd.f32 %v152, %v883
  %v885 = vpop.f32.mrb[0].mxu0
  %886 = vmatprep.mubr.bf16.mxu0 %v481
  %887 = vmatmul.mubr.bf16.gmra.mrb[0].mxu0 %v480
  %v888 = vpop.f32.mrb[0].mxu0
  %v889 = vadd.f32 %v152, %v888
  %v890 = vpop.f32.mrb[0].mxu0
  %v891 = vpop.f32.mrb[0].mxu0
  %v892 = vadd.f32 %v152, %v891
  %v893 = vpop.f32.mrb[0].mxu0
  %894 = vmatprep.mubr.bf16.mxu0 %v483
  %895 = vmatmul.mubr.bf16.gmra.mrb[0].mxu0 %v482
  %v896 = vpop.f32.mrb[0].mxu0
  %v897 = vadd.f32 %v152, %v896
  %v898 = vpop.f32.mrb[0].mxu0
  %v899 = vpop.f32.mrb[0].mxu0
  %v900 = vadd.f32 %v152, %v899
  %v901 = vpop.f32.mrb[0].mxu0
  %902 = vmatprep.mubr.bf16.mxu0 %v485
  %903 = vmatmul.mubr.bf16.gmra.mrb[0].mxu0 %v484
  %v904 = vpop.f32.mrb[0].mxu0
  %v905 = vadd.f32 %v152, %v904
  %v906 = vpop.f32.mrb[0].mxu0
  %v907 = vpop.f32.mrb[0].mxu0
  %v908 = vadd.f32 %v152, %v907
  %v909 = vpop.f32.mrb[0].mxu0
  %910 = vmatprep.mubr.bf16.mxu0 %v487
  %911 = vmatmul.mubr.bf16.gmra.mrb[0].mxu0 %v486
  %v912 = vpop.f32.mrb[0].mxu0
  %v913 = vadd.f32 %v152, %v912
  %v914 = vpop.f32.mrb[0].mxu0
  %v915 = vpop.f32.mrb[0].mxu0
  %v916 = vadd.f32 %v152, %v915
  %v917 = vpop.f32.mrb[0].mxu0
  %918 = vmatprep.mubr.bf16.mxu0 %v489
  %919 = vmatmul.mubr.bf16.gmra.mrb[0].mxu0 %v488
  %v920 = vpop.f32.mrb[0].mxu0
  %v921 = vadd.f32 %v152, %v920
  %v922 = vpop.f32.mrb[0].mxu0
  %v923 = vpop.f32.mrb[0].mxu0
  %v924 = vadd.f32 %v152, %v923
  %v925 = vpop.f32.mrb[0].mxu0
  %926 = vmatprep.mubr.bf16.mxu0 %v491
  %927 = vmatmul.mubr.bf16.gmra.mrb[0].mxu0 %v490
  %v928 = vpop.f32.mrb[0].mxu0
  %v929 = vadd.f32 %v152, %v928
  %v930 = vpop.f32.mrb[0].mxu0
  %v931 = vpop.f32.mrb[0].mxu0
  %v932 = vadd.f32 %v152, %v931
  %v933 = vpop.f32.mrb[0].mxu0
  %934 = vmatprep.mubr.bf16.mxu0 %v493
  %935 = vmatmul.mubr.bf16.gmra.mrb[0].mxu0 %v492
  %v936 = vpop.f32.mrb[0].mxu0
  %v937 = vadd.f32 %v152, %v936
  %v938 = vpop.f32.mrb[0].mxu0
  %v939 = vpop.f32.mrb[0].mxu0
  %v940 = vadd.f32 %v152, %v939
  %v941 = vpop.f32.mrb[0].mxu0
  %942 = vmatprep.mubr.bf16.mxu0 %v495
  %943 = vmatmul.mubr.bf16.gmra.mrb[0].mxu0 %v494
  %v944 = vpop.f32.mrb[0].mxu0
  %v945 = vadd.f32 %v152, %v944
  %v946 = vpop.f32.mrb[0].mxu0
  %v947 = vpop.f32.mrb[0].mxu0
  %v948 = vadd.f32 %v152, %v947
  %v949 = vpop.f32.mrb[0].mxu0
  %950 = vmatprep.mubr.bf16.mxu0 %v497
  %951 = vmatmul.mubr.bf16.gmra.mrb[0].mxu0 %v496
  %v952 = vpop.f32.mrb[0].mxu0
  %v953 = vadd.f32 %v152, %v952
  %v954 = vpop.f32.mrb[0].mxu0
  %v955 = vpop.f32.mrb[0].mxu0
  %v956 = vadd.f32 %v152, %v955
  %v957 = vpop.f32.mrb[0].mxu0
  %958 = vmatprep.mubr.bf16.mxu0 %v499
  %959 = vmatmul.mubr.bf16.gmra.mrb[0].mxu0 %v498
  %v960 = vpop.f32.mrb[0].mxu0
  %v961 = vadd.f32 %v152, %v960
  %v962 = vpop.f32.mrb[0].mxu0
  %v963 = vpop.f32.mrb[0].mxu0
  %v964 = vadd.f32 %v152, %v963
  %v965 = vpop.f32.mrb[0].mxu0
  %966 = vmatprep.mubr.bf16.mxu0 %v501
  %967 = vmatmul.mubr.bf16.gmra.mrb[0].mxu0 %v500
  %v968 = vpop.f32.mrb[0].mxu0
  %v969 = vadd.f32 %v152, %v968
  %v970 = vpop.f32.mrb[0].mxu0
  %v971 = vpop.f32.mrb[0].mxu0
  %v972 = vadd.f32 %v152, %v971
  %v973 = vpop.f32.mrb[0].mxu0
  %974 = vmatprep.mubr.bf16.mxu0 %v503
  %975 = vmatmul.mubr.bf16.gmra.mrb[0].mxu0 %v502
  %v976 = vpop.f32.mrb[0].mxu0
  %v977 = vadd.f32 %v152, %v976
  %v978 = vpop.f32.mrb[0].mxu0
  %v979 = vpop.f32.mrb[0].mxu0
  %v980 = vadd.f32 %v152, %v979
  %v981 = vpop.f32.mrb[0].mxu0
  %982 = vmatprep.mubr.bf16.mxu0 %v505
  %983 = vmatmul.mubr.bf16.gmra.mrb[0].mxu0 %v504
  %v984 = vpop.f32.mrb[0].mxu0
  %v985 = vadd.f32 %v152, %v984
  %v986 = vpop.f32.mrb[0].mxu0
  %v987 = vpop.f32.mrb[0].mxu0
  %v988 = vadd.f32 %v152, %v987
  %v989 = vpop.f32.mrb[0].mxu0
  %990 = vmatprep.mubr.bf16.mxu0 %v507
  %991 = vmatmul.mubr.bf16.gmra.mrb[0].mxu0 %v506
  %v992 = vpop.f32.mrb[0].mxu0
  %v993 = vadd.f32 %v152, %v992
  %v994 = vpop.f32.mrb[0].mxu0
  %v995 = vpop.f32.mrb[0].mxu0
  %v996 = vadd.f32 %v152, %v995
  %v997 = vpop.f32.mrb[0].mxu0
  %998 = vmatprep.mubr.bf16.mxu0 %v509
  %999 = vmatmul.mubr.bf16.gmra.mrb[0].mxu0 %v508
  %v1000 = vpop.f32.mrb[0].mxu0
  %v1001 = vadd.f32 %v152, %v1000
  %v1002 = vpop.f32.mrb[0].mxu0
  %v1003 = vpop.f32.mrb[0].mxu0
  %v1004 = vadd.f32 %v152, %v1003
  %v1005 = vpop.f32.mrb[0].mxu0
  %1006 = vmatprep.mubr.bf16.mxu0 %v511
  %1007 = vmatmul.mubr.bf16.gmra.mrb[0].mxu0 %v510
  %v1008 = vpop.f32.mrb[0].mxu0
  %v1009 = vadd.f32 %v152, %v1008
  %v1010 = vpop.f32.mrb[0].mxu0
  %v1011 = vpop.f32.mrb[0].mxu0
  %v1012 = vadd.f32 %v152, %v1011
  %v1013 = vpop.f32.mrb[0].mxu0
  %1014 = vmatprep.mubr.bf16.mxu0 %v513
  %1015 = vmatmul.mubr.bf16.gmra.mrb[0].mxu0 %v512
  %v1016 = vpop.f32.mrb[0].mxu0
  %v1017 = vadd.f32 %v152, %v1016
  %v1018 = vpop.f32.mrb[0].mxu0
  %v1019 = vpop.f32.mrb[0].mxu0
  %v1020 = vadd.f32 %v152, %v1019
  %v1021 = vpop.f32.mrb[0].mxu0
  %1022 = vmatprep.mubr.bf16.mxu0 %v515
  %1023 = vmatmul.mubr.bf16.gmra.mrb[0].mxu0 %v514
  %v1024 = vpop.f32.mrb[0].mxu0
  %v1025 = vadd.f32 %v152, %v1024
  %v1026 = vpop.f32.mrb[0].mxu0
  %v1027 = vpop.f32.mrb[0].mxu0
  %v1028 = vadd.f32 %v152, %v1027
  %v1029 = vpop.f32.mrb[0].mxu0
  %1030 = vmatprep.mubr.bf16.mxu0 %v517
  %1031 = vmatmul.mubr.bf16.gmra.mrb[0].mxu0 %v516
  %v1032 = vpop.f32.mrb[0].mxu0
  %v1033 = vadd.f32 %v152, %v1032
  %v1034 = vpop.f32.mrb[0].mxu0
  %v1035 = vpop.f32.mrb[0].mxu0
  %v1036 = vadd.f32 %v152, %v1035
  %v1037 = vpop.f32.mrb[0].mxu0
  %1038 = vmatprep.mubr.bf16.mxu0 %v519
  %1039 = vmatmul.mubr.bf16.gmra.mrb[0].mxu0 %v518
  %v1040 = vpop.f32.mrb[0].mxu0
  %v1041 = vadd.f32 %v152, %v1040
  %v1042 = vpop.f32.mrb[0].mxu0
  %v1043 = vpop.f32.mrb[0].mxu0
  %v1044 = vadd.f32 %v152, %v1043
  %v1045 = vpop.f32.mrb[0].mxu0
  %1046 = vmatprep.mubr.bf16.mxu0 %v521
  %1047 = vmatmul.mubr.bf16.gmra.mrb[0].mxu0 %v520
  %v1048 = vpop.f32.mrb[0].mxu0
  %v1049 = vadd.f32 %v152, %v1048
  %v1050 = vpop.f32.mrb[0].mxu0
  %v1051 = vpop.f32.mrb[0].mxu0
  %v1052 = vadd.f32 %v152, %v1051
  %v1053 = vpop.f32.mrb[0].mxu0
  %1054 = vmatprep.mubr.bf16.mxu0 %v523
  %1055 = vmatmul.mubr.bf16.gmra.mrb[0].mxu0 %v522
  %v1056 = vpop.f32.mrb[0].mxu0
  %v1057 = vadd.f32 %v152, %v1056
  %v1058 = vpop.f32.mrb[0].mxu0
  %v1059 = vpop.f32.mrb[0].mxu0
  %v1060 = vadd.f32 %v152, %v1059
  %v1061 = vpop.f32.mrb[0].mxu0
  %1062 = vmatprep.mubr.bf16.mxu0 %v525
  %1063 = vmatmul.mubr.bf16.gmra.mrb[0].mxu0 %v524
  %v1064 = vpop.f32.mrb[0].mxu0
  %v1065 = vadd.f32 %v152, %v1064
  %v1066 = vpop.f32.mrb[0].mxu0
  %v1067 = vpop.f32.mrb[0].mxu0
  %v1068 = vadd.f32 %v152, %v1067
  %v1069 = vpop.f32.mrb[0].mxu0
  %1070 = vmatprep.mubr.bf16.mxu0 %v527
  %1071 = vmatmul.mubr.bf16.gmra.mrb[0].mxu0 %v526
  %v1072 = vpop.f32.mrb[0].mxu0
  %v1073 = vadd.f32 %v152, %v1072
  %v1074 = vpop.f32.mrb[0].mxu0
  %v1075 = vpop.f32.mrb[0].mxu0
  %v1076 = vadd.f32 %v152, %v1075
  %v1077 = vpop.f32.mrb[0].mxu0
  %1078 = vmatprep.mubr.bf16.mxu0 %v529
  %1079 = vmatmul.mubr.bf16.gmra.mrb[0].mxu0 %v528
  %v1080 = vpop.f32.mrb[0].mxu0
  %v1081 = vadd.f32 %v152, %v1080
  %v1082 = vpop.f32.mrb[0].mxu0
  %v1083 = vpop.f32.mrb[0].mxu0
  %v1084 = vadd.f32 %v152, %v1083
  %v1085 = vpop.f32.mrb[0].mxu0
  %1086 = vmatprep.mubr.bf16.mxu0 %v531
  %1087 = vmatmul.mubr.bf16.gmra.mrb[0].mxu0 %v530
  %v1088 = vpop.f32.mrb[0].mxu0
  %v1089 = vadd.f32 %v152, %v1088
  %v1090 = vpop.f32.mrb[0].mxu0
  %v1091 = vpop.f32.mrb[0].mxu0
  %v1092 = vadd.f32 %v152, %v1091
  %v1093 = vpop.f32.mrb[0].mxu0
  %1094 = vmatprep.mubr.bf16.mxu0 %v533
  %1095 = vmatmul.mubr.bf16.gmra.mrb[0].mxu0 %v532
  %v1096 = vpop.f32.mrb[0].mxu0
  %v1097 = vadd.f32 %v152, %v1096
  %v1098 = vpop.f32.mrb[0].mxu0
  %v1099 = vpop.f32.mrb[0].mxu0
  %v1100 = vadd.f32 %v152, %v1099
  %v1101 = vpop.f32.mrb[0].mxu0
  %1102 = vmatprep.mubr.bf16.mxu0 %v535
  %1103 = vmatmul.mubr.bf16.gmra.mrb[0].mxu0 %v534
  %v1104 = vpop.f32.mrb[0].mxu0
  %v1105 = vadd.f32 %v152, %v1104
  %v1106 = vpop.f32.mrb[0].mxu0
  %v1107 = vpop.f32.mrb[0].mxu0
  %v1108 = vadd.f32 %v152, %v1107
  %v1109 = vpop.f32.mrb[0].mxu0
  %1110 = vmatprep.mubr.bf16.mxu0 %v537
  %1111 = vmatmul.mubr.bf16.gmra.mrb[0].mxu0 %v536
  %v1112 = vpop.f32.mrb[0].mxu0
  %v1113 = vadd.f32 %v152, %v1112
  %v1114 = vpop.f32.mrb[0].mxu0
  %v1115 = vpop.f32.mrb[0].mxu0
  %v1116 = vadd.f32 %v152, %v1115
  %v1117 = vpop.f32.mrb[0].mxu0
  %1118 = vmatprep.mubr.bf16.mxu0 %v539
  %1119 = vmatmul.mubr.bf16.gmra.mrb[0].mxu0 %v538
  %v1120 = vpop.f32.mrb[0].mxu0
  %v1121 = vadd.f32 %v152, %v1120
  %v1122 = vpop.f32.mrb[0].mxu0
  %v1123 = vpop.f32.mrb[0].mxu0
  %v1124 = vadd.f32 %v152, %v1123
  %v1125 = vpop.f32.mrb[0].mxu0
  %1126 = vmatprep.mubr.bf16.mxu0 %v541
  %1127 = vmatmul.mubr.bf16.gmra.mrb[0].mxu0 %v540
  %v1128 = vpop.f32.mrb[0].mxu0
  %v1129 = vadd.f32 %v152, %v1128
  %v1130 = vpop.f32.mrb[0].mxu0
  %v1131 = vpop.f32.mrb[0].mxu0
  %v1132 = vadd.f32 %v152, %v1131
  %v1133 = vpop.f32.mrb[0].mxu0
  %1134 = vmatprep.mubr.bf16.mxu0 %v543
  %1135 = vmatmul.mubr.bf16.gmra.mrb[0].mxu0 %v542
  %v1136 = vpop.f32.mrb[0].mxu0
  %v1137 = vadd.f32 %v152, %v1136
  %v1138 = vpop.f32.mrb[0].mxu0
  %v1139 = vpop.f32.mrb[0].mxu0
  %v1140 = vadd.f32 %v152, %v1139
  %v1141 = vpop.f32.mrb[0].mxu0
  %1142 = vmatprep.mubr.bf16.mxu0 %v545
  %1143 = vmatmul.mubr.bf16.gmra.mrb[0].mxu0 %v544
  %v1144 = vpop.f32.mrb[0].mxu0
  %v1145 = vadd.f32 %v152, %v1144
  %v1146 = vpop.f32.mrb[0].mxu0
  %v1147 = vpop.f32.mrb[0].mxu0
  %v1148 = vadd.f32 %v152, %v1147
  %v1149 = vpop.f32.mrb[0].mxu0
  %1150 = vmatprep.mubr.bf16.mxu0 %v547
  %1151 = vmatmul.mubr.bf16.gmra.mrb[0].mxu0 %v546
  %v1152 = vpop.f32.mrb[0].mxu0
  %v1153 = vadd.f32 %v152, %v1152
  %v1154 = vpop.f32.mrb[0].mxu0
  %v1155 = vpop.f32.mrb[0].mxu0
  %v1156 = vadd.f32 %v152, %v1155
  %v1157 = vpop.f32.mrb[0].mxu0
  %1158 = vmatprep.mubr.bf16.mxu0 %v549
  %1159 = vmatmul.mubr.bf16.gmra.mrb[0].mxu0 %v548
  %v1160 = vpop.f32.mrb[0].mxu0
  %v1161 = vadd.f32 %v152, %v1160
  %v1162 = vpop.f32.mrb[0].mxu0
  %v1163 = vpop.f32.mrb[0].mxu0
  %v1164 = vadd.f32 %v152, %v1163
  %v1165 = vpop.f32.mrb[0].mxu0
  %1166 = vmatprep.mubr.bf16.mxu0 %v551
  %1167 = vmatmul.mubr.bf16.gmra.mrb[0].mxu0 %v550
  %v1168 = vpop.f32.mrb[0].mxu0
  %v1169 = vadd.f32 %v152, %v1168
  %v1170 = vpop.f32.mrb[0].mxu0
  %v1171 = vpop.f32.mrb[0].mxu0
  %v1172 = vadd.f32 %v152, %v1171
  %v1173 = vpop.f32.mrb[0].mxu0
  %1174 = vmatprep.mubr.bf16.mxu0 %v553
  %1175 = vmatmul.mubr.bf16.gmra.mrb[0].mxu0 %v552
  %v1176 = vpop.f32.mrb[0].mxu0
  %v1177 = vadd.f32 %v152, %v1176
  %v1178 = vpop.f32.mrb[0].mxu0
  %v1179 = vpop.f32.mrb[0].mxu0
  %v1180 = vadd.f32 %v152, %v1179
  %v1181 = vpop.f32.mrb[0].mxu0
  %1182 = vdwg.mxu0
  %v1183 = vmax.f32 %v785, 0.0
  %v1184 = vmax.f32 %v788, 0.0
  %v1185 = vmax.f32 %v793, 0.0
  %v1186 = vmax.f32 %v796, 0.0
  %v1187 = vmax.f32 %v801, 0.0
  %v1188 = vmax.f32 %v804, 0.0
  %v1189 = vmax.f32 %v809, 0.0
  %v1190 = vmax.f32 %v812, 0.0
  %v1191 = vmax.f32 %v817, 0.0
  %v1192 = vmax.f32 %v820, 0.0
  %v1193 = vmax.f32 %v825, 0.0
  %v1194 = vmax.f32 %v828, 0.0
  %v1195 = vmax.f32 %v833, 0.0
  %v1196 = vmax.f32 %v836, 0.0
  %v1197 = vmax.f32 %v841, 0.0
  %v1198 = vmax.f32 %v844, 0.0
  %v1199 = vmax.f32 %v849, 0.0
  %v1200 = vmax.f32 %v852, 0.0
  %v1201 = vmax.f32 %v857, 0.0
  %v1202 = vmax.f32 %v860, 0.0
  %v1203 = vmax.f32 %v865, 0.0
  %v1204 = vmax.f32 %v868, 0.0
  %v1205 = vmax.f32 %v873, 0.0
  %v1206 = vmax.f32 %v876, 0.0
  %v1207 = vmax.f32 %v881, 0.0
  %v1208 = vmax.f32 %v884, 0.0
  %v1209 = vmax.f32 %v889, 0.0
  %v1210 = vmax.f32 %v892, 0.0
  %v1211 = vmax.f32 %v897, 0.0
  %v1212 = vmax.f32 %v900, 0.0
  %v1213 = vmax.f32 %v905, 0.0
  %v1214 = vmax.f32 %v908, 0.0
  %v1215 = vmax.f32 %v913, 0.0
  %v1216 = vmax.f32 %v916, 0.0
  %v1217 = vmax.f32 %v921, 0.0
  %v1218 = vmax.f32 %v924, 0.0
  %v1219 = vmax.f32 %v929, 0.0
  %v1220 = vmax.f32 %v932, 0.0
  %v1221 = vmax.f32 %v937, 0.0
  %v1222 = vmax.f32 %v940, 0.0
  %v1223 = vmax.f32 %v945, 0.0
  %v1224 = vmax.f32 %v948, 0.0
  %v1225 = vmax.f32 %v953, 0.0
  %v1226 = vmax.f32 %v956, 0.0
  %v1227 = vmax.f32 %v961, 0.0
  %v1228 = vmax.f32 %v964, 0.0
  %v1229 = vmax.f32 %v969, 0.0
  %v1230 = vmax.f32 %v972, 0.0
  %v1231 = vmax.f32 %v977, 0.0
  %v1232 = vmax.f32 %v980, 0.0
  %v1233 = vmax.f32 %v985, 0.0
  %v1234 = vmax.f32 %v988, 0.0
  %v1235 = vmax.f32 %v993, 0.0
  %v1236 = vmax.f32 %v996, 0.0
  %v1237 = vmax.f32 %v1001, 0.0
  %v1238 = vmax.f32 %v1004, 0.0
  %v1239 = vmax.f32 %v1009, 0.0
  %v1240 = vmax.f32 %v1012, 0.0
  %v1241 = vmax.f32 %v1017, 0.0
  %v1242 = vmax.f32 %v1020, 0.0
  %v1243 = vmax.f32 %v1025, 0.0
  %v1244 = vmax.f32 %v1028, 0.0
  %v1245 = vmax.f32 %v1033, 0.0
  %v1246 = vmax.f32 %v1036, 0.0
  %v1247 = vmax.f32 %v1041, 0.0
  %v1248 = vmax.f32 %v1044, 0.0
  %v1249 = vmax.f32 %v1049, 0.0
  %v1250 = vmax.f32 %v1052, 0.0
  %v1251 = vmax.f32 %v1057, 0.0
  %v1252 = vmax.f32 %v1060, 0.0
  %v1253 = vmax.f32 %v1065, 0.0
  %v1254 = vmax.f32 %v1068, 0.0
  %v1255 = vmax.f32 %v1073, 0.0
  %v1256 = vmax.f32 %v1076, 0.0
  %v1257 = vmax.f32 %v1081, 0.0
  %v1258 = vmax.f32 %v1084, 0.0
  %v1259 = vmax.f32 %v1089, 0.0
  %v1260 = vmax.f32 %v1092, 0.0
  %v1261 = vmax.f32 %v1097, 0.0
  %v1262 = vmax.f32 %v1100, 0.0
  %v1263 = vmax.f32 %v1105, 0.0
  %v1264 = vmax.f32 %v1108, 0.0
  %v1265 = vmax.f32 %v1113, 0.0
  %v1266 = vmax.f32 %v1116, 0.0
  %v1267 = vmax.f32 %v1121, 0.0
  %v1268 = vmax.f32 %v1124, 0.0
  %v1269 = vmax.f32 %v1129, 0.0
  %v1270 = vmax.f32 %v1132, 0.0
  %v1271 = vmax.f32 %v1137, 0.0
  %v1272 = vmax.f32 %v1140, 0.0
  %v1273 = vmax.f32 %v1145, 0.0
  %v1274 = vmax.f32 %v1148, 0.0
  %v1275 = vmax.f32 %v1153, 0.0
  %v1276 = vmax.f32 %v1156, 0.0
  %v1277 = vmax.f32 %v1161, 0.0
  %v1278 = vmax.f32 %v1164, 0.0
  %v1279 = vmax.f32 %v1169, 0.0
  %v1280 = vmax.f32 %v1172, 0.0
  %v1281 = vmax.f32 %v1177, 0.0
  %v1282 = vmax.f32 %v1180, 0.0
  %v1283 = vpack.c.bf16 %v1184, %v1183
  %v1284 = vpack.c.bf16 %v1186, %v1185
  %v1285 = vpack.c.bf16 %v1188, %v1187
  %v1286 = vpack.c.bf16 %v1190, %v1189
  %v1287 = vpack.c.bf16 %v1192, %v1191
  %v1288 = vpack.c.bf16 %v1194, %v1193
  %v1289 = vpack.c.bf16 %v1196, %v1195
  %v1290 = vpack.c.bf16 %v1198, %v1197
  %v1291 = vpack.c.bf16 %v1200, %v1199
  %v1292 = vpack.c.bf16 %v1202, %v1201
  %v1293 = vpack.c.bf16 %v1204, %v1203
  %v1294 = vpack.c.bf16 %v1206, %v1205
  %v1295 = vpack.c.bf16 %v1208, %v1207
  %v1296 = vpack.c.bf16 %v1210, %v1209
  %v1297 = vpack.c.bf16 %v1212, %v1211
  %v1298 = vpack.c.bf16 %v1214, %v1213
  %v1299 = vpack.c.bf16 %v1216, %v1215
  %v1300 = vpack.c.bf16 %v1218, %v1217
  %v1301 = vpack.c.bf16 %v1220, %v1219
  %v1302 = vpack.c.bf16 %v1222, %v1221
  %v1303 = vpack.c.bf16 %v1224, %v1223
  %v1304 = vpack.c.bf16 %v1226, %v1225
  %v1305 = vpack.c.bf16 %v1228, %v1227
  %v1306 = vpack.c.bf16 %v1230, %v1229
  %v1307 = vpack.c.bf16 %v1232, %v1231
  %v1308 = vpack.c.bf16 %v1234, %v1233
  %v1309 = vpack.c.bf16 %v1236, %v1235
  %v1310 = vpack.c.bf16 %v1238, %v1237
  %v1311 = vpack.c.bf16 %v1240, %v1239
  %v1312 = vpack.c.bf16 %v1242, %v1241
  %v1313 = vpack.c.bf16 %v1244, %v1243
  %v1314 = vpack.c.bf16 %v1246, %v1245
  %v1315 = vpack.c.bf16 %v1248, %v1247
  %v1316 = vpack.c.bf16 %v1250, %v1249
  %v1317 = vpack.c.bf16 %v1252, %v1251
  %v1318 = vpack.c.bf16 %v1254, %v1253
  %v1319 = vpack.c.bf16 %v1256, %v1255
  %v1320 = vpack.c.bf16 %v1258, %v1257
  %v1321 = vpack.c.bf16 %v1260, %v1259
  %v1322 = vpack.c.bf16 %v1262, %v1261
  %v1323 = vpack.c.bf16 %v1264, %v1263
  %v1324 = vpack.c.bf16 %v1266, %v1265
  %v1325 = vpack.c.bf16 %v1268, %v1267
  %v1326 = vpack.c.bf16 %v1270, %v1269
  %v1327 = vpack.c.bf16 %v1272, %v1271
  %v1328 = vpack.c.bf16 %v1274, %v1273
  %v1329 = vpack.c.bf16 %v1276, %v1275
  %v1330 = vpack.c.bf16 %v1278, %v1277
  %v1331 = vpack.c.bf16 %v1280, %v1279
  %v1332 = vpack.c.bf16 %v1282, %v1281
  %v1383 = vunpack.c.l.b16 %v1283
  %v1384 = vunpack.c.h.b16 %v1283
  %v1385 = vunpack.c.l.b16 %v1284
  %v1386 = vunpack.c.h.b16 %v1284
  %v1387 = vunpack.c.l.b16 %v1285
  %v1388 = vunpack.c.h.b16 %v1285
  %v1389 = vunpack.c.l.b16 %v1286
  %v1390 = vunpack.c.h.b16 %v1286
  %v1391 = vunpack.c.l.b16 %v1287
  %v1392 = vunpack.c.h.b16 %v1287
  %v1393 = vunpack.c.l.b16 %v1288
  %v1394 = vunpack.c.h.b16 %v1288
  %v1395 = vunpack.c.l.b16 %v1289
  %v1396 = vunpack.c.h.b16 %v1289
  %v1397 = vunpack.c.l.b16 %v1290
  %v1398 = vunpack.c.h.b16 %v1290
  %v1399 = vunpack.c.l.b16 %v1291
  %v1400 = vunpack.c.h.b16 %v1291
  %v1401 = vunpack.c.l.b16 %v1292
  %v1402 = vunpack.c.h.b16 %v1292
  %v1403 = vunpack.c.l.b16 %v1293
  %v1404 = vunpack.c.h.b16 %v1293
  %v1405 = vunpack.c.l.b16 %v1294
  %v1406 = vunpack.c.h.b16 %v1294
  %v1407 = vunpack.c.l.b16 %v1295
  %v1408 = vunpack.c.h.b16 %v1295
  %v1409 = vunpack.c.l.b16 %v1296
  %v1410 = vunpack.c.h.b16 %v1296
  %v1411 = vunpack.c.l.b16 %v1297
  %v1412 = vunpack.c.h.b16 %v1297
  %v1413 = vunpack.c.l.b16 %v1298
  %v1414 = vunpack.c.h.b16 %v1298
  %v1415 = vunpack.c.l.b16 %v1299
  %v1416 = vunpack.c.h.b16 %v1299
  %v1417 = vunpack.c.l.b16 %v1300
  %v1418 = vunpack.c.h.b16 %v1300
  %v1419 = vunpack.c.l.b16 %v1301
  %v1420 = vunpack.c.h.b16 %v1301
  %v1421 = vunpack.c.l.b16 %v1302
  %v1422 = vunpack.c.h.b16 %v1302
  %v1423 = vunpack.c.l.b16 %v1303
  %v1424 = vunpack.c.h.b16 %v1303
  %v1425 = vunpack.c.l.b16 %v1304
  %v1426 = vunpack.c.h.b16 %v1304
  %v1427 = vunpack.c.l.b16 %v1305
  %v1428 = vunpack.c.h.b16 %v1305
  %v1429 = vunpack.c.l.b16 %v1306
  %v1430 = vunpack.c.h.b16 %v1306
  %v1431 = vunpack.c.l.b16 %v1307
  %v1432 = vunpack.c.h.b16 %v1307
  %v1433 = vunpack.c.l.b16 %v1308
  %v1434 = vunpack.c.h.b16 %v1308
  %v1435 = vunpack.c.l.b16 %v1309
  %v1436 = vunpack.c.h.b16 %v1309
  %v1437 = vunpack.c.l.b16 %v1310
  %v1438 = vunpack.c.h.b16 %v1310
  %v1439 = vunpack.c.l.b16 %v1311
  %v1440 = vunpack.c.h.b16 %v1311
  %v1441 = vunpack.c.l.b16 %v1312
  %v1442 = vunpack.c.h.b16 %v1312
  %v1443 = vunpack.c.l.b16 %v1313
  %v1444 = vunpack.c.h.b16 %v1313
  %v1445 = vunpack.c.l.b16 %v1314
  %v1446 = vunpack.c.h.b16 %v1314
  %v1447 = vunpack.c.l.b16 %v1315
  %v1448 = vunpack.c.h.b16 %v1315
  %v1449 = vunpack.c.l.b16 %v1316
  %v1450 = vunpack.c.h.b16 %v1316
  %v1451 = vunpack.c.l.b16 %v1317
  %v1452 = vunpack.c.h.b16 %v1317
  %v1453 = vunpack.c.l.b16 %v1318
  %v1454 = vunpack.c.h.b16 %v1318
  %v1455 = vunpack.c.l.b16 %v1319
  %v1456 = vunpack.c.h.b16 %v1319
  %v1457 = vunpack.c.l.b16 %v1320
  %v1458 = vunpack.c.h.b16 %v1320
  %v1459 = vunpack.c.l.b16 %v1321
  %v1460 = vunpack.c.h.b16 %v1321
  %v1461 = vunpack.c.l.b16 %v1322
  %v1462 = vunpack.c.h.b16 %v1322
  %v1463 = vunpack.c.l.b16 %v1323
  %v1464 = vunpack.c.h.b16 %v1323
  %v1465 = vunpack.c.l.b16 %v1324
  %v1466 = vunpack.c.h.b16 %v1324
  %v1467 = vunpack.c.l.b16 %v1325
  %v1468 = vunpack.c.h.b16 %v1325
  %v1469 = vunpack.c.l.b16 %v1326
  %v1470 = vunpack.c.h.b16 %v1326
  %v1471 = vunpack.c.l.b16 %v1327
  %v1472 = vunpack.c.h.b16 %v1327
  %v1473 = vunpack.c.l.b16 %v1328
  %v1474 = vunpack.c.h.b16 %v1328
  %v1475 = vunpack.c.l.b16 %v1329
  %v1476 = vunpack.c.h.b16 %v1329
  %v1477 = vunpack.c.l.b16 %v1330
  %v1478 = vunpack.c.h.b16 %v1330
  %v1479 = vunpack.c.l.b16 %v1331
  %v1480 = vunpack.c.h.b16 %v1331
  %v1481 = vunpack.c.l.b16 %v1332
  %v1482 = vunpack.c.h.b16 %v1332
  %v1483 = vpack.c.b16 %v1383, %v1383
  %v1484 = vpack.c.b16 %v1384, %v1384
  %v1485 = vpack.c.b16 %v1385, %v1385
  %v1486 = vpack.c.b16 %v1386, %v1386
  %v1487 = vpack.c.b16 %v1387, %v1387
  %v1488 = vpack.c.b16 %v1388, %v1388
  %v1489 = vpack.c.b16 %v1389, %v1389
  %v1490 = vpack.c.b16 %v1390, %v1390
  %v1491 = vpack.c.b16 %v1391, %v1391
  %v1492 = vpack.c.b16 %v1392, %v1392
  %v1493 = vpack.c.b16 %v1393, %v1393
  %v1494 = vpack.c.b16 %v1394, %v1394
  %v1495 = vpack.c.b16 %v1395, %v1395
  %v1496 = vpack.c.b16 %v1396, %v1396
  %v1497 = vpack.c.b16 %v1397, %v1397
  %v1498 = vpack.c.b16 %v1398, %v1398
  %v1499 = vpack.c.b16 %v1399, %v1399
  %v1500 = vpack.c.b16 %v1400, %v1400
  %v1501 = vpack.c.b16 %v1401, %v1401
  %v1502 = vpack.c.b16 %v1402, %v1402
  %v1503 = vpack.c.b16 %v1403, %v1403
  %v1504 = vpack.c.b16 %v1404, %v1404
  %v1505 = vpack.c.b16 %v1405, %v1405
  %v1506 = vpack.c.b16 %v1406, %v1406
  %v1507 = vpack.c.b16 %v1407, %v1407
  %v1508 = vpack.c.b16 %v1408, %v1408
  %v1509 = vpack.c.b16 %v1409, %v1409
  %v1510 = vpack.c.b16 %v1410, %v1410
  %v1511 = vpack.c.b16 %v1411, %v1411
  %v1512 = vpack.c.b16 %v1412, %v1412
  %v1513 = vpack.c.b16 %v1413, %v1413
  %v1514 = vpack.c.b16 %v1414, %v1414
  %v1515 = vpack.c.b16 %v1415, %v1415
  %v1516 = vpack.c.b16 %v1416, %v1416
  %v1517 = vpack.c.b16 %v1417, %v1417
  %v1518 = vpack.c.b16 %v1418, %v1418
  %v1519 = vpack.c.b16 %v1419, %v1419
  %v1520 = vpack.c.b16 %v1420, %v1420
  %v1521 = vpack.c.b16 %v1421, %v1421
  %v1522 = vpack.c.b16 %v1422, %v1422
  %v1523 = vpack.c.b16 %v1423, %v1423
  %v1524 = vpack.c.b16 %v1424, %v1424
  %v1525 = vpack.c.b16 %v1425, %v1425
  %v1526 = vpack.c.b16 %v1426, %v1426
  %v1527 = vpack.c.b16 %v1427, %v1427
  %v1528 = vpack.c.b16 %v1428, %v1428
  %v1529 = vpack.c.b16 %v1429, %v1429
  %v1530 = vpack.c.b16 %v1430, %v1430
  %v1531 = vpack.c.b16 %v1431, %v1431
  %v1532 = vpack.c.b16 %v1432, %v1432
  %v1533 = vpack.c.b16 %v1433, %v1433
  %v1534 = vpack.c.b16 %v1434, %v1434
  %v1535 = vpack.c.b16 %v1435, %v1435
  %v1536 = vpack.c.b16 %v1436, %v1436
  %v1537 = vpack.c.b16 %v1437, %v1437
  %v1538 = vpack.c.b16 %v1438, %v1438
  %v1539 = vpack.c.b16 %v1439, %v1439
  %v1540 = vpack.c.b16 %v1440, %v1440
  %v1541 = vpack.c.b16 %v1441, %v1441
  %v1542 = vpack.c.b16 %v1442, %v1442
  %v1543 = vpack.c.b16 %v1443, %v1443
  %v1544 = vpack.c.b16 %v1444, %v1444
  %v1545 = vpack.c.b16 %v1445, %v1445
  %v1546 = vpack.c.b16 %v1446, %v1446
  %v1547 = vpack.c.b16 %v1447, %v1447
  %v1548 = vpack.c.b16 %v1448, %v1448
  %v1549 = vpack.c.b16 %v1449, %v1449
  %v1550 = vpack.c.b16 %v1450, %v1450
  %v1551 = vpack.c.b16 %v1451, %v1451
  %v1552 = vpack.c.b16 %v1452, %v1452
  %v1553 = vpack.c.b16 %v1453, %v1453
  %v1554 = vpack.c.b16 %v1454, %v1454
  %v1555 = vpack.c.b16 %v1455, %v1455
  %v1556 = vpack.c.b16 %v1456, %v1456
  %v1557 = vpack.c.b16 %v1457, %v1457
  %v1558 = vpack.c.b16 %v1458, %v1458
  %v1559 = vpack.c.b16 %v1459, %v1459
  %v1560 = vpack.c.b16 %v1460, %v1460
  %v1561 = vpack.c.b16 %v1461, %v1461
  %v1562 = vpack.c.b16 %v1462, %v1462
  %v1563 = vpack.c.b16 %v1463, %v1463
  %v1564 = vpack.c.b16 %v1464, %v1464
  %v1565 = vpack.c.b16 %v1465, %v1465
  %v1566 = vpack.c.b16 %v1466, %v1466
  %v1567 = vpack.c.b16 %v1467, %v1467
  %v1568 = vpack.c.b16 %v1468, %v1468
  %v1569 = vpack.c.b16 %v1469, %v1469
  %v1570 = vpack.c.b16 %v1470, %v1470
  %v1571 = vpack.c.b16 %v1471, %v1471
  %v1572 = vpack.c.b16 %v1472, %v1472
  %v1573 = vpack.c.b16 %v1473, %v1473
  %v1574 = vpack.c.b16 %v1474, %v1474
  %v1575 = vpack.c.b16 %v1475, %v1475
  %v1576 = vpack.c.b16 %v1476, %v1476
  %v1577 = vpack.c.b16 %v1477, %v1477
  %v1578 = vpack.c.b16 %v1478, %v1478
  %v1579 = vpack.c.b16 %v1479, %v1479
  %v1580 = vpack.c.b16 %v1480, %v1480
  %v1581 = vpack.c.b16 %v1481, %v1481
  %v1582 = vpack.c.b16 %v1482, %v1482
  %vm1683 = vcmask 240640
  %1684 = vst.msk [vmem:[%s3] sm:$0xf] %vm1683, %v1483
  %1685 = vst.msk [vmem:[%s3 + $0x4] sm:$0xf] %vm1683, %v1484
  %1686 = vst.msk [vmem:[%s3 + $0x8] sm:$0xf] %vm1683, %v1485
  %1687 = vst.msk [vmem:[%s3 + $0xc] sm:$0xf] %vm1683, %v1486
  %1688 = vst.msk [vmem:[%s3 + $0x10] sm:$0xf] %vm1683, %v1487
  %1689 = vst.msk [vmem:[%s3 + $0x14] sm:$0xf] %vm1683, %v1488
  %1690 = vst.msk [vmem:[%s3 + $0x18] sm:$0xf] %vm1683, %v1489
  %1691 = vst.msk [vmem:[%s3 + $0x1c] sm:$0xf] %vm1683, %v1490
  %1692 = vst.msk [vmem:[%s3 + $0x20] sm:$0xf] %vm1683, %v1491
  %1693 = vst.msk [vmem:[%s3 + $0x24] sm:$0xf] %vm1683, %v1492
  %1694 = vst.msk [vmem:[%s3 + $0x28] sm:$0xf] %vm1683, %v1493
  %1695 = vst.msk [vmem:[%s3 + $0x2c] sm:$0xf] %vm1683, %v1494
  %1696 = vst.msk [vmem:[%s3 + $0x30] sm:$0xf] %vm1683, %v1495
  %1697 = vst.msk [vmem:[%s3 + $0x34] sm:$0xf] %vm1683, %v1496
  %1698 = vst.msk [vmem:[%s3 + $0x38] sm:$0xf] %vm1683, %v1497
  %1699 = vst.msk [vmem:[%s3 + $0x3c] sm:$0xf] %vm1683, %v1498
  %1700 = vst.msk [vmem:[%s3 + $0x40] sm:$0xf] %vm1683, %v1499
  %1701 = vst.msk [vmem:[%s3 + $0x44] sm:$0xf] %vm1683, %v1500
  %1702 = vst.msk [vmem:[%s3 + $0x48] sm:$0xf] %vm1683, %v1501
  %1703 = vst.msk [vmem:[%s3 + $0x4c] sm:$0xf] %vm1683, %v1502
  %1704 = vst.msk [vmem:[%s3 + $0x50] sm:$0xf] %vm1683, %v1503
  %1705 = vst.msk [vmem:[%s3 + $0x54] sm:$0xf] %vm1683, %v1504
  %1706 = vst.msk [vmem:[%s3 + $0x58] sm:$0xf] %vm1683, %v1505
  %1707 = vst.msk [vmem:[%s3 + $0x5c] sm:$0xf] %vm1683, %v1506
  %1708 = vst.msk [vmem:[%s3 + $0x60] sm:$0xf] %vm1683, %v1507
  %1709 = vst.msk [vmem:[%s3 + $0x64] sm:$0xf] %vm1683, %v1508
  %1710 = vst.msk [vmem:[%s3 + $0x68] sm:$0xf] %vm1683, %v1509
  %1711 = vst.msk [vmem:[%s3 + $0x6c] sm:$0xf] %vm1683, %v1510
  %1712 = vst.msk [vmem:[%s3 + $0x70] sm:$0xf] %vm1683, %v1511
  %1713 = vst.msk [vmem:[%s3 + $0x74] sm:$0xf] %vm1683, %v1512
  %1714 = vst.msk [vmem:[%s3 + $0x78] sm:$0xf] %vm1683, %v1513
  %1715 = vst.msk [vmem:[%s3 + $0x7c] sm:$0xf] %vm1683, %v1514
  %1716 = vst.msk [vmem:[%s3 + $0x80] sm:$0xf] %vm1683, %v1515
  %1717 = vst.msk [vmem:[%s3 + $0x84] sm:$0xf] %vm1683, %v1516
  %1718 = vst.msk [vmem:[%s3 + $0x88] sm:$0xf] %vm1683, %v1517
  %1719 = vst.msk [vmem:[%s3 + $0x8c] sm:$0xf] %vm1683, %v1518
  %1720 = vst.msk [vmem:[%s3 + $0x90] sm:$0xf] %vm1683, %v1519
  %1721 = vst.msk [vmem:[%s3 + $0x94] sm:$0xf] %vm1683, %v1520
  %1722 = vst.msk [vmem:[%s3 + $0x98] sm:$0xf] %vm1683, %v1521
  %1723 = vst.msk [vmem:[%s3 + $0x9c] sm:$0xf] %vm1683, %v1522
  %1724 = vst.msk [vmem:[%s3 + $0xa0] sm:$0xf] %vm1683, %v1523
  %1725 = vst.msk [vmem:[%s3 + $0xa4] sm:$0xf] %vm1683, %v1524
  %1726 = vst.msk [vmem:[%s3 + $0xa8] sm:$0xf] %vm1683, %v1525
  %1727 = vst.msk [vmem:[%s3 + $0xac] sm:$0xf] %vm1683, %v1526
  %1728 = vst.msk [vmem:[%s3 + $0xb0] sm:$0xf] %vm1683, %v1527
  %1729 = vst.msk [vmem:[%s3 + $0xb4] sm:$0xf] %vm1683, %v1528
  %1730 = vst.msk [vmem:[%s3 + $0xb8] sm:$0xf] %vm1683, %v1529
  %1731 = vst.msk [vmem:[%s3 + $0xbc] sm:$0xf] %vm1683, %v1530
  %1732 = vst.msk [vmem:[%s3 + $0xc0] sm:$0xf] %vm1683, %v1531
  %1733 = vst.msk [vmem:[%s3 + $0xc4] sm:$0xf] %vm1683, %v1532
  %1734 = vst.msk [vmem:[%s3 + $0xc8] sm:$0xf] %vm1683, %v1533
  %1735 = vst.msk [vmem:[%s3 + $0xcc] sm:$0xf] %vm1683, %v1534
  %1736 = vst.msk [vmem:[%s3 + $0xd0] sm:$0xf] %vm1683, %v1535
  %1737 = vst.msk [vmem:[%s3 + $0xd4] sm:$0xf] %vm1683, %v1536
  %1738 = vst.msk [vmem:[%s3 + $0xd8] sm:$0xf] %vm1683, %v1537
  %1739 = vst.msk [vmem:[%s3 + $0xdc] sm:$0xf] %vm1683, %v1538
  %1740 = vst.msk [vmem:[%s3 + $0xe0] sm:$0xf] %vm1683, %v1539
  %1741 = vst.msk [vmem:[%s3 + $0xe4] sm:$0xf] %vm1683, %v1540
  %1742 = vst.msk [vmem:[%s3 + $0xe8] sm:$0xf] %vm1683, %v1541
  %1743 = vst.msk [vmem:[%s3 + $0xec] sm:$0xf] %vm1683, %v1542
  %1744 = vst.msk [vmem:[%s3 + $0xf0] sm:$0xf] %vm1683, %v1543
  %1745 = vst.msk [vmem:[%s3 + $0xf4] sm:$0xf] %vm1683, %v1544
  %1746 = vst.msk [vmem:[%s3 + $0xf8] sm:$0xf] %vm1683, %v1545
  %1747 = vst.msk [vmem:[%s3 + $0xfc] sm:$0xf] %vm1683, %v1546
  %1748 = vst.msk [vmem:[%s3 + $0x100] sm:$0xf] %vm1683, %v1547
  %1749 = vst.msk [vmem:[%s3 + $0x104] sm:$0xf] %vm1683, %v1548
  %1750 = vst.msk [vmem:[%s3 + $0x108] sm:$0xf] %vm1683, %v1549
  %1751 = vst.msk [vmem:[%s3 + $0x10c] sm:$0xf] %vm1683, %v1550
  %1752 = vst.msk [vmem:[%s3 + $0x110] sm:$0xf] %vm1683, %v1551
  %1753 = vst.msk [vmem:[%s3 + $0x114] sm:$0xf] %vm1683, %v1552
  %1754 = vst.msk [vmem:[%s3 + $0x118] sm:$0xf] %vm1683, %v1553
  %1755 = vst.msk [vmem:[%s3 + $0x11c] sm:$0xf] %vm1683, %v1554
  %1756 = vst.msk [vmem:[%s3 + $0x120] sm:$0xf] %vm1683, %v1555
  %1757 = vst.msk [vmem:[%s3 + $0x124] sm:$0xf] %vm1683, %v1556
  %1758 = vst.msk [vmem:[%s3 + $0x128] sm:$0xf] %vm1683, %v1557
  %1759 = vst.msk [vmem:[%s3 + $0x12c] sm:$0xf] %vm1683, %v1558
  %1760 = vst.msk [vmem:[%s3 + $0x130] sm:$0xf] %vm1683, %v1559
  %1761 = vst.msk [vmem:[%s3 + $0x134] sm:$0xf] %vm1683, %v1560
  %1762 = vst.msk [vmem:[%s3 + $0x138] sm:$0xf] %vm1683, %v1561
  %1763 = vst.msk [vmem:[%s3 + $0x13c] sm:$0xf] %vm1683, %v1562
  %1764 = vst.msk [vmem:[%s3 + $0x140] sm:$0xf] %vm1683, %v1563
  %1765 = vst.msk [vmem:[%s3 + $0x144] sm:$0xf] %vm1683, %v1564
  %1766 = vst.msk [vmem:[%s3 + $0x148] sm:$0xf] %vm1683, %v1565
  %1767 = vst.msk [vmem:[%s3 + $0x14c] sm:$0xf] %vm1683, %v1566
  %1768 = vst.msk [vmem:[%s3 + $0x150] sm:$0xf] %vm1683, %v1567
  %1769 = vst.msk [vmem:[%s3 + $0x154] sm:$0xf] %vm1683, %v1568
  %1770 = vst.msk [vmem:[%s3 + $0x158] sm:$0xf] %vm1683, %v1569
  %1771 = vst.msk [vmem:[%s3 + $0x15c] sm:$0xf] %vm1683, %v1570
  %1772 = vst.msk [vmem:[%s3 + $0x160] sm:$0xf] %vm1683, %v1571
  %1773 = vst.msk [vmem:[%s3 + $0x164] sm:$0xf] %vm1683, %v1572
  %1774 = vst.msk [vmem:[%s3 + $0x168] sm:$0xf] %vm1683, %v1573
  %1775 = vst.msk [vmem:[%s3 + $0x16c] sm:$0xf] %vm1683, %v1574
  %1776 = vst.msk [vmem:[%s3 + $0x170] sm:$0xf] %vm1683, %v1575
  %1777 = vst.msk [vmem:[%s3 + $0x174] sm:$0xf] %vm1683, %v1576
  %1778 = vst.msk [vmem:[%s3 + $0x178] sm:$0xf] %vm1683, %v1577
  %1779 = vst.msk [vmem:[%s3 + $0x17c] sm:$0xf] %vm1683, %v1578
  %1780 = vst.msk [vmem:[%s3 + $0x180] sm:$0xf] %vm1683, %v1579
  %1781 = vst.msk [vmem:[%s3 + $0x184] sm:$0xf] %vm1683, %v1580
  %1782 = vst.msk [vmem:[%s3 + $0x188] sm:$0xf] %vm1683, %v1581
  %1783 = vst.msk [vmem:[%s3 + $0x18c] sm:$0xf] %vm1683, %v1582
  // Predicated region
  $region14: #{forward.2} parent=0 // pred_check
    _
  $region15: #{forward.2} parent=0 // pred_check_branch
    %1785 = sbr.rel (0) target = $region17
  $region16: #{forward.2} parent=0 // pred_region
    _
  $region17: #{forward.2} parent=0 // pred_fallthru
    _
  // Predicated region
  $region18: #{forward.2} parent=0 // pred_check
    _
  $region19: #{forward.2} parent=0 // pred_check_branch
    %1787 = sbr.rel (0) target = $region21
  $region20: #{forward.2} parent=0 // pred_region
    _
  $region21: #{forward.2} parent=0 // pred_fallthru
    _

// kernel: forward.3
$region0: #{forward.3}
  #allocation0 [shape = 'u32[]', space=smem, size = 0x4, offset = 0x4, fixed_abs, tag = 'smem constant byte address 0x4 - core index']
  #allocation1 [shape = 'u32[144,128]{1,0:T(1,128)}', space=vmem, size = 0x12000, scoped, tag = 'internal scratch']
  #allocation2 [shape = 'bf16[98,64]{1,0:T(8,128)(2,1)}', space=vmem, size = 0x6800, scoped, tag = 'scratch operand']
  #allocation3 [shape = 'f32[2,512]{1,0:T(2,128)}', space=vmem, size = 0x1000, scoped, tag = 'scratch operand']
  %s0 = inlined_call_operand.vmem [shape: bf16[162,480], index: 0, kind: input, shape index: {}]
  %s1 = inlined_call_operand.vmem [shape: bf16[480,15], index: 1, kind: input, shape index: {}]
  %s2 = inlined_call_operand.vmem [shape: f32[1,15], index: 2, kind: input, shape index: {}]
  %s3 = inlined_call_operand.vmem [shape: bf16[9,15,64], index: 3, kind: input, shape index: {}]
  %s4 = inlined_call_operand.vmem [shape: f32[1,64], index: 4, kind: input, shape index: {}]
  %s5 = inlined_call_operand.vmem [shape: s32[98,1], index: 5, kind: input, shape index: {}]
  %s6 = inlined_call_operand.vmem [shape: s32[2,1], index: 6, kind: input, shape index: {}]
  %s7 = inlined_call_operand.vmem [shape: bf16[3136,512], index: 7, kind: input, shape index: {}]
  %s8 = inlined_call_operand.vmem [shape: f32[1,512], index: 8, kind: input, shape index: {}]
  %s9 = inlined_call_operand.vmem [shape: f32[512,5], index: 9, kind: input, shape index: {}]
  %s10 = inlined_call_operand.vmem [shape: f32[1,5], index: 10, kind: input, shape index: {}]
  %s11 = inlined_call_operand.hbm [shape: f32[2,5], index: 11, kind: output, shape index: {}]
  %s12 = sld [smem:[#allocation0]]
  $region85: #{forward.3} parent=0
    _
  %s14 = ssub.s32 1, %s12
  %s15 = scalar_select 0, %s14, %s12
  $region1: #{forward.3} parent=0
    #allocation4 [shape = 'u8[1024]{0}', space=vmem, size = 0x400, scoped, tag = 'output window, operand 0, single buffered']
    #allocation5 [shape = 's32[2]{0}', space=sflag, size = 0x8, scoped, tag = 'scoped memory for forward.3']
    %16 = vsyncpa [#allocation5], 0
    loop: start=0, step=1, limit=9
    $region2: #{forward.3} parent=1 // loop_pre_header
      _
    $region3: #{forward.3} parent=1 // loop_header
      %s18 = sphi 0, %s22
      %p19 = scmp.ge.s32.totalorder %s18, 9
      %s26 = sphi 0, %s26
      %s28 = sphi 0, %s26
      %s29 = sphi 0, %s28
      %s43 = sphi 0, %s29
      %s47 = sphi 0, %s47
      %s49 = sphi 0, %s47
      %s50 = sphi 0, %s49
      %s64 = sphi 0, %s50
      %s68 = sphi 0, %s68
      %s70 = sphi 0, %s68
      %s71 = sphi 0, %s70
      %s85 = sphi 0, %s71
      %s89 = sphi 0, %s89
      %s91 = sphi 0, %s89
      %s92 = sphi 0, %s91
      %s106 = sphi 0, %s92
      %s110 = sphi 0, %s110
      %s112 = sphi 0, %s110
      %s113 = sphi 0, %s112
      %s127 = sphi 0, %s113
      %s131 = sphi 0, %s131
      %s133 = sphi 0, %s131
      %s134 = sphi 0, %s133
      %s148 = sphi 0, %s134
      %s152 = sphi 0, %s152
      %s154 = sphi 0, %s152
      %s155 = sphi 0, %s154
      %s169 = sphi 0, %s155
      %s175 = sphi 0, %s177
      %s178 = sphi 0, %s175
      %s179 = sphi 0, %s178
      %s195 = sphi 0, %s179
      %s199 = sphi 0, %s199
      %s201 = sphi 0, %s199
      %s202 = sphi 0, %s201
      %s216 = sphi 0, %s202
      %s220 = sphi 0, %s220
      %s222 = sphi 0, %s220
      %s223 = sphi 0, %s222
      %s237 = sphi 0, %s223
      %s241 = sphi 0, %s241
      %s243 = sphi 0, %s241
      %s244 = sphi 0, %s243
      %s258 = sphi 0, %s244
      %s262 = sphi 0, %s262
      %s264 = sphi 0, %s262
      %s265 = sphi 0, %s264
      %s279 = sphi 0, %s265
    $region4: #{forward.3} parent=1 // loop_header_branch
      %21 = sbr.rel (%p19) target = $region8
    $region5: #{forward.3} parent=1 // loop_body
      %s23 = ssub.s32 %s18, 1
      %s24 = ssub.s32 %s18, 2
      %s25 = sadd.s32 %s18, 1
      %s27 = sadd.s32 %s26, 1
      %p30 = scmp.eq.s32.totalorder %s18, 6
      %p31 = scmp.ne.s32.totalorder %s26, %s28
      %p32 = scmp.eq.s32.totalorder %s18, 0
      %p33 = por %p31, %p32
      %p34 = scmp.ne.s32.totalorder %s26, %s28
      %p35 = scmp.eq.s32.totalorder %s23, 6
      %p36 = por %p34, %p35
      %p37 = scmp.ne.s32.totalorder %s28, %s29
      %p38 = scmp.eq.s32.totalorder %s23, 0
      %p39 = por %p37, %p38
      %p40 = scmp.ne.s32.totalorder %s28, %s29
      %p41 = scmp.eq.s32.totalorder %s24, 6
      %p42 = por %p40, %p41
      %p44 = scmp.ne.s32.totalorder %s29, %s43
      %p45 = scmp.eq.s32.totalorder %s24, 0
      %p46 = por %p44, %p45
      %s48 = sadd.s32 %s47, 1
      %p51 = scmp.eq.s32.totalorder %s18, 6
      %p52 = scmp.ne.s32.totalorder %s47, %s49
      %p53 = scmp.eq.s32.totalorder %s18, 0
      %p54 = por %p52, %p53
      %p55 = scmp.ne.s32.totalorder %s47, %s49
      %p56 = scmp.eq.s32.totalorder %s23, 6
      %p57 = por %p55, %p56
      %p58 = scmp.ne.s32.totalorder %s49, %s50
      %p59 = scmp.eq.s32.totalorder %s23, 0
      %p60 = por %p58, %p59
      %p61 = scmp.ne.s32.totalorder %s49, %s50
      %p62 = scmp.eq.s32.totalorder %s24, 6
      %p63 = por %p61, %p62
      %p65 = scmp.ne.s32.totalorder %s50, %s64
      %p66 = scmp.eq.s32.totalorder %s24, 0
      %p67 = por %p65, %p66
      %s69 = sadd.s32 %s68, 1
      %p72 = scmp.eq.s32.totalorder %s18, 6
      %p73 = scmp.ne.s32.totalorder %s68, %s70
      %p74 = scmp.eq.s32.totalorder %s18, 0
      %p75 = por %p73, %p74
      %p76 = scmp.ne.s32.totalorder %s68, %s70
      %p77 = scmp.eq.s32.totalorder %s23, 6
      %p78 = por %p76, %p77
      %p79 = scmp.ne.s32.totalorder %s70, %s71
      %p80 = scmp.eq.s32.totalorder %s23, 0
      %p81 = por %p79, %p80
      %p82 = scmp.ne.s32.totalorder %s70, %s71
      %p83 = scmp.eq.s32.totalorder %s24, 6
      %p84 = por %p82, %p83
      %p86 = scmp.ne.s32.totalorder %s71, %s85
      %p87 = scmp.eq.s32.totalorder %s24, 0
      %p88 = por %p86, %p87
      %s90 = sadd.s32 %s89, 1
      %p93 = scmp.eq.s32.totalorder %s18, 6
      %p94 = scmp.ne.s32.totalorder %s89, %s91
      %p95 = scmp.eq.s32.totalorder %s18, 0
      %p96 = por %p94, %p95
      %p97 = scmp.ne.s32.totalorder %s89, %s91
      %p98 = scmp.eq.s32.totalorder %s23, 6
      %p99 = por %p97, %p98
      %p100 = scmp.ne.s32.totalorder %s91, %s92
      %p101 = scmp.eq.s32.totalorder %s23, 0
      %p102 = por %p100, %p101
      %p103 = scmp.ne.s32.totalorder %s91, %s92
      %p104 = scmp.eq.s32.totalorder %s24, 6
      %p105 = por %p103, %p104
      %p107 = scmp.ne.s32.totalorder %s92, %s106
      %p108 = scmp.eq.s32.totalorder %s24, 0
      %p109 = por %p107, %p108
      %s111 = sadd.s32 %s110, 1
      %p114 = scmp.eq.s32.totalorder %s18, 6
      %p115 = scmp.ne.s32.totalorder %s110, %s112
      %p116 = scmp.eq.s32.totalorder %s18, 0
      %p117 = por %p115, %p116
      %p118 = scmp.ne.s32.totalorder %s110, %s112
      %p119 = scmp.eq.s32.totalorder %s23, 6
      %p120 = por %p118, %p119
      %p121 = scmp.ne.s32.totalorder %s112, %s113
      %p122 = scmp.eq.s32.totalorder %s23, 0
      %p123 = por %p121, %p122
      %p124 = scmp.ne.s32.totalorder %s112, %s113
      %p125 = scmp.eq.s32.totalorder %s24, 6
      %p126 = por %p124, %p125
      %p128 = scmp.ne.s32.totalorder %s113, %s127
      %p129 = scmp.eq.s32.totalorder %s24, 0
      %p130 = por %p128, %p129
      %s132 = sadd.s32 %s131, 1
      %p135 = scmp.eq.s32.totalorder %s18, 6
      %p136 = scmp.ne.s32.totalorder %s131, %s133
      %p137 = scmp.eq.s32.totalorder %s18, 0
      %p138 = por %p136, %p137
      %p139 = scmp.ne.s32.totalorder %s131, %s133
      %p140 = scmp.eq.s32.totalorder %s23, 6
      %p141 = por %p139, %p140
      %p142 = scmp.ne.s32.totalorder %s133, %s134
      %p143 = scmp.eq.s32.totalorder %s23, 0
      %p144 = por %p142, %p143
      %p145 = scmp.ne.s32.totalorder %s133, %s134
      %p146 = scmp.eq.s32.totalorder %s24, 6
      %p147 = por %p145, %p146
      %p149 = scmp.ne.s32.totalorder %s134, %s148
      %p150 = scmp.eq.s32.totalorder %s24, 0
      %p151 = por %p149, %p150
      %s153 = sadd.s32 %s152, 1
      %p156 = scmp.eq.s32.totalorder %s18, 6
      %p157 = scmp.ne.s32.totalorder %s152, %s154
      %p158 = scmp.eq.s32.totalorder %s18, 0
      %p159 = por %p157, %p158
      %p160 = scmp.ne.s32.totalorder %s152, %s154
      %p161 = scmp.eq.s32.totalorder %s23, 6
      %p162 = por %p160, %p161
      %p163 = scmp.ne.s32.totalorder %s154, %s155
      %p164 = scmp.eq.s32.totalorder %s23, 0
      %p165 = por %p163, %p164
      %p166 = scmp.ne.s32.totalorder %s154, %s155
      %p167 = scmp.eq.s32.totalorder %s24, 6
      %p168 = por %p166, %p167
      %p170 = scmp.ne.s32.totalorder %s155, %s169
      %p171 = scmp.eq.s32.totalorder %s24, 0
      %p172 = por %p170, %p171
      %s173 = ssub.s32 %s18, %s25
      %p174 = scmp.eq.s32.totalorder %s173, 0
      %s176 = sadd.s32 %s175, 1
      %s177 = scalar_select %p174, %s175, %s176
      %p180 = pneg %p174
      %p181 = scmp.eq.s32.totalorder %s18, 6
      %p182 = por %p180, %p181
      %p183 = scmp.ne.s32.totalorder %s175, %s178
      %p184 = scmp.eq.s32.totalorder %s18, 0
      %p185 = por %p183, %p184
      %p186 = scmp.ne.s32.totalorder %s175, %s178
      %p187 = scmp.eq.s32.totalorder %s23, 6
      %p188 = por %p186, %p187
      %p189 = scmp.ne.s32.totalorder %s178, %s179
      %p190 = scmp.eq.s32.totalorder %s23, 0
      %p191 = por %p189, %p190
      %p192 = scmp.ne.s32.totalorder %s178, %s179
      %p193 = scmp.eq.s32.totalorder %s24, 6
      %p194 = por %p192, %p193
      %p196 = scmp.ne.s32.totalorder %s179, %s195
      %p197 = scmp.eq.s32.totalorder %s24, 0
      %p198 = por %p196, %p197
      %s200 = sadd.s32 %s199, 1
      %p203 = scmp.eq.s32.totalorder %s18, 6
      %p204 = scmp.ne.s32.totalorder %s199, %s201
      %p205 = scmp.eq.s32.totalorder %s18, 0
      %p206 = por %p204, %p205
      %p207 = scmp.ne.s32.totalorder %s199, %s201
      %p208 = scmp.eq.s32.totalorder %s23, 6
      %p209 = por %p207, %p208
      %p210 = scmp.ne.s32.totalorder %s201, %s202
      %p211 = scmp.eq.s32.totalorder %s23, 0
      %p212 = por %p210, %p211
      %p213 = scmp.ne.s32.totalorder %s201, %s202
      %p214 = scmp.eq.s32.totalorder %s24, 6
      %p215 = por %p213, %p214
      %p217 = scmp.ne.s32.totalorder %s202, %s216
      %p218 = scmp.eq.s32.totalorder %s24, 0
      %p219 = por %p217, %p218
      %s221 = sadd.s32 %s220, 1
      %p224 = scmp.eq.s32.totalorder %s18, 6
      %p225 = scmp.ne.s32.totalorder %s220, %s222
      %p226 = scmp.eq.s32.totalorder %s18, 0
      %p227 = por %p225, %p226
      %p228 = scmp.ne.s32.totalorder %s220, %s222
      %p229 = scmp.eq.s32.totalorder %s23, 6
      %p230 = por %p228, %p229
      %p231 = scmp.ne.s32.totalorder %s222, %s223
      %p232 = scmp.eq.s32.totalorder %s23, 0
      %p233 = por %p231, %p232
      %p234 = scmp.ne.s32.totalorder %s222, %s223
      %p235 = scmp.eq.s32.totalorder %s24, 6
      %p236 = por %p234, %p235
      %p238 = scmp.ne.s32.totalorder %s223, %s237
      %p239 = scmp.eq.s32.totalorder %s24, 0
      %p240 = por %p238, %p239
      %s242 = sadd.s32 %s241, 1
      %p245 = scmp.eq.s32.totalorder %s18, 6
      %p246 = scmp.ne.s32.totalorder %s241, %s243
      %p247 = scmp.eq.s32.totalorder %s18, 0
      %p248 = por %p246, %p247
      %p249 = scmp.ne.s32.totalorder %s241, %s243
      %p250 = scmp.eq.s32.totalorder %s23, 6
      %p251 = por %p249, %p250
      %p252 = scmp.ne.s32.totalorder %s243, %s244
      %p253 = scmp.eq.s32.totalorder %s23, 0
      %p254 = por %p252, %p253
      %p255 = scmp.ne.s32.totalorder %s243, %s244
      %p256 = scmp.eq.s32.totalorder %s24, 6
      %p257 = por %p255, %p256
      %p259 = scmp.ne.s32.totalorder %s244, %s258
      %p260 = scmp.eq.s32.totalorder %s24, 0
      %p261 = por %p259, %p260
      %s263 = sadd.s32 %s262, 1
      %p266 = scmp.eq.s32.totalorder %s18, 6
      %p267 = scmp.ne.s32.totalorder %s262, %s264
      %p268 = scmp.eq.s32.totalorder %s18, 0
      %p269 = por %p267, %p268
      %p270 = scmp.ne.s32.totalorder %s262, %s264
      %p271 = scmp.eq.s32.totalorder %s23, 6
      %p272 = por %p270, %p271
      %p273 = scmp.ne.s32.totalorder %s264, %s265
      %p274 = scmp.eq.s32.totalorder %s23, 0
      %p275 = por %p273, %p274
      %p276 = scmp.ne.s32.totalorder %s264, %s265
      %p277 = scmp.eq.s32.totalorder %s24, 6
      %p278 = por %p276, %p277
      %p280 = scmp.ne.s32.totalorder %s265, %s279
      %p281 = scmp.eq.s32.totalorder %s24, 0
      %p282 = por %p280, %p281
      %p283 = scmp.le.s32.totalorder 1, %s18
      %p284 = scmp.lt.s32.totalorder %s18, 8
      %p285 = pnand %p283, %p284
      %p286 = pneg %p285
      // Predicated region
      $region9: #{forward.3} parent=5 // pred_check
        _
      $region10: #{forward.3} parent=5 // pred_check_branch
        %288 = sbr.rel (%p285) target = $region12
      $region11: #{forward.3} parent=5 // pred_region
        %s289 = ssub.s32 %s18, 1
        // Predicated region
        $region13: #{forward.3} parent=11 // pred_check
          %p290 = pneg %p39
        $region14: #{forward.3} parent=11 // pred_check_branch
          %292 = sbr.rel (%p290) target = $region16
        $region15: #{forward.3} parent=11 // pred_region
          _
        $region16: #{forward.3} parent=11 // pred_fallthru
          _
        // Predicated region
        $region17: #{forward.3} parent=11 // pred_check
          %p293 = pneg %p60
        $region18: #{forward.3} parent=11 // pred_check_branch
          %295 = sbr.rel (%p293) target = $region20
        $region19: #{forward.3} parent=11 // pred_region
          _
        $region20: #{forward.3} parent=11 // pred_fallthru
          _
        // Predicated region
        $region21: #{forward.3} parent=11 // pred_check
          %p296 = pneg %p81
        $region22: #{forward.3} parent=11 // pred_check_branch
          %298 = sbr.rel (%p296) target = $region24
        $region23: #{forward.3} parent=11 // pred_region
          _
        $region24: #{forward.3} parent=11 // pred_fallthru
          _
        // Predicated region
        $region25: #{forward.3} parent=11 // pred_check
          %p299 = pneg %p102
        $region26: #{forward.3} parent=11 // pred_check_branch
          %301 = sbr.rel (%p299) target = $region28
        $region27: #{forward.3} parent=11 // pred_region
          _
        $region28: #{forward.3} parent=11 // pred_fallthru
          _
        // Predicated region
        $region29: #{forward.3} parent=11 // pred_check
          %p302 = pneg %p123
        $region30: #{forward.3} parent=11 // pred_check_branch
          %304 = sbr.rel (%p302) target = $region32
        $region31: #{forward.3} parent=11 // pred_region
          _
        $region32: #{forward.3} parent=11 // pred_fallthru
          _
        // Predicated region
        $region33: #{forward.3} parent=11 // pred_check
          %p305 = pneg %p144
        $region34: #{forward.3} parent=11 // pred_check_branch
          %307 = sbr.rel (%p305) target = $region36
        $region35: #{forward.3} parent=11 // pred_region
          _
        $region36: #{forward.3} parent=11 // pred_fallthru
          _
        // Predicated region
        $region37: #{forward.3} parent=11 // pred_check
          %p308 = pneg %p165
        $region38: #{forward.3} parent=11 // pred_check_branch
          %310 = sbr.rel (%p308) target = $region40
        $region39: #{forward.3} parent=11 // pred_region
          _
        $region40: #{forward.3} parent=11 // pred_fallthru
          _
        // Predicated region
        $region41: #{forward.3} parent=11 // pred_check
          %p311 = pneg %p212
        $region42: #{forward.3} parent=11 // pred_check_branch
          %313 = sbr.rel (%p311) target = $region44
        $region43: #{forward.3} parent=11 // pred_region
          _
        $region44: #{forward.3} parent=11 // pred_fallthru
          _
        // Predicated region
        $region45: #{forward.3} parent=11 // pred_check
          %p314 = pneg %p233
        $region46: #{forward.3} parent=11 // pred_check_branch
          %316 = sbr.rel (%p314) target = $region48
        $region47: #{forward.3} parent=11 // pred_region
          _
        $region48: #{forward.3} parent=11 // pred_fallthru
          _
        // Predicated region
        $region49: #{forward.3} parent=11 // pred_check
          %p317 = pneg %p254
        $region50: #{forward.3} parent=11 // pred_check_branch
          %319 = sbr.rel (%p317) target = $region52
        $region51: #{forward.3} parent=11 // pred_region
          _
        $region52: #{forward.3} parent=11 // pred_fallthru
          _
      $region12: #{forward.3} parent=5 // pred_fallthru
        _
      %p320 = scmp.lt.s32.totalorder %s18, 7
      // Predicated region
      $region53: #{forward.3} parent=5 // pred_check
        %p321 = pneg %p320
      $region54: #{forward.3} parent=5 // pred_check_branch
        %323 = sbr.rel (%p321) target = $region56
      $region55: #{forward.3} parent=5 // pred_region
        // Predicated region
        $region57: #{forward.3} parent=55 // pred_check
          %p324 = pneg %p185
        $region58: #{forward.3} parent=55 // pred_check_branch
          %326 = sbr.rel (%p324) target = $region60
        $region59: #{forward.3} parent=55 // pred_region
          %s327 = smul.u32 56, %s18
          %p328 = scmp.lt.s32.totalorder %s327, 391
          %s329 = scalar_select %p328, %s327, 391
          %s330 = smul.addr %s329, 4
          %s331 = smul.addr %s330, 4
          %s332 = scalar_lea.vmem %s7, %s331
          %s333 = smul.u32 56, %s18
        $region60: #{forward.3} parent=55 // pred_fallthru
          _
      $region56: #{forward.3} parent=5 // pred_fallthru
        _
      %p334 = scmp.le.s32.totalorder 1, %s18
      %p335 = scmp.lt.s32.totalorder %s18, 8
      %p336 = pnand %p334, %p335
      %p337 = pneg %p336
      // Predicated region
      $region61: #{forward.3} parent=5 // pred_check
        _
      $region62: #{forward.3} parent=5 // pred_check_branch
        %339 = sbr.rel (%p336) target = $region64
      $region63: #{forward.3} parent=5 // pred_region
        %s340 = ssub.s32 %s18, 1
        %p341 = pneg %p39
        %p342 = pneg %p36
        %p343 = pneg %p60
        %p344 = pneg %p57
        %p345 = pneg %p81
        %p346 = pneg %p78
        %p347 = pneg %p102
        %p348 = pneg %p99
        %p349 = pneg %p123
        %p350 = pneg %p120
        %p351 = pneg %p144
        %p352 = pneg %p141
        %p353 = pneg %p165
        %p354 = pneg %p162
        %s355 = smul.u32 56, %s23
        %p356 = scmp.lt.s32.totalorder %s355, 391
        %s357 = scalar_select %p356, %s355, 391
        %s358 = smul.addr %s357, 4
        %s359 = smul.addr %s358, 4
        %s360 = scalar_lea.vmem %s7, %s359
        %p361 = pneg %p191
        %p362 = pneg %p188
        %p363 = pneg %p212
        %p364 = pneg %p209
        %p365 = pneg %p233
        %p366 = pneg %p230
        %p367 = pneg %p254
        %p368 = pneg %p251
        %p369 = pneg %p275
        %p370 = pneg %p272
        %s371 = smul.u32 56, %s23
        %p372 = scmp.lt.s32.totalorder %s371, 391
        %s373 = scalar_select %p372, %s371, 391
        %s374 = smul.addr %s373, 4
        %s375 = smul.addr %s374, 4
        %s376 = scalar_lea.vmem %s7, %s375
        %s377 = smul.u32 56, %s23
        %p379 = scmp.eq.s32.totalorder %s23, 0
        // Predicated region
        $region65: #{forward.3} parent=63 // pred_check
          %p380 = pneg %p379
        $region66: #{forward.3} parent=63 // pred_check_branch
          %382 = sbr.rel (%p380) target = $region68
        $region67: #{forward.3} parent=63 // pred_region
          %v383 = vld [vmem:[%s0] sm:$0xff]
          %v384 = vld [vmem:[%s0 + $0x8] sm:$0xff]
          %v385 = vld [vmem:[%s0 + $0x10] sm:$0xff]
          %v386 = vld [vmem:[%s0 + $0x18] sm:$0xff]
          %v387 = vld [vmem:[%s0 + $0x20] sm:$0xff]
          %v388 = vld [vmem:[%s0 + $0x28] sm:$0xff]
          %v389 = vld [vmem:[%s0 + $0x30] sm:$0xff]
          %v390 = vld [vmem:[%s0 + $0x38] sm:$0xff]
          %v391 = vld [vmem:[%s0 + $0x40] sm:$0xff]
          %v392 = vld [vmem:[%s0 + $0x48] sm:$0xff]
          %v393 = vld [vmem:[%s0 + $0x50] sm:$0xff]
          %v394 = vld [vmem:[%s0 + $0x58] sm:$0xff]
          %v395 = vld [vmem:[%s0 + $0x60] sm:$0xff]
          %v396 = vld [vmem:[%s0 + $0x68] sm:$0xff]
          %v397 = vld [vmem:[%s0 + $0x70] sm:$0xff]
          %v398 = vld [vmem:[%s0 + $0x78] sm:$0xff]
          %v399 = vld [vmem:[%s0 + $0x80] sm:$0xff]
          %v400 = vld [vmem:[%s0 + $0x88] sm:$0xff]
          %v401 = vld [vmem:[%s0 + $0x90] sm:$0xff]
          %v402 = vld [vmem:[%s0 + $0x98] sm:$0xff]
          %v403 = vld [vmem:[%s0 + $0xa0] sm:$0xff]
          %v404 = vld [vmem:[%s0 + $0xa8] sm:$0xff]
          %v405 = vld [vmem:[%s0 + $0xb0] sm:$0xff]
          %v406 = vld [vmem:[%s0 + $0xb8] sm:$0xff]
          %v407 = vld [vmem:[%s0 + $0xc0] sm:$0xff]
          %v408 = vld [vmem:[%s0 + $0xc8] sm:$0xff]
          %v409 = vld [vmem:[%s0 + $0xd0] sm:$0xff]
          %v410 = vld [vmem:[%s0 + $0xd8] sm:$0xff]
          %v411 = vld [vmem:[%s0 + $0xe0] sm:$0xff]
          %v412 = vld [vmem:[%s0 + $0xe8] sm:$0xff]
          %v413 = vld [vmem:[%s0 + $0xf0] sm:$0xff]
          %v414 = vld [vmem:[%s0 + $0xf8] sm:$0xff]
          %v415 = vld [vmem:[%s0 + $0x100] sm:$0xff]
          %v416 = vld [vmem:[%s0 + $0x108] sm:$0xff]
          %v417 = vld [vmem:[%s0 + $0x110] sm:$0xff]
          %v418 = vld [vmem:[%s0 + $0x118] sm:$0xff]
          %v419 = vld [vmem:[%s0 + $0x120] sm:$0xff]
          %v420 = vld [vmem:[%s0 + $0x128] sm:$0xff]
          %v421 = vld [vmem:[%s0 + $0x130] sm:$0xff]
          %v422 = vld [vmem:[%s0 + $0x138] sm:$0xff]
          %v423 = vld [vmem:[%s0 + $0x140] sm:$0x11]
          %v424 = vld [vmem:[%s0 + $0x148] sm:$0x11]
          %v425 = vld [vmem:[%s1] sm:$0xf]
          %v426 = vld [vmem:[%s1 + $0x4] sm:$0xf]
          %v427 = vld [vmem:[%s1 + $0x8] sm:$0xf]
          %v428 = vld [vmem:[%s1 + $0xc] sm:$0xf]
          %v429 = vld [vmem:[%s1 + $0x10] sm:$0xf]
          %v430 = vld [vmem:[%s1 + $0x14] sm:$0xf]
          %v431 = vld [vmem:[%s1 + $0x18] sm:$0xf]
          %v432 = vld [vmem:[%s1 + $0x1c] sm:$0xf]
          %v433 = vld [vmem:[%s1 + $0x20] sm:$0xf]
          %v434 = vld [vmem:[%s1 + $0x24] sm:$0xf]
          %v435 = vld [vmem:[%s1 + $0x28] sm:$0xf]
          %v436 = vld [vmem:[%s1 + $0x2c] sm:$0xf]
          %v437 = vld [vmem:[%s1 + $0x30] sm:$0xf]
          %v438 = vld [vmem:[%s1 + $0x34] sm:$0xf]
          %v439 = vld [vmem:[%s1 + $0x38] sm:$0xf]
          %v440 = vld [vmem:[%s1 + $0x3c] sm:$0xf]
          %v441 = vld [vmem:[%s1 + $0x40] sm:$0xf]
          %v442 = vld [vmem:[%s1 + $0x44] sm:$0xf]
          %v443 = vld [vmem:[%s1 + $0x48] sm:$0xf]
          %v444 = vld [vmem:[%s1 + $0x4c] sm:$0xf]
          %v445 = vld [vmem:[%s1 + $0x50] sm:$0xf]
          %v446 = vld [vmem:[%s1 + $0x54] sm:$0xf]
          %v447 = vld [vmem:[%s1 + $0x58] sm:$0xf]
          %v448 = vld [vmem:[%s1 + $0x5c] sm:$0xf]
          %v449 = vld [vmem:[%s1 + $0x60] sm:$0xf]
          %v450 = vld [vmem:[%s1 + $0x64] sm:$0xf]
          %v451 = vld [vmem:[%s1 + $0x68] sm:$0xf]
          %v452 = vld [vmem:[%s1 + $0x6c] sm:$0xf]
          %v453 = vld [vmem:[%s1 + $0x70] sm:$0xf]
          %v454 = vld [vmem:[%s1 + $0x74] sm:$0xf]
          %v455 = vld [vmem:[%s1 + $0x78] sm:$0xf]
          %v456 = vld [vmem:[%s1 + $0x7c] sm:$0xf]
          %v457 = vld [vmem:[%s1 + $0x80] sm:$0xf]
          %v458 = vld [vmem:[%s1 + $0x84] sm:$0xf]
          %v459 = vld [vmem:[%s1 + $0x88] sm:$0xf]
          %v460 = vld [vmem:[%s1 + $0x8c] sm:$0xf]
          %v461 = vld [vmem:[%s1 + $0x90] sm:$0xf]
          %v462 = vld [vmem:[%s1 + $0x94] sm:$0xf]
          %v463 = vld [vmem:[%s1 + $0x98] sm:$0xf]
          %v464 = vld [vmem:[%s1 + $0x9c] sm:$0xf]
          %v465 = vld [vmem:[%s1 + $0xa0] sm:$0xf]
          %v466 = vld [vmem:[%s1 + $0xa4] sm:$0xf]
          %v467 = vld [vmem:[%s1 + $0xa8] sm:$0xf]
          %v468 = vld [vmem:[%s1 + $0xac] sm:$0xf]
          %v469 = vld [vmem:[%s1 + $0xb0] sm:$0xf]
          %v470 = vld [vmem:[%s1 + $0xb4] sm:$0xf]
          %v471 = vld [vmem:[%s1 + $0xb8] sm:$0xf]
          %v472 = vld [vmem:[%s1 + $0xbc] sm:$0xf]
          %v473 = vld [vmem:[%s1 + $0xc0] sm:$0xf]
          %v474 = vld [vmem:[%s1 + $0xc4] sm:$0xf]
          %v475 = vld [vmem:[%s1 + $0xc8] sm:$0xf]
          %v476 = vld [vmem:[%s1 + $0xcc] sm:$0xf]
          %v477 = vld [vmem:[%s1 + $0xd0] sm:$0xf]
          %v478 = vld [vmem:[%s1 + $0xd4] sm:$0xf]
          %v479 = vld [vmem:[%s1 + $0xd8] sm:$0xf]
          %v480 = vld [vmem:[%s1 + $0xdc] sm:$0xf]
          %v481 = vld [vmem:[%s1 + $0xe0] sm:$0xf]
          %v482 = vld [vmem:[%s1 + $0xe4] sm:$0xf]
          %v483 = vld [vmem:[%s1 + $0xe8] sm:$0xf]
          %v484 = vld [vmem:[%s1 + $0xec] sm:$0xf]
          %v485 = vld [vmem:[%s2] sm:$0x1]
          %v487 = vlaneseq
          %v488 = vshrl.u32 %v487, 7
          %v489 = vsub.s32 0, %v488
          %v490 = vrot.slane %v485, %v489
          %v534 = vunpack.c.l.b16 %v383
          %v535 = vunpack.c.h.b16 %v383
          %v536 = vunpack.c.l.b16 %v384
          %v537 = vunpack.c.h.b16 %v384
          %v538 = vunpack.c.l.b16 %v385
          %v539 = vunpack.c.h.b16 %v385
          %v540 = vunpack.c.l.b16 %v386
          %v541 = vunpack.c.h.b16 %v386
          %v542 = vunpack.c.l.b16 %v387
          %v543 = vunpack.c.h.b16 %v387
          %v544 = vunpack.c.l.b16 %v388
          %v545 = vunpack.c.h.b16 %v388
          %v546 = vunpack.c.l.b16 %v389
          %v547 = vunpack.c.h.b16 %v389
          %v548 = vunpack.c.l.b16 %v390
          %v549 = vunpack.c.h.b16 %v390
          %v550 = vunpack.c.l.b16 %v391
          %v551 = vunpack.c.h.b16 %v391
          %v552 = vunpack.c.l.b16 %v392
          %v553 = vunpack.c.h.b16 %v392
          %v554 = vunpack.c.l.b16 %v393
          %v555 = vunpack.c.h.b16 %v393
          %v556 = vunpack.c.l.b16 %v394
          %v557 = vunpack.c.h.b16 %v394
          %v558 = vunpack.c.l.b16 %v395
          %v559 = vunpack.c.h.b16 %v395
          %v560 = vunpack.c.l.b16 %v396
          %v561 = vunpack.c.h.b16 %v396
          %v562 = vunpack.c.l.b16 %v397
          %v563 = vunpack.c.h.b16 %v397
          %v564 = vunpack.c.l.b16 %v398
          %v565 = vunpack.c.h.b16 %v398
          %v566 = vunpack.c.l.b16 %v399
          %v567 = vunpack.c.h.b16 %v399
          %v568 = vunpack.c.l.b16 %v400
          %v569 = vunpack.c.h.b16 %v400
          %v570 = vunpack.c.l.b16 %v401
          %v571 = vunpack.c.h.b16 %v401
          %v572 = vunpack.c.l.b16 %v402
          %v573 = vunpack.c.h.b16 %v402
          %v574 = vunpack.c.l.b16 %v403
          %v575 = vunpack.c.h.b16 %v403
          %v576 = vunpack.c.l.b16 %v404
          %v577 = vunpack.c.h.b16 %v404
          %v578 = vunpack.c.l.b16 %v405
          %v579 = vunpack.c.h.b16 %v405
          %v580 = vunpack.c.l.b16 %v406
          %v581 = vunpack.c.h.b16 %v406
          %v582 = vunpack.c.l.b16 %v407
          %v583 = vunpack.c.h.b16 %v407
          %v584 = vunpack.c.l.b16 %v408
          %v585 = vunpack.c.h.b16 %v408
          %v586 = vunpack.c.l.b16 %v409
          %v587 = vunpack.c.h.b16 %v409
          %v588 = vunpack.c.l.b16 %v410
          %v589 = vunpack.c.h.b16 %v410
          %v590 = vunpack.c.l.b16 %v411
          %v591 = vunpack.c.h.b16 %v411
          %v592 = vunpack.c.l.b16 %v412
          %v593 = vunpack.c.h.b16 %v412
          %v594 = vunpack.c.l.b16 %v413
          %v595 = vunpack.c.h.b16 %v413
          %v596 = vunpack.c.l.b16 %v414
          %v597 = vunpack.c.h.b16 %v414
          %v598 = vunpack.c.l.b16 %v415
          %v599 = vunpack.c.h.b16 %v415
          %v600 = vunpack.c.l.b16 %v416
          %v601 = vunpack.c.h.b16 %v416
          %v602 = vunpack.c.l.b16 %v417
          %v603 = vunpack.c.h.b16 %v417
          %v604 = vunpack.c.l.b16 %v418
          %v605 = vunpack.c.h.b16 %v418
          %v606 = vunpack.c.l.b16 %v419
          %v607 = vunpack.c.h.b16 %v419
          %v608 = vunpack.c.l.b16 %v420
          %v609 = vunpack.c.h.b16 %v420
          %v610 = vunpack.c.l.b16 %v421
          %v611 = vunpack.c.h.b16 %v421
          %v612 = vunpack.c.l.b16 %v422
          %v613 = vunpack.c.h.b16 %v422
          %v614 = vunpack.c.l.b16 %v423
          %v615 = vunpack.c.h.b16 %v423
          %v616 = vunpack.c.l.b16 %v424
          %v617 = vunpack.c.h.b16 %v424
          %v618 = vpack.c.b16 %v538, %v534
          %v619 = vpack.c.b16 %v539, %v535
          %v620 = vpack.c.b16 %v540, %v536
          %v621 = vpack.c.b16 %v541, %v537
          %v622 = vpack.c.b16 %v546, %v542
          %v623 = vpack.c.b16 %v547, %v543
          %v624 = vpack.c.b16 %v548, %v544
          %v625 = vpack.c.b16 %v549, %v545
          %v626 = vpack.c.b16 %v554, %v550
          %v627 = vpack.c.b16 %v555, %v551
          %v628 = vpack.c.b16 %v556, %v552
          %v629 = vpack.c.b16 %v557, %v553
          %v630 = vpack.c.b16 %v562, %v558
          %v631 = vpack.c.b16 %v563, %v559
          %v632 = vpack.c.b16 %v564, %v560
          %v633 = vpack.c.b16 %v565, %v561
          %v634 = vpack.c.b16 %v570, %v566
          %v635 = vpack.c.b16 %v571, %v567
          %v636 = vpack.c.b16 %v572, %v568
          %v637 = vpack.c.b16 %v573, %v569
          %v638 = vpack.c.b16 %v578, %v574
          %v639 = vpack.c.b16 %v579, %v575
          %v640 = vpack.c.b16 %v580, %v576
          %v641 = vpack.c.b16 %v581, %v577
          %v642 = vpack.c.b16 %v586, %v582
          %v643 = vpack.c.b16 %v587, %v583
          %v644 = vpack.c.b16 %v588, %v584
          %v645 = vpack.c.b16 %v589, %v585
          %v646 = vpack.c.b16 %v594, %v590
          %v647 = vpack.c.b16 %v595, %v591
          %v648 = vpack.c.b16 %v596, %v592
          %v649 = vpack.c.b16 %v597, %v593
          %v650 = vpack.c.b16 %v602, %v598
          %v651 = vpack.c.b16 %v603, %v599
          %v652 = vpack.c.b16 %v604, %v600
          %v653 = vpack.c.b16 %v605, %v601
          %v654 = vpack.c.b16 %v610, %v606
          %v655 = vpack.c.b16 %v611, %v607
          %v656 = vpack.c.b16 %v612, %v608
          %v657 = vpack.c.b16 %v613, %v609
          %v658 = vpack.c.b16 %v614, %v614
          %v659 = vpack.c.b16 %v615, %v615
          %v660 = vpack.c.b16 %v616, %v616
          %v661 = vpack.c.b16 %v617, %v617
          %v755 = vunpack.c.l.b16 %v425
          %v756 = vunpack.c.l.b16 %v426
          %v757 = vunpack.c.l.b16 %v427
          %v758 = vunpack.c.l.b16 %v428
          %v759 = vunpack.c.l.b16 %v429
          %v760 = vunpack.c.l.b16 %v430
          %v761 = vunpack.c.l.b16 %v431
          %v762 = vunpack.c.l.b16 %v432
          %v763 = vunpack.c.l.b16 %v433
          %v764 = vunpack.c.l.b16 %v434
          %v765 = vunpack.c.l.b16 %v435
          %v766 = vunpack.c.l.b16 %v436
          %v767 = vunpack.c.l.b16 %v437
          %v768 = vunpack.c.l.b16 %v438
          %v769 = vunpack.c.l.b16 %v439
          %v770 = vunpack.c.l.b16 %v440
          %v771 = vunpack.c.l.b16 %v441
          %v772 = vunpack.c.l.b16 %v442
          %v773 = vunpack.c.l.b16 %v443
          %v774 = vunpack.c.l.b16 %v444
          %v775 = vunpack.c.l.b16 %v445
          %v776 = vunpack.c.l.b16 %v446
          %v777 = vunpack.c.l.b16 %v447
          %v778 = vunpack.c.l.b16 %v448
          %v779 = vunpack.c.l.b16 %v449
          %v780 = vunpack.c.l.b16 %v450
          %v781 = vunpack.c.l.b16 %v451
          %v782 = vunpack.c.l.b16 %v452
          %v783 = vunpack.c.l.b16 %v453
          %v784 = vunpack.c.l.b16 %v454
          %v785 = vunpack.c.l.b16 %v455
          %v786 = vunpack.c.l.b16 %v456
          %v787 = vunpack.c.l.b16 %v457
          %v788 = vunpack.c.l.b16 %v458
          %v789 = vunpack.c.l.b16 %v459
          %v790 = vunpack.c.l.b16 %v460
          %v791 = vunpack.c.l.b16 %v461
          %v792 = vunpack.c.l.b16 %v462
          %v793 = vunpack.c.l.b16 %v463
          %v794 = vunpack.c.l.b16 %v464
          %v795 = vunpack.c.l.b16 %v465
          %v796 = vunpack.c.l.b16 %v466
          %v797 = vunpack.c.l.b16 %v467
          %v798 = vunpack.c.l.b16 %v468
          %v799 = vunpack.c.l.b16 %v469
          %v800 = vunpack.c.l.b16 %v470
          %v801 = vunpack.c.l.b16 %v471
          %v802 = vunpack.c.l.b16 %v472
          %v803 = vunpack.c.l.b16 %v473
          %v804 = vunpack.c.l.b16 %v474
          %v805 = vunpack.c.l.b16 %v475
          %v806 = vunpack.c.l.b16 %v476
          %v807 = vunpack.c.l.b16 %v477
          %v808 = vunpack.c.l.b16 %v478
          %v809 = vunpack.c.l.b16 %v479
          %v810 = vunpack.c.l.b16 %v480
          %v811 = vunpack.c.l.b16 %v481
          %v812 = vunpack.c.l.b16 %v482
          %v813 = vunpack.c.l.b16 %v483
          %v814 = vunpack.c.l.b16 %v484
          %v815 = vpack.c.b16 %v756, %v755
          %v816 = vpack.c.b16 %v758, %v757
          %v817 = vpack.c.b16 %v760, %v759
          %v818 = vpack.c.b16 %v762, %v761
          %v819 = vpack.c.b16 %v764, %v763
          %v820 = vpack.c.b16 %v766, %v765
          %v821 = vpack.c.b16 %v768, %v767
          %v822 = vpack.c.b16 %v770, %v769
          %v823 = vpack.c.b16 %v772, %v771
          %v824 = vpack.c.b16 %v774, %v773
          %v825 = vpack.c.b16 %v776, %v775
          %v826 = vpack.c.b16 %v778, %v777
          %v827 = vpack.c.b16 %v780, %v779
          %v828 = vpack.c.b16 %v782, %v781
          %v829 = vpack.c.b16 %v784, %v783
          %v830 = vpack.c.b16 %v786, %v785
          %v831 = vpack.c.b16 %v788, %v787
          %v832 = vpack.c.b16 %v790, %v789
          %v833 = vpack.c.b16 %v792, %v791
          %v834 = vpack.c.b16 %v794, %v793
          %v835 = vpack.c.b16 %v796, %v795
          %v836 = vpack.c.b16 %v798, %v797
          %v837 = vpack.c.b16 %v800, %v799
          %v838 = vpack.c.b16 %v802, %v801
          %v839 = vpack.c.b16 %v804, %v803
          %v840 = vpack.c.b16 %v806, %v805
          %v841 = vpack.c.b16 %v808, %v807
          %v842 = vpack.c.b16 %v810, %v809
          %v843 = vpack.c.b16 %v812, %v811
          %v844 = vpack.c.b16 %v814, %v813
          %vm875 = vcmask 785408
          %v877 = vsel %vm875, %v621, 0
          %v880 = vsel %vm875, %v625, 0
          %v883 = vsel %vm875, %v629, 0
          %v886 = vsel %vm875, %v633, 0
          %v889 = vsel %vm875, %v637, 0
          %v892 = vsel %vm875, %v641, 0
          %v895 = vsel %vm875, %v645, 0
          %v898 = vsel %vm875, %v649, 0
          %v901 = vsel %vm875, %v653, 0
          %v904 = vsel %vm875, %v657, 0
          %v907 = vsel %vm875, %v661, 0
          %909 = vmatprep.subr.bf16.mxu0 0
          %910 = vmatpush1.bf16.msra.mxu0 %v815
          %911 = vmatprep.subr.bf16.mxu0 0
          %912 = vmatpush1.bf16.msra.mxu0 %v816
          %913 = vmatprep.subr.bf16.mxu0 0
          %914 = vmatpush1.bf16.msra.mxu0 %v817
          %915 = vmatprep.subr.bf16.mxu0 0
          %916 = vmatpush1.bf16.msra.mxu0 %v818
          %917 = vmatprep.subr.bf16.mxu0 0
          %918 = vmatpush1.bf16.msra.mxu0 %v819
          %919 = vmatprep.subr.bf16.mxu0 0
          %920 = vmatpush1.bf16.msra.mxu0 %v820
          %921 = vmatprep.subr.bf16.mxu0 0
          %922 = vmatpush1.bf16.msra.mxu0 %v821
          %923 = vmatprep.subr.bf16.mxu0 0
          %924 = vmatpush1.bf16.msra.mxu0 %v822
          %925 = vmatprep.subr.bf16.mxu0 0
          %926 = vmatpush1.bf16.msra.mxu0 %v823
          %927 = vmatprep.subr.bf16.mxu0 0
          %928 = vmatpush1.bf16.msra.mxu0 %v824
          %929 = vmatprep.subr.bf16.mxu0 0
          %930 = vmatpush1.bf16.msra.mxu0 %v825
          %931 = vmatprep.subr.bf16.mxu0 0
          %932 = vmatpush1.bf16.msra.mxu0 %v826
          %933 = vmatprep.subr.bf16.mxu0 0
          %934 = vmatpush1.bf16.msra.mxu0 %v827
          %935 = vmatprep.subr.bf16.mxu0 0
          %936 = vmatpush1.bf16.msra.mxu0 %v828
          %937 = vmatprep.subr.bf16.mxu0 0
          %938 = vmatpush1.bf16.msra.mxu0 %v829
          %939 = vmatprep.subr.bf16.mxu0 0
          %940 = vmatpush1.bf16.msra.mxu0 %v830
          %941 = vmatprep.mubr.bf16.mxu0 %v619
          %942 = vmatmul.mubr.bf16.gmra.mrb[0].mxu0 %v618
          %v943 = vpop.f32.mrb[0].mxu0
          %v944 = vadd.f32 %v490, %v943
          %v945 = vpop.f32.mrb[0].mxu0
          %v946 = vpop.f32.mrb[0].mxu0
          %v947 = vadd.f32 %v490, %v946
          %v948 = vpop.f32.mrb[0].mxu0
          %949 = vmatprep.mubr.bf16.mxu0 %v623
          %950 = vmatmul.mubr.bf16.gmra.mrb[0].mxu0 %v622
          %v951 = vpop.f32.mrb[0].mxu0
          %v952 = vadd.f32 %v490, %v951
          %v953 = vpop.f32.mrb[0].mxu0
          %v954 = vpop.f32.mrb[0].mxu0
          %v955 = vadd.f32 %v490, %v954
          %v956 = vpop.f32.mrb[0].mxu0
          %957 = vmatprep.mubr.bf16.mxu0 %v627
          %958 = vmatmul.mubr.bf16.gmra.mrb[0].mxu0 %v626
          %v959 = vpop.f32.mrb[0].mxu0
          %v960 = vadd.f32 %v490, %v959
          %v961 = vpop.f32.mrb[0].mxu0
          %v962 = vpop.f32.mrb[0].mxu0
          %v963 = vadd.f32 %v490, %v962
          %v964 = vpop.f32.mrb[0].mxu0
          %965 = vmatprep.mubr.bf16.mxu0 %v631
          %966 = vmatmul.mubr.bf16.gmra.mrb[0].mxu0 %v630
          %v967 = vpop.f32.mrb[0].mxu0
          %v968 = vadd.f32 %v490, %v967
          %v969 = vpop.f32.mrb[0].mxu0
          %v970 = vpop.f32.mrb[0].mxu0
          %v971 = vadd.f32 %v490, %v970
          %v972 = vpop.f32.mrb[0].mxu0
          %973 = vmatprep.mubr.bf16.mxu0 %v635
          %974 = vmatmul.mubr.bf16.gmra.mrb[0].mxu0 %v634
          %v975 = vpop.f32.mrb[0].mxu0
          %v976 = vadd.f32 %v490, %v975
          %v977 = vpop.f32.mrb[0].mxu0
          %v978 = vpop.f32.mrb[0].mxu0
          %v979 = vadd.f32 %v490, %v978
          %v980 = vpop.f32.mrb[0].mxu0
          %981 = vmatprep.mubr.bf16.mxu0 %v639
          %982 = vmatmul.mubr.bf16.gmra.mrb[0].mxu0 %v638
          %v983 = vpop.f32.mrb[0].mxu0
          %v984 = vadd.f32 %v490, %v983
          %v985 = vpop.f32.mrb[0].mxu0
          %v986 = vpop.f32.mrb[0].mxu0
          %v987 = vadd.f32 %v490, %v986
          %v988 = vpop.f32.mrb[0].mxu0
          %989 = vmatprep.mubr.bf16.mxu0 %v643
          %990 = vmatmul.mubr.bf16.gmra.mrb[0].mxu0 %v642
          %v991 = vpop.f32.mrb[0].mxu0
          %v992 = vadd.f32 %v490, %v991
          %v993 = vpop.f32.mrb[0].mxu0
          %v994 = vpop.f32.mrb[0].mxu0
          %v995 = vadd.f32 %v490, %v994
          %v996 = vpop.f32.mrb[0].mxu0
          %997 = vmatprep.mubr.bf16.mxu0 %v647
          %998 = vmatmul.mubr.bf16.gmra.mrb[0].mxu0 %v646
          %v999 = vpop.f32.mrb[0].mxu0
          %v1000 = vadd.f32 %v490, %v999
          %v1001 = vpop.f32.mrb[0].mxu0
          %v1002 = vpop.f32.mrb[0].mxu0
          %v1003 = vadd.f32 %v490, %v1002
          %v1004 = vpop.f32.mrb[0].mxu0
          %1005 = vmatprep.mubr.bf16.mxu0 %v651
          %1006 = vmatmul.mubr.bf16.gmra.mrb[0].mxu0 %v650
          %v1007 = vpop.f32.mrb[0].mxu0
          %v1008 = vadd.f32 %v490, %v1007
          %v1009 = vpop.f32.mrb[0].mxu0
          %v1010 = vpop.f32.mrb[0].mxu0
          %v1011 = vadd.f32 %v490, %v1010
          %v1012 = vpop.f32.mrb[0].mxu0
          %1013 = vmatprep.mubr.bf16.mxu0 %v655
          %1014 = vmatmul.mubr.bf16.gmra.mrb[0].mxu0 %v654
          %v1015 = vpop.f32.mrb[0].mxu0
          %v1016 = vadd.f32 %v490, %v1015
          %v1017 = vpop.f32.mrb[0].mxu0
          %v1018 = vpop.f32.mrb[0].mxu0
          %v1019 = vadd.f32 %v490, %v1018
          %v1020 = vpop.f32.mrb[0].mxu0
          %1021 = vmatprep.mubr.bf16.mxu0 %v659
          %1022 = vmatmul.mubr.bf16.gmra.mrb[0].mxu0 %v658
          %v1023 = vpop.f32.mrb[0].mxu0
          %v1024 = vadd.f32 %v490, %v1023
          %v1025 = vpop.f32.mrb[0].mxu0
          %v1026 = vpop.f32.mrb[0].mxu0
          %v1027 = vpop.f32.mrb[0].mxu0
          %1028 = vdwg.mxu0
          %1029 = vmatprep.subr.bf16.mxu0 0
          %1030 = vmatpush1.bf16.msra.mxu0 %v831
          %1031 = vmatprep.subr.bf16.mxu0 0
          %1032 = vmatpush1.bf16.msra.mxu0 %v832
          %1033 = vmatprep.subr.bf16.mxu0 0
          %1034 = vmatpush1.bf16.msra.mxu0 %v833
          %1035 = vmatprep.subr.bf16.mxu0 0
          %1036 = vmatpush1.bf16.msra.mxu0 %v834
          %1037 = vmatprep.subr.bf16.mxu0 0
          %1038 = vmatpush1.bf16.msra.mxu0 %v835
          %1039 = vmatprep.subr.bf16.mxu0 0
          %1040 = vmatpush1.bf16.msra.mxu0 %v836
          %1041 = vmatprep.subr.bf16.mxu0 0
          %1042 = vmatpush1.bf16.msra.mxu0 %v837
          %1043 = vmatprep.subr.bf16.mxu0 0
          %1044 = vmatpush1.bf16.msra.mxu0 %v838
          %1045 = vmatprep.subr.bf16.mxu0 0
          %1046 = vmatpush1.bf16.msra.mxu0 %v839
          %1047 = vmatprep.subr.bf16.mxu0 0
          %1048 = vmatpush1.bf16.msra.mxu0 %v840
          %1049 = vmatprep.subr.bf16.mxu0 0
          %1050 = vmatpush1.bf16.msra.mxu0 %v841
          %1051 = vmatprep.subr.bf16.mxu0 0
          %1052 = vmatpush1.bf16.msra.mxu0 %v842
          %1053 = vmatprep.subr.bf16.mxu0 0
          %1054 = vmatpush1.bf16.msra.mxu0 %v843
          %1055 = vmatprep.subr.bf16.mxu0 0
          %1056 = vmatpush1.bf16.msra.mxu0 %v844
          %1057 = vmatprep.subr.bf16.mxu0 0
          %1058 = vmatpush1.bf16.msra.mxu0 0
          %1059 = vmatprep.subr.bf16.mxu0 0
          %1060 = vmatpush1.bf16.msra.mxu0 0
          %1061 = vmatprep.mubr.bf16.mxu0 %v877
          %1062 = vmatmul.mubr.bf16.gmra.mrb[0].mxu0 %v620
          %v1063 = vpop.f32.mrb[0].mxu0
          %v1064 = vadd.f32 %v944, %v1063
          %v1065 = vpop.f32.mrb[0].mxu0
          %v1066 = vpop.f32.mrb[0].mxu0
          %v1067 = vadd.f32 %v947, %v1066
          %v1068 = vpop.f32.mrb[0].mxu0
          %1069 = vmatprep.mubr.bf16.mxu0 %v880
          %1070 = vmatmul.mubr.bf16.gmra.mrb[0].mxu0 %v624
          %v1071 = vpop.f32.mrb[0].mxu0
          %v1072 = vadd.f32 %v952, %v1071
          %v1073 = vpop.f32.mrb[0].mxu0
          %v1074 = vpop.f32.mrb[0].mxu0
          %v1075 = vadd.f32 %v955, %v1074
          %v1076 = vpop.f32.mrb[0].mxu0
          %1077 = vmatprep.mubr.bf16.mxu0 %v883
          %1078 = vmatmul.mubr.bf16.gmra.mrb[0].mxu0 %v628
          %v1079 = vpop.f32.mrb[0].mxu0
          %v1080 = vadd.f32 %v960, %v1079
          %v1081 = vpop.f32.mrb[0].mxu0
          %v1082 = vpop.f32.mrb[0].mxu0
          %v1083 = vadd.f32 %v963, %v1082
          %v1084 = vpop.f32.mrb[0].mxu0
          %1085 = vmatprep.mubr.bf16.mxu0 %v886
          %1086 = vmatmul.mubr.bf16.gmra.mrb[0].mxu0 %v632
          %v1087 = vpop.f32.mrb[0].mxu0
          %v1088 = vadd.f32 %v968, %v1087
          %v1089 = vpop.f32.mrb[0].mxu0
          %v1090 = vpop.f32.mrb[0].mxu0
          %v1091 = vadd.f32 %v971, %v1090
          %v1092 = vpop.f32.mrb[0].mxu0
          %1093 = vmatprep.mubr.bf16.mxu0 %v889
          %1094 = vmatmul.mubr.bf16.gmra.mrb[0].mxu0 %v636
          %v1095 = vpop.f32.mrb[0].mxu0
          %v1096 = vadd.f32 %v976, %v1095
          %v1097 = vpop.f32.mrb[0].mxu0
          %v1098 = vpop.f32.mrb[0].mxu0
          %v1099 = vadd.f32 %v979, %v1098
          %v1100 = vpop.f32.mrb[0].mxu0
          %1101 = vmatprep.mubr.bf16.mxu0 %v892
          %1102 = vmatmul.mubr.bf16.gmra.mrb[0].mxu0 %v640
          %v1103 = vpop.f32.mrb[0].mxu0
          %v1104 = vadd.f32 %v984, %v1103
          %v1105 = vpop.f32.mrb[0].mxu0
          %v1106 = vpop.f32.mrb[0].mxu0
          %v1107 = vadd.f32 %v987, %v1106
          %v1108 = vpop.f32.mrb[0].mxu0
          %1109 = vmatprep.mubr.bf16.mxu0 %v895
          %1110 = vmatmul.mubr.bf16.gmra.mrb[0].mxu0 %v644
          %v1111 = vpop.f32.mrb[0].mxu0
          %v1112 = vadd.f32 %v992, %v1111
          %v1113 = vpop.f32.mrb[0].mxu0
          %v1114 = vpop.f32.mrb[0].mxu0
          %v1115 = vadd.f32 %v995, %v1114
          %v1116 = vpop.f32.mrb[0].mxu0
          %1117 = vmatprep.mubr.bf16.mxu0 %v898
          %1118 = vmatmul.mubr.bf16.gmra.mrb[0].mxu0 %v648
          %v1119 = vpop.f32.mrb[0].mxu0
          %v1120 = vadd.f32 %v1000, %v1119
          %v1121 = vpop.f32.mrb[0].mxu0
          %v1122 = vpop.f32.mrb[0].mxu0
          %v1123 = vadd.f32 %v1003, %v1122
          %v1124 = vpop.f32.mrb[0].mxu0
          %1125 = vmatprep.mubr.bf16.mxu0 %v901
          %1126 = vmatmul.mubr.bf16.gmra.mrb[0].mxu0 %v652
          %v1127 = vpop.f32.mrb[0].mxu0
          %v1128 = vadd.f32 %v1008, %v1127
          %v1129 = vpop.f32.mrb[0].mxu0
          %v1130 = vpop.f32.mrb[0].mxu0
          %v1131 = vadd.f32 %v1011, %v1130
          %v1132 = vpop.f32.mrb[0].mxu0
          %1133 = vmatprep.mubr.bf16.mxu0 %v904
          %1134 = vmatmul.mubr.bf16.gmra.mrb[0].mxu0 %v656
          %v1135 = vpop.f32.mrb[0].mxu0
          %v1136 = vadd.f32 %v1016, %v1135
          %v1137 = vpop.f32.mrb[0].mxu0
          %v1138 = vpop.f32.mrb[0].mxu0
          %v1139 = vadd.f32 %v1019, %v1138
          %v1140 = vpop.f32.mrb[0].mxu0
          %1141 = vmatprep.mubr.bf16.mxu0 %v907
          %1142 = vmatmul.mubr.bf16.gmra.mrb[0].mxu0 %v660
          %v1143 = vpop.f32.mrb[0].mxu0
          %v1144 = vadd.f32 %v1024, %v1143
          %v1145 = vpop.f32.mrb[0].mxu0
          %v1146 = vpop.f32.mrb[0].mxu0
          %v1147 = vpop.f32.mrb[0].mxu0
          %1148 = vdwg.mxu0
          %v1149 = vmax.f32 %v1064, 0.0
          %v1150 = vmax.f32 %v1067, 0.0
          %v1151 = vmax.f32 %v1072, 0.0
          %v1152 = vmax.f32 %v1075, 0.0
          %v1153 = vmax.f32 %v1080, 0.0
          %v1154 = vmax.f32 %v1083, 0.0
          %v1155 = vmax.f32 %v1088, 0.0
          %v1156 = vmax.f32 %v1091, 0.0
          %v1157 = vmax.f32 %v1096, 0.0
          %v1158 = vmax.f32 %v1099, 0.0
          %v1159 = vmax.f32 %v1104, 0.0
          %v1160 = vmax.f32 %v1107, 0.0
          %v1161 = vmax.f32 %v1112, 0.0
          %v1162 = vmax.f32 %v1115, 0.0
          %v1163 = vmax.f32 %v1120, 0.0
          %v1164 = vmax.f32 %v1123, 0.0
          %v1165 = vmax.f32 %v1128, 0.0
          %v1166 = vmax.f32 %v1131, 0.0
          %v1167 = vmax.f32 %v1136, 0.0
          %v1168 = vmax.f32 %v1139, 0.0
          %v1169 = vmax.f32 %v1144, 0.0
          %v1170 = vpack.c.bf16 %v1150, %v1149
          %v1171 = vpack.c.bf16 %v1152, %v1151
          %v1172 = vpack.c.bf16 %v1154, %v1153
          %v1173 = vpack.c.bf16 %v1156, %v1155
          %v1174 = vpack.c.bf16 %v1158, %v1157
          %v1175 = vpack.c.bf16 %v1160, %v1159
          %v1176 = vpack.c.bf16 %v1162, %v1161
          %v1177 = vpack.c.bf16 %v1164, %v1163
          %v1178 = vpack.c.bf16 %v1166, %v1165
          %v1179 = vpack.c.bf16 %v1168, %v1167
          %v1180 = vpack.c.bf16 %v1169, %v1169
          %v1181 = vlaneseq
          %v1182 = vand.u32 %v1181, 127
          %v1183 = vadd.s32 %v1182, 128
          %v1184 = vld [vmem:[%s5] sm:$0xff]
          %v1185 = vld [vmem:[%s5 + $0x8] sm:$0xff]
          %v1186 = vld [vmem:[%s5 + $0x10] sm:$0xff]
          %v1187 = vld [vmem:[%s5 + $0x18] sm:$0xff]
          %v1188 = vld [vmem:[%s5 + $0x20] sm:$0xff]
          %v1189 = vld [vmem:[%s5 + $0x28] sm:$0xff]
          %v1190 = vld [vmem:[%s5 + $0x30] sm:$0xff]
          %v1191 = vld [vmem:[%s5 + $0x38] sm:$0xff]
          %v1192 = vld [vmem:[%s5 + $0x40] sm:$0xff]
          %v1193 = vld [vmem:[%s5 + $0x48] sm:$0xff]
          %v1194 = vld [vmem:[%s5 + $0x50] sm:$0xff]
          %v1195 = vld [vmem:[%s5 + $0x58] sm:$0xff]
          %v1196 = vld [vmem:[%s5 + $0x60] sm:$0x3]
          %v1197 = vld [vmem:[%s4] sm:$0x1]
          %v1199 = vlaneseq
          %v1200 = vshrl.u32 %v1199, 7
          %v1201 = vsub.s32 0, %v1200
          %v1202 = vrot.slane %v1197, %v1201
          %v1204 = vadd.f32 %v1202, 0.0
          %1205 = vset.pattern.permute.xlu0 0
          %1206 = vperm.xlu0 %1205, %v1184
          %v1207 = vpop.permute.xlu0 %1206
          %1208 = vset.pattern.permute.xlu0 0
          %1209 = vperm.xlu0 %1208, %v1185
          %v1210 = vpop.permute.xlu0 %1209
          %1211 = vset.pattern.permute.xlu0 0
          %1212 = vperm.xlu0 %1211, %v1186
          %v1213 = vpop.permute.xlu0 %1212
          %1214 = vset.pattern.permute.xlu0 0
          %1215 = vperm.xlu0 %1214, %v1187
          %v1216 = vpop.permute.xlu0 %1215
          %1217 = vset.pattern.permute.xlu0 0
          %1218 = vperm.xlu0 %1217, %v1188
          %v1219 = vpop.permute.xlu0 %1218
          %1220 = vset.pattern.permute.xlu0 0
          %1221 = vperm.xlu0 %1220, %v1189
          %v1222 = vpop.permute.xlu0 %1221
          %1223 = vset.pattern.permute.xlu0 0
          %1224 = vperm.xlu0 %1223, %v1190
          %v1225 = vpop.permute.xlu0 %1224
          %1226 = vset.pattern.permute.xlu0 0
          %1227 = vperm.xlu0 %1226, %v1191
          %v1228 = vpop.permute.xlu0 %1227
          %1229 = vset.pattern.permute.xlu0 0
          %1230 = vperm.xlu0 %1229, %v1192
          %v1231 = vpop.permute.xlu0 %1230
          %1232 = vset.pattern.permute.xlu0 0
          %1233 = vperm.xlu0 %1232, %v1193
          %v1234 = vpop.permute.xlu0 %1233
          %1235 = vset.pattern.permute.xlu0 0
          %1236 = vperm.xlu0 %1235, %v1194
          %v1237 = vpop.permute.xlu0 %1236
          %1238 = vset.pattern.permute.xlu0 0
          %1239 = vperm.xlu0 %1238, %v1195
          %v1240 = vpop.permute.xlu0 %1239
          %1241 = vset.pattern.permute.xlu0 0
          %1242 = vperm.xlu0 %1241, %v1196
          %v1243 = vpop.permute.xlu0 %1242
          %vm1244 = vcmp.eq.s32.totalorder %v1182, %v1207
          %vm1245 = vcmp.eq.s32.totalorder %v1183, %v1207
          %vm1246 = vcmp.eq.s32.totalorder %v1182, %v1210
          %vm1247 = vcmp.eq.s32.totalorder %v1183, %v1210
          %vm1248 = vcmp.eq.s32.totalorder %v1182, %v1213
          %vm1249 = vcmp.eq.s32.totalorder %v1183, %v1213
          %vm1250 = vcmp.eq.s32.totalorder %v1182, %v1216
          %vm1251 = vcmp.eq.s32.totalorder %v1183, %v1216
          %vm1252 = vcmp.eq.s32.totalorder %v1182, %v1219
          %vm1253 = vcmp.eq.s32.totalorder %v1183, %v1219
          %vm1254 = vcmp.eq.s32.totalorder %v1182, %v1222
          %vm1255 = vcmp.eq.s32.totalorder %v1183, %v1222
          %vm1256 = vcmp.eq.s32.totalorder %v1182, %v1225
          %vm1257 = vcmp.eq.s32.totalorder %v1183, %v1225
          %vm1258 = vcmp.eq.s32.totalorder %v1182, %v1228
          %vm1259 = vcmp.eq.s32.totalorder %v1183, %v1228
          %vm1260 = vcmp.eq.s32.totalorder %v1182, %v1231
          %vm1261 = vcmp.eq.s32.totalorder %v1183, %v1231
          %vm1262 = vcmp.eq.s32.totalorder %v1182, %v1234
          %vm1263 = vcmp.eq.s32.totalorder %v1183, %v1234
          %vm1264 = vcmp.eq.s32.totalorder %v1182, %v1237
          %vm1265 = vcmp.eq.s32.totalorder %v1183, %v1237
          %vm1266 = vcmp.eq.s32.totalorder %v1182, %v1240
          %vm1267 = vcmp.eq.s32.totalorder %v1183, %v1240
          %vm1268 = vcmp.eq.s32.totalorder %v1182, %v1243
          %vm1269 = vcmp.eq.s32.totalorder %v1183, %v1243
          %v1270 = vsel %vm1244, 1.0, 0.0
          %v1271 = vsel %vm1245, 1.0, 0.0
          %v1272 = vsel %vm1246, 1.0, 0.0
          %v1273 = vsel %vm1247, 1.0, 0.0
          %v1274 = vsel %vm1248, 1.0, 0.0
          %v1275 = vsel %vm1249, 1.0, 0.0
          %v1276 = vsel %vm1250, 1.0, 0.0
          %v1277 = vsel %vm1251, 1.0, 0.0
          %v1278 = vsel %vm1252, 1.0, 0.0
          %v1279 = vsel %vm1253, 1.0, 0.0
          %v1280 = vsel %vm1254, 1.0, 0.0
          %v1281 = vsel %vm1255, 1.0, 0.0
          %v1282 = vsel %vm1256, 1.0, 0.0
          %v1283 = vsel %vm1257, 1.0, 0.0
          %v1284 = vsel %vm1258, 1.0, 0.0
          %v1285 = vsel %vm1259, 1.0, 0.0
          %v1286 = vsel %vm1260, 1.0, 0.0
          %v1287 = vsel %vm1261, 1.0, 0.0
          %v1288 = vsel %vm1262, 1.0, 0.0
          %v1289 = vsel %vm1263, 1.0, 0.0
          %v1290 = vsel %vm1264, 1.0, 0.0
          %v1291 = vsel %vm1265, 1.0, 0.0
          %v1292 = vsel %vm1266, 1.0, 0.0
          %v1293 = vsel %vm1267, 1.0, 0.0
          %v1294 = vsel %vm1268, 1.0, 0.0
          %v1295 = vsel %vm1269, 1.0, 0.0
          %v1296 = vpack.c.bf16 %v1272, %v1270
          %v1297 = vpack.c.bf16 %v1273, %v1271
          %v1298 = vpack.c.bf16 %v1276, %v1274
          %v1299 = vpack.c.bf16 %v1277, %v1275
          %v1300 = vpack.c.bf16 %v1280, %v1278
          %v1301 = vpack.c.bf16 %v1281, %v1279
          %v1302 = vpack.c.bf16 %v1284, %v1282
          %v1303 = vpack.c.bf16 %v1285, %v1283
          %v1304 = vpack.c.bf16 %v1288, %v1286
          %v1305 = vpack.c.bf16 %v1289, %v1287
          %v1306 = vpack.c.bf16 %v1292, %v1290
          %v1307 = vpack.c.bf16 %v1293, %v1291
          %v1308 = vpack.c.bf16 %v1294, %v1294
          %v1309 = vpack.c.bf16 %v1295, %v1295
          %vm1310 = vcmask 277504
          %v1312 = vsel %vm1310, %v1297, 0
          %v1315 = vsel %vm1310, %v1299, 0
          %v1318 = vsel %vm1310, %v1301, 0
          %v1321 = vsel %vm1310, %v1303, 0
          %v1324 = vsel %vm1310, %v1305, 0
          %v1327 = vsel %vm1310, %v1307, 0
          %v1330 = vsel %vm1310, %v1309, 0
          %vm1332 = vcmask 1040384
          %v1334 = vsel %vm1332, %v1180, 0
          %1336 = vmatprep.subr.bf16.mxu0 0
          %1337 = vmatpush1.bf16.msra.mxu0 %v1170
          %1338 = vmatprep.subr.bf16.mxu0 0
          %1339 = vmatpush1.bf16.msra.mxu0 %v1171
          %1340 = vmatprep.subr.bf16.mxu0 0
          %1341 = vmatpush1.bf16.msra.mxu0 %v1172
          %1342 = vmatprep.subr.bf16.mxu0 0
          %1343 = vmatpush1.bf16.msra.mxu0 %v1173
          %1344 = vmatprep.subr.bf16.mxu0 0
          %1345 = vmatpush1.bf16.msra.mxu0 %v1174
          %1346 = vmatprep.subr.bf16.mxu0 0
          %1347 = vmatpush1.bf16.msra.mxu0 %v1175
          %1348 = vmatprep.subr.bf16.mxu0 0
          %1349 = vmatpush1.bf16.msra.mxu0 %v1176
          %1350 = vmatprep.subr.bf16.mxu0 0
          %1351 = vmatpush1.bf16.msra.mxu0 %v1177
          %1352 = vmatprep.subr.bf16.mxu0 0
          %1353 = vmatpush1.bf16.msra.mxu0 %v1178
          %1354 = vmatprep.subr.bf16.mxu0 0
          %1355 = vmatpush1.bf16.msra.mxu0 %v1179
          %1356 = vmatprep.subr.bf16.mxu0 0
          %1357 = vmatpush1.bf16.msra.mxu0 %v1334
          %1358 = vmatprep.subr.bf16.mxu0 0
          %1359 = vmatpush1.bf16.msra.mxu0 0
          %1360 = vmatprep.subr.bf16.mxu0 0
          %1361 = vmatpush1.bf16.msra.mxu0 0
          %1362 = vmatprep.subr.bf16.mxu0 0
          %1363 = vmatpush1.bf16.msra.mxu0 0
          %1364 = vmatprep.subr.bf16.mxu0 0
          %1365 = vmatpush1.bf16.msra.mxu0 0
          %1366 = vmatprep.subr.bf16.mxu0 0
          %1367 = vmatpush1.bf16.msra.mxu0 0
          %1368 = vmatprep.mubr.bf16.mxu0 %v1312
          %1369 = vmatmul.mubr.bf16.gmra.mrb[0].mxu0 %v1296
          %v1370 = vpop.f32.mrb[0].mxu0
          %v1371 = vadd.f32 0.0, %v1370
          %v1372 = vpop.f32.mrb[0].mxu0
          %v1373 = vpop.f32.mrb[0].mxu0
          %v1374 = vadd.f32 0.0, %v1373
          %v1375 = vpop.f32.mrb[0].mxu0
          %1376 = vmatprep.mubr.bf16.mxu0 %v1315
          %1377 = vmatmul.mubr.bf16.gmra.mrb[0].mxu0 %v1298
          %v1378 = vpop.f32.mrb[0].mxu0
          %v1379 = vadd.f32 0.0, %v1378
          %v1380 = vpop.f32.mrb[0].mxu0
          %v1381 = vpop.f32.mrb[0].mxu0
          %v1382 = vadd.f32 0.0, %v1381
          %v1383 = vpop.f32.mrb[0].mxu0
          %1384 = vmatprep.mubr.bf16.mxu0 %v1318
          %1385 = vmatmul.mubr.bf16.gmra.mrb[0].mxu0 %v1300
          %v1386 = vpop.f32.mrb[0].mxu0
          %v1387 = vadd.f32 0.0, %v1386
          %v1388 = vpop.f32.mrb[0].mxu0
          %v1389 = vpop.f32.mrb[0].mxu0
          %v1390 = vadd.f32 0.0, %v1389
          %v1391 = vpop.f32.mrb[0].mxu0
          %1392 = vmatprep.mubr.bf16.mxu0 %v1321
          %1393 = vmatmul.mubr.bf16.gmra.mrb[0].mxu0 %v1302
          %v1394 = vpop.f32.mrb[0].mxu0
          %v1395 = vadd.f32 0.0, %v1394
          %v1396 = vpop.f32.mrb[0].mxu0
          %v1397 = vpop.f32.mrb[0].mxu0
          %v1398 = vadd.f32 0.0, %v1397
          %v1399 = vpop.f32.mrb[0].mxu0
          %1400 = vmatprep.mubr.bf16.mxu0 %v1324
          %1401 = vmatmul.mubr.bf16.gmra.mrb[0].mxu0 %v1304
          %v1402 = vpop.f32.mrb[0].mxu0
          %v1403 = vadd.f32 0.0, %v1402
          %v1404 = vpop.f32.mrb[0].mxu0
          %v1405 = vpop.f32.mrb[0].mxu0
          %v1406 = vadd.f32 0.0, %v1405
          %v1407 = vpop.f32.mrb[0].mxu0
          %1408 = vmatprep.mubr.bf16.mxu0 %v1327
          %1409 = vmatmul.mubr.bf16.gmra.mrb[0].mxu0 %v1306
          %v1410 = vpop.f32.mrb[0].mxu0
          %v1411 = vadd.f32 0.0, %v1410
          %v1412 = vpop.f32.mrb[0].mxu0
          %v1413 = vpop.f32.mrb[0].mxu0
          %v1414 = vadd.f32 0.0, %v1413
          %v1415 = vpop.f32.mrb[0].mxu0
          %1416 = vmatprep.mubr.bf16.mxu0 %v1330
          %1417 = vmatmul.mubr.bf16.gmra.mrb[0].mxu0 %v1308
          %v1418 = vpop.f32.mrb[0].mxu0
          %v1419 = vadd.f32 0.0, %v1418
          %v1420 = vpop.f32.mrb[0].mxu0
          %v1421 = vpop.f32.mrb[0].mxu0
          %v1422 = vpop.f32.mrb[0].mxu0
          %1423 = vdwg.mxu0
          %v1424 = vpack.c.bf16 %v1374, %v1371
          %v1425 = vpack.c.bf16 %v1382, %v1379
          %v1426 = vpack.c.bf16 %v1390, %v1387
          %v1427 = vpack.c.bf16 %v1398, %v1395
          %v1428 = vpack.c.bf16 %v1406, %v1403
          %v1429 = vpack.c.bf16 %v1414, %v1411
          %v1430 = vpack.c.bf16 %v1419, %v1419
          %v1431 = vld [vmem:[%s3] sm:$0xf]
          %v1432 = vld [vmem:[%s3 + $0x4] sm:$0xf]
          %v1435 = vunpack.c.l.b16 %v1431
          %v1436 = vunpack.c.l.b16 %v1432
          %v1437 = vpack.c.b16 %v1436, %v1435
          %vm1438 = vcmask 121856
          %v1440 = vsel %vm1438, %v1424, 0
          %v1443 = vsel %vm1438, %v1425, 0
          %v1446 = vsel %vm1438, %v1426, 0
          %v1449 = vsel %vm1438, %v1427, 0
          %v1452 = vsel %vm1438, %v1428, 0
          %v1455 = vsel %vm1438, %v1429, 0
          %v1458 = vsel %vm1438, %v1430, 0
          %vm1460 = vcmask 1046528
          %vm1461 = vcmask 1047552
          %v1462 = vsel %vm1460, 4294967295, 65535
          %v1463 = vsel %vm1461, %v1462, 0
          %v1465 = vand.u32 %v1437, %v1463
          %1467 = vmatprep.subr.bf16.mxu0 0
          %1468 = vmatpush1.bf16.msra.mxu0 %v1465
          %1469 = vmatprep.subr.bf16.mxu0 0
          %1470 = vmatpush1.bf16.msra.mxu0 0
          %1471 = vmatprep.subr.bf16.mxu0 0
          %1472 = vmatpush1.bf16.msra.mxu0 0
          %1473 = vmatprep.subr.bf16.mxu0 0
          %1474 = vmatpush1.bf16.msra.mxu0 0
          %1475 = vmatprep.subr.bf16.mxu0 0
          %1476 = vmatpush1.bf16.msra.mxu0 0
          %1477 = vmatprep.subr.bf16.mxu0 0
          %1478 = vmatpush1.bf16.msra.mxu0 0
          %1479 = vmatprep.subr.bf16.mxu0 0
          %1480 = vmatpush1.bf16.msra.mxu0 0
          %1481 = vmatprep.subr.bf16.mxu0 0
          %1482 = vmatpush1.bf16.msra.mxu0 0
          %1483 = vmatprep.subr.bf16.mxu0 0
          %1484 = vmatpush1.bf16.msra.mxu0 0
          %1485 = vmatprep.subr.bf16.mxu0 0
          %1486 = vmatpush1.bf16.msra.mxu0 0
          %1487 = vmatprep.subr.bf16.mxu0 0
          %1488 = vmatpush1.bf16.msra.mxu0 0
          %1489 = vmatprep.subr.bf16.mxu0 0
          %1490 = vmatpush1.bf16.msra.mxu0 0
          %1491 = vmatprep.subr.bf16.mxu0 0
          %1492 = vmatpush1.bf16.msra.mxu0 0
          %1493 = vmatprep.subr.bf16.mxu0 0
          %1494 = vmatpush1.bf16.msra.mxu0 0
          %1495 = vmatprep.subr.bf16.mxu0 0
          %1496 = vmatpush1.bf16.msra.mxu0 0
          %1497 = vmatprep.subr.bf16.mxu0 0
          %1498 = vmatpush1.bf16.msra.mxu0 0
          %1499 = vmatprep.mubr.bf16.mxu0 0
          %1500 = vmatmul.mubr.bf16.gmra.mrb[0].mxu0 %v1440
          %v1501 = vpop.f32.mrb[0].mxu0
          %v1502 = vadd.f32 0.0, %v1501
          %v1503 = vpop.f32.mrb[0].mxu0
          %v1504 = vpop.f32.mrb[0].mxu0
          %v1505 = vadd.f32 0.0, %v1504
          %v1506 = vpop.f32.mrb[0].mxu0
          %1507 = vmatprep.mubr.bf16.mxu0 0
          %1508 = vmatmul.mubr.bf16.gmra.mrb[0].mxu0 %v1443
          %v1509 = vpop.f32.mrb[0].mxu0
          %v1510 = vadd.f32 0.0, %v1509
          %v1511 = vpop.f32.mrb[0].mxu0
          %v1512 = vpop.f32.mrb[0].mxu0
          %v1513 = vadd.f32 0.0, %v1512
          %v1514 = vpop.f32.mrb[0].mxu0
          %1515 = vmatprep.mubr.bf16.mxu0 0
          %1516 = vmatmul.mubr.bf16.gmra.mrb[0].mxu0 %v1446
          %v1517 = vpop.f32.mrb[0].mxu0
          %v1518 = vadd.f32 0.0, %v1517
          %v1519 = vpop.f32.mrb[0].mxu0
          %v1520 = vpop.f32.mrb[0].mxu0
          %v1521 = vadd.f32 0.0, %v1520
          %v1522 = vpop.f32.mrb[0].mxu0
          %1523 = vmatprep.mubr.bf16.mxu0 0
          %1524 = vmatmul.mubr.bf16.gmra.mrb[0].mxu0 %v1449
          %v1525 = vpop.f32.mrb[0].mxu0
          %v1526 = vadd.f32 0.0, %v1525
          %v1527 = vpop.f32.mrb[0].mxu0
          %v1528 = vpop.f32.mrb[0].mxu0
          %v1529 = vadd.f32 0.0, %v1528
          %v1530 = vpop.f32.mrb[0].mxu0
          %1531 = vmatprep.mubr.bf16.mxu0 0
          %1532 = vmatmul.mubr.bf16.gmra.mrb[0].mxu0 %v1452
          %v1533 = vpop.f32.mrb[0].mxu0
          %v1534 = vadd.f32 0.0, %v1533
          %v1535 = vpop.f32.mrb[0].mxu0
          %v1536 = vpop.f32.mrb[0].mxu0
          %v1537 = vadd.f32 0.0, %v1536
          %v1538 = vpop.f32.mrb[0].mxu0
          %1539 = vmatprep.mubr.bf16.mxu0 0
          %1540 = vmatmul.mubr.bf16.gmra.mrb[0].mxu0 %v1455
          %v1541 = vpop.f32.mrb[0].mxu0
          %v1542 = vadd.f32 0.0, %v1541
          %v1543 = vpop.f32.mrb[0].mxu0
          %v1544 = vpop.f32.mrb[0].mxu0
          %v1545 = vadd.f32 0.0, %v1544
          %v1546 = vpop.f32.mrb[0].mxu0
          %1547 = vmatprep.mubr.bf16.mxu0 0
          %1548 = vmatmul.mubr.bf16.gmra.mrb[0].mxu0 %v1458
          %v1549 = vpop.f32.mrb[0].mxu0
          %v1550 = vadd.f32 0.0, %v1549
          %v1551 = vpop.f32.mrb[0].mxu0
          %v1552 = vpop.f32.mrb[0].mxu0
          %v1553 = vpop.f32.mrb[0].mxu0
          %1554 = vdwg.mxu0
          %v1555 = vadd.f32 %v1204, %v1502
          %v1556 = vadd.f32 %v1204, %v1505
          %v1557 = vadd.f32 %v1204, %v1510
          %v1558 = vadd.f32 %v1204, %v1513
          %v1559 = vadd.f32 %v1204, %v1518
          %v1560 = vadd.f32 %v1204, %v1521
          %v1561 = vadd.f32 %v1204, %v1526
          %v1562 = vadd.f32 %v1204, %v1529
          %v1563 = vadd.f32 %v1204, %v1534
          %v1564 = vadd.f32 %v1204, %v1537
          %v1565 = vadd.f32 %v1204, %v1542
          %v1566 = vadd.f32 %v1204, %v1545
          %v1567 = vadd.f32 %v1204, %v1550
          %v1568 = vadd.s32 %v1184, 1
          %v1569 = vadd.s32 %v1185, 1
          %v1570 = vadd.s32 %v1186, 1
          %v1571 = vadd.s32 %v1187, 1
          %v1572 = vadd.s32 %v1188, 1
          %v1573 = vadd.s32 %v1189, 1
          %v1574 = vadd.s32 %v1190, 1
          %v1575 = vadd.s32 %v1191, 1
          %v1576 = vadd.s32 %v1192, 1
          %v1577 = vadd.s32 %v1193, 1
          %v1578 = vadd.s32 %v1194, 1
          %v1579 = vadd.s32 %v1195, 1
          %v1580 = vadd.s32 %v1196, 1
          %1581 = vset.pattern.permute.xlu0 0
          %1582 = vperm.xlu0 %1581, %v1568
          %v1583 = vpop.permute.xlu0 %1582
          %1584 = vset.pattern.permute.xlu0 0
          %1585 = vperm.xlu0 %1584, %v1569
          %v1586 = vpop.permute.xlu0 %1585
          %1587 = vset.pattern.permute.xlu0 0
          %1588 = vperm.xlu0 %1587, %v1570
          %v1589 = vpop.permute.xlu0 %1588
          %1590 = vset.pattern.permute.xlu0 0
          %1591 = vperm.xlu0 %1590, %v1571
          %v1592 = vpop.permute.xlu0 %1591
          %1593 = vset.pattern.permute.xlu0 0
          %1594 = vperm.xlu0 %1593, %v1572
          %v1595 = vpop.permute.xlu0 %1594
          %1596 = vset.pattern.permute.xlu0 0
          %1597 = vperm.xlu0 %1596, %v1573
          %v1598 = vpop.permute.xlu0 %1597
          %1599 = vset.pattern.permute.xlu0 0
          %1600 = vperm.xlu0 %1599, %v1574
          %v1601 = vpop.permute.xlu0 %1600
          %1602 = vset.pattern.permute.xlu0 0
          %1603 = vperm.xlu0 %1602, %v1575
          %v1604 = vpop.permute.xlu0 %1603
          %1605 = vset.pattern.permute.xlu0 0
          %1606 = vperm.xlu0 %1605, %v1576
          %v1607 = vpop.permute.xlu0 %1606
          %1608 = vset.pattern.permute.xlu0 0
          %1609 = vperm.xlu0 %1608, %v1577
          %v1610 = vpop.permute.xlu0 %1609
          %1611 = vset.pattern.permute.xlu0 0
          %1612 = vperm.xlu0 %1611, %v1578
          %v1613 = vpop.permute.xlu0 %1612
          %1614 = vset.pattern.permute.xlu0 0
          %1615 = vperm.xlu0 %1614, %v1579
          %v1616 = vpop.permute.xlu0 %1615
          %1617 = vset.pattern.permute.xlu0 0
          %1618 = vperm.xlu0 %1617, %v1580
          %v1619 = vpop.permute.xlu0 %1618
          %vm1620 = vcmp.eq.s32.totalorder %v1182, %v1583
          %vm1621 = vcmp.eq.s32.totalorder %v1183, %v1583
          %vm1622 = vcmp.eq.s32.totalorder %v1182, %v1586
          %vm1623 = vcmp.eq.s32.totalorder %v1183, %v1586
          %vm1624 = vcmp.eq.s32.totalorder %v1182, %v1589
          %vm1625 = vcmp.eq.s32.totalorder %v1183, %v1589
          %vm1626 = vcmp.eq.s32.totalorder %v1182, %v1592
          %vm1627 = vcmp.eq.s32.totalorder %v1183, %v1592
          %vm1628 = vcmp.eq.s32.totalorder %v1182, %v1595
          %vm1629 = vcmp.eq.s32.totalorder %v1183, %v1595
          %vm1630 = vcmp.eq.s32.totalorder %v1182, %v1598
          %vm1631 = vcmp.eq.s32.totalorder %v1183, %v1598
          %vm1632 = vcmp.eq.s32.totalorder %v1182, %v1601
          %vm1633 = vcmp.eq.s32.totalorder %v1183, %v1601
          %vm1634 = vcmp.eq.s32.totalorder %v1182, %v1604
          %vm1635 = vcmp.eq.s32.totalorder %v1183, %v1604
          %vm1636 = vcmp.eq.s32.totalorder %v1182, %v1607
          %vm1637 = vcmp.eq.s32.totalorder %v1183, %v1607
          %vm1638 = vcmp.eq.s32.totalorder %v1182, %v1610
          %vm1639 = vcmp.eq.s32.totalorder %v1183, %v1610
          %vm1640 = vcmp.eq.s32.totalorder %v1182, %v1613
          %vm1641 = vcmp.eq.s32.totalorder %v1183, %v1613
          %vm1642 = vcmp.eq.s32.totalorder %v1182, %v1616
          %vm1643 = vcmp.eq.s32.totalorder %v1183, %v1616
          %vm1644 = vcmp.eq.s32.totalorder %v1182, %v1619
          %vm1645 = vcmp.eq.s32.totalorder %v1183, %v1619
          %v1646 = vsel %vm1620, 1.0, 0.0
          %v1647 = vsel %vm1621, 1.0, 0.0
          %v1648 = vsel %vm1622, 1.0, 0.0
          %v1649 = vsel %vm1623, 1.0, 0.0
          %v1650 = vsel %vm1624, 1.0, 0.0
          %v1651 = vsel %vm1625, 1.0, 0.0
          %v1652 = vsel %vm1626, 1.0, 0.0
          %v1653 = vsel %vm1627, 1.0, 0.0
          %v1654 = vsel %vm1628, 1.0, 0.0
          %v1655 = vsel %vm1629, 1.0, 0.0
          %v1656 = vsel %vm1630, 1.0, 0.0
          %v1657 = vsel %vm1631, 1.0, 0.0
          %v1658 = vsel %vm1632, 1.0, 0.0
          %v1659 = vsel %vm1633, 1.0, 0.0
          %v1660 = vsel %vm1634, 1.0, 0.0
          %v1661 = vsel %vm1635, 1.0, 0.0
          %v1662 = vsel %vm1636, 1.0, 0.0
          %v1663 = vsel %vm1637, 1.0, 0.0
          %v1664 = vsel %vm1638, 1.0, 0.0
          %v1665 = vsel %vm1639, 1.0, 0.0
          %v1666 = vsel %vm1640, 1.0, 0.0
          %v1667 = vsel %vm1641, 1.0, 0.0
          %v1668 = vsel %vm1642, 1.0, 0.0
          %v1669 = vsel %vm1643, 1.0, 0.0
          %v1670 = vsel %vm1644, 1.0, 0.0
          %v1671 = vsel %vm1645, 1.0, 0.0
          %v1672 = vpack.c.bf16 %v1648, %v1646
          %v1673 = vpack.c.bf16 %v1649, %v1647
          %v1674 = vpack.c.bf16 %v1652, %v1650
          %v1675 = vpack.c.bf16 %v1653, %v1651
          %v1676 = vpack.c.bf16 %v1656, %v1654
          %v1677 = vpack.c.bf16 %v1657, %v1655
          %v1678 = vpack.c.bf16 %v1660, %v1658
          %v1679 = vpack.c.bf16 %v1661, %v1659
          %v1680 = vpack.c.bf16 %v1664, %v1662
          %v1681 = vpack.c.bf16 %v1665, %v1663
          %v1682 = vpack.c.bf16 %v1668, %v1666
          %v1683 = vpack.c.bf16 %v1669, %v1667
          %v1684 = vpack.c.bf16 %v1670, %v1670
          %v1685 = vpack.c.bf16 %v1671, %v1671
          %v1687 = vsel %vm1310, %v1673, 0
          %v1690 = vsel %vm1310, %v1675, 0
          %v1693 = vsel %vm1310, %v1677, 0
          %v1696 = vsel %vm1310, %v1679, 0
          %v1699 = vsel %vm1310, %v1681, 0
          %v1702 = vsel %vm1310, %v1683, 0
          %v1705 = vsel %vm1310, %v1685, 0
          %1707 = vmatprep.subr.bf16.mxu0 0
          %1708 = vmatpush1.bf16.msra.mxu0 %v1170
          %1709 = vmatprep.subr.bf16.mxu0 0
          %1710 = vmatpush1.bf16.msra.mxu0 %v1171
          %1711 = vmatprep.subr.bf16.mxu0 0
          %1712 = vmatpush1.bf16.msra.mxu0 %v1172
          %1713 = vmatprep.subr.bf16.mxu0 0
          %1714 = vmatpush1.bf16.msra.mxu0 %v1173
          %1715 = vmatprep.subr.bf16.mxu0 0
          %1716 = vmatpush1.bf16.msra.mxu0 %v1174
          %1717 = vmatprep.subr.bf16.mxu0 0
          %1718 = vmatpush1.bf16.msra.mxu0 %v1175
          %1719 = vmatprep.subr.bf16.mxu0 0
          %1720 = vmatpush1.bf16.msra.mxu0 %v1176
          %1721 = vmatprep.subr.bf16.mxu0 0
          %1722 = vmatpush1.bf16.msra.mxu0 %v1177
          %1723 = vmatprep.subr.bf16.mxu0 0
          %1724 = vmatpush1.bf16.msra.mxu0 %v1178
          %1725 = vmatprep.subr.bf16.mxu0 0
          %1726 = vmatpush1.bf16.msra.mxu0 %v1179
          %1727 = vmatprep.subr.bf16.mxu0 0
          %1728 = vmatpush1.bf16.msra.mxu0 %v1334
          %1729 = vmatprep.subr.bf16.mxu0 0
          %1730 = vmatpush1.bf16.msra.mxu0 0
          %1731 = vmatprep.subr.bf16.mxu0 0
          %1732 = vmatpush1.bf16.msra.mxu0 0
          %1733 = vmatprep.subr.bf16.mxu0 0
          %1734 = vmatpush1.bf16.msra.mxu0 0
          %1735 = vmatprep.subr.bf16.mxu0 0
          %1736 = vmatpush1.bf16.msra.mxu0 0
          %1737 = vmatprep.subr.bf16.mxu0 0
          %1738 = vmatpush1.bf16.msra.mxu0 0
          %1739 = vmatprep.mubr.bf16.mxu0 %v1687
          %1740 = vmatmul.mubr.bf16.gmra.mrb[0].mxu0 %v1672
          %v1741 = vpop.f32.mrb[0].mxu0
          %v1742 = vadd.f32 0.0, %v1741
          %v1743 = vpop.f32.mrb[0].mxu0
          %v1744 = vpop.f32.mrb[0].mxu0
          %v1745 = vadd.f32 0.0, %v1744
          %v1746 = vpop.f32.mrb[0].mxu0
          %1747 = vmatprep.mubr.bf16.mxu0 %v1690
          %1748 = vmatmul.mubr.bf16.gmra.mrb[0].mxu0 %v1674
          %v1749 = vpop.f32.mrb[0].mxu0
          %v1750 = vadd.f32 0.0, %v1749
          %v1751 = vpop.f32.mrb[0].mxu0
          %v1752 = vpop.f32.mrb[0].mxu0
          %v1753 = vadd.f32 0.0, %v1752
          %v1754 = vpop.f32.mrb[0].mxu0
          %1755 = vmatprep.mubr.bf16.mxu0 %v1693
          %1756 = vmatmul.mubr.bf16.gmra.mrb[0].mxu0 %v1676
          %v1757 = vpop.f32.mrb[0].mxu0
          %v1758 = vadd.f32 0.0, %v1757
          %v1759 = vpop.f32.mrb[0].mxu0
          %v1760 = vpop.f32.mrb[0].mxu0
          %v1761 = vadd.f32 0.0, %v1760
          %v1762 = vpop.f32.mrb[0].mxu0
          %1763 = vmatprep.mubr.bf16.mxu0 %v1696
          %1764 = vmatmul.mubr.bf16.gmra.mrb[0].mxu0 %v1678
          %v1765 = vpop.f32.mrb[0].mxu0
          %v1766 = vadd.f32 0.0, %v1765
          %v1767 = vpop.f32.mrb[0].mxu0
          %v1768 = vpop.f32.mrb[0].mxu0
          %v1769 = vadd.f32 0.0, %v1768
          %v1770 = vpop.f32.mrb[0].mxu0
          %1771 = vmatprep.mubr.bf16.mxu0 %v1699
          %1772 = vmatmul.mubr.bf16.gmra.mrb[0].mxu0 %v1680
          %v1773 = vpop.f32.mrb[0].mxu0
          %v1774 = vadd.f32 0.0, %v1773
          %v1775 = vpop.f32.mrb[0].mxu0
          %v1776 = vpop.f32.mrb[0].mxu0
          %v1777 = vadd.f32 0.0, %v1776
          %v1778 = vpop.f32.mrb[0].mxu0
          %1779 = vmatprep.mubr.bf16.mxu0 %v1702
          %1780 = vmatmul.mubr.bf16.gmra.mrb[0].mxu0 %v1682
          %v1781 = vpop.f32.mrb[0].mxu0
          %v1782 = vadd.f32 0.0, %v1781
          %v1783 = vpop.f32.mrb[0].mxu0
          %v1784 = vpop.f32.mrb[0].mxu0
          %v1785 = vadd.f32 0.0, %v1784
          %v1786 = vpop.f32.mrb[0].mxu0
          %1787 = vmatprep.mubr.bf16.mxu0 %v1705
          %1788 = vmatmul.mubr.bf16.gmra.mrb[0].mxu0 %v1684
          %v1789 = vpop.f32.mrb[0].mxu0
          %v1790 = vadd.f32 0.0, %v1789
          %v1791 = vpop.f32.mrb[0].mxu0
          %v1792 = vpop.f32.mrb[0].mxu0
          %v1793 = vpop.f32.mrb[0].mxu0
          %1794 = vdwg.mxu0
          %v1795 = vpack.c.bf16 %v1745, %v1742
          %v1796 = vpack.c.bf16 %v1753, %v1750
          %v1797 = vpack.c.bf16 %v1761, %v1758
          %v1798 = vpack.c.bf16 %v1769, %v1766
          %v1799 = vpack.c.bf16 %v1777, %v1774
          %v1800 = vpack.c.bf16 %v1785, %v1782
          %v1801 = vpack.c.bf16 %v1790, %v1790
          %s1802 = scalar_lea.vmem %s3, 8
          %v1803 = vld [vmem:[%s1802] sm:$0xf]
          %v1804 = vld [vmem:[%s1802 + $0x4] sm:$0xf]
          %v1807 = vunpack.c.l.b16 %v1803
          %v1808 = vunpack.c.l.b16 %v1804
          %v1809 = vpack.c.b16 %v1808, %v1807
          %v1811 = vsel %vm1438, %v1795, 0
          %v1814 = vsel %vm1438, %v1796, 0
          %v1817 = vsel %vm1438, %v1797, 0
          %v1820 = vsel %vm1438, %v1798, 0
          %v1823 = vsel %vm1438, %v1799, 0
          %v1826 = vsel %vm1438, %v1800, 0
          %v1829 = vsel %vm1438, %v1801, 0
          %v1832 = vand.u32 %v1809, %v1463
          %1834 = vmatprep.subr.bf16.mxu0 0
          %1835 = vmatpush1.bf16.msra.mxu0 %v1832
          %1836 = vmatprep.subr.bf16.mxu0 0
          %1837 = vmatpush1.bf16.msra.mxu0 0
          %1838 = vmatprep.subr.bf16.mxu0 0
          %1839 = vmatpush1.bf16.msra.mxu0 0
          %1840 = vmatprep.subr.bf16.mxu0 0
          %1841 = vmatpush1.bf16.msra.mxu0 0
          %1842 = vmatprep.subr.bf16.mxu0 0
          %1843 = vmatpush1.bf16.msra.mxu0 0
          %1844 = vmatprep.subr.bf16.mxu0 0
          %1845 = vmatpush1.bf16.msra.mxu0 0
          %1846 = vmatprep.subr.bf16.mxu0 0
          %1847 = vmatpush1.bf16.msra.mxu0 0
          %1848 = vmatprep.subr.bf16.mxu0 0
          %1849 = vmatpush1.bf16.msra.mxu0 0
          %1850 = vmatprep.subr.bf16.mxu0 0
          %1851 = vmatpush1.bf16.msra.mxu0 0
          %1852 = vmatprep.subr.bf16.mxu0 0
          %1853 = vmatpush1.bf16.msra.mxu0 0
          %1854 = vmatprep.subr.bf16.mxu0 0
          %1855 = vmatpush1.bf16.msra.mxu0 0
          %1856 = vmatprep.subr.bf16.mxu0 0
          %1857 = vmatpush1.bf16.msra.mxu0 0
          %1858 = vmatprep.subr.bf16.mxu0 0
          %1859 = vmatpush1.bf16.msra.mxu0 0
          %1860 = vmatprep.subr.bf16.mxu0 0
          %1861 = vmatpush1.bf16.msra.mxu0 0
          %1862 = vmatprep.subr.bf16.mxu0 0
          %1863 = vmatpush1.bf16.msra.mxu0 0
          %1864 = vmatprep.subr.bf16.mxu0 0
          %1865 = vmatpush1.bf16.msra.mxu0 0
          %1866 = vmatprep.mubr.bf16.mxu0 0
          %1867 = vmatmul.mubr.bf16.gmra.mrb[0].mxu0 %v1811
          %v1868 = vpop.f32.mrb[0].mxu0
          %v1869 = vadd.f32 0.0, %v1868
          %v1870 = vpop.f32.mrb[0].mxu0
          %v1871 = vpop.f32.mrb[0].mxu0
          %v1872 = vadd.f32 0.0, %v1871
          %v1873 = vpop.f32.mrb[0].mxu0
          %1874 = vmatprep.mubr.bf16.mxu0 0
          %1875 = vmatmul.mubr.bf16.gmra.mrb[0].mxu0 %v1814
          %v1876 = vpop.f32.mrb[0].mxu0
          %v1877 = vadd.f32 0.0, %v1876
          %v1878 = vpop.f32.mrb[0].mxu0
          %v1879 = vpop.f32.mrb[0].mxu0
          %v1880 = vadd.f32 0.0, %v1879
          %v1881 = vpop.f32.mrb[0].mxu0
          %1882 = vmatprep.mubr.bf16.mxu0 0
          %1883 = vmatmul.mubr.bf16.gmra.mrb[0].mxu0 %v1817
          %v1884 = vpop.f32.mrb[0].mxu0
          %v1885 = vadd.f32 0.0, %v1884
          %v1886 = vpop.f32.mrb[0].mxu0
          %v1887 = vpop.f32.mrb[0].mxu0
          %v1888 = vadd.f32 0.0, %v1887
          %v1889 = vpop.f32.mrb[0].mxu0
          %1890 = vmatprep.mubr.bf16.mxu0 0
          %1891 = vmatmul.mubr.bf16.gmra.mrb[0].mxu0 %v1820
          %v1892 = vpop.f32.mrb[0].mxu0
          %v1893 = vadd.f32 0.0, %v1892
          %v1894 = vpop.f32.mrb[0].mxu0
          %v1895 = vpop.f32.mrb[0].mxu0
          %v1896 = vadd.f32 0.0, %v1895
          %v1897 = vpop.f32.mrb[0].mxu0
          %1898 = vmatprep.mubr.bf16.mxu0 0
          %1899 = vmatmul.mubr.bf16.gmra.mrb[0].mxu0 %v1823
          %v1900 = vpop.f32.mrb[0].mxu0
          %v1901 = vadd.f32 0.0, %v1900
          %v1902 = vpop.f32.mrb[0].mxu0
          %v1903 = vpop.f32.mrb[0].mxu0
          %v1904 = vadd.f32 0.0, %v1903
          %v1905 = vpop.f32.mrb[0].mxu0
          %1906 = vmatprep.mubr.bf16.mxu0 0
          %1907 = vmatmul.mubr.bf16.gmra.mrb[0].mxu0 %v1826
          %v1908 = vpop.f32.mrb[0].mxu0
          %v1909 = vadd.f32 0.0, %v1908
          %v1910 = vpop.f32.mrb[0].mxu0
          %v1911 = vpop.f32.mrb[0].mxu0
          %v1912 = vadd.f32 0.0, %v1911
          %v1913 = vpop.f32.mrb[0].mxu0
          %1914 = vmatprep.mubr.bf16.mxu0 0
          %1915 = vmatmul.mubr.bf16.gmra.mrb[0].mxu0 %v1829
          %v1916 = vpop.f32.mrb[0].mxu0
          %v1917 = vadd.f32 0.0, %v1916
          %v1918 = vpop.f32.mrb[0].mxu0
          %v1919 = vpop.f32.mrb[0].mxu0
          %v1920 = vpop.f32.mrb[0].mxu0
          %1921 = vdwg.mxu0
          %v1922 = vadd.f32 %v1555, %v1869
          %v1923 = vadd.f32 %v1556, %v1872
          %v1924 = vadd.f32 %v1557, %v1877
          %v1925 = vadd.f32 %v1558, %v1880
          %v1926 = vadd.f32 %v1559, %v1885
          %v1927 = vadd.f32 %v1560, %v1888
          %v1928 = vadd.f32 %v1561, %v1893
          %v1929 = vadd.f32 %v1562, %v1896
          %v1930 = vadd.f32 %v1563, %v1901
          %v1931 = vadd.f32 %v1564, %v1904
          %v1932 = vadd.f32 %v1565, %v1909
          %v1933 = vadd.f32 %v1566, %v1912
          %v1934 = vadd.f32 %v1567, %v1917
          %v1935 = vadd.s32 %v1184, 2
          %v1936 = vadd.s32 %v1185, 2
          %v1937 = vadd.s32 %v1186, 2
          %v1938 = vadd.s32 %v1187, 2
          %v1939 = vadd.s32 %v1188, 2
          %v1940 = vadd.s32 %v1189, 2
          %v1941 = vadd.s32 %v1190, 2
          %v1942 = vadd.s32 %v1191, 2
          %v1943 = vadd.s32 %v1192, 2
          %v1944 = vadd.s32 %v1193, 2
          %v1945 = vadd.s32 %v1194, 2
          %v1946 = vadd.s32 %v1195, 2
          %v1947 = vadd.s32 %v1196, 2
          %1948 = vset.pattern.permute.xlu0 0
          %1949 = vperm.xlu0 %1948, %v1935
          %v1950 = vpop.permute.xlu0 %1949
          %1951 = vset.pattern.permute.xlu0 0
          %1952 = vperm.xlu0 %1951, %v1936
          %v1953 = vpop.permute.xlu0 %1952
          %1954 = vset.pattern.permute.xlu0 0
          %1955 = vperm.xlu0 %1954, %v1937
          %v1956 = vpop.permute.xlu0 %1955
          %1957 = vset.pattern.permute.xlu0 0
          %1958 = vperm.xlu0 %1957, %v1938
          %v1959 = vpop.permute.xlu0 %1958
          %1960 = vset.pattern.permute.xlu0 0
          %1961 = vperm.xlu0 %1960, %v1939
          %v1962 = vpop.permute.xlu0 %1961
          %1963 = vset.pattern.permute.xlu0 0
          %1964 = vperm.xlu0 %1963, %v1940
          %v1965 = vpop.permute.xlu0 %1964
          %1966 = vset.pattern.permute.xlu0 0
          %1967 = vperm.xlu0 %1966, %v1941
          %v1968 = vpop.permute.xlu0 %1967
          %1969 = vset.pattern.permute.xlu0 0
          %1970 = vperm.xlu0 %1969, %v1942
          %v1971 = vpop.permute.xlu0 %1970
          %1972 = vset.pattern.permute.xlu0 0
          %1973 = vperm.xlu0 %1972, %v1943
          %v1974 = vpop.permute.xlu0 %1973
          %1975 = vset.pattern.permute.xlu0 0
          %1976 = vperm.xlu0 %1975, %v1944
          %v1977 = vpop.permute.xlu0 %1976
          %1978 = vset.pattern.permute.xlu0 0
          %1979 = vperm.xlu0 %1978, %v1945
          %v1980 = vpop.permute.xlu0 %1979
          %1981 = vset.pattern.permute.xlu0 0
          %1982 = vperm.xlu0 %1981, %v1946
          %v1983 = vpop.permute.xlu0 %1982
          %1984 = vset.pattern.permute.xlu0 0
          %1985 = vperm.xlu0 %1984, %v1947
          %v1986 = vpop.permute.xlu0 %1985
          %vm1987 = vcmp.eq.s32.totalorder %v1182, %v1950
          %vm1988 = vcmp.eq.s32.totalorder %v1183, %v1950
          %vm1989 = vcmp.eq.s32.totalorder %v1182, %v1953
          %vm1990 = vcmp.eq.s32.totalorder %v1183, %v1953
          %vm1991 = vcmp.eq.s32.totalorder %v1182, %v1956
          %vm1992 = vcmp.eq.s32.totalorder %v1183, %v1956
          %vm1993 = vcmp.eq.s32.totalorder %v1182, %v1959
          %vm1994 = vcmp.eq.s32.totalorder %v1183, %v1959
          %vm1995 = vcmp.eq.s32.totalorder %v1182, %v1962
          %vm1996 = vcmp.eq.s32.totalorder %v1183, %v1962
          %vm1997 = vcmp.eq.s32.totalorder %v1182, %v1965
          %vm1998 = vcmp.eq.s32.totalorder %v1183, %v1965
          %vm1999 = vcmp.eq.s32.totalorder %v1182, %v1968
          %vm2000 = vcmp.eq.s32.totalorder %v1183, %v1968
          %vm2001 = vcmp.eq.s32.totalorder %v1182, %v1971
          %vm2002 = vcmp.eq.s32.totalorder %v1183, %v1971
          %vm2003 = vcmp.eq.s32.totalorder %v1182, %v1974
          %vm2004 = vcmp.eq.s32.totalorder %v1183, %v1974
          %vm2005 = vcmp.eq.s32.totalorder %v1182, %v1977
          %vm2006 = vcmp.eq.s32.totalorder %v1183, %v1977
          %vm2007 = vcmp.eq.s32.totalorder %v1182, %v1980
          %vm2008 = vcmp.eq.s32.totalorder %v1183, %v1980
          %vm2009 = vcmp.eq.s32.totalorder %v1182, %v1983
          %vm2010 = vcmp.eq.s32.totalorder %v1183, %v1983
          %vm2011 = vcmp.eq.s32.totalorder %v1182, %v1986
          %vm2012 = vcmp.eq.s32.totalorder %v1183, %v1986
          %v2013 = vsel %vm1987, 1.0, 0.0
          %v2014 = vsel %vm1988, 1.0, 0.0
          %v2015 = vsel %vm1989, 1.0, 0.0
          %v2016 = vsel %vm1990, 1.0, 0.0
          %v2017 = vsel %vm1991, 1.0, 0.0
          %v2018 = vsel %vm1992, 1.0, 0.0
          %v2019 = vsel %vm1993, 1.0, 0.0
          %v2020 = vsel %vm1994, 1.0, 0.0
          %v2021 = vsel %vm1995, 1.0, 0.0
          %v2022 = vsel %vm1996, 1.0, 0.0
          %v2023 = vsel %vm1997, 1.0, 0.0
          %v2024 = vsel %vm1998, 1.0, 0.0
          %v2025 = vsel %vm1999, 1.0, 0.0
          %v2026 = vsel %vm2000, 1.0, 0.0
          %v2027 = vsel %vm2001, 1.0, 0.0
          %v2028 = vsel %vm2002, 1.0, 0.0
          %v2029 = vsel %vm2003, 1.0, 0.0
          %v2030 = vsel %vm2004, 1.0, 0.0
          %v2031 = vsel %vm2005, 1.0, 0.0
          %v2032 = vsel %vm2006, 1.0, 0.0
          %v2033 = vsel %vm2007, 1.0, 0.0
          %v2034 = vsel %vm2008, 1.0, 0.0
          %v2035 = vsel %vm2009, 1.0, 0.0
          %v2036 = vsel %vm2010, 1.0, 0.0
          %v2037 = vsel %vm2011, 1.0, 0.0
          %v2038 = vsel %vm2012, 1.0, 0.0
          %v2039 = vpack.c.bf16 %v2015, %v2013
          %v2040 = vpack.c.bf16 %v2016, %v2014
          %v2041 = vpack.c.bf16 %v2019, %v2017
          %v2042 = vpack.c.bf16 %v2020, %v2018
          %v2043 = vpack.c.bf16 %v2023, %v2021
          %v2044 = vpack.c.bf16 %v2024, %v2022
          %v2045 = vpack.c.bf16 %v2027, %v2025
          %v2046 = vpack.c.bf16 %v2028, %v2026
          %v2047 = vpack.c.bf16 %v2031, %v2029
          %v2048 = vpack.c.bf16 %v2032, %v2030
          %v2049 = vpack.c.bf16 %v2035, %v2033
          %v2050 = vpack.c.bf16 %v2036, %v2034
          %v2051 = vpack.c.bf16 %v2037, %v2037
          %v2052 = vpack.c.bf16 %v2038, %v2038
          %v2054 = vsel %vm1310, %v2040, 0
          %v2057 = vsel %vm1310, %v2042, 0
          %v2060 = vsel %vm1310, %v2044, 0
          %v2063 = vsel %vm1310, %v2046, 0
          %v2066 = vsel %vm1310, %v2048, 0
          %v2069 = vsel %vm1310, %v2050, 0
          %v2072 = vsel %vm1310, %v2052, 0
          %2074 = vmatprep.subr.bf16.mxu0 0
          %2075 = vmatpush1.bf16.msra.mxu0 %v1170
          %2076 = vmatprep.subr.bf16.mxu0 0
          %2077 = vmatpush1.bf16.msra.mxu0 %v1171
          %2078 = vmatprep.subr.bf16.mxu0 0
          %2079 = vmatpush1.bf16.msra.mxu0 %v1172
          %2080 = vmatprep.subr.bf16.mxu0 0
          %2081 = vmatpush1.bf16.msra.mxu0 %v1173
          %2082 = vmatprep.subr.bf16.mxu0 0
          %2083 = vmatpush1.bf16.msra.mxu0 %v1174
          %2084 = vmatprep.subr.bf16.mxu0 0
          %2085 = vmatpush1.bf16.msra.mxu0 %v1175
          %2086 = vmatprep.subr.bf16.mxu0 0
          %2087 = vmatpush1.bf16.msra.mxu0 %v1176
          %2088 = vmatprep.subr.bf16.mxu0 0
          %2089 = vmatpush1.bf16.msra.mxu0 %v1177
          %2090 = vmatprep.subr.bf16.mxu0 0
          %2091 = vmatpush1.bf16.msra.mxu0 %v1178
          %2092 = vmatprep.subr.bf16.mxu0 0
          %2093 = vmatpush1.bf16.msra.mxu0 %v1179
          %2094 = vmatprep.subr.bf16.mxu0 0
          %2095 = vmatpush1.bf16.msra.mxu0 %v1334
          %2096 = vmatprep.subr.bf16.mxu0 0
          %2097 = vmatpush1.bf16.msra.mxu0 0
          %2098 = vmatprep.subr.bf16.mxu0 0
          %2099 = vmatpush1.bf16.msra.mxu0 0
          %2100 = vmatprep.subr.bf16.mxu0 0
          %2101 = vmatpush1.bf16.msra.mxu0 0
          %2102 = vmatprep.subr.bf16.mxu0 0
          %2103 = vmatpush1.bf16.msra.mxu0 0
          %2104 = vmatprep.subr.bf16.mxu0 0
          %2105 = vmatpush1.bf16.msra.mxu0 0
          %2106 = vmatprep.mubr.bf16.mxu0 %v2054
          %2107 = vmatmul.mubr.bf16.gmra.mrb[0].mxu0 %v2039
          %v2108 = vpop.f32.mrb[0].mxu0
          %v2109 = vadd.f32 0.0, %v2108
          %v2110 = vpop.f32.mrb[0].mxu0
          %v2111 = vpop.f32.mrb[0].mxu0
          %v2112 = vadd.f32 0.0, %v2111
          %v2113 = vpop.f32.mrb[0].mxu0
          %2114 = vmatprep.mubr.bf16.mxu0 %v2057
          %2115 = vmatmul.mubr.bf16.gmra.mrb[0].mxu0 %v2041
          %v2116 = vpop.f32.mrb[0].mxu0
          %v2117 = vadd.f32 0.0, %v2116
          %v2118 = vpop.f32.mrb[0].mxu0
          %v2119 = vpop.f32.mrb[0].mxu0
          %v2120 = vadd.f32 0.0, %v2119
          %v2121 = vpop.f32.mrb[0].mxu0
          %2122 = vmatprep.mubr.bf16.mxu0 %v2060
          %2123 = vmatmul.mubr.bf16.gmra.mrb[0].mxu0 %v2043
          %v2124 = vpop.f32.mrb[0].mxu0
          %v2125 = vadd.f32 0.0, %v2124
          %v2126 = vpop.f32.mrb[0].mxu0
          %v2127 = vpop.f32.mrb[0].mxu0
          %v2128 = vadd.f32 0.0, %v2127
          %v2129 = vpop.f32.mrb[0].mxu0
          %2130 = vmatprep.mubr.bf16.mxu0 %v2063
          %2131 = vmatmul.mubr.bf16.gmra.mrb[0].mxu0 %v2045
          %v2132 = vpop.f32.mrb[0].mxu0
          %v2133 = vadd.f32 0.0, %v2132
          %v2134 = vpop.f32.mrb[0].mxu0
          %v2135 = vpop.f32.mrb[0].mxu0
          %v2136 = vadd.f32 0.0, %v2135
          %v2137 = vpop.f32.mrb[0].mxu0
          %2138 = vmatprep.mubr.bf16.mxu0 %v2066
          %2139 = vmatmul.mubr.bf16.gmra.mrb[0].mxu0 %v2047
          %v2140 = vpop.f32.mrb[0].mxu0
          %v2141 = vadd.f32 0.0, %v2140
          %v2142 = vpop.f32.mrb[0].mxu0
          %v2143 = vpop.f32.mrb[0].mxu0
          %v2144 = vadd.f32 0.0, %v2143
          %v2145 = vpop.f32.mrb[0].mxu0
          %2146 = vmatprep.mubr.bf16.mxu0 %v2069
          %2147 = vmatmul.mubr.bf16.gmra.mrb[0].mxu0 %v2049
          %v2148 = vpop.f32.mrb[0].mxu0
          %v2149 = vadd.f32 0.0, %v2148
          %v2150 = vpop.f32.mrb[0].mxu0
          %v2151 = vpop.f32.mrb[0].mxu0
          %v2152 = vadd.f32 0.0, %v2151
          %v2153 = vpop.f32.mrb[0].mxu0
          %2154 = vmatprep.mubr.bf16.mxu0 %v2072
          %2155 = vmatmul.mubr.bf16.gmra.mrb[0].mxu0 %v2051
          %v2156 = vpop.f32.mrb[0].mxu0
          %v2157 = vadd.f32 0.0, %v2156
          %v2158 = vpop.f32.mrb[0].mxu0
          %v2159 = vpop.f32.mrb[0].mxu0
          %v2160 = vpop.f32.mrb[0].mxu0
          %2161 = vdwg.mxu0
          %v2162 = vpack.c.bf16 %v2112, %v2109
          %v2163 = vpack.c.bf16 %v2120, %v2117
          %v2164 = vpack.c.bf16 %v2128, %v2125
          %v2165 = vpack.c.bf16 %v2136, %v2133
          %v2166 = vpack.c.bf16 %v2144, %v2141
          %v2167 = vpack.c.bf16 %v2152, %v2149
          %v2168 = vpack.c.bf16 %v2157, %v2157
          %s2169 = scalar_lea.vmem %s3, 16
          %v2170 = vld [vmem:[%s2169] sm:$0xf]
          %v2171 = vld [vmem:[%s2169 + $0x4] sm:$0xf]
          %v2174 = vunpack.c.l.b16 %v2170
          %v2175 = vunpack.c.l.b16 %v2171
          %v2176 = vpack.c.b16 %v2175, %v2174
          %v2178 = vsel %vm1438, %v2162, 0
          %v2181 = vsel %vm1438, %v2163, 0
          %v2184 = vsel %vm1438, %v2164, 0
          %v2187 = vsel %vm1438, %v2165, 0
          %v2190 = vsel %vm1438, %v2166, 0
          %v2193 = vsel %vm1438, %v2167, 0
          %v2196 = vsel %vm1438, %v2168, 0
          %v2199 = vand.u32 %v2176, %v1463
          %2201 = vmatprep.subr.bf16.mxu0 0
          %2202 = vmatpush1.bf16.msra.mxu0 %v2199
          %2203 = vmatprep.subr.bf16.mxu0 0
          %2204 = vmatpush1.bf16.msra.mxu0 0
          %2205 = vmatprep.subr.bf16.mxu0 0
          %2206 = vmatpush1.bf16.msra.mxu0 0
          %2207 = vmatprep.subr.bf16.mxu0 0
          %2208 = vmatpush1.bf16.msra.mxu0 0
          %2209 = vmatprep.subr.bf16.mxu0 0
          %2210 = vmatpush1.bf16.msra.mxu0 0
          %2211 = vmatprep.subr.bf16.mxu0 0
          %2212 = vmatpush1.bf16.msra.mxu0 0
          %2213 = vmatprep.subr.bf16.mxu0 0
          %2214 = vmatpush1.bf16.msra.mxu0 0
          %2215 = vmatprep.subr.bf16.mxu0 0
          %2216 = vmatpush1.bf16.msra.mxu0 0
          %2217 = vmatprep.subr.bf16.mxu0 0
          %2218 = vmatpush1.bf16.msra.mxu0 0
          %2219 = vmatprep.subr.bf16.mxu0 0
          %2220 = vmatpush1.bf16.msra.mxu0 0
          %2221 = vmatprep.subr.bf16.mxu0 0
          %2222 = vmatpush1.bf16.msra.mxu0 0
          %2223 = vmatprep.subr.bf16.mxu0 0
          %2224 = vmatpush1.bf16.msra.mxu0 0
          %2225 = vmatprep.subr.bf16.mxu0 0
          %2226 = vmatpush1.bf16.msra.mxu0 0
          %2227 = vmatprep.subr.bf16.mxu0 0
          %2228 = vmatpush1.bf16.msra.mxu0 0
          %2229 = vmatprep.subr.bf16.mxu0 0
          %2230 = vmatpush1.bf16.msra.mxu0 0
          %2231 = vmatprep.subr.bf16.mxu0 0
          %2232 = vmatpush1.bf16.msra.mxu0 0
          %2233 = vmatprep.mubr.bf16.mxu0 0
          %2234 = vmatmul.mubr.bf16.gmra.mrb[0].mxu0 %v2178
          %v2235 = vpop.f32.mrb[0].mxu0
          %v2236 = vadd.f32 0.0, %v2235
          %v2237 = vpop.f32.mrb[0].mxu0
          %v2238 = vpop.f32.mrb[0].mxu0
          %v2239 = vadd.f32 0.0, %v2238
          %v2240 = vpop.f32.mrb[0].mxu0
          %2241 = vmatprep.mubr.bf16.mxu0 0
          %2242 = vmatmul.mubr.bf16.gmra.mrb[0].mxu0 %v2181
          %v2243 = vpop.f32.mrb[0].mxu0
          %v2244 = vadd.f32 0.0, %v2243
          %v2245 = vpop.f32.mrb[0].mxu0
          %v2246 = vpop.f32.mrb[0].mxu0
          %v2247 = vadd.f32 0.0, %v2246
          %v2248 = vpop.f32.mrb[0].mxu0
          %2249 = vmatprep.mubr.bf16.mxu0 0
          %2250 = vmatmul.mubr.bf16.gmra.mrb[0].mxu0 %v2184
          %v2251 = vpop.f32.mrb[0].mxu0
          %v2252 = vadd.f32 0.0, %v2251
          %v2253 = vpop.f32.mrb[0].mxu0
          %v2254 = vpop.f32.mrb[0].mxu0
          %v2255 = vadd.f32 0.0, %v2254
          %v2256 = vpop.f32.mrb[0].mxu0
          %2257 = vmatprep.mubr.bf16.mxu0 0
          %2258 = vmatmul.mubr.bf16.gmra.mrb[0].mxu0 %v2187
          %v2259 = vpop.f32.mrb[0].mxu0
          %v2260 = vadd.f32 0.0, %v2259
          %v2261 = vpop.f32.mrb[0].mxu0
          %v2262 = vpop.f32.mrb[0].mxu0
          %v2263 = vadd.f32 0.0, %v2262
          %v2264 = vpop.f32.mrb[0].mxu0
          %2265 = vmatprep.mubr.bf16.mxu0 0
          %2266 = vmatmul.mubr.bf16.gmra.mrb[0].mxu0 %v2190
          %v2267 = vpop.f32.mrb[0].mxu0
          %v2268 = vadd.f32 0.0, %v2267
          %v2269 = vpop.f32.mrb[0].mxu0
          %v2270 = vpop.f32.mrb[0].mxu0
          %v2271 = vadd.f32 0.0, %v2270
          %v2272 = vpop.f32.mrb[0].mxu0
          %2273 = vmatprep.mubr.bf16.mxu0 0
          %2274 = vmatmul.mubr.bf16.gmra.mrb[0].mxu0 %v2193
          %v2275 = vpop.f32.mrb[0].mxu0
          %v2276 = vadd.f32 0.0, %v2275
          %v2277 = vpop.f32.mrb[0].mxu0
          %v2278 = vpop.f32.mrb[0].mxu0
          %v2279 = vadd.f32 0.0, %v2278
          %v2280 = vpop.f32.mrb[0].mxu0
          %2281 = vmatprep.mubr.bf16.mxu0 0
          %2282 = vmatmul.mubr.bf16.gmra.mrb[0].mxu0 %v2196
          %v2283 = vpop.f32.mrb[0].mxu0
          %v2284 = vadd.f32 0.0, %v2283
          %v2285 = vpop.f32.mrb[0].mxu0
          %v2286 = vpop.f32.mrb[0].mxu0
          %v2287 = vpop.f32.mrb[0].mxu0
          %2288 = vdwg.mxu0
          %v2289 = vadd.f32 %v1922, %v2236
          %v2290 = vadd.f32 %v1923, %v2239
          %v2291 = vadd.f32 %v1924, %v2244
          %v2292 = vadd.f32 %v1925, %v2247
          %v2293 = vadd.f32 %v1926, %v2252
          %v2294 = vadd.f32 %v1927, %v2255
          %v2295 = vadd.f32 %v1928, %v2260
          %v2296 = vadd.f32 %v1929, %v2263
          %v2297 = vadd.f32 %v1930, %v2268
          %v2298 = vadd.f32 %v1931, %v2271
          %v2299 = vadd.f32 %v1932, %v2276
          %v2300 = vadd.f32 %v1933, %v2279
          %v2301 = vadd.f32 %v1934, %v2284
          %v2302 = vadd.s32 %v1184, 9
          %v2303 = vadd.s32 %v1185, 9
          %v2304 = vadd.s32 %v1186, 9
          %v2305 = vadd.s32 %v1187, 9
          %v2306 = vadd.s32 %v1188, 9
          %v2307 = vadd.s32 %v1189, 9
          %v2308 = vadd.s32 %v1190, 9
          %v2309 = vadd.s32 %v1191, 9
          %v2310 = vadd.s32 %v1192, 9
          %v2311 = vadd.s32 %v1193, 9
          %v2312 = vadd.s32 %v1194, 9
          %v2313 = vadd.s32 %v1195, 9
          %v2314 = vadd.s32 %v1196, 9
          %2315 = vset.pattern.permute.xlu0 0
          %2316 = vperm.xlu0 %2315, %v2302
          %v2317 = vpop.permute.xlu0 %2316
          %2318 = vset.pattern.permute.xlu0 0
          %2319 = vperm.xlu0 %2318, %v2303
          %v2320 = vpop.permute.xlu0 %2319
          %2321 = vset.pattern.permute.xlu0 0
          %2322 = vperm.xlu0 %2321, %v2304
          %v2323 = vpop.permute.xlu0 %2322
          %2324 = vset.pattern.permute.xlu0 0
          %2325 = vperm.xlu0 %2324, %v2305
          %v2326 = vpop.permute.xlu0 %2325
          %2327 = vset.pattern.permute.xlu0 0
          %2328 = vperm.xlu0 %2327, %v2306
          %v2329 = vpop.permute.xlu0 %2328
          %2330 = vset.pattern.permute.xlu0 0
          %2331 = vperm.xlu0 %2330, %v2307
          %v2332 = vpop.permute.xlu0 %2331
          %2333 = vset.pattern.permute.xlu0 0
          %2334 = vperm.xlu0 %2333, %v2308
          %v2335 = vpop.permute.xlu0 %2334
          %2336 = vset.pattern.permute.xlu0 0
          %2337 = vperm.xlu0 %2336, %v2309
          %v2338 = vpop.permute.xlu0 %2337
          %2339 = vset.pattern.permute.xlu0 0
          %2340 = vperm.xlu0 %2339, %v2310
          %v2341 = vpop.permute.xlu0 %2340
          %2342 = vset.pattern.permute.xlu0 0
          %2343 = vperm.xlu0 %2342, %v2311
          %v2344 = vpop.permute.xlu0 %2343
          %2345 = vset.pattern.permute.xlu0 0
          %2346 = vperm.xlu0 %2345, %v2312
          %v2347 = vpop.permute.xlu0 %2346
          %2348 = vset.pattern.permute.xlu0 0
          %2349 = vperm.xlu0 %2348, %v2313
          %v2350 = vpop.permute.xlu0 %2349
          %2351 = vset.pattern.permute.xlu0 0
          %2352 = vperm.xlu0 %2351, %v2314
          %v2353 = vpop.permute.xlu0 %2352
          %vm2354 = vcmp.eq.s32.totalorder %v1182, %v2317
          %vm2355 = vcmp.eq.s32.totalorder %v1183, %v2317
          %vm2356 = vcmp.eq.s32.totalorder %v1182, %v2320
          %vm2357 = vcmp.eq.s32.totalorder %v1183, %v2320
          %vm2358 = vcmp.eq.s32.totalorder %v1182, %v2323
          %vm2359 = vcmp.eq.s32.totalorder %v1183, %v2323
          %vm2360 = vcmp.eq.s32.totalorder %v1182, %v2326
          %vm2361 = vcmp.eq.s32.totalorder %v1183, %v2326
          %vm2362 = vcmp.eq.s32.totalorder %v1182, %v2329
          %vm2363 = vcmp.eq.s32.totalorder %v1183, %v2329
          %vm2364 = vcmp.eq.s32.totalorder %v1182, %v2332
          %vm2365 = vcmp.eq.s32.totalorder %v1183, %v2332
          %vm2366 = vcmp.eq.s32.totalorder %v1182, %v2335
          %vm2367 = vcmp.eq.s32.totalorder %v1183, %v2335
          %vm2368 = vcmp.eq.s32.totalorder %v1182, %v2338
          %vm2369 = vcmp.eq.s32.totalorder %v1183, %v2338
          %vm2370 = vcmp.eq.s32.totalorder %v1182, %v2341
          %vm2371 = vcmp.eq.s32.totalorder %v1183, %v2341
          %vm2372 = vcmp.eq.s32.totalorder %v1182, %v2344
          %vm2373 = vcmp.eq.s32.totalorder %v1183, %v2344
          %vm2374 = vcmp.eq.s32.totalorder %v1182, %v2347
          %vm2375 = vcmp.eq.s32.totalorder %v1183, %v2347
          %vm2376 = vcmp.eq.s32.totalorder %v1182, %v2350
          %vm2377 = vcmp.eq.s32.totalorder %v1183, %v2350
          %vm2378 = vcmp.eq.s32.totalorder %v1182, %v2353
          %vm2379 = vcmp.eq.s32.totalorder %v1183, %v2353
          %v2380 = vsel %vm2354, 1.0, 0.0
          %v2381 = vsel %vm2355, 1.0, 0.0
          %v2382 = vsel %vm2356, 1.0, 0.0
          %v2383 = vsel %vm2357, 1.0, 0.0
          %v2384 = vsel %vm2358, 1.0, 0.0
          %v2385 = vsel %vm2359, 1.0, 0.0
          %v2386 = vsel %vm2360, 1.0, 0.0
          %v2387 = vsel %vm2361, 1.0, 0.0
          %v2388 = vsel %vm2362, 1.0, 0.0
          %v2389 = vsel %vm2363, 1.0, 0.0
          %v2390 = vsel %vm2364, 1.0, 0.0
          %v2391 = vsel %vm2365, 1.0, 0.0
          %v2392 = vsel %vm2366, 1.0, 0.0
          %v2393 = vsel %vm2367, 1.0, 0.0
          %v2394 = vsel %vm2368, 1.0, 0.0
          %v2395 = vsel %vm2369, 1.0, 0.0
          %v2396 = vsel %vm2370, 1.0, 0.0
          %v2397 = vsel %vm2371, 1.0, 0.0
          %v2398 = vsel %vm2372, 1.0, 0.0
          %v2399 = vsel %vm2373, 1.0, 0.0
          %v2400 = vsel %vm2374, 1.0, 0.0
          %v2401 = vsel %vm2375, 1.0, 0.0
          %v2402 = vsel %vm2376, 1.0, 0.0
          %v2403 = vsel %vm2377, 1.0, 0.0
          %v2404 = vsel %vm2378, 1.0, 0.0
          %v2405 = vsel %vm2379, 1.0, 0.0
          %v2406 = vpack.c.bf16 %v2382, %v2380
          %v2407 = vpack.c.bf16 %v2383, %v2381
          %v2408 = vpack.c.bf16 %v2386, %v2384
          %v2409 = vpack.c.bf16 %v2387, %v2385
          %v2410 = vpack.c.bf16 %v2390, %v2388
          %v2411 = vpack.c.bf16 %v2391, %v2389
          %v2412 = vpack.c.bf16 %v2394, %v2392
          %v2413 = vpack.c.bf16 %v2395, %v2393
          %v2414 = vpack.c.bf16 %v2398, %v2396
          %v2415 = vpack.c.bf16 %v2399, %v2397
          %v2416 = vpack.c.bf16 %v2402, %v2400
          %v2417 = vpack.c.bf16 %v2403, %v2401
          %v2418 = vpack.c.bf16 %v2404, %v2404
          %v2419 = vpack.c.bf16 %v2405, %v2405
          %v2421 = vsel %vm1310, %v2407, 0
          %v2424 = vsel %vm1310, %v2409, 0
          %v2427 = vsel %vm1310, %v2411, 0
          %v2430 = vsel %vm1310, %v2413, 0
          %v2433 = vsel %vm1310, %v2415, 0
          %v2436 = vsel %vm1310, %v2417, 0
          %v2439 = vsel %vm1310, %v2419, 0
          %2441 = vmatprep.subr.bf16.mxu0 0
          %2442 = vmatpush1.bf16.msra.mxu0 %v1170
          %2443 = vmatprep.subr.bf16.mxu0 0
          %2444 = vmatpush1.bf16.msra.mxu0 %v1171
          %2445 = vmatprep.subr.bf16.mxu0 0
          %2446 = vmatpush1.bf16.msra.mxu0 %v1172
          %2447 = vmatprep.subr.bf16.mxu0 0
          %2448 = vmatpush1.bf16.msra.mxu0 %v1173
          %2449 = vmatprep.subr.bf16.mxu0 0
          %2450 = vmatpush1.bf16.msra.mxu0 %v1174
          %2451 = vmatprep.subr.bf16.mxu0 0
          %2452 = vmatpush1.bf16.msra.mxu0 %v1175
          %2453 = vmatprep.subr.bf16.mxu0 0
          %2454 = vmatpush1.bf16.msra.mxu0 %v1176
          %2455 = vmatprep.subr.bf16.mxu0 0
          %2456 = vmatpush1.bf16.msra.mxu0 %v1177
          %2457 = vmatprep.subr.bf16.mxu0 0
          %2458 = vmatpush1.bf16.msra.mxu0 %v1178
          %2459 = vmatprep.subr.bf16.mxu0 0
          %2460 = vmatpush1.bf16.msra.mxu0 %v1179
          %2461 = vmatprep.subr.bf16.mxu0 0
          %2462 = vmatpush1.bf16.msra.mxu0 %v1334
          %2463 = vmatprep.subr.bf16.mxu0 0
          %2464 = vmatpush1.bf16.msra.mxu0 0
          %2465 = vmatprep.subr.bf16.mxu0 0
          %2466 = vmatpush1.bf16.msra.mxu0 0
          %2467 = vmatprep.subr.bf16.mxu0 0
          %2468 = vmatpush1.bf16.msra.mxu0 0
          %2469 = vmatprep.subr.bf16.mxu0 0
          %2470 = vmatpush1.bf16.msra.mxu0 0
          %2471 = vmatprep.subr.bf16.mxu0 0
          %2472 = vmatpush1.bf16.msra.mxu0 0
          %2473 = vmatprep.mubr.bf16.mxu0 %v2421
          %2474 = vmatmul.mubr.bf16.gmra.mrb[0].mxu0 %v2406
          %v2475 = vpop.f32.mrb[0].mxu0
          %v2476 = vadd.f32 0.0, %v2475
          %v2477 = vpop.f32.mrb[0].mxu0
          %v2478 = vpop.f32.mrb[0].mxu0
          %v2479 = vadd.f32 0.0, %v2478
          %v2480 = vpop.f32.mrb[0].mxu0
          %2481 = vmatprep.mubr.bf16.mxu0 %v2424
          %2482 = vmatmul.mubr.bf16.gmra.mrb[0].mxu0 %v2408
          %v2483 = vpop.f32.mrb[0].mxu0
          %v2484 = vadd.f32 0.0, %v2483
          %v2485 = vpop.f32.mrb[0].mxu0
          %v2486 = vpop.f32.mrb[0].mxu0
          %v2487 = vadd.f32 0.0, %v2486
          %v2488 = vpop.f32.mrb[0].mxu0
          %2489 = vmatprep.mubr.bf16.mxu0 %v2427
          %2490 = vmatmul.mubr.bf16.gmra.mrb[0].mxu0 %v2410
          %v2491 = vpop.f32.mrb[0].mxu0
          %v2492 = vadd.f32 0.0, %v2491
          %v2493 = vpop.f32.mrb[0].mxu0
          %v2494 = vpop.f32.mrb[0].mxu0
          %v2495 = vadd.f32 0.0, %v2494
          %v2496 = vpop.f32.mrb[0].mxu0
          %2497 = vmatprep.mubr.bf16.mxu0 %v2430
          %2498 = vmatmul.mubr.bf16.gmra.mrb[0].mxu0 %v2412
          %v2499 = vpop.f32.mrb[0].mxu0
          %v2500 = vadd.f32 0.0, %v2499
          %v2501 = vpop.f32.mrb[0].mxu0
          %v2502 = vpop.f32.mrb[0].mxu0
          %v2503 = vadd.f32 0.0, %v2502
          %v2504 = vpop.f32.mrb[0].mxu0
          %2505 = vmatprep.mubr.bf16.mxu0 %v2433
          %2506 = vmatmul.mubr.bf16.gmra.mrb[0].mxu0 %v2414
          %v2507 = vpop.f32.mrb[0].mxu0
          %v2508 = vadd.f32 0.0, %v2507
          %v2509 = vpop.f32.mrb[0].mxu0
          %v2510 = vpop.f32.mrb[0].mxu0
          %v2511 = vadd.f32 0.0, %v2510
          %v2512 = vpop.f32.mrb[0].mxu0
          %2513 = vmatprep.mubr.bf16.mxu0 %v2436
          %2514 = vmatmul.mubr.bf16.gmra.mrb[0].mxu0 %v2416
          %v2515 = vpop.f32.mrb[0].mxu0
          %v2516 = vadd.f32 0.0, %v2515
          %v2517 = vpop.f32.mrb[0].mxu0
          %v2518 = vpop.f32.mrb[0].mxu0
          %v2519 = vadd.f32 0.0, %v2518
          %v2520 = vpop.f32.mrb[0].mxu0
          %2521 = vmatprep.mubr.bf16.mxu0 %v2439
          %2522 = vmatmul.mubr.bf16.gmra.mrb[0].mxu0 %v2418
          %v2523 = vpop.f32.mrb[0].mxu0
          %v2524 = vadd.f32 0.0, %v2523
          %v2525 = vpop.f32.mrb[0].mxu0
          %v2526 = vpop.f32.mrb[0].mxu0
          %v2527 = vpop.f32.mrb[0].mxu0
          %2528 = vdwg.mxu0
          %v2529 = vpack.c.bf16 %v2479, %v2476
          %v2530 = vpack.c.bf16 %v2487, %v2484
          %v2531 = vpack.c.bf16 %v2495, %v2492
          %v2532 = vpack.c.bf16 %v2503, %v2500
          %v2533 = vpack.c.bf16 %v2511, %v2508
          %v2534 = vpack.c.bf16 %v2519, %v2516
          %v2535 = vpack.c.bf16 %v2524, %v2524
          %s2536 = scalar_lea.vmem %s3, 24
          %v2537 = vld [vmem:[%s2536] sm:$0xf]
          %v2538 = vld [vmem:[%s2536 + $0x4] sm:$0xf]
          %v2541 = vunpack.c.l.b16 %v2537
          %v2542 = vunpack.c.l.b16 %v2538
          %v2543 = vpack.c.b16 %v2542, %v2541
          %v2545 = vsel %vm1438, %v2529, 0
          %v2548 = vsel %vm1438, %v2530, 0
          %v2551 = vsel %vm1438, %v2531, 0
          %v2554 = vsel %vm1438, %v2532, 0
          %v2557 = vsel %vm1438, %v2533, 0
          %v2560 = vsel %vm1438, %v2534, 0
          %v2563 = vsel %vm1438, %v2535, 0
          %v2566 = vand.u32 %v2543, %v1463
          %2568 = vmatprep.subr.bf16.mxu0 0
          %2569 = vmatpush1.bf16.msra.mxu0 %v2566
          %2570 = vmatprep.subr.bf16.mxu0 0
          %2571 = vmatpush1.bf16.msra.mxu0 0
          %2572 = vmatprep.subr.bf16.mxu0 0
          %2573 = vmatpush1.bf16.msra.mxu0 0
          %2574 = vmatprep.subr.bf16.mxu0 0
          %2575 = vmatpush1.bf16.msra.mxu0 0
          %2576 = vmatprep.subr.bf16.mxu0 0
          %2577 = vmatpush1.bf16.msra.mxu0 0
          %2578 = vmatprep.subr.bf16.mxu0 0
          %2579 = vmatpush1.bf16.msra.mxu0 0
          %2580 = vmatprep.subr.bf16.mxu0 0
          %2581 = vmatpush1.bf16.msra.mxu0 0
          %2582 = vmatprep.subr.bf16.mxu0 0
          %2583 = vmatpush1.bf16.msra.mxu0 0
          %2584 = vmatprep.subr.bf16.mxu0 0
          %2585 = vmatpush1.bf16.msra.mxu0 0
          %2586 = vmatprep.subr.bf16.mxu0 0
          %2587 = vmatpush1.bf16.msra.mxu0 0
          %2588 = vmatprep.subr.bf16.mxu0 0
          %2589 = vmatpush1.bf16.msra.mxu0 0
          %2590 = vmatprep.subr.bf16.mxu0 0
          %2591 = vmatpush1.bf16.msra.mxu0 0
          %2592 = vmatprep.subr.bf16.mxu0 0
          %2593 = vmatpush1.bf16.msra.mxu0 0
          %2594 = vmatprep.subr.bf16.mxu0 0
          %2595 = vmatpush1.bf16.msra.mxu0 0
          %2596 = vmatprep.subr.bf16.mxu0 0
          %2597 = vmatpush1.bf16.msra.mxu0 0
          %2598 = vmatprep.subr.bf16.mxu0 0
          %2599 = vmatpush1.bf16.msra.mxu0 0
          %2600 = vmatprep.mubr.bf16.mxu0 0
          %2601 = vmatmul.mubr.bf16.gmra.mrb[0].mxu0 %v2545
          %v2602 = vpop.f32.mrb[0].mxu0
          %v2603 = vadd.f32 0.0, %v2602
          %v2604 = vpop.f32.mrb[0].mxu0
          %v2605 = vpop.f32.mrb[0].mxu0
          %v2606 = vadd.f32 0.0, %v2605
          %v2607 = vpop.f32.mrb[0].mxu0
          %2608 = vmatprep.mubr.bf16.mxu0 0
          %2609 = vmatmul.mubr.bf16.gmra.mrb[0].mxu0 %v2548
          %v2610 = vpop.f32.mrb[0].mxu0
          %v2611 = vadd.f32 0.0, %v2610
          %v2612 = vpop.f32.mrb[0].mxu0
          %v2613 = vpop.f32.mrb[0].mxu0
          %v2614 = vadd.f32 0.0, %v2613
          %v2615 = vpop.f32.mrb[0].mxu0
          %2616 = vmatprep.mubr.bf16.mxu0 0
          %2617 = vmatmul.mubr.bf16.gmra.mrb[0].mxu0 %v2551
          %v2618 = vpop.f32.mrb[0].mxu0
          %v2619 = vadd.f32 0.0, %v2618
          %v2620 = vpop.f32.mrb[0].mxu0
          %v2621 = vpop.f32.mrb[0].mxu0
          %v2622 = vadd.f32 0.0, %v2621
          %v2623 = vpop.f32.mrb[0].mxu0
          %2624 = vmatprep.mubr.bf16.mxu0 0
          %2625 = vmatmul.mubr.bf16.gmra.mrb[0].mxu0 %v2554
          %v2626 = vpop.f32.mrb[0].mxu0
          %v2627 = vadd.f32 0.0, %v2626
          %v2628 = vpop.f32.mrb[0].mxu0
          %v2629 = vpop.f32.mrb[0].mxu0
          %v2630 = vadd.f32 0.0, %v2629
          %v2631 = vpop.f32.mrb[0].mxu0
          %2632 = vmatprep.mubr.bf16.mxu0 0
          %2633 = vmatmul.mubr.bf16.gmra.mrb[0].mxu0 %v2557
          %v2634 = vpop.f32.mrb[0].mxu0
          %v2635 = vadd.f32 0.0, %v2634
          %v2636 = vpop.f32.mrb[0].mxu0
          %v2637 = vpop.f32.mrb[0].mxu0
          %v2638 = vadd.f32 0.0, %v2637
          %v2639 = vpop.f32.mrb[0].mxu0
          %2640 = vmatprep.mubr.bf16.mxu0 0
          %2641 = vmatmul.mubr.bf16.gmra.mrb[0].mxu0 %v2560
          %v2642 = vpop.f32.mrb[0].mxu0
          %v2643 = vadd.f32 0.0, %v2642
          %v2644 = vpop.f32.mrb[0].mxu0
          %v2645 = vpop.f32.mrb[0].mxu0
          %v2646 = vadd.f32 0.0, %v2645
          %v2647 = vpop.f32.mrb[0].mxu0
          %2648 = vmatprep.mubr.bf16.mxu0 0
          %2649 = vmatmul.mubr.bf16.gmra.mrb[0].mxu0 %v2563
          %v2650 = vpop.f32.mrb[0].mxu0
          %v2651 = vadd.f32 0.0, %v2650
          %v2652 = vpop.f32.mrb[0].mxu0
          %v2653 = vpop.f32.mrb[0].mxu0
          %v2654 = vpop.f32.mrb[0].mxu0
          %2655 = vdwg.mxu0
          %v2656 = vadd.f32 %v2289, %v2603
          %v2657 = vadd.f32 %v2290, %v2606
          %v2658 = vadd.f32 %v2291, %v2611
          %v2659 = vadd.f32 %v2292, %v2614
          %v2660 = vadd.f32 %v2293, %v2619
          %v2661 = vadd.f32 %v2294, %v2622
          %v2662 = vadd.f32 %v2295, %v2627
          %v2663 = vadd.f32 %v2296, %v2630
          %v2664 = vadd.f32 %v2297, %v2635
          %v2665 = vadd.f32 %v2298, %v2638
          %v2666 = vadd.f32 %v2299, %v2643
          %v2667 = vadd.f32 %v2300, %v2646
          %v2668 = vadd.f32 %v2301, %v2651
          %v2669 = vadd.s32 %v1184, 10
          %v2670 = vadd.s32 %v1185, 10
          %v2671 = vadd.s32 %v1186, 10
          %v2672 = vadd.s32 %v1187, 10
          %v2673 = vadd.s32 %v1188, 10
          %v2674 = vadd.s32 %v1189, 10
          %v2675 = vadd.s32 %v1190, 10
          %v2676 = vadd.s32 %v1191, 10
          %v2677 = vadd.s32 %v1192, 10
          %v2678 = vadd.s32 %v1193, 10
          %v2679 = vadd.s32 %v1194, 10
          %v2680 = vadd.s32 %v1195, 10
          %v2681 = vadd.s32 %v1196, 10
          %2682 = vset.pattern.permute.xlu0 0
          %2683 = vperm.xlu0 %2682, %v2669
          %v2684 = vpop.permute.xlu0 %2683
          %2685 = vset.pattern.permute.xlu0 0
          %2686 = vperm.xlu0 %2685, %v2670
          %v2687 = vpop.permute.xlu0 %2686
          %2688 = vset.pattern.permute.xlu0 0
          %2689 = vperm.xlu0 %2688, %v2671
          %v2690 = vpop.permute.xlu0 %2689
          %2691 = vset.pattern.permute.xlu0 0
          %2692 = vperm.xlu0 %2691, %v2672
          %v2693 = vpop.permute.xlu0 %2692
          %2694 = vset.pattern.permute.xlu0 0
          %2695 = vperm.xlu0 %2694, %v2673
          %v2696 = vpop.permute.xlu0 %2695
          %2697 = vset.pattern.permute.xlu0 0
          %2698 = vperm.xlu0 %2697, %v2674
          %v2699 = vpop.permute.xlu0 %2698
          %2700 = vset.pattern.permute.xlu0 0
          %2701 = vperm.xlu0 %2700, %v2675
          %v2702 = vpop.permute.xlu0 %2701
          %2703 = vset.pattern.permute.xlu0 0
          %2704 = vperm.xlu0 %2703, %v2676
          %v2705 = vpop.permute.xlu0 %2704
          %2706 = vset.pattern.permute.xlu0 0
          %2707 = vperm.xlu0 %2706, %v2677
          %v2708 = vpop.permute.xlu0 %2707
          %2709 = vset.pattern.permute.xlu0 0
          %2710 = vperm.xlu0 %2709, %v2678
          %v2711 = vpop.permute.xlu0 %2710
          %2712 = vset.pattern.permute.xlu0 0
          %2713 = vperm.xlu0 %2712, %v2679
          %v2714 = vpop.permute.xlu0 %2713
          %2715 = vset.pattern.permute.xlu0 0
          %2716 = vperm.xlu0 %2715, %v2680
          %v2717 = vpop.permute.xlu0 %2716
          %2718 = vset.pattern.permute.xlu0 0
          %2719 = vperm.xlu0 %2718, %v2681
          %v2720 = vpop.permute.xlu0 %2719
          %vm2721 = vcmp.eq.s32.totalorder %v1182, %v2684
          %vm2722 = vcmp.eq.s32.totalorder %v1183, %v2684
          %vm2723 = vcmp.eq.s32.totalorder %v1182, %v2687
          %vm2724 = vcmp.eq.s32.totalorder %v1183, %v2687
          %vm2725 = vcmp.eq.s32.totalorder %v1182, %v2690
          %vm2726 = vcmp.eq.s32.totalorder %v1183, %v2690
          %vm2727 = vcmp.eq.s32.totalorder %v1182, %v2693
          %vm2728 = vcmp.eq.s32.totalorder %v1183, %v2693
          %vm2729 = vcmp.eq.s32.totalorder %v1182, %v2696
          %vm2730 = vcmp.eq.s32.totalorder %v1183, %v2696
          %vm2731 = vcmp.eq.s32.totalorder %v1182, %v2699
          %vm2732 = vcmp.eq.s32.totalorder %v1183, %v2699
          %vm2733 = vcmp.eq.s32.totalorder %v1182, %v2702
          %vm2734 = vcmp.eq.s32.totalorder %v1183, %v2702
          %vm2735 = vcmp.eq.s32.totalorder %v1182, %v2705
          %vm2736 = vcmp.eq.s32.totalorder %v1183, %v2705
          %vm2737 = vcmp.eq.s32.totalorder %v1182, %v2708
          %vm2738 = vcmp.eq.s32.totalorder %v1183, %v2708
          %vm2739 = vcmp.eq.s32.totalorder %v1182, %v2711
          %vm2740 = vcmp.eq.s32.totalorder %v1183, %v2711
          %vm2741 = vcmp.eq.s32.totalorder %v1182, %v2714
          %vm2742 = vcmp.eq.s32.totalorder %v1183, %v2714
          %vm2743 = vcmp.eq.s32.totalorder %v1182, %v2717
          %vm2744 = vcmp.eq.s32.totalorder %v1183, %v2717
          %vm2745 = vcmp.eq.s32.totalorder %v1182, %v2720
          %vm2746 = vcmp.eq.s32.totalorder %v1183, %v2720
          %v2747 = vsel %vm2721, 1.0, 0.0
          %v2748 = vsel %vm2722, 1.0, 0.0
          %v2749 = vsel %vm2723, 1.0, 0.0
          %v2750 = vsel %vm2724, 1.0, 0.0
          %v2751 = vsel %vm2725, 1.0, 0.0
          %v2752 = vsel %vm2726, 1.0, 0.0
          %v2753 = vsel %vm2727, 1.0, 0.0
          %v2754 = vsel %vm2728, 1.0, 0.0
          %v2755 = vsel %vm2729, 1.0, 0.0
          %v2756 = vsel %vm2730, 1.0, 0.0
          %v2757 = vsel %vm2731, 1.0, 0.0
          %v2758 = vsel %vm2732, 1.0, 0.0
          %v2759 = vsel %vm2733, 1.0, 0.0
          %v2760 = vsel %vm2734, 1.0, 0.0
          %v2761 = vsel %vm2735, 1.0, 0.0
          %v2762 = vsel %vm2736, 1.0, 0.0
          %v2763 = vsel %vm2737, 1.0, 0.0
          %v2764 = vsel %vm2738, 1.0, 0.0
          %v2765 = vsel %vm2739, 1.0, 0.0
          %v2766 = vsel %vm2740, 1.0, 0.0
          %v2767 = vsel %vm2741, 1.0, 0.0
          %v2768 = vsel %vm2742, 1.0, 0.0
          %v2769 = vsel %vm2743, 1.0, 0.0
          %v2770 = vsel %vm2744, 1.0, 0.0
          %v2771 = vsel %vm2745, 1.0, 0.0
          %v2772 = vsel %vm2746, 1.0, 0.0
          %v2773 = vpack.c.bf16 %v2749, %v2747
          %v2774 = vpack.c.bf16 %v2750, %v2748
          %v2775 = vpack.c.bf16 %v2753, %v2751
          %v2776 = vpack.c.bf16 %v2754, %v2752
          %v2777 = vpack.c.bf16 %v2757, %v2755
          %v2778 = vpack.c.bf16 %v2758, %v2756
          %v2779 = vpack.c.bf16 %v2761, %v2759
          %v2780 = vpack.c.bf16 %v2762, %v2760
          %v2781 = vpack.c.bf16 %v2765, %v2763
          %v2782 = vpack.c.bf16 %v2766, %v2764
          %v2783 = vpack.c.bf16 %v2769, %v2767
          %v2784 = vpack.c.bf16 %v2770, %v2768
          %v2785 = vpack.c.bf16 %v2771, %v2771
          %v2786 = vpack.c.bf16 %v2772, %v2772
          %v2788 = vsel %vm1310, %v2774, 0
          %v2791 = vsel %vm1310, %v2776, 0
          %v2794 = vsel %vm1310, %v2778, 0
          %v2797 = vsel %vm1310, %v2780, 0
          %v2800 = vsel %vm1310, %v2782, 0
          %v2803 = vsel %vm1310, %v2784, 0
          %v2806 = vsel %vm1310, %v2786, 0
          %2808 = vmatprep.subr.bf16.mxu0 0
          %2809 = vmatpush1.bf16.msra.mxu0 %v1170
          %2810 = vmatprep.subr.bf16.mxu0 0
          %2811 = vmatpush1.bf16.msra.mxu0 %v1171
          %2812 = vmatprep.subr.bf16.mxu0 0
          %2813 = vmatpush1.bf16.msra.mxu0 %v1172
          %2814 = vmatprep.subr.bf16.mxu0 0
          %2815 = vmatpush1.bf16.msra.mxu0 %v1173
          %2816 = vmatprep.subr.bf16.mxu0 0
          %2817 = vmatpush1.bf16.msra.mxu0 %v1174
          %2818 = vmatprep.subr.bf16.mxu0 0
          %2819 = vmatpush1.bf16.msra.mxu0 %v1175
          %2820 = vmatprep.subr.bf16.mxu0 0
          %2821 = vmatpush1.bf16.msra.mxu0 %v1176
          %2822 = vmatprep.subr.bf16.mxu0 0
          %2823 = vmatpush1.bf16.msra.mxu0 %v1177
          %2824 = vmatprep.subr.bf16.mxu0 0
          %2825 = vmatpush1.bf16.msra.mxu0 %v1178
          %2826 = vmatprep.subr.bf16.mxu0 0
          %2827 = vmatpush1.bf16.msra.mxu0 %v1179
          %2828 = vmatprep.subr.bf16.mxu0 0
          %2829 = vmatpush1.bf16.msra.mxu0 %v1334
          %2830 = vmatprep.subr.bf16.mxu0 0
          %2831 = vmatpush1.bf16.msra.mxu0 0
          %2832 = vmatprep.subr.bf16.mxu0 0
          %2833 = vmatpush1.bf16.msra.mxu0 0
          %2834 = vmatprep.subr.bf16.mxu0 0
          %2835 = vmatpush1.bf16.msra.mxu0 0
          %2836 = vmatprep.subr.bf16.mxu0 0
          %2837 = vmatpush1.bf16.msra.mxu0 0
          %2838 = vmatprep.subr.bf16.mxu0 0
          %2839 = vmatpush1.bf16.msra.mxu0 0
          %2840 = vmatprep.mubr.bf16.mxu0 %v2788
          %2841 = vmatmul.mubr.bf16.gmra.mrb[0].mxu0 %v2773
          %v2842 = vpop.f32.mrb[0].mxu0
          %v2843 = vadd.f32 0.0, %v2842
          %v2844 = vpop.f32.mrb[0].mxu0
          %v2845 = vpop.f32.mrb[0].mxu0
          %v2846 = vadd.f32 0.0, %v2845
          %v2847 = vpop.f32.mrb[0].mxu0
          %2848 = vmatprep.mubr.bf16.mxu0 %v2791
          %2849 = vmatmul.mubr.bf16.gmra.mrb[0].mxu0 %v2775
          %v2850 = vpop.f32.mrb[0].mxu0
          %v2851 = vadd.f32 0.0, %v2850
          %v2852 = vpop.f32.mrb[0].mxu0
          %v2853 = vpop.f32.mrb[0].mxu0
          %v2854 = vadd.f32 0.0, %v2853
          %v2855 = vpop.f32.mrb[0].mxu0
          %2856 = vmatprep.mubr.bf16.mxu0 %v2794
          %2857 = vmatmul.mubr.bf16.gmra.mrb[0].mxu0 %v2777
          %v2858 = vpop.f32.mrb[0].mxu0
          %v2859 = vadd.f32 0.0, %v2858
          %v2860 = vpop.f32.mrb[0].mxu0
          %v2861 = vpop.f32.mrb[0].mxu0
          %v2862 = vadd.f32 0.0, %v2861
          %v2863 = vpop.f32.mrb[0].mxu0
          %2864 = vmatprep.mubr.bf16.mxu0 %v2797
          %2865 = vmatmul.mubr.bf16.gmra.mrb[0].mxu0 %v2779
          %v2866 = vpop.f32.mrb[0].mxu0
          %v2867 = vadd.f32 0.0, %v2866
          %v2868 = vpop.f32.mrb[0].mxu0
          %v2869 = vpop.f32.mrb[0].mxu0
          %v2870 = vadd.f32 0.0, %v2869
          %v2871 = vpop.f32.mrb[0].mxu0
          %2872 = vmatprep.mubr.bf16.mxu0 %v2800
          %2873 = vmatmul.mubr.bf16.gmra.mrb[0].mxu0 %v2781
          %v2874 = vpop.f32.mrb[0].mxu0
          %v2875 = vadd.f32 0.0, %v2874
          %v2876 = vpop.f32.mrb[0].mxu0
          %v2877 = vpop.f32.mrb[0].mxu0
          %v2878 = vadd.f32 0.0, %v2877
          %v2879 = vpop.f32.mrb[0].mxu0
          %2880 = vmatprep.mubr.bf16.mxu0 %v2803
          %2881 = vmatmul.mubr.bf16.gmra.mrb[0].mxu0 %v2783
          %v2882 = vpop.f32.mrb[0].mxu0
          %v2883 = vadd.f32 0.0, %v2882
          %v2884 = vpop.f32.mrb[0].mxu0
          %v2885 = vpop.f32.mrb[0].mxu0
          %v2886 = vadd.f32 0.0, %v2885
          %v2887 = vpop.f32.mrb[0].mxu0
          %2888 = vmatprep.mubr.bf16.mxu0 %v2806
          %2889 = vmatmul.mubr.bf16.gmra.mrb[0].mxu0 %v2785
          %v2890 = vpop.f32.mrb[0].mxu0
          %v2891 = vadd.f32 0.0, %v2890
          %v2892 = vpop.f32.mrb[0].mxu0
          %v2893 = vpop.f32.mrb[0].mxu0
          %v2894 = vpop.f32.mrb[0].mxu0
          %2895 = vdwg.mxu0
          %v2896 = vpack.c.bf16 %v2846, %v2843
          %v2897 = vpack.c.bf16 %v2854, %v2851
          %v2898 = vpack.c.bf16 %v2862, %v2859
          %v2899 = vpack.c.bf16 %v2870, %v2867
          %v2900 = vpack.c.bf16 %v2878, %v2875
          %v2901 = vpack.c.bf16 %v2886, %v2883
          %v2902 = vpack.c.bf16 %v2891, %v2891
          %s2903 = scalar_lea.vmem %s3, 32
          %v2904 = vld [vmem:[%s2903] sm:$0xf]
          %v2905 = vld [vmem:[%s2903 + $0x4] sm:$0xf]
          %v2908 = vunpack.c.l.b16 %v2904
          %v2909 = vunpack.c.l.b16 %v2905
          %v2910 = vpack.c.b16 %v2909, %v2908
          %v2912 = vsel %vm1438, %v2896, 0
          %v2915 = vsel %vm1438, %v2897, 0
          %v2918 = vsel %vm1438, %v2898, 0
          %v2921 = vsel %vm1438, %v2899, 0
          %v2924 = vsel %vm1438, %v2900, 0
          %v2927 = vsel %vm1438, %v2901, 0
          %v2930 = vsel %vm1438, %v2902, 0
          %v2933 = vand.u32 %v2910, %v1463
          %2935 = vmatprep.subr.bf16.mxu0 0
          %2936 = vmatpush1.bf16.msra.mxu0 %v2933
          %2937 = vmatprep.subr.bf16.mxu0 0
          %2938 = vmatpush1.bf16.msra.mxu0 0
          %2939 = vmatprep.subr.bf16.mxu0 0
          %2940 = vmatpush1.bf16.msra.mxu0 0
          %2941 = vmatprep.subr.bf16.mxu0 0
          %2942 = vmatpush1.bf16.msra.mxu0 0
          %2943 = vmatprep.subr.bf16.mxu0 0
          %2944 = vmatpush1.bf16.msra.mxu0 0
          %2945 = vmatprep.subr.bf16.mxu0 0
          %2946 = vmatpush1.bf16.msra.mxu0 0
          %2947 = vmatprep.subr.bf16.mxu0 0
          %2948 = vmatpush1.bf16.msra.mxu0 0
          %2949 = vmatprep.subr.bf16.mxu0 0
          %2950 = vmatpush1.bf16.msra.mxu0 0
          %2951 = vmatprep.subr.bf16.mxu0 0
          %2952 = vmatpush1.bf16.msra.mxu0 0
          %2953 = vmatprep.subr.bf16.mxu0 0
          %2954 = vmatpush1.bf16.msra.mxu0 0
          %2955 = vmatprep.subr.bf16.mxu0 0
          %2956 = vmatpush1.bf16.msra.mxu0 0
          %2957 = vmatprep.subr.bf16.mxu0 0
          %2958 = vmatpush1.bf16.msra.mxu0 0
          %2959 = vmatprep.subr.bf16.mxu0 0
          %2960 = vmatpush1.bf16.msra.mxu0 0
          %2961 = vmatprep.subr.bf16.mxu0 0
          %2962 = vmatpush1.bf16.msra.mxu0 0
          %2963 = vmatprep.subr.bf16.mxu0 0
          %2964 = vmatpush1.bf16.msra.mxu0 0
          %2965 = vmatprep.subr.bf16.mxu0 0
          %2966 = vmatpush1.bf16.msra.mxu0 0
          %2967 = vmatprep.mubr.bf16.mxu0 0
          %2968 = vmatmul.mubr.bf16.gmra.mrb[0].mxu0 %v2912
          %v2969 = vpop.f32.mrb[0].mxu0
          %v2970 = vadd.f32 0.0, %v2969
          %v2971 = vpop.f32.mrb[0].mxu0
          %v2972 = vpop.f32.mrb[0].mxu0
          %v2973 = vadd.f32 0.0, %v2972
          %v2974 = vpop.f32.mrb[0].mxu0
          %2975 = vmatprep.mubr.bf16.mxu0 0
          %2976 = vmatmul.mubr.bf16.gmra.mrb[0].mxu0 %v2915
          %v2977 = vpop.f32.mrb[0].mxu0
          %v2978 = vadd.f32 0.0, %v2977
          %v2979 = vpop.f32.mrb[0].mxu0
          %v2980 = vpop.f32.mrb[0].mxu0
          %v2981 = vadd.f32 0.0, %v2980
          %v2982 = vpop.f32.mrb[0].mxu0
          %2983 = vmatprep.mubr.bf16.mxu0 0
          %2984 = vmatmul.mubr.bf16.gmra.mrb[0].mxu0 %v2918
          %v2985 = vpop.f32.mrb[0].mxu0
          %v2986 = vadd.f32 0.0, %v2985
          %v2987 = vpop.f32.mrb[0].mxu0
          %v2988 = vpop.f32.mrb[0].mxu0
          %v2989 = vadd.f32 0.0, %v2988
          %v2990 = vpop.f32.mrb[0].mxu0
          %2991 = vmatprep.mubr.bf16.mxu0 0
          %2992 = vmatmul.mubr.bf16.gmra.mrb[0].mxu0 %v2921
          %v2993 = vpop.f32.mrb[0].mxu0
          %v2994 = vadd.f32 0.0, %v2993
          %v2995 = vpop.f32.mrb[0].mxu0
          %v2996 = vpop.f32.mrb[0].mxu0
          %v2997 = vadd.f32 0.0, %v2996
          %v2998 = vpop.f32.mrb[0].mxu0
          %2999 = vmatprep.mubr.bf16.mxu0 0
          %3000 = vmatmul.mubr.bf16.gmra.mrb[0].mxu0 %v2924
          %v3001 = vpop.f32.mrb[0].mxu0
          %v3002 = vadd.f32 0.0, %v3001
          %v3003 = vpop.f32.mrb[0].mxu0
          %v3004 = vpop.f32.mrb[0].mxu0
          %v3005 = vadd.f32 0.0, %v3004
          %v3006 = vpop.f32.mrb[0].mxu0
          %3007 = vmatprep.mubr.bf16.mxu0 0
          %3008 = vmatmul.mubr.bf16.gmra.mrb[0].mxu0 %v2927
          %v3009 = vpop.f32.mrb[0].mxu0
          %v3010 = vadd.f32 0.0, %v3009
          %v3011 = vpop.f32.mrb[0].mxu0
          %v3012 = vpop.f32.mrb[0].mxu0
          %v3013 = vadd.f32 0.0, %v3012
          %v3014 = vpop.f32.mrb[0].mxu0
          %3015 = vmatprep.mubr.bf16.mxu0 0
          %3016 = vmatmul.mubr.bf16.gmra.mrb[0].mxu0 %v2930
          %v3017 = vpop.f32.mrb[0].mxu0
          %v3018 = vadd.f32 0.0, %v3017
          %v3019 = vpop.f32.mrb[0].mxu0
          %v3020 = vpop.f32.mrb[0].mxu0
          %v3021 = vpop.f32.mrb[0].mxu0
          %3022 = vdwg.mxu0
          %v3023 = vadd.f32 %v2656, %v2970
          %v3024 = vadd.f32 %v2657, %v2973
          %v3025 = vadd.f32 %v2658, %v2978
          %v3026 = vadd.f32 %v2659, %v2981
          %v3027 = vadd.f32 %v2660, %v2986
          %v3028 = vadd.f32 %v2661, %v2989
          %v3029 = vadd.f32 %v2662, %v2994
          %v3030 = vadd.f32 %v2663, %v2997
          %v3031 = vadd.f32 %v2664, %v3002
          %v3032 = vadd.f32 %v2665, %v3005
          %v3033 = vadd.f32 %v2666, %v3010
          %v3034 = vadd.f32 %v2667, %v3013
          %v3035 = vadd.f32 %v2668, %v3018
          %v3036 = vadd.s32 %v1184, 11
          %v3037 = vadd.s32 %v1185, 11
          %v3038 = vadd.s32 %v1186, 11
          %v3039 = vadd.s32 %v1187, 11
          %v3040 = vadd.s32 %v1188, 11
          %v3041 = vadd.s32 %v1189, 11
          %v3042 = vadd.s32 %v1190, 11
          %v3043 = vadd.s32 %v1191, 11
          %v3044 = vadd.s32 %v1192, 11
          %v3045 = vadd.s32 %v1193, 11
          %v3046 = vadd.s32 %v1194, 11
          %v3047 = vadd.s32 %v1195, 11
          %v3048 = vadd.s32 %v1196, 11
          %3049 = vset.pattern.permute.xlu0 0
          %3050 = vperm.xlu0 %3049, %v3036
          %v3051 = vpop.permute.xlu0 %3050
          %3052 = vset.pattern.permute.xlu0 0
          %3053 = vperm.xlu0 %3052, %v3037
          %v3054 = vpop.permute.xlu0 %3053
          %3055 = vset.pattern.permute.xlu0 0
          %3056 = vperm.xlu0 %3055, %v3038
          %v3057 = vpop.permute.xlu0 %3056
          %3058 = vset.pattern.permute.xlu0 0
          %3059 = vperm.xlu0 %3058, %v3039
          %v3060 = vpop.permute.xlu0 %3059
          %3061 = vset.pattern.permute.xlu0 0
          %3062 = vperm.xlu0 %3061, %v3040
          %v3063 = vpop.permute.xlu0 %3062
          %3064 = vset.pattern.permute.xlu0 0
          %3065 = vperm.xlu0 %3064, %v3041
          %v3066 = vpop.permute.xlu0 %3065
          %3067 = vset.pattern.permute.xlu0 0
          %3068 = vperm.xlu0 %3067, %v3042
          %v3069 = vpop.permute.xlu0 %3068
          %3070 = vset.pattern.permute.xlu0 0
          %3071 = vperm.xlu0 %3070, %v3043
          %v3072 = vpop.permute.xlu0 %3071
          %3073 = vset.pattern.permute.xlu0 0
          %3074 = vperm.xlu0 %3073, %v3044
          %v3075 = vpop.permute.xlu0 %3074
          %3076 = vset.pattern.permute.xlu0 0
          %3077 = vperm.xlu0 %3076, %v3045
          %v3078 = vpop.permute.xlu0 %3077
          %3079 = vset.pattern.permute.xlu0 0
          %3080 = vperm.xlu0 %3079, %v3046
          %v3081 = vpop.permute.xlu0 %3080
          %3082 = vset.pattern.permute.xlu0 0
          %3083 = vperm.xlu0 %3082, %v3047
          %v3084 = vpop.permute.xlu0 %3083
          %3085 = vset.pattern.permute.xlu0 0
          %3086 = vperm.xlu0 %3085, %v3048
          %v3087 = vpop.permute.xlu0 %3086
          %vm3088 = vcmp.eq.s32.totalorder %v1182, %v3051
          %vm3089 = vcmp.eq.s32.totalorder %v1183, %v3051
          %vm3090 = vcmp.eq.s32.totalorder %v1182, %v3054
          %vm3091 = vcmp.eq.s32.totalorder %v1183, %v3054
          %vm3092 = vcmp.eq.s32.totalorder %v1182, %v3057
          %vm3093 = vcmp.eq.s32.totalorder %v1183, %v3057
          %vm3094 = vcmp.eq.s32.totalorder %v1182, %v3060
          %vm3095 = vcmp.eq.s32.totalorder %v1183, %v3060
          %vm3096 = vcmp.eq.s32.totalorder %v1182, %v3063
          %vm3097 = vcmp.eq.s32.totalorder %v1183, %v3063
          %vm3098 = vcmp.eq.s32.totalorder %v1182, %v3066
          %vm3099 = vcmp.eq.s32.totalorder %v1183, %v3066
          %vm3100 = vcmp.eq.s32.totalorder %v1182, %v3069
          %vm3101 = vcmp.eq.s32.totalorder %v1183, %v3069
          %vm3102 = vcmp.eq.s32.totalorder %v1182, %v3072
          %vm3103 = vcmp.eq.s32.totalorder %v1183, %v3072
          %vm3104 = vcmp.eq.s32.totalorder %v1182, %v3075
          %vm3105 = vcmp.eq.s32.totalorder %v1183, %v3075
          %vm3106 = vcmp.eq.s32.totalorder %v1182, %v3078
          %vm3107 = vcmp.eq.s32.totalorder %v1183, %v3078
          %vm3108 = vcmp.eq.s32.totalorder %v1182, %v3081
          %vm3109 = vcmp.eq.s32.totalorder %v1183, %v3081
          %vm3110 = vcmp.eq.s32.totalorder %v1182, %v3084
          %vm3111 = vcmp.eq.s32.totalorder %v1183, %v3084
          %vm3112 = vcmp.eq.s32.totalorder %v1182, %v3087
          %vm3113 = vcmp.eq.s32.totalorder %v1183, %v3087
          %v3114 = vsel %vm3088, 1.0, 0.0
          %v3115 = vsel %vm3089, 1.0, 0.0
          %v3116 = vsel %vm3090, 1.0, 0.0
          %v3117 = vsel %vm3091, 1.0, 0.0
          %v3118 = vsel %vm3092, 1.0, 0.0
          %v3119 = vsel %vm3093, 1.0, 0.0
          %v3120 = vsel %vm3094, 1.0, 0.0
          %v3121 = vsel %vm3095, 1.0, 0.0
          %v3122 = vsel %vm3096, 1.0, 0.0
          %v3123 = vsel %vm3097, 1.0, 0.0
          %v3124 = vsel %vm3098, 1.0, 0.0
          %v3125 = vsel %vm3099, 1.0, 0.0
          %v3126 = vsel %vm3100, 1.0, 0.0
          %v3127 = vsel %vm3101, 1.0, 0.0
          %v3128 = vsel %vm3102, 1.0, 0.0
          %v3129 = vsel %vm3103, 1.0, 0.0
          %v3130 = vsel %vm3104, 1.0, 0.0
          %v3131 = vsel %vm3105, 1.0, 0.0
          %v3132 = vsel %vm3106, 1.0, 0.0
          %v3133 = vsel %vm3107, 1.0, 0.0
          %v3134 = vsel %vm3108, 1.0, 0.0
          %v3135 = vsel %vm3109, 1.0, 0.0
          %v3136 = vsel %vm3110, 1.0, 0.0
          %v3137 = vsel %vm3111, 1.0, 0.0
          %v3138 = vsel %vm3112, 1.0, 0.0
          %v3139 = vsel %vm3113, 1.0, 0.0
          %v3140 = vpack.c.bf16 %v3116, %v3114
          %v3141 = vpack.c.bf16 %v3117, %v3115
          %v3142 = vpack.c.bf16 %v3120, %v3118
          %v3143 = vpack.c.bf16 %v3121, %v3119
          %v3144 = vpack.c.bf16 %v3124, %v3122
          %v3145 = vpack.c.bf16 %v3125, %v3123
          %v3146 = vpack.c.bf16 %v3128, %v3126
          %v3147 = vpack.c.bf16 %v3129, %v3127
          %v3148 = vpack.c.bf16 %v3132, %v3130
          %v3149 = vpack.c.bf16 %v3133, %v3131
          %v3150 = vpack.c.bf16 %v3136, %v3134
          %v3151 = vpack.c.bf16 %v3137, %v3135
          %v3152 = vpack.c.bf16 %v3138, %v3138
          %v3153 = vpack.c.bf16 %v3139, %v3139
          %v3155 = vsel %vm1310, %v3141, 0
          %v3158 = vsel %vm1310, %v3143, 0
          %v3161 = vsel %vm1310, %v3145, 0
          %v3164 = vsel %vm1310, %v3147, 0
          %v3167 = vsel %vm1310, %v3149, 0
          %v3170 = vsel %vm1310, %v3151, 0
          %v3173 = vsel %vm1310, %v3153, 0
          %3175 = vmatprep.subr.bf16.mxu0 0
          %3176 = vmatpush1.bf16.msra.mxu0 %v1170
          %3177 = vmatprep.subr.bf16.mxu0 0
          %3178 = vmatpush1.bf16.msra.mxu0 %v1171
          %3179 = vmatprep.subr.bf16.mxu0 0
          %3180 = vmatpush1.bf16.msra.mxu0 %v1172
          %3181 = vmatprep.subr.bf16.mxu0 0
          %3182 = vmatpush1.bf16.msra.mxu0 %v1173
          %3183 = vmatprep.subr.bf16.mxu0 0
          %3184 = vmatpush1.bf16.msra.mxu0 %v1174
          %3185 = vmatprep.subr.bf16.mxu0 0
          %3186 = vmatpush1.bf16.msra.mxu0 %v1175
          %3187 = vmatprep.subr.bf16.mxu0 0
          %3188 = vmatpush1.bf16.msra.mxu0 %v1176
          %3189 = vmatprep.subr.bf16.mxu0 0
          %3190 = vmatpush1.bf16.msra.mxu0 %v1177
          %3191 = vmatprep.subr.bf16.mxu0 0
          %3192 = vmatpush1.bf16.msra.mxu0 %v1178
          %3193 = vmatprep.subr.bf16.mxu0 0
          %3194 = vmatpush1.bf16.msra.mxu0 %v1179
          %3195 = vmatprep.subr.bf16.mxu0 0
          %3196 = vmatpush1.bf16.msra.mxu0 %v1334
          %3197 = vmatprep.subr.bf16.mxu0 0
          %3198 = vmatpush1.bf16.msra.mxu0 0
          %3199 = vmatprep.subr.bf16.mxu0 0
          %3200 = vmatpush1.bf16.msra.mxu0 0
          %3201 = vmatprep.subr.bf16.mxu0 0
          %3202 = vmatpush1.bf16.msra.mxu0 0
          %3203 = vmatprep.subr.bf16.mxu0 0
          %3204 = vmatpush1.bf16.msra.mxu0 0
          %3205 = vmatprep.subr.bf16.mxu0 0
          %3206 = vmatpush1.bf16.msra.mxu0 0
          %3207 = vmatprep.mubr.bf16.mxu0 %v3155
          %3208 = vmatmul.mubr.bf16.gmra.mrb[0].mxu0 %v3140
          %v3209 = vpop.f32.mrb[0].mxu0
          %v3210 = vadd.f32 0.0, %v3209
          %v3211 = vpop.f32.mrb[0].mxu0
          %v3212 = vpop.f32.mrb[0].mxu0
          %v3213 = vadd.f32 0.0, %v3212
          %v3214 = vpop.f32.mrb[0].mxu0
          %3215 = vmatprep.mubr.bf16.mxu0 %v3158
          %3216 = vmatmul.mubr.bf16.gmra.mrb[0].mxu0 %v3142
          %v3217 = vpop.f32.mrb[0].mxu0
          %v3218 = vadd.f32 0.0, %v3217
          %v3219 = vpop.f32.mrb[0].mxu0
          %v3220 = vpop.f32.mrb[0].mxu0
          %v3221 = vadd.f32 0.0, %v3220
          %v3222 = vpop.f32.mrb[0].mxu0
          %3223 = vmatprep.mubr.bf16.mxu0 %v3161
          %3224 = vmatmul.mubr.bf16.gmra.mrb[0].mxu0 %v3144
          %v3225 = vpop.f32.mrb[0].mxu0
          %v3226 = vadd.f32 0.0, %v3225
          %v3227 = vpop.f32.mrb[0].mxu0
          %v3228 = vpop.f32.mrb[0].mxu0
          %v3229 = vadd.f32 0.0, %v3228
          %v3230 = vpop.f32.mrb[0].mxu0
          %3231 = vmatprep.mubr.bf16.mxu0 %v3164
          %3232 = vmatmul.mubr.bf16.gmra.mrb[0].mxu0 %v3146
          %v3233 = vpop.f32.mrb[0].mxu0
          %v3234 = vadd.f32 0.0, %v3233
          %v3235 = vpop.f32.mrb[0].mxu0
          %v3236 = vpop.f32.mrb[0].mxu0
          %v3237 = vadd.f32 0.0, %v3236
          %v3238 = vpop.f32.mrb[0].mxu0
          %3239 = vmatprep.mubr.bf16.mxu0 %v3167
          %3240 = vmatmul.mubr.bf16.gmra.mrb[0].mxu0 %v3148
          %v3241 = vpop.f32.mrb[0].mxu0
          %v3242 = vadd.f32 0.0, %v3241
          %v3243 = vpop.f32.mrb[0].mxu0
          %v3244 = vpop.f32.mrb[0].mxu0
          %v3245 = vadd.f32 0.0, %v3244
          %v3246 = vpop.f32.mrb[0].mxu0
          %3247 = vmatprep.mubr.bf16.mxu0 %v3170
          %3248 = vmatmul.mubr.bf16.gmra.mrb[0].mxu0 %v3150
          %v3249 = vpop.f32.mrb[0].mxu0
          %v3250 = vadd.f32 0.0, %v3249
          %v3251 = vpop.f32.mrb[0].mxu0
          %v3252 = vpop.f32.mrb[0].mxu0
          %v3253 = vadd.f32 0.0, %v3252
          %v3254 = vpop.f32.mrb[0].mxu0
          %3255 = vmatprep.mubr.bf16.mxu0 %v3173
          %3256 = vmatmul.mubr.bf16.gmra.mrb[0].mxu0 %v3152
          %v3257 = vpop.f32.mrb[0].mxu0
          %v3258 = vadd.f32 0.0, %v3257
          %v3259 = vpop.f32.mrb[0].mxu0
          %v3260 = vpop.f32.mrb[0].mxu0
          %v3261 = vpop.f32.mrb[0].mxu0
          %3262 = vdwg.mxu0
          %v3263 = vpack.c.bf16 %v3213, %v3210
          %v3264 = vpack.c.bf16 %v3221, %v3218
          %v3265 = vpack.c.bf16 %v3229, %v3226
          %v3266 = vpack.c.bf16 %v3237, %v3234
          %v3267 = vpack.c.bf16 %v3245, %v3242
          %v3268 = vpack.c.bf16 %v3253, %v3250
          %v3269 = vpack.c.bf16 %v3258, %v3258
          %s3270 = scalar_lea.vmem %s3, 40
          %v3271 = vld [vmem:[%s3270] sm:$0xf]
          %v3272 = vld [vmem:[%s3270 + $0x4] sm:$0xf]
          %v3275 = vunpack.c.l.b16 %v3271
          %v3276 = vunpack.c.l.b16 %v3272
          %v3277 = vpack.c.b16 %v3276, %v3275
          %v3279 = vsel %vm1438, %v3263, 0
          %v3282 = vsel %vm1438, %v3264, 0
          %v3285 = vsel %vm1438, %v3265, 0
          %v3288 = vsel %vm1438, %v3266, 0
          %v3291 = vsel %vm1438, %v3267, 0
          %v3294 = vsel %vm1438, %v3268, 0
          %v3297 = vsel %vm1438, %v3269, 0
          %v3300 = vand.u32 %v3277, %v1463
          %3302 = vmatprep.subr.bf16.mxu0 0
          %3303 = vmatpush1.bf16.msra.mxu0 %v3300
          %3304 = vmatprep.subr.bf16.mxu0 0
          %3305 = vmatpush1.bf16.msra.mxu0 0
          %3306 = vmatprep.subr.bf16.mxu0 0
          %3307 = vmatpush1.bf16.msra.mxu0 0
          %3308 = vmatprep.subr.bf16.mxu0 0
          %3309 = vmatpush1.bf16.msra.mxu0 0
          %3310 = vmatprep.subr.bf16.mxu0 0
          %3311 = vmatpush1.bf16.msra.mxu0 0
          %3312 = vmatprep.subr.bf16.mxu0 0
          %3313 = vmatpush1.bf16.msra.mxu0 0
          %3314 = vmatprep.subr.bf16.mxu0 0
          %3315 = vmatpush1.bf16.msra.mxu0 0
          %3316 = vmatprep.subr.bf16.mxu0 0
          %3317 = vmatpush1.bf16.msra.mxu0 0
          %3318 = vmatprep.subr.bf16.mxu0 0
          %3319 = vmatpush1.bf16.msra.mxu0 0
          %3320 = vmatprep.subr.bf16.mxu0 0
          %3321 = vmatpush1.bf16.msra.mxu0 0
          %3322 = vmatprep.subr.bf16.mxu0 0
          %3323 = vmatpush1.bf16.msra.mxu0 0
          %3324 = vmatprep.subr.bf16.mxu0 0
          %3325 = vmatpush1.bf16.msra.mxu0 0
          %3326 = vmatprep.subr.bf16.mxu0 0
          %3327 = vmatpush1.bf16.msra.mxu0 0
          %3328 = vmatprep.subr.bf16.mxu0 0
          %3329 = vmatpush1.bf16.msra.mxu0 0
          %3330 = vmatprep.subr.bf16.mxu0 0
          %3331 = vmatpush1.bf16.msra.mxu0 0
          %3332 = vmatprep.subr.bf16.mxu0 0
          %3333 = vmatpush1.bf16.msra.mxu0 0
          %3334 = vmatprep.mubr.bf16.mxu0 0
          %3335 = vmatmul.mubr.bf16.gmra.mrb[0].mxu0 %v3279
          %v3336 = vpop.f32.mrb[0].mxu0
          %v3337 = vadd.f32 0.0, %v3336
          %v3338 = vpop.f32.mrb[0].mxu0
          %v3339 = vpop.f32.mrb[0].mxu0
          %v3340 = vadd.f32 0.0, %v3339
          %v3341 = vpop.f32.mrb[0].mxu0
          %3342 = vmatprep.mubr.bf16.mxu0 0
          %3343 = vmatmul.mubr.bf16.gmra.mrb[0].mxu0 %v3282
          %v3344 = vpop.f32.mrb[0].mxu0
          %v3345 = vadd.f32 0.0, %v3344
          %v3346 = vpop.f32.mrb[0].mxu0
          %v3347 = vpop.f32.mrb[0].mxu0
          %v3348 = vadd.f32 0.0, %v3347
          %v3349 = vpop.f32.mrb[0].mxu0
          %3350 = vmatprep.mubr.bf16.mxu0 0
          %3351 = vmatmul.mubr.bf16.gmra.mrb[0].mxu0 %v3285
          %v3352 = vpop.f32.mrb[0].mxu0
          %v3353 = vadd.f32 0.0, %v3352
          %v3354 = vpop.f32.mrb[0].mxu0
          %v3355 = vpop.f32.mrb[0].mxu0
          %v3356 = vadd.f32 0.0, %v3355
          %v3357 = vpop.f32.mrb[0].mxu0
          %3358 = vmatprep.mubr.bf16.mxu0 0
          %3359 = vmatmul.mubr.bf16.gmra.mrb[0].mxu0 %v3288
          %v3360 = vpop.f32.mrb[0].mxu0
          %v3361 = vadd.f32 0.0, %v3360
          %v3362 = vpop.f32.mrb[0].mxu0
          %v3363 = vpop.f32.mrb[0].mxu0
          %v3364 = vadd.f32 0.0, %v3363
          %v3365 = vpop.f32.mrb[0].mxu0
          %3366 = vmatprep.mubr.bf16.mxu0 0
          %3367 = vmatmul.mubr.bf16.gmra.mrb[0].mxu0 %v3291
          %v3368 = vpop.f32.mrb[0].mxu0
          %v3369 = vadd.f32 0.0, %v3368
          %v3370 = vpop.f32.mrb[0].mxu0
          %v3371 = vpop.f32.mrb[0].mxu0
          %v3372 = vadd.f32 0.0, %v3371
          %v3373 = vpop.f32.mrb[0].mxu0
          %3374 = vmatprep.mubr.bf16.mxu0 0
          %3375 = vmatmul.mubr.bf16.gmra.mrb[0].mxu0 %v3294
          %v3376 = vpop.f32.mrb[0].mxu0
          %v3377 = vadd.f32 0.0, %v3376
          %v3378 = vpop.f32.mrb[0].mxu0
          %v3379 = vpop.f32.mrb[0].mxu0
          %v3380 = vadd.f32 0.0, %v3379
          %v3381 = vpop.f32.mrb[0].mxu0
          %3382 = vmatprep.mubr.bf16.mxu0 0
          %3383 = vmatmul.mubr.bf16.gmra.mrb[0].mxu0 %v3297
          %v3384 = vpop.f32.mrb[0].mxu0
          %v3385 = vadd.f32 0.0, %v3384
          %v3386 = vpop.f32.mrb[0].mxu0
          %v3387 = vpop.f32.mrb[0].mxu0
          %v3388 = vpop.f32.mrb[0].mxu0
          %3389 = vdwg.mxu0
          %v3390 = vadd.f32 %v3023, %v3337
          %v3391 = vadd.f32 %v3024, %v3340
          %v3392 = vadd.f32 %v3025, %v3345
          %v3393 = vadd.f32 %v3026, %v3348
          %v3394 = vadd.f32 %v3027, %v3353
          %v3395 = vadd.f32 %v3028, %v3356
          %v3396 = vadd.f32 %v3029, %v3361
          %v3397 = vadd.f32 %v3030, %v3364
          %v3398 = vadd.f32 %v3031, %v3369
          %v3399 = vadd.f32 %v3032, %v3372
          %v3400 = vadd.f32 %v3033, %v3377
          %v3401 = vadd.f32 %v3034, %v3380
          %v3402 = vadd.f32 %v3035, %v3385
          %v3403 = vadd.s32 %v1184, 18
          %v3404 = vadd.s32 %v1185, 18
          %v3405 = vadd.s32 %v1186, 18
          %v3406 = vadd.s32 %v1187, 18
          %v3407 = vadd.s32 %v1188, 18
          %v3408 = vadd.s32 %v1189, 18
          %v3409 = vadd.s32 %v1190, 18
          %v3410 = vadd.s32 %v1191, 18
          %v3411 = vadd.s32 %v1192, 18
          %v3412 = vadd.s32 %v1193, 18
          %v3413 = vadd.s32 %v1194, 18
          %v3414 = vadd.s32 %v1195, 18
          %v3415 = vadd.s32 %v1196, 18
          %3416 = vset.pattern.permute.xlu0 0
          %3417 = vperm.xlu0 %3416, %v3403
          %v3418 = vpop.permute.xlu0 %3417
          %3419 = vset.pattern.permute.xlu0 0
          %3420 = vperm.xlu0 %3419, %v3404
          %v3421 = vpop.permute.xlu0 %3420
          %3422 = vset.pattern.permute.xlu0 0
          %3423 = vperm.xlu0 %3422, %v3405
          %v3424 = vpop.permute.xlu0 %3423
          %3425 = vset.pattern.permute.xlu0 0
          %3426 = vperm.xlu0 %3425, %v3406
          %v3427 = vpop.permute.xlu0 %3426
          %3428 = vset.pattern.permute.xlu0 0
          %3429 = vperm.xlu0 %3428, %v3407
          %v3430 = vpop.permute.xlu0 %3429
          %3431 = vset.pattern.permute.xlu0 0
          %3432 = vperm.xlu0 %3431, %v3408
          %v3433 = vpop.permute.xlu0 %3432
          %3434 = vset.pattern.permute.xlu0 0
          %3435 = vperm.xlu0 %3434, %v3409
          %v3436 = vpop.permute.xlu0 %3435
          %3437 = vset.pattern.permute.xlu0 0
          %3438 = vperm.xlu0 %3437, %v3410
          %v3439 = vpop.permute.xlu0 %3438
          %3440 = vset.pattern.permute.xlu0 0
          %3441 = vperm.xlu0 %3440, %v3411
          %v3442 = vpop.permute.xlu0 %3441
          %3443 = vset.pattern.permute.xlu0 0
          %3444 = vperm.xlu0 %3443, %v3412
          %v3445 = vpop.permute.xlu0 %3444
          %3446 = vset.pattern.permute.xlu0 0
          %3447 = vperm.xlu0 %3446, %v3413
          %v3448 = vpop.permute.xlu0 %3447
          %3449 = vset.pattern.permute.xlu0 0
          %3450 = vperm.xlu0 %3449, %v3414
          %v3451 = vpop.permute.xlu0 %3450
          %3452 = vset.pattern.permute.xlu0 0
          %3453 = vperm.xlu0 %3452, %v3415
          %v3454 = vpop.permute.xlu0 %3453
          %vm3455 = vcmp.eq.s32.totalorder %v1182, %v3418
          %vm3456 = vcmp.eq.s32.totalorder %v1183, %v3418
          %vm3457 = vcmp.eq.s32.totalorder %v1182, %v3421
          %vm3458 = vcmp.eq.s32.totalorder %v1183, %v3421
          %vm3459 = vcmp.eq.s32.totalorder %v1182, %v3424
          %vm3460 = vcmp.eq.s32.totalorder %v1183, %v3424
          %vm3461 = vcmp.eq.s32.totalorder %v1182, %v3427
          %vm3462 = vcmp.eq.s32.totalorder %v1183, %v3427
          %vm3463 = vcmp.eq.s32.totalorder %v1182, %v3430
          %vm3464 = vcmp.eq.s32.totalorder %v1183, %v3430
          %vm3465 = vcmp.eq.s32.totalorder %v1182, %v3433
          %vm3466 = vcmp.eq.s32.totalorder %v1183, %v3433
          %vm3467 = vcmp.eq.s32.totalorder %v1182, %v3436
          %vm3468 = vcmp.eq.s32.totalorder %v1183, %v3436
          %vm3469 = vcmp.eq.s32.totalorder %v1182, %v3439
          %vm3470 = vcmp.eq.s32.totalorder %v1183, %v3439
          %vm3471 = vcmp.eq.s32.totalorder %v1182, %v3442
          %vm3472 = vcmp.eq.s32.totalorder %v1183, %v3442
          %vm3473 = vcmp.eq.s32.totalorder %v1182, %v3445
          %vm3474 = vcmp.eq.s32.totalorder %v1183, %v3445
          %vm3475 = vcmp.eq.s32.totalorder %v1182, %v3448
          %vm3476 = vcmp.eq.s32.totalorder %v1183, %v3448
          %vm3477 = vcmp.eq.s32.totalorder %v1182, %v3451
          %vm3478 = vcmp.eq.s32.totalorder %v1183, %v3451
          %vm3479 = vcmp.eq.s32.totalorder %v1182, %v3454
          %vm3480 = vcmp.eq.s32.totalorder %v1183, %v3454
          %v3481 = vsel %vm3455, 1.0, 0.0
          %v3482 = vsel %vm3456, 1.0, 0.0
          %v3483 = vsel %vm3457, 1.0, 0.0
          %v3484 = vsel %vm3458, 1.0, 0.0
          %v3485 = vsel %vm3459, 1.0, 0.0
          %v3486 = vsel %vm3460, 1.0, 0.0
          %v3487 = vsel %vm3461, 1.0, 0.0
          %v3488 = vsel %vm3462, 1.0, 0.0
          %v3489 = vsel %vm3463, 1.0, 0.0
          %v3490 = vsel %vm3464, 1.0, 0.0
          %v3491 = vsel %vm3465, 1.0, 0.0
          %v3492 = vsel %vm3466, 1.0, 0.0
          %v3493 = vsel %vm3467, 1.0, 0.0
          %v3494 = vsel %vm3468, 1.0, 0.0
          %v3495 = vsel %vm3469, 1.0, 0.0
          %v3496 = vsel %vm3470, 1.0, 0.0
          %v3497 = vsel %vm3471, 1.0, 0.0
          %v3498 = vsel %vm3472, 1.0, 0.0
          %v3499 = vsel %vm3473, 1.0, 0.0
          %v3500 = vsel %vm3474, 1.0, 0.0
          %v3501 = vsel %vm3475, 1.0, 0.0
          %v3502 = vsel %vm3476, 1.0, 0.0
          %v3503 = vsel %vm3477, 1.0, 0.0
          %v3504 = vsel %vm3478, 1.0, 0.0
          %v3505 = vsel %vm3479, 1.0, 0.0
          %v3506 = vsel %vm3480, 1.0, 0.0
          %v3507 = vpack.c.bf16 %v3483, %v3481
          %v3508 = vpack.c.bf16 %v3484, %v3482
          %v3509 = vpack.c.bf16 %v3487, %v3485
          %v3510 = vpack.c.bf16 %v3488, %v3486
          %v3511 = vpack.c.bf16 %v3491, %v3489
          %v3512 = vpack.c.bf16 %v3492, %v3490
          %v3513 = vpack.c.bf16 %v3495, %v3493
          %v3514 = vpack.c.bf16 %v3496, %v3494
          %v3515 = vpack.c.bf16 %v3499, %v3497
          %v3516 = vpack.c.bf16 %v3500, %v3498
          %v3517 = vpack.c.bf16 %v3503, %v3501
          %v3518 = vpack.c.bf16 %v3504, %v3502
          %v3519 = vpack.c.bf16 %v3505, %v3505
          %v3520 = vpack.c.bf16 %v3506, %v3506
          %v3522 = vsel %vm1310, %v3508, 0
          %v3525 = vsel %vm1310, %v3510, 0
          %v3528 = vsel %vm1310, %v3512, 0
          %v3531 = vsel %vm1310, %v3514, 0
          %v3534 = vsel %vm1310, %v3516, 0
          %v3537 = vsel %vm1310, %v3518, 0
          %v3540 = vsel %vm1310, %v3520, 0
          %3542 = vmatprep.subr.bf16.mxu0 0
          %3543 = vmatpush1.bf16.msra.mxu0 %v1170
          %3544 = vmatprep.subr.bf16.mxu0 0
          %3545 = vmatpush1.bf16.msra.mxu0 %v1171
          %3546 = vmatprep.subr.bf16.mxu0 0
          %3547 = vmatpush1.bf16.msra.mxu0 %v1172
          %3548 = vmatprep.subr.bf16.mxu0 0
          %3549 = vmatpush1.bf16.msra.mxu0 %v1173
          %3550 = vmatprep.subr.bf16.mxu0 0
          %3551 = vmatpush1.bf16.msra.mxu0 %v1174
          %3552 = vmatprep.subr.bf16.mxu0 0
          %3553 = vmatpush1.bf16.msra.mxu0 %v1175
          %3554 = vmatprep.subr.bf16.mxu0 0
          %3555 = vmatpush1.bf16.msra.mxu0 %v1176
          %3556 = vmatprep.subr.bf16.mxu0 0
          %3557 = vmatpush1.bf16.msra.mxu0 %v1177
          %3558 = vmatprep.subr.bf16.mxu0 0
          %3559 = vmatpush1.bf16.msra.mxu0 %v1178
          %3560 = vmatprep.subr.bf16.mxu0 0
          %3561 = vmatpush1.bf16.msra.mxu0 %v1179
          %3562 = vmatprep.subr.bf16.mxu0 0
          %3563 = vmatpush1.bf16.msra.mxu0 %v1334
          %3564 = vmatprep.subr.bf16.mxu0 0
          %3565 = vmatpush1.bf16.msra.mxu0 0
          %3566 = vmatprep.subr.bf16.mxu0 0
          %3567 = vmatpush1.bf16.msra.mxu0 0
          %3568 = vmatprep.subr.bf16.mxu0 0
          %3569 = vmatpush1.bf16.msra.mxu0 0
          %3570 = vmatprep.subr.bf16.mxu0 0
          %3571 = vmatpush1.bf16.msra.mxu0 0
          %3572 = vmatprep.subr.bf16.mxu0 0
          %3573 = vmatpush1.bf16.msra.mxu0 0
          %3574 = vmatprep.mubr.bf16.mxu0 %v3522
          %3575 = vmatmul.mubr.bf16.gmra.mrb[0].mxu0 %v3507
          %v3576 = vpop.f32.mrb[0].mxu0
          %v3577 = vadd.f32 0.0, %v3576
          %v3578 = vpop.f32.mrb[0].mxu0
          %v3579 = vpop.f32.mrb[0].mxu0
          %v3580 = vadd.f32 0.0, %v3579
          %v3581 = vpop.f32.mrb[0].mxu0
          %3582 = vmatprep.mubr.bf16.mxu0 %v3525
          %3583 = vmatmul.mubr.bf16.gmra.mrb[0].mxu0 %v3509
          %v3584 = vpop.f32.mrb[0].mxu0
          %v3585 = vadd.f32 0.0, %v3584
          %v3586 = vpop.f32.mrb[0].mxu0
          %v3587 = vpop.f32.mrb[0].mxu0
          %v3588 = vadd.f32 0.0, %v3587
          %v3589 = vpop.f32.mrb[0].mxu0
          %3590 = vmatprep.mubr.bf16.mxu0 %v3528
          %3591 = vmatmul.mubr.bf16.gmra.mrb[0].mxu0 %v3511
          %v3592 = vpop.f32.mrb[0].mxu0
          %v3593 = vadd.f32 0.0, %v3592
          %v3594 = vpop.f32.mrb[0].mxu0
          %v3595 = vpop.f32.mrb[0].mxu0
          %v3596 = vadd.f32 0.0, %v3595
          %v3597 = vpop.f32.mrb[0].mxu0
          %3598 = vmatprep.mubr.bf16.mxu0 %v3531
          %3599 = vmatmul.mubr.bf16.gmra.mrb[0].mxu0 %v3513
          %v3600 = vpop.f32.mrb[0].mxu0
          %v3601 = vadd.f32 0.0, %v3600
          %v3602 = vpop.f32.mrb[0].mxu0
          %v3603 = vpop.f32.mrb[0].mxu0
          %v3604 = vadd.f32 0.0, %v3603
          %v3605 = vpop.f32.mrb[0].mxu0
          %3606 = vmatprep.mubr.bf16.mxu0 %v3534
          %3607 = vmatmul.mubr.bf16.gmra.mrb[0].mxu0 %v3515
          %v3608 = vpop.f32.mrb[0].mxu0
          %v3609 = vadd.f32 0.0, %v3608
          %v3610 = vpop.f32.mrb[0].mxu0
          %v3611 = vpop.f32.mrb[0].mxu0
          %v3612 = vadd.f32 0.0, %v3611
          %v3613 = vpop.f32.mrb[0].mxu0
          %3614 = vmatprep.mubr.bf16.mxu0 %v3537
          %3615 = vmatmul.mubr.bf16.gmra.mrb[0].mxu0 %v3517
          %v3616 = vpop.f32.mrb[0].mxu0
          %v3617 = vadd.f32 0.0, %v3616
          %v3618 = vpop.f32.mrb[0].mxu0
          %v3619 = vpop.f32.mrb[0].mxu0
          %v3620 = vadd.f32 0.0, %v3619
          %v3621 = vpop.f32.mrb[0].mxu0
          %3622 = vmatprep.mubr.bf16.mxu0 %v3540
          %3623 = vmatmul.mubr.bf16.gmra.mrb[0].mxu0 %v3519
          %v3624 = vpop.f32.mrb[0].mxu0
          %v3625 = vadd.f32 0.0, %v3624
          %v3626 = vpop.f32.mrb[0].mxu0
          %v3627 = vpop.f32.mrb[0].mxu0
          %v3628 = vpop.f32.mrb[0].mxu0
          %3629 = vdwg.mxu0
          %v3630 = vpack.c.bf16 %v3580, %v3577
          %v3631 = vpack.c.bf16 %v3588, %v3585
          %v3632 = vpack.c.bf16 %v3596, %v3593
          %v3633 = vpack.c.bf16 %v3604, %v3601
          %v3634 = vpack.c.bf16 %v3612, %v3609
          %v3635 = vpack.c.bf16 %v3620, %v3617
          %v3636 = vpack.c.bf16 %v3625, %v3625
          %s3637 = scalar_lea.vmem %s3, 48
          %v3638 = vld [vmem:[%s3637] sm:$0xf]
          %v3639 = vld [vmem:[%s3637 + $0x4] sm:$0xf]
          %v3642 = vunpack.c.l.b16 %v3638
          %v3643 = vunpack.c.l.b16 %v3639
          %v3644 = vpack.c.b16 %v3643, %v3642
          %v3646 = vsel %vm1438, %v3630, 0
          %v3649 = vsel %vm1438, %v3631, 0
          %v3652 = vsel %vm1438, %v3632, 0
          %v3655 = vsel %vm1438, %v3633, 0
          %v3658 = vsel %vm1438, %v3634, 0
          %v3661 = vsel %vm1438, %v3635, 0
          %v3664 = vsel %vm1438, %v3636, 0
          %v3667 = vand.u32 %v3644, %v1463
          %3669 = vmatprep.subr.bf16.mxu0 0
          %3670 = vmatpush1.bf16.msra.mxu0 %v3667
          %3671 = vmatprep.subr.bf16.mxu0 0
          %3672 = vmatpush1.bf16.msra.mxu0 0
          %3673 = vmatprep.subr.bf16.mxu0 0
          %3674 = vmatpush1.bf16.msra.mxu0 0
          %3675 = vmatprep.subr.bf16.mxu0 0
          %3676 = vmatpush1.bf16.msra.mxu0 0
          %3677 = vmatprep.subr.bf16.mxu0 0
          %3678 = vmatpush1.bf16.msra.mxu0 0
          %3679 = vmatprep.subr.bf16.mxu0 0
          %3680 = vmatpush1.bf16.msra.mxu0 0
          %3681 = vmatprep.subr.bf16.mxu0 0
          %3682 = vmatpush1.bf16.msra.mxu0 0
          %3683 = vmatprep.subr.bf16.mxu0 0
          %3684 = vmatpush1.bf16.msra.mxu0 0
          %3685 = vmatprep.subr.bf16.mxu0 0
          %3686 = vmatpush1.bf16.msra.mxu0 0
          %3687 = vmatprep.subr.bf16.mxu0 0
          %3688 = vmatpush1.bf16.msra.mxu0 0
          %3689 = vmatprep.subr.bf16.mxu0 0
          %3690 = vmatpush1.bf16.msra.mxu0 0
          %3691 = vmatprep.subr.bf16.mxu0 0
          %3692 = vmatpush1.bf16.msra.mxu0 0
          %3693 = vmatprep.subr.bf16.mxu0 0
          %3694 = vmatpush1.bf16.msra.mxu0 0
          %3695 = vmatprep.subr.bf16.mxu0 0
          %3696 = vmatpush1.bf16.msra.mxu0 0
          %3697 = vmatprep.subr.bf16.mxu0 0
          %3698 = vmatpush1.bf16.msra.mxu0 0
          %3699 = vmatprep.subr.bf16.mxu0 0
          %3700 = vmatpush1.bf16.msra.mxu0 0
          %3701 = vmatprep.mubr.bf16.mxu0 0
          %3702 = vmatmul.mubr.bf16.gmra.mrb[0].mxu0 %v3646
          %v3703 = vpop.f32.mrb[0].mxu0
          %v3704 = vadd.f32 0.0, %v3703
          %v3705 = vpop.f32.mrb[0].mxu0
          %v3706 = vpop.f32.mrb[0].mxu0
          %v3707 = vadd.f32 0.0, %v3706
          %v3708 = vpop.f32.mrb[0].mxu0
          %3709 = vmatprep.mubr.bf16.mxu0 0
          %3710 = vmatmul.mubr.bf16.gmra.mrb[0].mxu0 %v3649
          %v3711 = vpop.f32.mrb[0].mxu0
          %v3712 = vadd.f32 0.0, %v3711
          %v3713 = vpop.f32.mrb[0].mxu0
          %v3714 = vpop.f32.mrb[0].mxu0
          %v3715 = vadd.f32 0.0, %v3714
          %v3716 = vpop.f32.mrb[0].mxu0
          %3717 = vmatprep.mubr.bf16.mxu0 0
          %3718 = vmatmul.mubr.bf16.gmra.mrb[0].mxu0 %v3652
          %v3719 = vpop.f32.mrb[0].mxu0
          %v3720 = vadd.f32 0.0, %v3719
          %v3721 = vpop.f32.mrb[0].mxu0
          %v3722 = vpop.f32.mrb[0].mxu0
          %v3723 = vadd.f32 0.0, %v3722
          %v3724 = vpop.f32.mrb[0].mxu0
          %3725 = vmatprep.mubr.bf16.mxu0 0
          %3726 = vmatmul.mubr.bf16.gmra.mrb[0].mxu0 %v3655
          %v3727 = vpop.f32.mrb[0].mxu0
          %v3728 = vadd.f32 0.0, %v3727
          %v3729 = vpop.f32.mrb[0].mxu0
          %v3730 = vpop.f32.mrb[0].mxu0
          %v3731 = vadd.f32 0.0, %v3730
          %v3732 = vpop.f32.mrb[0].mxu0
          %3733 = vmatprep.mubr.bf16.mxu0 0
          %3734 = vmatmul.mubr.bf16.gmra.mrb[0].mxu0 %v3658
          %v3735 = vpop.f32.mrb[0].mxu0
          %v3736 = vadd.f32 0.0, %v3735
          %v3737 = vpop.f32.mrb[0].mxu0
          %v3738 = vpop.f32.mrb[0].mxu0
          %v3739 = vadd.f32 0.0, %v3738
          %v3740 = vpop.f32.mrb[0].mxu0
          %3741 = vmatprep.mubr.bf16.mxu0 0
          %3742 = vmatmul.mubr.bf16.gmra.mrb[0].mxu0 %v3661
          %v3743 = vpop.f32.mrb[0].mxu0
          %v3744 = vadd.f32 0.0, %v3743
          %v3745 = vpop.f32.mrb[0].mxu0
          %v3746 = vpop.f32.mrb[0].mxu0
          %v3747 = vadd.f32 0.0, %v3746
          %v3748 = vpop.f32.mrb[0].mxu0
          %3749 = vmatprep.mubr.bf16.mxu0 0
          %3750 = vmatmul.mubr.bf16.gmra.mrb[0].mxu0 %v3664
          %v3751 = vpop.f32.mrb[0].mxu0
          %v3752 = vadd.f32 0.0, %v3751
          %v3753 = vpop.f32.mrb[0].mxu0
          %v3754 = vpop.f32.mrb[0].mxu0
          %v3755 = vpop.f32.mrb[0].mxu0
          %3756 = vdwg.mxu0
          %v3757 = vadd.f32 %v3390, %v3704
          %v3758 = vadd.f32 %v3391, %v3707
          %v3759 = vadd.f32 %v3392, %v3712
          %v3760 = vadd.f32 %v3393, %v3715
          %v3761 = vadd.f32 %v3394, %v3720
          %v3762 = vadd.f32 %v3395, %v3723
          %v3763 = vadd.f32 %v3396, %v3728
          %v3764 = vadd.f32 %v3397, %v3731
          %v3765 = vadd.f32 %v3398, %v3736
          %v3766 = vadd.f32 %v3399, %v3739
          %v3767 = vadd.f32 %v3400, %v3744
          %v3768 = vadd.f32 %v3401, %v3747
          %v3769 = vadd.f32 %v3402, %v3752
          %v3770 = vadd.s32 %v1184, 19
          %v3771 = vadd.s32 %v1185, 19
          %v3772 = vadd.s32 %v1186, 19
          %v3773 = vadd.s32 %v1187, 19
          %v3774 = vadd.s32 %v1188, 19
          %v3775 = vadd.s32 %v1189, 19
          %v3776 = vadd.s32 %v1190, 19
          %v3777 = vadd.s32 %v1191, 19
          %v3778 = vadd.s32 %v1192, 19
          %v3779 = vadd.s32 %v1193, 19
          %v3780 = vadd.s32 %v1194, 19
          %v3781 = vadd.s32 %v1195, 19
          %v3782 = vadd.s32 %v1196, 19
          %3783 = vset.pattern.permute.xlu0 0
          %3784 = vperm.xlu0 %3783, %v3770
          %v3785 = vpop.permute.xlu0 %3784
          %3786 = vset.pattern.permute.xlu0 0
          %3787 = vperm.xlu0 %3786, %v3771
          %v3788 = vpop.permute.xlu0 %3787
          %3789 = vset.pattern.permute.xlu0 0
          %3790 = vperm.xlu0 %3789, %v3772
          %v3791 = vpop.permute.xlu0 %3790
          %3792 = vset.pattern.permute.xlu0 0
          %3793 = vperm.xlu0 %3792, %v3773
          %v3794 = vpop.permute.xlu0 %3793
          %3795 = vset.pattern.permute.xlu0 0
          %3796 = vperm.xlu0 %3795, %v3774
          %v3797 = vpop.permute.xlu0 %3796
          %3798 = vset.pattern.permute.xlu0 0
          %3799 = vperm.xlu0 %3798, %v3775
          %v3800 = vpop.permute.xlu0 %3799
          %3801 = vset.pattern.permute.xlu0 0
          %3802 = vperm.xlu0 %3801, %v3776
          %v3803 = vpop.permute.xlu0 %3802
          %3804 = vset.pattern.permute.xlu0 0
          %3805 = vperm.xlu0 %3804, %v3777
          %v3806 = vpop.permute.xlu0 %3805
          %3807 = vset.pattern.permute.xlu0 0
          %3808 = vperm.xlu0 %3807, %v3778
          %v3809 = vpop.permute.xlu0 %3808
          %3810 = vset.pattern.permute.xlu0 0
          %3811 = vperm.xlu0 %3810, %v3779
          %v3812 = vpop.permute.xlu0 %3811
          %3813 = vset.pattern.permute.xlu0 0
          %3814 = vperm.xlu0 %3813, %v3780
          %v3815 = vpop.permute.xlu0 %3814
          %3816 = vset.pattern.permute.xlu0 0
          %3817 = vperm.xlu0 %3816, %v3781
          %v3818 = vpop.permute.xlu0 %3817
          %3819 = vset.pattern.permute.xlu0 0
          %3820 = vperm.xlu0 %3819, %v3782
          %v3821 = vpop.permute.xlu0 %3820
          %vm3822 = vcmp.eq.s32.totalorder %v1182, %v3785
          %vm3823 = vcmp.eq.s32.totalorder %v1183, %v3785
          %vm3824 = vcmp.eq.s32.totalorder %v1182, %v3788
          %vm3825 = vcmp.eq.s32.totalorder %v1183, %v3788
          %vm3826 = vcmp.eq.s32.totalorder %v1182, %v3791
          %vm3827 = vcmp.eq.s32.totalorder %v1183, %v3791
          %vm3828 = vcmp.eq.s32.totalorder %v1182, %v3794
          %vm3829 = vcmp.eq.s32.totalorder %v1183, %v3794
          %vm3830 = vcmp.eq.s32.totalorder %v1182, %v3797
          %vm3831 = vcmp.eq.s32.totalorder %v1183, %v3797
          %vm3832 = vcmp.eq.s32.totalorder %v1182, %v3800
          %vm3833 = vcmp.eq.s32.totalorder %v1183, %v3800
          %vm3834 = vcmp.eq.s32.totalorder %v1182, %v3803
          %vm3835 = vcmp.eq.s32.totalorder %v1183, %v3803
          %vm3836 = vcmp.eq.s32.totalorder %v1182, %v3806
          %vm3837 = vcmp.eq.s32.totalorder %v1183, %v3806
          %vm3838 = vcmp.eq.s32.totalorder %v1182, %v3809
          %vm3839 = vcmp.eq.s32.totalorder %v1183, %v3809
          %vm3840 = vcmp.eq.s32.totalorder %v1182, %v3812
          %vm3841 = vcmp.eq.s32.totalorder %v1183, %v3812
          %vm3842 = vcmp.eq.s32.totalorder %v1182, %v3815
          %vm3843 = vcmp.eq.s32.totalorder %v1183, %v3815
          %vm3844 = vcmp.eq.s32.totalorder %v1182, %v3818
          %vm3845 = vcmp.eq.s32.totalorder %v1183, %v3818
          %vm3846 = vcmp.eq.s32.totalorder %v1182, %v3821
          %vm3847 = vcmp.eq.s32.totalorder %v1183, %v3821
          %v3848 = vsel %vm3822, 1.0, 0.0
          %v3849 = vsel %vm3823, 1.0, 0.0
          %v3850 = vsel %vm3824, 1.0, 0.0
          %v3851 = vsel %vm3825, 1.0, 0.0
          %v3852 = vsel %vm3826, 1.0, 0.0
          %v3853 = vsel %vm3827, 1.0, 0.0
          %v3854 = vsel %vm3828, 1.0, 0.0
          %v3855 = vsel %vm3829, 1.0, 0.0
          %v3856 = vsel %vm3830, 1.0, 0.0
          %v3857 = vsel %vm3831, 1.0, 0.0
          %v3858 = vsel %vm3832, 1.0, 0.0
          %v3859 = vsel %vm3833, 1.0, 0.0
          %v3860 = vsel %vm3834, 1.0, 0.0
          %v3861 = vsel %vm3835, 1.0, 0.0
          %v3862 = vsel %vm3836, 1.0, 0.0
          %v3863 = vsel %vm3837, 1.0, 0.0
          %v3864 = vsel %vm3838, 1.0, 0.0
          %v3865 = vsel %vm3839, 1.0, 0.0
          %v3866 = vsel %vm3840, 1.0, 0.0
          %v3867 = vsel %vm3841, 1.0, 0.0
          %v3868 = vsel %vm3842, 1.0, 0.0
          %v3869 = vsel %vm3843, 1.0, 0.0
          %v3870 = vsel %vm3844, 1.0, 0.0
          %v3871 = vsel %vm3845, 1.0, 0.0
          %v3872 = vsel %vm3846, 1.0, 0.0
          %v3873 = vsel %vm3847, 1.0, 0.0
          %v3874 = vpack.c.bf16 %v3850, %v3848
          %v3875 = vpack.c.bf16 %v3851, %v3849
          %v3876 = vpack.c.bf16 %v3854, %v3852
          %v3877 = vpack.c.bf16 %v3855, %v3853
          %v3878 = vpack.c.bf16 %v3858, %v3856
          %v3879 = vpack.c.bf16 %v3859, %v3857
          %v3880 = vpack.c.bf16 %v3862, %v3860
          %v3881 = vpack.c.bf16 %v3863, %v3861
          %v3882 = vpack.c.bf16 %v3866, %v3864
          %v3883 = vpack.c.bf16 %v3867, %v3865
          %v3884 = vpack.c.bf16 %v3870, %v3868
          %v3885 = vpack.c.bf16 %v3871, %v3869
          %v3886 = vpack.c.bf16 %v3872, %v3872
          %v3887 = vpack.c.bf16 %v3873, %v3873
          %v3889 = vsel %vm1310, %v3875, 0
          %v3892 = vsel %vm1310, %v3877, 0
          %v3895 = vsel %vm1310, %v3879, 0
          %v3898 = vsel %vm1310, %v3881, 0
          %v3901 = vsel %vm1310, %v3883, 0
          %v3904 = vsel %vm1310, %v3885, 0
          %v3907 = vsel %vm1310, %v3887, 0
          %3909 = vmatprep.subr.bf16.mxu0 0
          %3910 = vmatpush1.bf16.msra.mxu0 %v1170
          %3911 = vmatprep.subr.bf16.mxu0 0
          %3912 = vmatpush1.bf16.msra.mxu0 %v1171
          %3913 = vmatprep.subr.bf16.mxu0 0
          %3914 = vmatpush1.bf16.msra.mxu0 %v1172
          %3915 = vmatprep.subr.bf16.mxu0 0
          %3916 = vmatpush1.bf16.msra.mxu0 %v1173
          %3917 = vmatprep.subr.bf16.mxu0 0
          %3918 = vmatpush1.bf16.msra.mxu0 %v1174
          %3919 = vmatprep.subr.bf16.mxu0 0
          %3920 = vmatpush1.bf16.msra.mxu0 %v1175
          %3921 = vmatprep.subr.bf16.mxu0 0
          %3922 = vmatpush1.bf16.msra.mxu0 %v1176
          %3923 = vmatprep.subr.bf16.mxu0 0
          %3924 = vmatpush1.bf16.msra.mxu0 %v1177
          %3925 = vmatprep.subr.bf16.mxu0 0
          %3926 = vmatpush1.bf16.msra.mxu0 %v1178
          %3927 = vmatprep.subr.bf16.mxu0 0
          %3928 = vmatpush1.bf16.msra.mxu0 %v1179
          %3929 = vmatprep.subr.bf16.mxu0 0
          %3930 = vmatpush1.bf16.msra.mxu0 %v1334
          %3931 = vmatprep.subr.bf16.mxu0 0
          %3932 = vmatpush1.bf16.msra.mxu0 0
          %3933 = vmatprep.subr.bf16.mxu0 0
          %3934 = vmatpush1.bf16.msra.mxu0 0
          %3935 = vmatprep.subr.bf16.mxu0 0
          %3936 = vmatpush1.bf16.msra.mxu0 0
          %3937 = vmatprep.subr.bf16.mxu0 0
          %3938 = vmatpush1.bf16.msra.mxu0 0
          %3939 = vmatprep.subr.bf16.mxu0 0
          %3940 = vmatpush1.bf16.msra.mxu0 0
          %3941 = vmatprep.mubr.bf16.mxu0 %v3889
          %3942 = vmatmul.mubr.bf16.gmra.mrb[0].mxu0 %v3874
          %v3943 = vpop.f32.mrb[0].mxu0
          %v3944 = vadd.f32 0.0, %v3943
          %v3945 = vpop.f32.mrb[0].mxu0
          %v3946 = vpop.f32.mrb[0].mxu0
          %v3947 = vadd.f32 0.0, %v3946
          %v3948 = vpop.f32.mrb[0].mxu0
          %3949 = vmatprep.mubr.bf16.mxu0 %v3892
          %3950 = vmatmul.mubr.bf16.gmra.mrb[0].mxu0 %v3876
          %v3951 = vpop.f32.mrb[0].mxu0
          %v3952 = vadd.f32 0.0, %v3951
          %v3953 = vpop.f32.mrb[0].mxu0
          %v3954 = vpop.f32.mrb[0].mxu0
          %v3955 = vadd.f32 0.0, %v3954
          %v3956 = vpop.f32.mrb[0].mxu0
          %3957 = vmatprep.mubr.bf16.mxu0 %v3895
          %3958 = vmatmul.mubr.bf16.gmra.mrb[0].mxu0 %v3878
          %v3959 = vpop.f32.mrb[0].mxu0
          %v3960 = vadd.f32 0.0, %v3959
          %v3961 = vpop.f32.mrb[0].mxu0
          %v3962 = vpop.f32.mrb[0].mxu0
          %v3963 = vadd.f32 0.0, %v3962
          %v3964 = vpop.f32.mrb[0].mxu0
          %3965 = vmatprep.mubr.bf16.mxu0 %v3898
          %3966 = vmatmul.mubr.bf16.gmra.mrb[0].mxu0 %v3880
          %v3967 = vpop.f32.mrb[0].mxu0
          %v3968 = vadd.f32 0.0, %v3967
          %v3969 = vpop.f32.mrb[0].mxu0
          %v3970 = vpop.f32.mrb[0].mxu0
          %v3971 = vadd.f32 0.0, %v3970
          %v3972 = vpop.f32.mrb[0].mxu0
          %3973 = vmatprep.mubr.bf16.mxu0 %v3901
          %3974 = vmatmul.mubr.bf16.gmra.mrb[0].mxu0 %v3882
          %v3975 = vpop.f32.mrb[0].mxu0
          %v3976 = vadd.f32 0.0, %v3975
          %v3977 = vpop.f32.mrb[0].mxu0
          %v3978 = vpop.f32.mrb[0].mxu0
          %v3979 = vadd.f32 0.0, %v3978
          %v3980 = vpop.f32.mrb[0].mxu0
          %3981 = vmatprep.mubr.bf16.mxu0 %v3904
          %3982 = vmatmul.mubr.bf16.gmra.mrb[0].mxu0 %v3884
          %v3983 = vpop.f32.mrb[0].mxu0
          %v3984 = vadd.f32 0.0, %v3983
          %v3985 = vpop.f32.mrb[0].mxu0
          %v3986 = vpop.f32.mrb[0].mxu0
          %v3987 = vadd.f32 0.0, %v3986
          %v3988 = vpop.f32.mrb[0].mxu0
          %3989 = vmatprep.mubr.bf16.mxu0 %v3907
          %3990 = vmatmul.mubr.bf16.gmra.mrb[0].mxu0 %v3886
          %v3991 = vpop.f32.mrb[0].mxu0
          %v3992 = vadd.f32 0.0, %v3991
          %v3993 = vpop.f32.mrb[0].mxu0
          %v3994 = vpop.f32.mrb[0].mxu0
          %v3995 = vpop.f32.mrb[0].mxu0
          %3996 = vdwg.mxu0
          %v3997 = vpack.c.bf16 %v3947, %v3944
          %v3998 = vpack.c.bf16 %v3955, %v3952
          %v3999 = vpack.c.bf16 %v3963, %v3960
          %v4000 = vpack.c.bf16 %v3971, %v3968
          %v4001 = vpack.c.bf16 %v3979, %v3976
          %v4002 = vpack.c.bf16 %v3987, %v3984
          %v4003 = vpack.c.bf16 %v3992, %v3992
          %s4004 = scalar_lea.vmem %s3, 56
          %v4005 = vld [vmem:[%s4004] sm:$0xf]
          %v4006 = vld [vmem:[%s4004 + $0x4] sm:$0xf]
          %v4009 = vunpack.c.l.b16 %v4005
          %v4010 = vunpack.c.l.b16 %v4006
          %v4011 = vpack.c.b16 %v4010, %v4009
          %v4013 = vsel %vm1438, %v3997, 0
          %v4016 = vsel %vm1438, %v3998, 0
          %v4019 = vsel %vm1438, %v3999, 0
          %v4022 = vsel %vm1438, %v4000, 0
          %v4025 = vsel %vm1438, %v4001, 0
          %v4028 = vsel %vm1438, %v4002, 0
          %v4031 = vsel %vm1438, %v4003, 0
          %v4034 = vand.u32 %v4011, %v1463
          %4036 = vmatprep.subr.bf16.mxu0 0
          %4037 = vmatpush1.bf16.msra.mxu0 %v4034
          %4038 = vmatprep.subr.bf16.mxu0 0
          %4039 = vmatpush1.bf16.msra.mxu0 0
          %4040 = vmatprep.subr.bf16.mxu0 0
          %4041 = vmatpush1.bf16.msra.mxu0 0
          %4042 = vmatprep.subr.bf16.mxu0 0
          %4043 = vmatpush1.bf16.msra.mxu0 0
          %4044 = vmatprep.subr.bf16.mxu0 0
          %4045 = vmatpush1.bf16.msra.mxu0 0
          %4046 = vmatprep.subr.bf16.mxu0 0
          %4047 = vmatpush1.bf16.msra.mxu0 0
          %4048 = vmatprep.subr.bf16.mxu0 0
          %4049 = vmatpush1.bf16.msra.mxu0 0
          %4050 = vmatprep.subr.bf16.mxu0 0
          %4051 = vmatpush1.bf16.msra.mxu0 0
          %4052 = vmatprep.subr.bf16.mxu0 0
          %4053 = vmatpush1.bf16.msra.mxu0 0
          %4054 = vmatprep.subr.bf16.mxu0 0
          %4055 = vmatpush1.bf16.msra.mxu0 0
          %4056 = vmatprep.subr.bf16.mxu0 0
          %4057 = vmatpush1.bf16.msra.mxu0 0
          %4058 = vmatprep.subr.bf16.mxu0 0
          %4059 = vmatpush1.bf16.msra.mxu0 0
          %4060 = vmatprep.subr.bf16.mxu0 0
          %4061 = vmatpush1.bf16.msra.mxu0 0
          %4062 = vmatprep.subr.bf16.mxu0 0
          %4063 = vmatpush1.bf16.msra.mxu0 0
          %4064 = vmatprep.subr.bf16.mxu0 0
          %4065 = vmatpush1.bf16.msra.mxu0 0
          %4066 = vmatprep.subr.bf16.mxu0 0
          %4067 = vmatpush1.bf16.msra.mxu0 0
          %4068 = vmatprep.mubr.bf16.mxu0 0
          %4069 = vmatmul.mubr.bf16.gmra.mrb[0].mxu0 %v4013
          %v4070 = vpop.f32.mrb[0].mxu0
          %v4071 = vadd.f32 0.0, %v4070
          %v4072 = vpop.f32.mrb[0].mxu0
          %v4073 = vpop.f32.mrb[0].mxu0
          %v4074 = vadd.f32 0.0, %v4073
          %v4075 = vpop.f32.mrb[0].mxu0
          %4076 = vmatprep.mubr.bf16.mxu0 0
          %4077 = vmatmul.mubr.bf16.gmra.mrb[0].mxu0 %v4016
          %v4078 = vpop.f32.mrb[0].mxu0
          %v4079 = vadd.f32 0.0, %v4078
          %v4080 = vpop.f32.mrb[0].mxu0
          %v4081 = vpop.f32.mrb[0].mxu0
          %v4082 = vadd.f32 0.0, %v4081
          %v4083 = vpop.f32.mrb[0].mxu0
          %4084 = vmatprep.mubr.bf16.mxu0 0
          %4085 = vmatmul.mubr.bf16.gmra.mrb[0].mxu0 %v4019
          %v4086 = vpop.f32.mrb[0].mxu0
          %v4087 = vadd.f32 0.0, %v4086
          %v4088 = vpop.f32.mrb[0].mxu0
          %v4089 = vpop.f32.mrb[0].mxu0
          %v4090 = vadd.f32 0.0, %v4089
          %v4091 = vpop.f32.mrb[0].mxu0
          %4092 = vmatprep.mubr.bf16.mxu0 0
          %4093 = vmatmul.mubr.bf16.gmra.mrb[0].mxu0 %v4022
          %v4094 = vpop.f32.mrb[0].mxu0
          %v4095 = vadd.f32 0.0, %v4094
          %v4096 = vpop.f32.mrb[0].mxu0
          %v4097 = vpop.f32.mrb[0].mxu0
          %v4098 = vadd.f32 0.0, %v4097
          %v4099 = vpop.f32.mrb[0].mxu0
          %4100 = vmatprep.mubr.bf16.mxu0 0
          %4101 = vmatmul.mubr.bf16.gmra.mrb[0].mxu0 %v4025
          %v4102 = vpop.f32.mrb[0].mxu0
          %v4103 = vadd.f32 0.0, %v4102
          %v4104 = vpop.f32.mrb[0].mxu0
          %v4105 = vpop.f32.mrb[0].mxu0
          %v4106 = vadd.f32 0.0, %v4105
          %v4107 = vpop.f32.mrb[0].mxu0
          %4108 = vmatprep.mubr.bf16.mxu0 0
          %4109 = vmatmul.mubr.bf16.gmra.mrb[0].mxu0 %v4028
          %v4110 = vpop.f32.mrb[0].mxu0
          %v4111 = vadd.f32 0.0, %v4110
          %v4112 = vpop.f32.mrb[0].mxu0
          %v4113 = vpop.f32.mrb[0].mxu0
          %v4114 = vadd.f32 0.0, %v4113
          %v4115 = vpop.f32.mrb[0].mxu0
          %4116 = vmatprep.mubr.bf16.mxu0 0
          %4117 = vmatmul.mubr.bf16.gmra.mrb[0].mxu0 %v4031
          %v4118 = vpop.f32.mrb[0].mxu0
          %v4119 = vadd.f32 0.0, %v4118
          %v4120 = vpop.f32.mrb[0].mxu0
          %v4121 = vpop.f32.mrb[0].mxu0
          %v4122 = vpop.f32.mrb[0].mxu0
          %4123 = vdwg.mxu0
          %v4124 = vadd.f32 %v3757, %v4071
          %v4125 = vadd.f32 %v3758, %v4074
          %v4126 = vadd.f32 %v3759, %v4079
          %v4127 = vadd.f32 %v3760, %v4082
          %v4128 = vadd.f32 %v3761, %v4087
          %v4129 = vadd.f32 %v3762, %v4090
          %v4130 = vadd.f32 %v3763, %v4095
          %v4131 = vadd.f32 %v3764, %v4098
          %v4132 = vadd.f32 %v3765, %v4103
          %v4133 = vadd.f32 %v3766, %v4106
          %v4134 = vadd.f32 %v3767, %v4111
          %v4135 = vadd.f32 %v3768, %v4114
          %v4136 = vadd.f32 %v3769, %v4119
          %v4137 = vadd.s32 %v1184, 20
          %v4138 = vadd.s32 %v1185, 20
          %v4139 = vadd.s32 %v1186, 20
          %v4140 = vadd.s32 %v1187, 20
          %v4141 = vadd.s32 %v1188, 20
          %v4142 = vadd.s32 %v1189, 20
          %v4143 = vadd.s32 %v1190, 20
          %v4144 = vadd.s32 %v1191, 20
          %v4145 = vadd.s32 %v1192, 20
          %v4146 = vadd.s32 %v1193, 20
          %v4147 = vadd.s32 %v1194, 20
          %v4148 = vadd.s32 %v1195, 20
          %v4149 = vadd.s32 %v1196, 20
          %4150 = vset.pattern.permute.xlu0 0
          %4151 = vperm.xlu0 %4150, %v4137
          %v4152 = vpop.permute.xlu0 %4151
          %4153 = vset.pattern.permute.xlu0 0
          %4154 = vperm.xlu0 %4153, %v4138
          %v4155 = vpop.permute.xlu0 %4154
          %4156 = vset.pattern.permute.xlu0 0
          %4157 = vperm.xlu0 %4156, %v4139
          %v4158 = vpop.permute.xlu0 %4157
          %4159 = vset.pattern.permute.xlu0 0
          %4160 = vperm.xlu0 %4159, %v4140
          %v4161 = vpop.permute.xlu0 %4160
          %4162 = vset.pattern.permute.xlu0 0
          %4163 = vperm.xlu0 %4162, %v4141
          %v4164 = vpop.permute.xlu0 %4163
          %4165 = vset.pattern.permute.xlu0 0
          %4166 = vperm.xlu0 %4165, %v4142
          %v4167 = vpop.permute.xlu0 %4166
          %4168 = vset.pattern.permute.xlu0 0
          %4169 = vperm.xlu0 %4168, %v4143
          %v4170 = vpop.permute.xlu0 %4169
          %4171 = vset.pattern.permute.xlu0 0
          %4172 = vperm.xlu0 %4171, %v4144
          %v4173 = vpop.permute.xlu0 %4172
          %4174 = vset.pattern.permute.xlu0 0
          %4175 = vperm.xlu0 %4174, %v4145
          %v4176 = vpop.permute.xlu0 %4175
          %4177 = vset.pattern.permute.xlu0 0
          %4178 = vperm.xlu0 %4177, %v4146
          %v4179 = vpop.permute.xlu0 %4178
          %4180 = vset.pattern.permute.xlu0 0
          %4181 = vperm.xlu0 %4180, %v4147
          %v4182 = vpop.permute.xlu0 %4181
          %4183 = vset.pattern.permute.xlu0 0
          %4184 = vperm.xlu0 %4183, %v4148
          %v4185 = vpop.permute.xlu0 %4184
          %4186 = vset.pattern.permute.xlu0 0
          %4187 = vperm.xlu0 %4186, %v4149
          %v4188 = vpop.permute.xlu0 %4187
          %vm4189 = vcmp.eq.s32.totalorder %v1182, %v4152
          %vm4190 = vcmp.eq.s32.totalorder %v1183, %v4152
          %vm4191 = vcmp.eq.s32.totalorder %v1182, %v4155
          %vm4192 = vcmp.eq.s32.totalorder %v1183, %v4155
          %vm4193 = vcmp.eq.s32.totalorder %v1182, %v4158
          %vm4194 = vcmp.eq.s32.totalorder %v1183, %v4158
          %vm4195 = vcmp.eq.s32.totalorder %v1182, %v4161
          %vm4196 = vcmp.eq.s32.totalorder %v1183, %v4161
          %vm4197 = vcmp.eq.s32.totalorder %v1182, %v4164
          %vm4198 = vcmp.eq.s32.totalorder %v1183, %v4164
          %vm4199 = vcmp.eq.s32.totalorder %v1182, %v4167
          %vm4200 = vcmp.eq.s32.totalorder %v1183, %v4167
          %vm4201 = vcmp.eq.s32.totalorder %v1182, %v4170
          %vm4202 = vcmp.eq.s32.totalorder %v1183, %v4170
          %vm4203 = vcmp.eq.s32.totalorder %v1182, %v4173
          %vm4204 = vcmp.eq.s32.totalorder %v1183, %v4173
          %vm4205 = vcmp.eq.s32.totalorder %v1182, %v4176
          %vm4206 = vcmp.eq.s32.totalorder %v1183, %v4176
          %vm4207 = vcmp.eq.s32.totalorder %v1182, %v4179
          %vm4208 = vcmp.eq.s32.totalorder %v1183, %v4179
          %vm4209 = vcmp.eq.s32.totalorder %v1182, %v4182
          %vm4210 = vcmp.eq.s32.totalorder %v1183, %v4182
          %vm4211 = vcmp.eq.s32.totalorder %v1182, %v4185
          %vm4212 = vcmp.eq.s32.totalorder %v1183, %v4185
          %vm4213 = vcmp.eq.s32.totalorder %v1182, %v4188
          %vm4214 = vcmp.eq.s32.totalorder %v1183, %v4188
          %v4215 = vsel %vm4189, 1.0, 0.0
          %v4216 = vsel %vm4190, 1.0, 0.0
          %v4217 = vsel %vm4191, 1.0, 0.0
          %v4218 = vsel %vm4192, 1.0, 0.0
          %v4219 = vsel %vm4193, 1.0, 0.0
          %v4220 = vsel %vm4194, 1.0, 0.0
          %v4221 = vsel %vm4195, 1.0, 0.0
          %v4222 = vsel %vm4196, 1.0, 0.0
          %v4223 = vsel %vm4197, 1.0, 0.0
          %v4224 = vsel %vm4198, 1.0, 0.0
          %v4225 = vsel %vm4199, 1.0, 0.0
          %v4226 = vsel %vm4200, 1.0, 0.0
          %v4227 = vsel %vm4201, 1.0, 0.0
          %v4228 = vsel %vm4202, 1.0, 0.0
          %v4229 = vsel %vm4203, 1.0, 0.0
          %v4230 = vsel %vm4204, 1.0, 0.0
          %v4231 = vsel %vm4205, 1.0, 0.0
          %v4232 = vsel %vm4206, 1.0, 0.0
          %v4233 = vsel %vm4207, 1.0, 0.0
          %v4234 = vsel %vm4208, 1.0, 0.0
          %v4235 = vsel %vm4209, 1.0, 0.0
          %v4236 = vsel %vm4210, 1.0, 0.0
          %v4237 = vsel %vm4211, 1.0, 0.0
          %v4238 = vsel %vm4212, 1.0, 0.0
          %v4239 = vsel %vm4213, 1.0, 0.0
          %v4240 = vsel %vm4214, 1.0, 0.0
          %v4241 = vpack.c.bf16 %v4217, %v4215
          %v4242 = vpack.c.bf16 %v4218, %v4216
          %v4243 = vpack.c.bf16 %v4221, %v4219
          %v4244 = vpack.c.bf16 %v4222, %v4220
          %v4245 = vpack.c.bf16 %v4225, %v4223
          %v4246 = vpack.c.bf16 %v4226, %v4224
          %v4247 = vpack.c.bf16 %v4229, %v4227
          %v4248 = vpack.c.bf16 %v4230, %v4228
          %v4249 = vpack.c.bf16 %v4233, %v4231
          %v4250 = vpack.c.bf16 %v4234, %v4232
          %v4251 = vpack.c.bf16 %v4237, %v4235
          %v4252 = vpack.c.bf16 %v4238, %v4236
          %v4253 = vpack.c.bf16 %v4239, %v4239
          %v4254 = vpack.c.bf16 %v4240, %v4240
          %v4256 = vsel %vm1310, %v4242, 0
          %v4259 = vsel %vm1310, %v4244, 0
          %v4262 = vsel %vm1310, %v4246, 0
          %v4265 = vsel %vm1310, %v4248, 0
          %v4268 = vsel %vm1310, %v4250, 0
          %v4271 = vsel %vm1310, %v4252, 0
          %v4274 = vsel %vm1310, %v4254, 0
          %4276 = vmatprep.subr.bf16.mxu0 0
          %4277 = vmatpush1.bf16.msra.mxu0 %v1170
          %4278 = vmatprep.subr.bf16.mxu0 0
          %4279 = vmatpush1.bf16.msra.mxu0 %v1171
          %4280 = vmatprep.subr.bf16.mxu0 0
          %4281 = vmatpush1.bf16.msra.mxu0 %v1172
          %4282 = vmatprep.subr.bf16.mxu0 0
          %4283 = vmatpush1.bf16.msra.mxu0 %v1173
          %4284 = vmatprep.subr.bf16.mxu0 0
          %4285 = vmatpush1.bf16.msra.mxu0 %v1174
          %4286 = vmatprep.subr.bf16.mxu0 0
          %4287 = vmatpush1.bf16.msra.mxu0 %v1175
          %4288 = vmatprep.subr.bf16.mxu0 0
          %4289 = vmatpush1.bf16.msra.mxu0 %v1176
          %4290 = vmatprep.subr.bf16.mxu0 0
          %4291 = vmatpush1.bf16.msra.mxu0 %v1177
          %4292 = vmatprep.subr.bf16.mxu0 0
          %4293 = vmatpush1.bf16.msra.mxu0 %v1178
          %4294 = vmatprep.subr.bf16.mxu0 0
          %4295 = vmatpush1.bf16.msra.mxu0 %v1179
          %4296 = vmatprep.subr.bf16.mxu0 0
          %4297 = vmatpush1.bf16.msra.mxu0 %v1334
          %4298 = vmatprep.subr.bf16.mxu0 0
          %4299 = vmatpush1.bf16.msra.mxu0 0
          %4300 = vmatprep.subr.bf16.mxu0 0
          %4301 = vmatpush1.bf16.msra.mxu0 0
          %4302 = vmatprep.subr.bf16.mxu0 0
          %4303 = vmatpush1.bf16.msra.mxu0 0
          %4304 = vmatprep.subr.bf16.mxu0 0
          %4305 = vmatpush1.bf16.msra.mxu0 0
          %4306 = vmatprep.subr.bf16.mxu0 0
          %4307 = vmatpush1.bf16.msra.mxu0 0
          %4308 = vmatprep.mubr.bf16.mxu0 %v4256
          %4309 = vmatmul.mubr.bf16.gmra.mrb[0].mxu0 %v4241
          %v4310 = vpop.f32.mrb[0].mxu0
          %v4311 = vadd.f32 0.0, %v4310
          %v4312 = vpop.f32.mrb[0].mxu0
          %v4313 = vpop.f32.mrb[0].mxu0
          %v4314 = vadd.f32 0.0, %v4313
          %v4315 = vpop.f32.mrb[0].mxu0
          %4316 = vmatprep.mubr.bf16.mxu0 %v4259
          %4317 = vmatmul.mubr.bf16.gmra.mrb[0].mxu0 %v4243
          %v4318 = vpop.f32.mrb[0].mxu0
          %v4319 = vadd.f32 0.0, %v4318
          %v4320 = vpop.f32.mrb[0].mxu0
          %v4321 = vpop.f32.mrb[0].mxu0
          %v4322 = vadd.f32 0.0, %v4321
          %v4323 = vpop.f32.mrb[0].mxu0
          %4324 = vmatprep.mubr.bf16.mxu0 %v4262
          %4325 = vmatmul.mubr.bf16.gmra.mrb[0].mxu0 %v4245
          %v4326 = vpop.f32.mrb[0].mxu0
          %v4327 = vadd.f32 0.0, %v4326
          %v4328 = vpop.f32.mrb[0].mxu0
          %v4329 = vpop.f32.mrb[0].mxu0
          %v4330 = vadd.f32 0.0, %v4329
          %v4331 = vpop.f32.mrb[0].mxu0
          %4332 = vmatprep.mubr.bf16.mxu0 %v4265
          %4333 = vmatmul.mubr.bf16.gmra.mrb[0].mxu0 %v4247
          %v4334 = vpop.f32.mrb[0].mxu0
          %v4335 = vadd.f32 0.0, %v4334
          %v4336 = vpop.f32.mrb[0].mxu0
          %v4337 = vpop.f32.mrb[0].mxu0
          %v4338 = vadd.f32 0.0, %v4337
          %v4339 = vpop.f32.mrb[0].mxu0
          %4340 = vmatprep.mubr.bf16.mxu0 %v4268
          %4341 = vmatmul.mubr.bf16.gmra.mrb[0].mxu0 %v4249
          %v4342 = vpop.f32.mrb[0].mxu0
          %v4343 = vadd.f32 0.0, %v4342
          %v4344 = vpop.f32.mrb[0].mxu0
          %v4345 = vpop.f32.mrb[0].mxu0
          %v4346 = vadd.f32 0.0, %v4345
          %v4347 = vpop.f32.mrb[0].mxu0
          %4348 = vmatprep.mubr.bf16.mxu0 %v4271
          %4349 = vmatmul.mubr.bf16.gmra.mrb[0].mxu0 %v4251
          %v4350 = vpop.f32.mrb[0].mxu0
          %v4351 = vadd.f32 0.0, %v4350
          %v4352 = vpop.f32.mrb[0].mxu0
          %v4353 = vpop.f32.mrb[0].mxu0
          %v4354 = vadd.f32 0.0, %v4353
          %v4355 = vpop.f32.mrb[0].mxu0
          %4356 = vmatprep.mubr.bf16.mxu0 %v4274
          %4357 = vmatmul.mubr.bf16.gmra.mrb[0].mxu0 %v4253
          %v4358 = vpop.f32.mrb[0].mxu0
          %v4359 = vadd.f32 0.0, %v4358
          %v4360 = vpop.f32.mrb[0].mxu0
          %v4361 = vpop.f32.mrb[0].mxu0
          %v4362 = vpop.f32.mrb[0].mxu0
          %4363 = vdwg.mxu0
          %v4364 = vpack.c.bf16 %v4314, %v4311
          %v4365 = vpack.c.bf16 %v4322, %v4319
          %v4366 = vpack.c.bf16 %v4330, %v4327
          %v4367 = vpack.c.bf16 %v4338, %v4335
          %v4368 = vpack.c.bf16 %v4346, %v4343
          %v4369 = vpack.c.bf16 %v4354, %v4351
          %v4370 = vpack.c.bf16 %v4359, %v4359
          %s4371 = scalar_lea.vmem %s3, 64
          %v4372 = vld [vmem:[%s4371] sm:$0xf]
          %v4373 = vld [vmem:[%s4371 + $0x4] sm:$0xf]
          %v4376 = vunpack.c.l.b16 %v4372
          %v4377 = vunpack.c.l.b16 %v4373
          %v4378 = vpack.c.b16 %v4377, %v4376
          %v4380 = vsel %vm1438, %v4364, 0
          %v4383 = vsel %vm1438, %v4365, 0
          %v4386 = vsel %vm1438, %v4366, 0
          %v4389 = vsel %vm1438, %v4367, 0
          %v4392 = vsel %vm1438, %v4368, 0
          %v4395 = vsel %vm1438, %v4369, 0
          %v4398 = vsel %vm1438, %v4370, 0
          %v4401 = vand.u32 %v4378, %v1463
          %4403 = vmatprep.subr.bf16.mxu0 0
          %4404 = vmatpush1.bf16.msra.mxu0 %v4401
          %4405 = vmatprep.subr.bf16.mxu0 0
          %4406 = vmatpush1.bf16.msra.mxu0 0
          %4407 = vmatprep.subr.bf16.mxu0 0
          %4408 = vmatpush1.bf16.msra.mxu0 0
          %4409 = vmatprep.subr.bf16.mxu0 0
          %4410 = vmatpush1.bf16.msra.mxu0 0
          %4411 = vmatprep.subr.bf16.mxu0 0
          %4412 = vmatpush1.bf16.msra.mxu0 0
          %4413 = vmatprep.subr.bf16.mxu0 0
          %4414 = vmatpush1.bf16.msra.mxu0 0
          %4415 = vmatprep.subr.bf16.mxu0 0
          %4416 = vmatpush1.bf16.msra.mxu0 0
          %4417 = vmatprep.subr.bf16.mxu0 0
          %4418 = vmatpush1.bf16.msra.mxu0 0
          %4419 = vmatprep.subr.bf16.mxu0 0
          %4420 = vmatpush1.bf16.msra.mxu0 0
          %4421 = vmatprep.subr.bf16.mxu0 0
          %4422 = vmatpush1.bf16.msra.mxu0 0
          %4423 = vmatprep.subr.bf16.mxu0 0
          %4424 = vmatpush1.bf16.msra.mxu0 0
          %4425 = vmatprep.subr.bf16.mxu0 0
          %4426 = vmatpush1.bf16.msra.mxu0 0
          %4427 = vmatprep.subr.bf16.mxu0 0
          %4428 = vmatpush1.bf16.msra.mxu0 0
          %4429 = vmatprep.subr.bf16.mxu0 0
          %4430 = vmatpush1.bf16.msra.mxu0 0
          %4431 = vmatprep.subr.bf16.mxu0 0
          %4432 = vmatpush1.bf16.msra.mxu0 0
          %4433 = vmatprep.subr.bf16.mxu0 0
          %4434 = vmatpush1.bf16.msra.mxu0 0
          %4435 = vmatprep.mubr.bf16.mxu0 0
          %4436 = vmatmul.mubr.bf16.gmra.mrb[0].mxu0 %v4380
          %v4437 = vpop.f32.mrb[0].mxu0
          %v4438 = vadd.f32 0.0, %v4437
          %v4439 = vpop.f32.mrb[0].mxu0
          %v4440 = vpop.f32.mrb[0].mxu0
          %v4441 = vadd.f32 0.0, %v4440
          %v4442 = vpop.f32.mrb[0].mxu0
          %4443 = vmatprep.mubr.bf16.mxu0 0
          %4444 = vmatmul.mubr.bf16.gmra.mrb[0].mxu0 %v4383
          %v4445 = vpop.f32.mrb[0].mxu0
          %v4446 = vadd.f32 0.0, %v4445
          %v4447 = vpop.f32.mrb[0].mxu0
          %v4448 = vpop.f32.mrb[0].mxu0
          %v4449 = vadd.f32 0.0, %v4448
          %v4450 = vpop.f32.mrb[0].mxu0
          %4451 = vmatprep.mubr.bf16.mxu0 0
          %4452 = vmatmul.mubr.bf16.gmra.mrb[0].mxu0 %v4386
          %v4453 = vpop.f32.mrb[0].mxu0
          %v4454 = vadd.f32 0.0, %v4453
          %v4455 = vpop.f32.mrb[0].mxu0
          %v4456 = vpop.f32.mrb[0].mxu0
          %v4457 = vadd.f32 0.0, %v4456
          %v4458 = vpop.f32.mrb[0].mxu0
          %4459 = vmatprep.mubr.bf16.mxu0 0
          %4460 = vmatmul.mubr.bf16.gmra.mrb[0].mxu0 %v4389
          %v4461 = vpop.f32.mrb[0].mxu0
          %v4462 = vadd.f32 0.0, %v4461
          %v4463 = vpop.f32.mrb[0].mxu0
          %v4464 = vpop.f32.mrb[0].mxu0
          %v4465 = vadd.f32 0.0, %v4464
          %v4466 = vpop.f32.mrb[0].mxu0
          %4467 = vmatprep.mubr.bf16.mxu0 0
          %4468 = vmatmul.mubr.bf16.gmra.mrb[0].mxu0 %v4392
          %v4469 = vpop.f32.mrb[0].mxu0
          %v4470 = vadd.f32 0.0, %v4469
          %v4471 = vpop.f32.mrb[0].mxu0
          %v4472 = vpop.f32.mrb[0].mxu0
          %v4473 = vadd.f32 0.0, %v4472
          %v4474 = vpop.f32.mrb[0].mxu0
          %4475 = vmatprep.mubr.bf16.mxu0 0
          %4476 = vmatmul.mubr.bf16.gmra.mrb[0].mxu0 %v4395
          %v4477 = vpop.f32.mrb[0].mxu0
          %v4478 = vadd.f32 0.0, %v4477
          %v4479 = vpop.f32.mrb[0].mxu0
          %v4480 = vpop.f32.mrb[0].mxu0
          %v4481 = vadd.f32 0.0, %v4480
          %v4482 = vpop.f32.mrb[0].mxu0
          %4483 = vmatprep.mubr.bf16.mxu0 0
          %4484 = vmatmul.mubr.bf16.gmra.mrb[0].mxu0 %v4398
          %v4485 = vpop.f32.mrb[0].mxu0
          %v4486 = vadd.f32 0.0, %v4485
          %v4487 = vpop.f32.mrb[0].mxu0
          %v4488 = vpop.f32.mrb[0].mxu0
          %v4489 = vpop.f32.mrb[0].mxu0
          %4490 = vdwg.mxu0
          %v4491 = vadd.f32 %v4124, %v4438
          %v4492 = vadd.f32 %v4125, %v4441
          %v4493 = vadd.f32 %v4126, %v4446
          %v4494 = vadd.f32 %v4127, %v4449
          %v4495 = vadd.f32 %v4128, %v4454
          %v4496 = vadd.f32 %v4129, %v4457
          %v4497 = vadd.f32 %v4130, %v4462
          %v4498 = vadd.f32 %v4131, %v4465
          %v4499 = vadd.f32 %v4132, %v4470
          %v4500 = vadd.f32 %v4133, %v4473
          %v4501 = vadd.f32 %v4134, %v4478
          %v4502 = vadd.f32 %v4135, %v4481
          %v4503 = vadd.f32 %v4136, %v4486
          %v4504 = vmax.f32 %v4491, 0.0
          %v4505 = vmax.f32 %v4492, 0.0
          %v4506 = vmax.f32 %v4493, 0.0
          %v4507 = vmax.f32 %v4494, 0.0
          %v4508 = vmax.f32 %v4495, 0.0
          %v4509 = vmax.f32 %v4496, 0.0
          %v4510 = vmax.f32 %v4497, 0.0
          %v4511 = vmax.f32 %v4498, 0.0
          %v4512 = vmax.f32 %v4499, 0.0
          %v4513 = vmax.f32 %v4500, 0.0
          %v4514 = vmax.f32 %v4501, 0.0
          %v4515 = vmax.f32 %v4502, 0.0
          %v4516 = vmax.f32 %v4503, 0.0
          %v4517 = vpack.c.bf16 %v4505, %v4504
          %v4518 = vpack.c.bf16 %v4507, %v4506
          %v4519 = vpack.c.bf16 %v4509, %v4508
          %v4520 = vpack.c.bf16 %v4511, %v4510
          %v4521 = vpack.c.bf16 %v4513, %v4512
          %v4522 = vpack.c.bf16 %v4515, %v4514
          %v4523 = vpack.c.bf16 %v4516, %v4516
          %v4531 = vunpack.c.l.b16 %v4517
          %v4532 = vunpack.c.h.b16 %v4517
          %v4533 = vunpack.c.l.b16 %v4518
          %v4534 = vunpack.c.h.b16 %v4518
          %v4535 = vunpack.c.l.b16 %v4519
          %v4536 = vunpack.c.h.b16 %v4519
          %v4537 = vunpack.c.l.b16 %v4520
          %v4538 = vunpack.c.h.b16 %v4520
          %v4539 = vunpack.c.l.b16 %v4521
          %v4540 = vunpack.c.h.b16 %v4521
          %v4541 = vunpack.c.l.b16 %v4522
          %v4542 = vunpack.c.h.b16 %v4522
          %v4543 = vunpack.c.l.b16 %v4523
          %v4544 = vpack.c.b16 %v4531, %v4531
          %v4545 = vpack.c.b16 %v4532, %v4532
          %v4546 = vpack.c.b16 %v4533, %v4533
          %v4547 = vpack.c.b16 %v4534, %v4534
          %v4548 = vpack.c.b16 %v4535, %v4535
          %v4549 = vpack.c.b16 %v4536, %v4536
          %v4550 = vpack.c.b16 %v4537, %v4537
          %v4551 = vpack.c.b16 %v4538, %v4538
          %v4552 = vpack.c.b16 %v4539, %v4539
          %v4553 = vpack.c.b16 %v4540, %v4540
          %v4554 = vpack.c.b16 %v4541, %v4541
          %v4555 = vpack.c.b16 %v4542, %v4542
          %v4556 = vpack.c.b16 %v4543, %v4543
          %vm4570 = vcmask 519168
          %4571 = vst.msk [vmem:[#allocation2] sm:$0xf] %vm4570, %v4544
          %4572 = vst.msk [vmem:[#allocation2 + $0x4] sm:$0xf] %vm4570, %v4545
          %4573 = vst.msk [vmem:[#allocation2 + $0x8] sm:$0xf] %vm4570, %v4546
          %4574 = vst.msk [vmem:[#allocation2 + $0xc] sm:$0xf] %vm4570, %v4547
          %4575 = vst.msk [vmem:[#allocation2 + $0x10] sm:$0xf] %vm4570, %v4548
          %4576 = vst.msk [vmem:[#allocation2 + $0x14] sm:$0xf] %vm4570, %v4549
          %4577 = vst.msk [vmem:[#allocation2 + $0x18] sm:$0xf] %vm4570, %v4550
          %4578 = vst.msk [vmem:[#allocation2 + $0x1c] sm:$0xf] %vm4570, %v4551
          %4579 = vst.msk [vmem:[#allocation2 + $0x20] sm:$0xf] %vm4570, %v4552
          %4580 = vst.msk [vmem:[#allocation2 + $0x24] sm:$0xf] %vm4570, %v4553
          %4581 = vst.msk [vmem:[#allocation2 + $0x28] sm:$0xf] %vm4570, %v4554
          %4582 = vst.msk [vmem:[#allocation2 + $0x2c] sm:$0xf] %vm4570, %v4555
          %vm4583 = vcmask 516096
          %4584 = vst.msk [vmem:[#allocation2 + $0x30] sm:$0x1] %vm4583, %v4556
          %v4585 = vld [vmem:[%s8] sm:$0xf]
          %v4587 = vlaneseq
          %v4588 = vshrl.u32 %v4587, 7
          %v4589 = vsub.s32 0, %v4588
          %v4590 = vrot.slane %v4585, %v4589
          %v4591 = vlaneseq
          %v4592 = vshrl.u32 %v4591, 7
          %v4593 = vsub.s32 1, %v4592
          %v4594 = vrot.slane %v4585, %v4593
          %v4595 = vlaneseq
          %v4596 = vshrl.u32 %v4595, 7
          %v4597 = vsub.s32 2, %v4596
          %v4598 = vrot.slane %v4585, %v4597
          %v4599 = vlaneseq
          %v4600 = vshrl.u32 %v4599, 7
          %v4601 = vsub.s32 3, %v4600
          %v4602 = vrot.slane %v4585, %v4601
          %v4607 = vadd.f32 %v4590, 0.0
          %v4608 = vadd.f32 %v4594, 0.0
          %v4609 = vadd.f32 %v4598, 0.0
          %v4610 = vadd.f32 %v4602, 0.0
          %v4615 = vcombine.low %v4607, %v4608
          %v4616 = vcombine.low %v4609, %v4610
          %v4618 = vunpack.c.l.s4 1983009808
          %v4619 = vunpack.c.0.s8 %v4618
          %v4620 = vlaneseq
          %v4621 = vshrl.u32 %v4620, 7
          %v4622 = vsub.s32 %v4619, %v4621
          %v4623 = vrot.slane %v4615, %v4622
          %v4625 = vunpack.c.l.s4 1983009808
          %v4626 = vunpack.c.0.s8 %v4625
          %v4627 = vlaneseq
          %v4628 = vshrl.u32 %v4627, 7
          %v4629 = vsub.s32 %v4626, %v4628
          %v4630 = vrot.slane %v4616, %v4629
          %v4631 = vcombine.low %v4623, %v4630
          %4633 = vst [vmem:[#allocation3] sm:$0xff] %v4631
        $region68: #{forward.3} parent=63 // pred_fallthru
          _
        %v4634 = vlaneseq
        %v4635 = vand.u32 %v4634, 127
        %v4636 = vld [vmem:[%s6] sm:$0x3]
        %v4637 = vld [vmem:[#allocation2] sm:$0xf]
        %v4638 = vld [vmem:[#allocation2 + $0x4] sm:$0xf]
        %v4639 = vld [vmem:[#allocation2 + $0x8] sm:$0xf]
        %v4640 = vld [vmem:[#allocation2 + $0xc] sm:$0xf]
        %v4641 = vld [vmem:[#allocation2 + $0x10] sm:$0xf]
        %v4642 = vld [vmem:[#allocation2 + $0x14] sm:$0xf]
        %v4643 = vld [vmem:[#allocation2 + $0x18] sm:$0xf]
        %v4644 = vld [vmem:[#allocation2 + $0x1c] sm:$0xf]
        %v4645 = vld [vmem:[#allocation2 + $0x20] sm:$0xf]
        %v4646 = vld [vmem:[#allocation2 + $0x24] sm:$0xf]
        %v4647 = vld [vmem:[#allocation2 + $0x28] sm:$0xf]
        %v4648 = vld [vmem:[#allocation2 + $0x2c] sm:$0xf]
        %v4649 = vld [vmem:[#allocation2 + $0x30] sm:$0x1]
        %v4650 = vld [vmem:[#allocation3] sm:$0xff]
        %s4651 = smul.u32 %s23, 7
        %v4652 = vstv %s4651
        %v4653 = vadd.s32 %v4636, %v4652
        %4654 = vset.pattern.permute.xlu0 0
        %4655 = vperm.xlu0 %4654, %v4653
        %v4656 = vpop.permute.xlu0 %4655
        %vm4657 = vcmp.eq.s32.totalorder %v4635, %v4656
        %v4658 = vsel %vm4657, 1.0, 0.0
        %v4659 = vpack.c.bf16 %v4658, %v4658
        %v4673 = vunpack.c.l.b16 %v4637
        %v4674 = vunpack.c.l.b16 %v4638
        %v4675 = vunpack.c.l.b16 %v4639
        %v4676 = vunpack.c.l.b16 %v4640
        %v4677 = vunpack.c.l.b16 %v4641
        %v4678 = vunpack.c.l.b16 %v4642
        %v4679 = vunpack.c.l.b16 %v4643
        %v4680 = vunpack.c.l.b16 %v4644
        %v4681 = vunpack.c.l.b16 %v4645
        %v4682 = vunpack.c.l.b16 %v4646
        %v4683 = vunpack.c.l.b16 %v4647
        %v4684 = vunpack.c.l.b16 %v4648
        %v4685 = vunpack.c.l.b16 %v4649
        %v4686 = vpack.c.b16 %v4674, %v4673
        %v4687 = vpack.c.b16 %v4676, %v4675
        %v4688 = vpack.c.b16 %v4678, %v4677
        %v4689 = vpack.c.b16 %v4680, %v4679
        %v4690 = vpack.c.b16 %v4682, %v4681
        %v4691 = vpack.c.b16 %v4684, %v4683
        %v4692 = vpack.c.b16 %v4685, %v4685
        %vm4699 = vcmask 801792
        %v4701 = vsel %vm4699, %v4659, 0
        %vm4703 = vcmask 1040384
        %v4705 = vsel %vm4703, %v4692, 0
        %4707 = vmatprep.subr.bf16.mxu0 0
        %4708 = vmatpush1.bf16.msra.mxu0 %v4686
        %4709 = vmatprep.subr.bf16.mxu0 0
        %4710 = vmatpush1.bf16.msra.mxu0 %v4687
        %4711 = vmatprep.subr.bf16.mxu0 0
        %4712 = vmatpush1.bf16.msra.mxu0 %v4688
        %4713 = vmatprep.subr.bf16.mxu0 0
        %4714 = vmatpush1.bf16.msra.mxu0 %v4689
        %4715 = vmatprep.subr.bf16.mxu0 0
        %4716 = vmatpush1.bf16.msra.mxu0 %v4690
        %4717 = vmatprep.subr.bf16.mxu0 0
        %4718 = vmatpush1.bf16.msra.mxu0 %v4691
        %4719 = vmatprep.subr.bf16.mxu0 0
        %4720 = vmatpush1.bf16.msra.mxu0 %v4705
        %4721 = vmatprep.subr.bf16.mxu0 0
        %4722 = vmatpush1.bf16.msra.mxu0 0
        %4723 = vmatprep.subr.bf16.mxu0 0
        %4724 = vmatpush1.bf16.msra.mxu0 0
        %4725 = vmatprep.subr.bf16.mxu0 0
        %4726 = vmatpush1.bf16.msra.mxu0 0
        %4727 = vmatprep.subr.bf16.mxu0 0
        %4728 = vmatpush1.bf16.msra.mxu0 0
        %4729 = vmatprep.subr.bf16.mxu0 0
        %4730 = vmatpush1.bf16.msra.mxu0 0
        %4731 = vmatprep.subr.bf16.mxu0 0
        %4732 = vmatpush1.bf16.msra.mxu0 0
        %4733 = vmatprep.subr.bf16.mxu0 0
        %4734 = vmatpush1.bf16.msra.mxu0 0
        %4735 = vmatprep.subr.bf16.mxu0 0
        %4736 = vmatpush1.bf16.msra.mxu0 0
        %4737 = vmatprep.subr.bf16.mxu0 0
        %4738 = vmatpush1.bf16.msra.mxu0 0
        %4739 = vmatprep.mubr.bf16.mxu0 0
        %4740 = vmatmul.mubr.bf16.gmra.mrb[0].mxu0 %v4701
        %v4741 = vpop.f32.mrb[0].mxu0
        %v4742 = vadd.f32 0.0, %v4741
        %v4743 = vpop.f32.mrb[0].mxu0
        %v4744 = vpop.f32.mrb[0].mxu0
        %v4745 = vpop.f32.mrb[0].mxu0
        %4746 = vdwg.mxu0
        %v4747 = vld [vmem:[%s376] sm:$0xff]
        %v4748 = vld [vmem:[%s376 + $0x8] sm:$0xff]
        %v4749 = vld [vmem:[%s376 + $0x10] sm:$0xff]
        %v4750 = vld [vmem:[%s376 + $0x18] sm:$0xff]
        %v4751 = vld [vmem:[%s376 + $0x20] sm:$0xff]
        %v4752 = vld [vmem:[%s376 + $0x28] sm:$0xff]
        %v4753 = vld [vmem:[%s376 + $0x30] sm:$0xff]
        %v4754 = vld [vmem:[%s376 + $0x38] sm:$0xff]
        %v4755 = vld [vmem:[%s376 + $0x40] sm:$0xff]
        %v4756 = vld [vmem:[%s376 + $0x48] sm:$0xff]
        %v4757 = vld [vmem:[%s376 + $0x50] sm:$0xff]
        %v4758 = vld [vmem:[%s376 + $0x58] sm:$0xff]
        %v4759 = vld [vmem:[%s376 + $0x60] sm:$0xff]
        %v4760 = vld [vmem:[%s376 + $0x68] sm:$0xff]
        %v4761 = vld [vmem:[%s376 + $0x70] sm:$0xff]
        %v4762 = vld [vmem:[%s376 + $0x78] sm:$0xff]
        %v4763 = vpack.c.bf16 %v4742, %v4742
        %v4780 = vunpack.c.l.b16 %v4747
        %v4781 = vunpack.c.h.b16 %v4747
        %v4782 = vunpack.c.l.b16 %v4748
        %v4783 = vunpack.c.h.b16 %v4748
        %v4784 = vunpack.c.l.b16 %v4749
        %v4785 = vunpack.c.h.b16 %v4749
        %v4786 = vunpack.c.l.b16 %v4750
        %v4787 = vunpack.c.h.b16 %v4750
        %v4788 = vunpack.c.l.b16 %v4751
        %v4789 = vunpack.c.h.b16 %v4751
        %v4790 = vunpack.c.l.b16 %v4752
        %v4791 = vunpack.c.h.b16 %v4752
        %v4792 = vunpack.c.l.b16 %v4753
        %v4793 = vunpack.c.h.b16 %v4753
        %v4794 = vunpack.c.l.b16 %v4754
        %v4795 = vunpack.c.h.b16 %v4754
        %v4796 = vunpack.c.l.b16 %v4755
        %v4797 = vunpack.c.h.b16 %v4755
        %v4798 = vunpack.c.l.b16 %v4756
        %v4799 = vunpack.c.h.b16 %v4756
        %v4800 = vunpack.c.l.b16 %v4757
        %v4801 = vunpack.c.h.b16 %v4757
        %v4802 = vunpack.c.l.b16 %v4758
        %v4803 = vunpack.c.h.b16 %v4758
        %v4804 = vunpack.c.l.b16 %v4759
        %v4805 = vunpack.c.h.b16 %v4759
        %v4806 = vunpack.c.l.b16 %v4760
        %v4807 = vunpack.c.h.b16 %v4760
        %v4808 = vunpack.c.l.b16 %v4761
        %v4809 = vunpack.c.h.b16 %v4761
        %v4810 = vunpack.c.l.b16 %v4762
        %v4811 = vunpack.c.h.b16 %v4762
        %v4812 = vpack.c.b16 %v4784, %v4780
        %v4813 = vpack.c.b16 %v4785, %v4781
        %v4814 = vpack.c.b16 %v4786, %v4782
        %v4815 = vpack.c.b16 %v4787, %v4783
        %v4816 = vpack.c.b16 %v4792, %v4788
        %v4817 = vpack.c.b16 %v4793, %v4789
        %v4818 = vpack.c.b16 %v4794, %v4790
        %v4819 = vpack.c.b16 %v4795, %v4791
        %v4820 = vpack.c.b16 %v4800, %v4796
        %v4821 = vpack.c.b16 %v4801, %v4797
        %v4822 = vpack.c.b16 %v4802, %v4798
        %v4823 = vpack.c.b16 %v4803, %v4799
        %v4824 = vpack.c.b16 %v4808, %v4804
        %v4825 = vpack.c.b16 %v4809, %v4805
        %v4826 = vpack.c.b16 %v4810, %v4806
        %v4827 = vpack.c.b16 %v4811, %v4807
        %vm4844 = vcmask 523264
        %v4846 = vsel %vm4844, %v4763, 0
        %4848 = vmatprep.subr.bf16.mxu0 %v4813
        %4849 = vmatpush1.bf16.msra.mxu0 %v4812
        %4850 = vmatprep.subr.bf16.mxu0 %v4817
        %4851 = vmatpush1.bf16.msra.mxu0 %v4816
        %4852 = vmatprep.subr.bf16.mxu0 %v4821
        %4853 = vmatpush1.bf16.msra.mxu0 %v4820
        %4854 = vmatprep.subr.bf16.mxu0 %v4825
        %4855 = vmatpush1.bf16.msra.mxu0 %v4824
        %4856 = vmatprep.subr.bf16.mxu0 0
        %4857 = vmatpush1.bf16.msra.mxu0 0
        %4858 = vmatprep.subr.bf16.mxu0 0
        %4859 = vmatpush1.bf16.msra.mxu0 0
        %4860 = vmatprep.subr.bf16.mxu0 0
        %4861 = vmatpush1.bf16.msra.mxu0 0
        %4862 = vmatprep.subr.bf16.mxu0 0
        %4863 = vmatpush1.bf16.msra.mxu0 0
        %4864 = vmatprep.subr.bf16.mxu0 0
        %4865 = vmatpush1.bf16.msra.mxu0 0
        %4866 = vmatprep.subr.bf16.mxu0 0
        %4867 = vmatpush1.bf16.msra.mxu0 0
        %4868 = vmatprep.subr.bf16.mxu0 0
        %4869 = vmatpush1.bf16.msra.mxu0 0
        %4870 = vmatprep.subr.bf16.mxu0 0
        %4871 = vmatpush1.bf16.msra.mxu0 0
        %4872 = vmatprep.subr.bf16.mxu0 0
        %4873 = vmatpush1.bf16.msra.mxu0 0
        %4874 = vmatprep.subr.bf16.mxu0 0
        %4875 = vmatpush1.bf16.msra.mxu0 0
        %4876 = vmatprep.subr.bf16.mxu0 0
        %4877 = vmatpush1.bf16.msra.mxu0 0
        %4878 = vmatprep.subr.bf16.mxu0 0
        %4879 = vmatpush1.bf16.msra.mxu0 0
        %4880 = vmatprep.mubr.bf16.mxu0 0
        %4881 = vmatmul.mubr.bf16.gmra.mrb[0].mxu0 %v4846
        %v4882 = vpop.f32.mrb[0].mxu0
        %v4883 = vadd.f32 0.0, %v4882
        %v4884 = vpop.f32.mrb[0].mxu0
        %v4885 = vadd.f32 0.0, %v4884
        %v4886 = vpop.f32.mrb[0].mxu0
        %v4887 = vpop.f32.mrb[0].mxu0
        %4888 = vdwg.mxu0
        %4889 = vmatprep.subr.bf16.mxu0 %v4815
        %4890 = vmatpush1.bf16.msra.mxu0 %v4814
        %4891 = vmatprep.subr.bf16.mxu0 %v4819
        %4892 = vmatpush1.bf16.msra.mxu0 %v4818
        %4893 = vmatprep.subr.bf16.mxu0 %v4823
        %4894 = vmatpush1.bf16.msra.mxu0 %v4822
        %4895 = vmatprep.subr.bf16.mxu0 %v4827
        %4896 = vmatpush1.bf16.msra.mxu0 %v4826
        %4897 = vmatprep.subr.bf16.mxu0 0
        %4898 = vmatpush1.bf16.msra.mxu0 0
        %4899 = vmatprep.subr.bf16.mxu0 0
        %4900 = vmatpush1.bf16.msra.mxu0 0
        %4901 = vmatprep.subr.bf16.mxu0 0
        %4902 = vmatpush1.bf16.msra.mxu0 0
        %4903 = vmatprep.subr.bf16.mxu0 0
        %4904 = vmatpush1.bf16.msra.mxu0 0
        %4905 = vmatprep.subr.bf16.mxu0 0
        %4906 = vmatpush1.bf16.msra.mxu0 0
        %4907 = vmatprep.subr.bf16.mxu0 0
        %4908 = vmatpush1.bf16.msra.mxu0 0
        %4909 = vmatprep.subr.bf16.mxu0 0
        %4910 = vmatpush1.bf16.msra.mxu0 0
        %4911 = vmatprep.subr.bf16.mxu0 0
        %4912 = vmatpush1.bf16.msra.mxu0 0
        %4913 = vmatprep.subr.bf16.mxu0 0
        %4914 = vmatpush1.bf16.msra.mxu0 0
        %4915 = vmatprep.subr.bf16.mxu0 0
        %4916 = vmatpush1.bf16.msra.mxu0 0
        %4917 = vmatprep.subr.bf16.mxu0 0
        %4918 = vmatpush1.bf16.msra.mxu0 0
        %4919 = vmatprep.subr.bf16.mxu0 0
        %4920 = vmatpush1.bf16.msra.mxu0 0
        %4921 = vmatprep.mubr.bf16.mxu0 0
        %4922 = vmatmul.mubr.bf16.gmra.mrb[0].mxu0 %v4846
        %v4923 = vpop.f32.mrb[0].mxu0
        %v4924 = vadd.f32 0.0, %v4923
        %v4925 = vpop.f32.mrb[0].mxu0
        %v4926 = vadd.f32 0.0, %v4925
        %v4927 = vpop.f32.mrb[0].mxu0
        %v4928 = vpop.f32.mrb[0].mxu0
        %4929 = vdwg.mxu0
        %v4934 = vcombine.low %v4883, %v4885
        %v4935 = vcombine.low %v4924, %v4926
        %v4937 = vunpack.c.l.s4 1983009808
        %v4938 = vunpack.c.0.s8 %v4937
        %v4939 = vlaneseq
        %v4940 = vshrl.u32 %v4939, 7
        %v4941 = vsub.s32 %v4938, %v4940
        %v4942 = vrot.slane %v4934, %v4941
        %v4944 = vunpack.c.l.s4 1983009808
        %v4945 = vunpack.c.0.s8 %v4944
        %v4946 = vlaneseq
        %v4947 = vshrl.u32 %v4946, 7
        %v4948 = vsub.s32 %v4945, %v4947
        %v4949 = vrot.slane %v4935, %v4948
        %v4950 = vcombine.low %v4942, %v4949
        %v4952 = vadd.f32 %v4650, %v4950
        %s4953 = sadd.s32 %s4651, 1
        %v4954 = vstv %s4953
        %v4955 = vadd.s32 %v4636, %v4954
        %4956 = vset.pattern.permute.xlu0 0
        %4957 = vperm.xlu0 %4956, %v4955
        %v4958 = vpop.permute.xlu0 %4957
        %vm4959 = vcmp.eq.s32.totalorder %v4635, %v4958
        %v4960 = vsel %vm4959, 1.0, 0.0
        %v4961 = vpack.c.bf16 %v4960, %v4960
        %v4963 = vsel %vm4699, %v4961, 0
        %4965 = vmatprep.subr.bf16.mxu0 0
        %4966 = vmatpush1.bf16.msra.mxu0 %v4686
        %4967 = vmatprep.subr.bf16.mxu0 0
        %4968 = vmatpush1.bf16.msra.mxu0 %v4687
        %4969 = vmatprep.subr.bf16.mxu0 0
        %4970 = vmatpush1.bf16.msra.mxu0 %v4688
        %4971 = vmatprep.subr.bf16.mxu0 0
        %4972 = vmatpush1.bf16.msra.mxu0 %v4689
        %4973 = vmatprep.subr.bf16.mxu0 0
        %4974 = vmatpush1.bf16.msra.mxu0 %v4690
        %4975 = vmatprep.subr.bf16.mxu0 0
        %4976 = vmatpush1.bf16.msra.mxu0 %v4691
        %4977 = vmatprep.subr.bf16.mxu0 0
        %4978 = vmatpush1.bf16.msra.mxu0 %v4705
        %4979 = vmatprep.subr.bf16.mxu0 0
        %4980 = vmatpush1.bf16.msra.mxu0 0
        %4981 = vmatprep.subr.bf16.mxu0 0
        %4982 = vmatpush1.bf16.msra.mxu0 0
        %4983 = vmatprep.subr.bf16.mxu0 0
        %4984 = vmatpush1.bf16.msra.mxu0 0
        %4985 = vmatprep.subr.bf16.mxu0 0
        %4986 = vmatpush1.bf16.msra.mxu0 0
        %4987 = vmatprep.subr.bf16.mxu0 0
        %4988 = vmatpush1.bf16.msra.mxu0 0
        %4989 = vmatprep.subr.bf16.mxu0 0
        %4990 = vmatpush1.bf16.msra.mxu0 0
        %4991 = vmatprep.subr.bf16.mxu0 0
        %4992 = vmatpush1.bf16.msra.mxu0 0
        %4993 = vmatprep.subr.bf16.mxu0 0
        %4994 = vmatpush1.bf16.msra.mxu0 0
        %4995 = vmatprep.subr.bf16.mxu0 0
        %4996 = vmatpush1.bf16.msra.mxu0 0
        %4997 = vmatprep.mubr.bf16.mxu0 0
        %4998 = vmatmul.mubr.bf16.gmra.mrb[0].mxu0 %v4963
        %v4999 = vpop.f32.mrb[0].mxu0
        %v5000 = vadd.f32 0.0, %v4999
        %v5001 = vpop.f32.mrb[0].mxu0
        %v5002 = vpop.f32.mrb[0].mxu0
        %v5003 = vpop.f32.mrb[0].mxu0
        %5004 = vdwg.mxu0
        %v5005 = vld [vmem:[%s376 + $0x80] sm:$0xff]
        %v5006 = vld [vmem:[%s376 + $0x88] sm:$0xff]
        %v5007 = vld [vmem:[%s376 + $0x90] sm:$0xff]
        %v5008 = vld [vmem:[%s376 + $0x98] sm:$0xff]
        %v5009 = vld [vmem:[%s376 + $0xa0] sm:$0xff]
        %v5010 = vld [vmem:[%s376 + $0xa8] sm:$0xff]
        %v5011 = vld [vmem:[%s376 + $0xb0] sm:$0xff]
        %v5012 = vld [vmem:[%s376 + $0xb8] sm:$0xff]
        %v5013 = vld [vmem:[%s376 + $0xc0] sm:$0xff]
        %v5014 = vld [vmem:[%s376 + $0xc8] sm:$0xff]
        %v5015 = vld [vmem:[%s376 + $0xd0] sm:$0xff]
        %v5016 = vld [vmem:[%s376 + $0xd8] sm:$0xff]
        %v5017 = vld [vmem:[%s376 + $0xe0] sm:$0xff]
        %v5018 = vld [vmem:[%s376 + $0xe8] sm:$0xff]
        %v5019 = vld [vmem:[%s376 + $0xf0] sm:$0xff]
        %v5020 = vld [vmem:[%s376 + $0xf8] sm:$0xff]
        %v5021 = vpack.c.bf16 %v5000, %v5000
        %v5038 = vunpack.c.l.b16 %v5005
        %v5039 = vunpack.c.h.b16 %v5005
        %v5040 = vunpack.c.l.b16 %v5006
        %v5041 = vunpack.c.h.b16 %v5006
        %v5042 = vunpack.c.l.b16 %v5007
        %v5043 = vunpack.c.h.b16 %v5007
        %v5044 = vunpack.c.l.b16 %v5008
        %v5045 = vunpack.c.h.b16 %v5008
        %v5046 = vunpack.c.l.b16 %v5009
        %v5047 = vunpack.c.h.b16 %v5009
        %v5048 = vunpack.c.l.b16 %v5010
        %v5049 = vunpack.c.h.b16 %v5010
        %v5050 = vunpack.c.l.b16 %v5011
        %v5051 = vunpack.c.h.b16 %v5011
        %v5052 = vunpack.c.l.b16 %v5012
        %v5053 = vunpack.c.h.b16 %v5012
        %v5054 = vunpack.c.l.b16 %v5013
        %v5055 = vunpack.c.h.b16 %v5013
        %v5056 = vunpack.c.l.b16 %v5014
        %v5057 = vunpack.c.h.b16 %v5014
        %v5058 = vunpack.c.l.b16 %v5015
        %v5059 = vunpack.c.h.b16 %v5015
        %v5060 = vunpack.c.l.b16 %v5016
        %v5061 = vunpack.c.h.b16 %v5016
        %v5062 = vunpack.c.l.b16 %v5017
        %v5063 = vunpack.c.h.b16 %v5017
        %v5064 = vunpack.c.l.b16 %v5018
        %v5065 = vunpack.c.h.b16 %v5018
        %v5066 = vunpack.c.l.b16 %v5019
        %v5067 = vunpack.c.h.b16 %v5019
        %v5068 = vunpack.c.l.b16 %v5020
        %v5069 = vunpack.c.h.b16 %v5020
        %v5070 = vpack.c.b16 %v5042, %v5038
        %v5071 = vpack.c.b16 %v5043, %v5039
        %v5072 = vpack.c.b16 %v5044, %v5040
        %v5073 = vpack.c.b16 %v5045, %v5041
        %v5074 = vpack.c.b16 %v5050, %v5046
        %v5075 = vpack.c.b16 %v5051, %v5047
        %v5076 = vpack.c.b16 %v5052, %v5048
        %v5077 = vpack.c.b16 %v5053, %v5049
        %v5078 = vpack.c.b16 %v5058, %v5054
        %v5079 = vpack.c.b16 %v5059, %v5055
        %v5080 = vpack.c.b16 %v5060, %v5056
        %v5081 = vpack.c.b16 %v5061, %v5057
        %v5082 = vpack.c.b16 %v5066, %v5062
        %v5083 = vpack.c.b16 %v5067, %v5063
        %v5084 = vpack.c.b16 %v5068, %v5064
        %v5085 = vpack.c.b16 %v5069, %v5065
        %v5103 = vsel %vm4844, %v5021, 0
        %5105 = vmatprep.subr.bf16.mxu0 %v5071
        %5106 = vmatpush1.bf16.msra.mxu0 %v5070
        %5107 = vmatprep.subr.bf16.mxu0 %v5075
        %5108 = vmatpush1.bf16.msra.mxu0 %v5074
        %5109 = vmatprep.subr.bf16.mxu0 %v5079
        %5110 = vmatpush1.bf16.msra.mxu0 %v5078
        %5111 = vmatprep.subr.bf16.mxu0 %v5083
        %5112 = vmatpush1.bf16.msra.mxu0 %v5082
        %5113 = vmatprep.subr.bf16.mxu0 0
        %5114 = vmatpush1.bf16.msra.mxu0 0
        %5115 = vmatprep.subr.bf16.mxu0 0
        %5116 = vmatpush1.bf16.msra.mxu0 0
        %5117 = vmatprep.subr.bf16.mxu0 0
        %5118 = vmatpush1.bf16.msra.mxu0 0
        %5119 = vmatprep.subr.bf16.mxu0 0
        %5120 = vmatpush1.bf16.msra.mxu0 0
        %5121 = vmatprep.subr.bf16.mxu0 0
        %5122 = vmatpush1.bf16.msra.mxu0 0
        %5123 = vmatprep.subr.bf16.mxu0 0
        %5124 = vmatpush1.bf16.msra.mxu0 0
        %5125 = vmatprep.subr.bf16.mxu0 0
        %5126 = vmatpush1.bf16.msra.mxu0 0
        %5127 = vmatprep.subr.bf16.mxu0 0
        %5128 = vmatpush1.bf16.msra.mxu0 0
        %5129 = vmatprep.subr.bf16.mxu0 0
        %5130 = vmatpush1.bf16.msra.mxu0 0
        %5131 = vmatprep.subr.bf16.mxu0 0
        %5132 = vmatpush1.bf16.msra.mxu0 0
        %5133 = vmatprep.subr.bf16.mxu0 0
        %5134 = vmatpush1.bf16.msra.mxu0 0
        %5135 = vmatprep.subr.bf16.mxu0 0
        %5136 = vmatpush1.bf16.msra.mxu0 0
        %5137 = vmatprep.mubr.bf16.mxu0 0
        %5138 = vmatmul.mubr.bf16.gmra.mrb[0].mxu0 %v5103
        %v5139 = vpop.f32.mrb[0].mxu0
        %v5140 = vadd.f32 0.0, %v5139
        %v5141 = vpop.f32.mrb[0].mxu0
        %v5142 = vadd.f32 0.0, %v5141
        %v5143 = vpop.f32.mrb[0].mxu0
        %v5144 = vpop.f32.mrb[0].mxu0
        %5145 = vdwg.mxu0
        %5146 = vmatprep.subr.bf16.mxu0 %v5073
        %5147 = vmatpush1.bf16.msra.mxu0 %v5072
        %5148 = vmatprep.subr.bf16.mxu0 %v5077
        %5149 = vmatpush1.bf16.msra.mxu0 %v5076
        %5150 = vmatprep.subr.bf16.mxu0 %v5081
        %5151 = vmatpush1.bf16.msra.mxu0 %v5080
        %5152 = vmatprep.subr.bf16.mxu0 %v5085
        %5153 = vmatpush1.bf16.msra.mxu0 %v5084
        %5154 = vmatprep.subr.bf16.mxu0 0
        %5155 = vmatpush1.bf16.msra.mxu0 0
        %5156 = vmatprep.subr.bf16.mxu0 0
        %5157 = vmatpush1.bf16.msra.mxu0 0
        %5158 = vmatprep.subr.bf16.mxu0 0
        %5159 = vmatpush1.bf16.msra.mxu0 0
        %5160 = vmatprep.subr.bf16.mxu0 0
        %5161 = vmatpush1.bf16.msra.mxu0 0
        %5162 = vmatprep.subr.bf16.mxu0 0
        %5163 = vmatpush1.bf16.msra.mxu0 0
        %5164 = vmatprep.subr.bf16.mxu0 0
        %5165 = vmatpush1.bf16.msra.mxu0 0
        %5166 = vmatprep.subr.bf16.mxu0 0
        %5167 = vmatpush1.bf16.msra.mxu0 0
        %5168 = vmatprep.subr.bf16.mxu0 0
        %5169 = vmatpush1.bf16.msra.mxu0 0
        %5170 = vmatprep.subr.bf16.mxu0 0
        %5171 = vmatpush1.bf16.msra.mxu0 0
        %5172 = vmatprep.subr.bf16.mxu0 0
        %5173 = vmatpush1.bf16.msra.mxu0 0
        %5174 = vmatprep.subr.bf16.mxu0 0
        %5175 = vmatpush1.bf16.msra.mxu0 0
        %5176 = vmatprep.subr.bf16.mxu0 0
        %5177 = vmatpush1.bf16.msra.mxu0 0
        %5178 = vmatprep.mubr.bf16.mxu0 0
        %5179 = vmatmul.mubr.bf16.gmra.mrb[0].mxu0 %v5103
        %v5180 = vpop.f32.mrb[0].mxu0
        %v5181 = vadd.f32 0.0, %v5180
        %v5182 = vpop.f32.mrb[0].mxu0
        %v5183 = vadd.f32 0.0, %v5182
        %v5184 = vpop.f32.mrb[0].mxu0
        %v5185 = vpop.f32.mrb[0].mxu0
        %5186 = vdwg.mxu0
        %v5191 = vcombine.low %v5140, %v5142
        %v5192 = vcombine.low %v5181, %v5183
        %v5194 = vunpack.c.l.s4 1983009808
        %v5195 = vunpack.c.0.s8 %v5194
        %v5196 = vlaneseq
        %v5197 = vshrl.u32 %v5196, 7
        %v5198 = vsub.s32 %v5195, %v5197
        %v5199 = vrot.slane %v5191, %v5198
        %v5201 = vunpack.c.l.s4 1983009808
        %v5202 = vunpack.c.0.s8 %v5201
        %v5203 = vlaneseq
        %v5204 = vshrl.u32 %v5203, 7
        %v5205 = vsub.s32 %v5202, %v5204
        %v5206 = vrot.slane %v5192, %v5205
        %v5207 = vcombine.low %v5199, %v5206
        %v5209 = vadd.f32 %v4952, %v5207
        %s5210 = sadd.s32 %s4651, 2
        %v5211 = vstv %s5210
        %v5212 = vadd.s32 %v4636, %v5211
        %5213 = vset.pattern.permute.xlu0 0
        %5214 = vperm.xlu0 %5213, %v5212
        %v5215 = vpop.permute.xlu0 %5214
        %vm5216 = vcmp.eq.s32.totalorder %v4635, %v5215
        %v5217 = vsel %vm5216, 1.0, 0.0
        %v5218 = vpack.c.bf16 %v5217, %v5217
        %v5220 = vsel %vm4699, %v5218, 0
        %5222 = vmatprep.subr.bf16.mxu0 0
        %5223 = vmatpush1.bf16.msra.mxu0 %v4686
        %5224 = vmatprep.subr.bf16.mxu0 0
        %5225 = vmatpush1.bf16.msra.mxu0 %v4687
        %5226 = vmatprep.subr.bf16.mxu0 0
        %5227 = vmatpush1.bf16.msra.mxu0 %v4688
        %5228 = vmatprep.subr.bf16.mxu0 0
        %5229 = vmatpush1.bf16.msra.mxu0 %v4689
        %5230 = vmatprep.subr.bf16.mxu0 0
        %5231 = vmatpush1.bf16.msra.mxu0 %v4690
        %5232 = vmatprep.subr.bf16.mxu0 0
        %5233 = vmatpush1.bf16.msra.mxu0 %v4691
        %5234 = vmatprep.subr.bf16.mxu0 0
        %5235 = vmatpush1.bf16.msra.mxu0 %v4705
        %5236 = vmatprep.subr.bf16.mxu0 0
        %5237 = vmatpush1.bf16.msra.mxu0 0
        %5238 = vmatprep.subr.bf16.mxu0 0
        %5239 = vmatpush1.bf16.msra.mxu0 0
        %5240 = vmatprep.subr.bf16.mxu0 0
        %5241 = vmatpush1.bf16.msra.mxu0 0
        %5242 = vmatprep.subr.bf16.mxu0 0
        %5243 = vmatpush1.bf16.msra.mxu0 0
        %5244 = vmatprep.subr.bf16.mxu0 0
        %5245 = vmatpush1.bf16.msra.mxu0 0
        %5246 = vmatprep.subr.bf16.mxu0 0
        %5247 = vmatpush1.bf16.msra.mxu0 0
        %5248 = vmatprep.subr.bf16.mxu0 0
        %5249 = vmatpush1.bf16.msra.mxu0 0
        %5250 = vmatprep.subr.bf16.mxu0 0
        %5251 = vmatpush1.bf16.msra.mxu0 0
        %5252 = vmatprep.subr.bf16.mxu0 0
        %5253 = vmatpush1.bf16.msra.mxu0 0
        %5254 = vmatprep.mubr.bf16.mxu0 0
        %5255 = vmatmul.mubr.bf16.gmra.mrb[0].mxu0 %v5220
        %v5256 = vpop.f32.mrb[0].mxu0
        %v5257 = vadd.f32 0.0, %v5256
        %v5258 = vpop.f32.mrb[0].mxu0
        %v5259 = vpop.f32.mrb[0].mxu0
        %v5260 = vpop.f32.mrb[0].mxu0
        %5261 = vdwg.mxu0
        %v5262 = vld [vmem:[%s376 + $0x100] sm:$0xff]
        %v5263 = vld [vmem:[%s376 + $0x108] sm:$0xff]
        %v5264 = vld [vmem:[%s376 + $0x110] sm:$0xff]
        %v5265 = vld [vmem:[%s376 + $0x118] sm:$0xff]
        %v5266 = vld [vmem:[%s376 + $0x120] sm:$0xff]
        %v5267 = vld [vmem:[%s376 + $0x128] sm:$0xff]
        %v5268 = vld [vmem:[%s376 + $0x130] sm:$0xff]
        %v5269 = vld [vmem:[%s376 + $0x138] sm:$0xff]
        %v5270 = vld [vmem:[%s376 + $0x140] sm:$0xff]
        %v5271 = vld [vmem:[%s376 + $0x148] sm:$0xff]
        %v5272 = vld [vmem:[%s376 + $0x150] sm:$0xff]
        %v5273 = vld [vmem:[%s376 + $0x158] sm:$0xff]
        %v5274 = vld [vmem:[%s376 + $0x160] sm:$0xff]
        %v5275 = vld [vmem:[%s376 + $0x168] sm:$0xff]
        %v5276 = vld [vmem:[%s376 + $0x170] sm:$0xff]
        %v5277 = vld [vmem:[%s376 + $0x178] sm:$0xff]
        %v5278 = vpack.c.bf16 %v5257, %v5257
        %v5295 = vunpack.c.l.b16 %v5262
        %v5296 = vunpack.c.h.b16 %v5262
        %v5297 = vunpack.c.l.b16 %v5263
        %v5298 = vunpack.c.h.b16 %v5263
        %v5299 = vunpack.c.l.b16 %v5264
        %v5300 = vunpack.c.h.b16 %v5264
        %v5301 = vunpack.c.l.b16 %v5265
        %v5302 = vunpack.c.h.b16 %v5265
        %v5303 = vunpack.c.l.b16 %v5266
        %v5304 = vunpack.c.h.b16 %v5266
        %v5305 = vunpack.c.l.b16 %v5267
        %v5306 = vunpack.c.h.b16 %v5267
        %v5307 = vunpack.c.l.b16 %v5268
        %v5308 = vunpack.c.h.b16 %v5268
        %v5309 = vunpack.c.l.b16 %v5269
        %v5310 = vunpack.c.h.b16 %v5269
        %v5311 = vunpack.c.l.b16 %v5270
        %v5312 = vunpack.c.h.b16 %v5270
        %v5313 = vunpack.c.l.b16 %v5271
        %v5314 = vunpack.c.h.b16 %v5271
        %v5315 = vunpack.c.l.b16 %v5272
        %v5316 = vunpack.c.h.b16 %v5272
        %v5317 = vunpack.c.l.b16 %v5273
        %v5318 = vunpack.c.h.b16 %v5273
        %v5319 = vunpack.c.l.b16 %v5274
        %v5320 = vunpack.c.h.b16 %v5274
        %v5321 = vunpack.c.l.b16 %v5275
        %v5322 = vunpack.c.h.b16 %v5275
        %v5323 = vunpack.c.l.b16 %v5276
        %v5324 = vunpack.c.h.b16 %v5276
        %v5325 = vunpack.c.l.b16 %v5277
        %v5326 = vunpack.c.h.b16 %v5277
        %v5327 = vpack.c.b16 %v5299, %v5295
        %v5328 = vpack.c.b16 %v5300, %v5296
        %v5329 = vpack.c.b16 %v5301, %v5297
        %v5330 = vpack.c.b16 %v5302, %v5298
        %v5331 = vpack.c.b16 %v5307, %v5303
        %v5332 = vpack.c.b16 %v5308, %v5304
        %v5333 = vpack.c.b16 %v5309, %v5305
        %v5334 = vpack.c.b16 %v5310, %v5306
        %v5335 = vpack.c.b16 %v5315, %v5311
        %v5336 = vpack.c.b16 %v5316, %v5312
        %v5337 = vpack.c.b16 %v5317, %v5313
        %v5338 = vpack.c.b16 %v5318, %v5314
        %v5339 = vpack.c.b16 %v5323, %v5319
        %v5340 = vpack.c.b16 %v5324, %v5320
        %v5341 = vpack.c.b16 %v5325, %v5321
        %v5342 = vpack.c.b16 %v5326, %v5322
        %v5360 = vsel %vm4844, %v5278, 0
        %5362 = vmatprep.subr.bf16.mxu0 %v5328
        %5363 = vmatpush1.bf16.msra.mxu0 %v5327
        %5364 = vmatprep.subr.bf16.mxu0 %v5332
        %5365 = vmatpush1.bf16.msra.mxu0 %v5331
        %5366 = vmatprep.subr.bf16.mxu0 %v5336
        %5367 = vmatpush1.bf16.msra.mxu0 %v5335
        %5368 = vmatprep.subr.bf16.mxu0 %v5340
        %5369 = vmatpush1.bf16.msra.mxu0 %v5339
        %5370 = vmatprep.subr.bf16.mxu0 0
        %5371 = vmatpush1.bf16.msra.mxu0 0
        %5372 = vmatprep.subr.bf16.mxu0 0
        %5373 = vmatpush1.bf16.msra.mxu0 0
        %5374 = vmatprep.subr.bf16.mxu0 0
        %5375 = vmatpush1.bf16.msra.mxu0 0
        %5376 = vmatprep.subr.bf16.mxu0 0
        %5377 = vmatpush1.bf16.msra.mxu0 0
        %5378 = vmatprep.subr.bf16.mxu0 0
        %5379 = vmatpush1.bf16.msra.mxu0 0
        %5380 = vmatprep.subr.bf16.mxu0 0
        %5381 = vmatpush1.bf16.msra.mxu0 0
        %5382 = vmatprep.subr.bf16.mxu0 0
        %5383 = vmatpush1.bf16.msra.mxu0 0
        %5384 = vmatprep.subr.bf16.mxu0 0
        %5385 = vmatpush1.bf16.msra.mxu0 0
        %5386 = vmatprep.subr.bf16.mxu0 0
        %5387 = vmatpush1.bf16.msra.mxu0 0
        %5388 = vmatprep.subr.bf16.mxu0 0
        %5389 = vmatpush1.bf16.msra.mxu0 0
        %5390 = vmatprep.subr.bf16.mxu0 0
        %5391 = vmatpush1.bf16.msra.mxu0 0
        %5392 = vmatprep.subr.bf16.mxu0 0
        %5393 = vmatpush1.bf16.msra.mxu0 0
        %5394 = vmatprep.mubr.bf16.mxu0 0
        %5395 = vmatmul.mubr.bf16.gmra.mrb[0].mxu0 %v5360
        %v5396 = vpop.f32.mrb[0].mxu0
        %v5397 = vadd.f32 0.0, %v5396
        %v5398 = vpop.f32.mrb[0].mxu0
        %v5399 = vadd.f32 0.0, %v5398
        %v5400 = vpop.f32.mrb[0].mxu0
        %v5401 = vpop.f32.mrb[0].mxu0
        %5402 = vdwg.mxu0
        %5403 = vmatprep.subr.bf16.mxu0 %v5330
        %5404 = vmatpush1.bf16.msra.mxu0 %v5329
        %5405 = vmatprep.subr.bf16.mxu0 %v5334
        %5406 = vmatpush1.bf16.msra.mxu0 %v5333
        %5407 = vmatprep.subr.bf16.mxu0 %v5338
        %5408 = vmatpush1.bf16.msra.mxu0 %v5337
        %5409 = vmatprep.subr.bf16.mxu0 %v5342
        %5410 = vmatpush1.bf16.msra.mxu0 %v5341
        %5411 = vmatprep.subr.bf16.mxu0 0
        %5412 = vmatpush1.bf16.msra.mxu0 0
        %5413 = vmatprep.subr.bf16.mxu0 0
        %5414 = vmatpush1.bf16.msra.mxu0 0
        %5415 = vmatprep.subr.bf16.mxu0 0
        %5416 = vmatpush1.bf16.msra.mxu0 0
        %5417 = vmatprep.subr.bf16.mxu0 0
        %5418 = vmatpush1.bf16.msra.mxu0 0
        %5419 = vmatprep.subr.bf16.mxu0 0
        %5420 = vmatpush1.bf16.msra.mxu0 0
        %5421 = vmatprep.subr.bf16.mxu0 0
        %5422 = vmatpush1.bf16.msra.mxu0 0
        %5423 = vmatprep.subr.bf16.mxu0 0
        %5424 = vmatpush1.bf16.msra.mxu0 0
        %5425 = vmatprep.subr.bf16.mxu0 0
        %5426 = vmatpush1.bf16.msra.mxu0 0
        %5427 = vmatprep.subr.bf16.mxu0 0
        %5428 = vmatpush1.bf16.msra.mxu0 0
        %5429 = vmatprep.subr.bf16.mxu0 0
        %5430 = vmatpush1.bf16.msra.mxu0 0
        %5431 = vmatprep.subr.bf16.mxu0 0
        %5432 = vmatpush1.bf16.msra.mxu0 0
        %5433 = vmatprep.subr.bf16.mxu0 0
        %5434 = vmatpush1.bf16.msra.mxu0 0
        %5435 = vmatprep.mubr.bf16.mxu0 0
        %5436 = vmatmul.mubr.bf16.gmra.mrb[0].mxu0 %v5360
        %v5437 = vpop.f32.mrb[0].mxu0
        %v5438 = vadd.f32 0.0, %v5437
        %v5439 = vpop.f32.mrb[0].mxu0
        %v5440 = vadd.f32 0.0, %v5439
        %v5441 = vpop.f32.mrb[0].mxu0
        %v5442 = vpop.f32.mrb[0].mxu0
        %5443 = vdwg.mxu0
        %v5448 = vcombine.low %v5397, %v5399
        %v5449 = vcombine.low %v5438, %v5440
        %v5451 = vunpack.c.l.s4 1983009808
        %v5452 = vunpack.c.0.s8 %v5451
        %v5453 = vlaneseq
        %v5454 = vshrl.u32 %v5453, 7
        %v5455 = vsub.s32 %v5452, %v5454
        %v5456 = vrot.slane %v5448, %v5455
        %v5458 = vunpack.c.l.s4 1983009808
        %v5459 = vunpack.c.0.s8 %v5458
        %v5460 = vlaneseq
        %v5461 = vshrl.u32 %v5460, 7
        %v5462 = vsub.s32 %v5459, %v5461
        %v5463 = vrot.slane %v5449, %v5462
        %v5464 = vcombine.low %v5456, %v5463
        %v5466 = vadd.f32 %v5209, %v5464
        %s5467 = sadd.s32 %s4651, 3
        %v5468 = vstv %s5467
        %v5469 = vadd.s32 %v4636, %v5468
        %5470 = vset.pattern.permute.xlu0 0
        %5471 = vperm.xlu0 %5470, %v5469
        %v5472 = vpop.permute.xlu0 %5471
        %vm5473 = vcmp.eq.s32.totalorder %v4635, %v5472
        %v5474 = vsel %vm5473, 1.0, 0.0
        %v5475 = vpack.c.bf16 %v5474, %v5474
        %v5477 = vsel %vm4699, %v5475, 0
        %5479 = vmatprep.subr.bf16.mxu0 0
        %5480 = vmatpush1.bf16.msra.mxu0 %v4686
        %5481 = vmatprep.subr.bf16.mxu0 0
        %5482 = vmatpush1.bf16.msra.mxu0 %v4687
        %5483 = vmatprep.subr.bf16.mxu0 0
        %5484 = vmatpush1.bf16.msra.mxu0 %v4688
        %5485 = vmatprep.subr.bf16.mxu0 0
        %5486 = vmatpush1.bf16.msra.mxu0 %v4689
        %5487 = vmatprep.subr.bf16.mxu0 0
        %5488 = vmatpush1.bf16.msra.mxu0 %v4690
        %5489 = vmatprep.subr.bf16.mxu0 0
        %5490 = vmatpush1.bf16.msra.mxu0 %v4691
        %5491 = vmatprep.subr.bf16.mxu0 0
        %5492 = vmatpush1.bf16.msra.mxu0 %v4705
        %5493 = vmatprep.subr.bf16.mxu0 0
        %5494 = vmatpush1.bf16.msra.mxu0 0
        %5495 = vmatprep.subr.bf16.mxu0 0
        %5496 = vmatpush1.bf16.msra.mxu0 0
        %5497 = vmatprep.subr.bf16.mxu0 0
        %5498 = vmatpush1.bf16.msra.mxu0 0
        %5499 = vmatprep.subr.bf16.mxu0 0
        %5500 = vmatpush1.bf16.msra.mxu0 0
        %5501 = vmatprep.subr.bf16.mxu0 0
        %5502 = vmatpush1.bf16.msra.mxu0 0
        %5503 = vmatprep.subr.bf16.mxu0 0
        %5504 = vmatpush1.bf16.msra.mxu0 0
        %5505 = vmatprep.subr.bf16.mxu0 0
        %5506 = vmatpush1.bf16.msra.mxu0 0
        %5507 = vmatprep.subr.bf16.mxu0 0
        %5508 = vmatpush1.bf16.msra.mxu0 0
        %5509 = vmatprep.subr.bf16.mxu0 0
        %5510 = vmatpush1.bf16.msra.mxu0 0
        %5511 = vmatprep.mubr.bf16.mxu0 0
        %5512 = vmatmul.mubr.bf16.gmra.mrb[0].mxu0 %v5477
        %v5513 = vpop.f32.mrb[0].mxu0
        %v5514 = vadd.f32 0.0, %v5513
        %v5515 = vpop.f32.mrb[0].mxu0
        %v5516 = vpop.f32.mrb[0].mxu0
        %v5517 = vpop.f32.mrb[0].mxu0
        %5518 = vdwg.mxu0
        %v5519 = vld [vmem:[%s376 + $0x180] sm:$0xff]
        %v5520 = vld [vmem:[%s376 + $0x188] sm:$0xff]
        %v5521 = vld [vmem:[%s376 + $0x190] sm:$0xff]
        %v5522 = vld [vmem:[%s376 + $0x198] sm:$0xff]
        %v5523 = vld [vmem:[%s376 + $0x1a0] sm:$0xff]
        %v5524 = vld [vmem:[%s376 + $0x1a8] sm:$0xff]
        %v5525 = vld [vmem:[%s376 + $0x1b0] sm:$0xff]
        %v5526 = vld [vmem:[%s376 + $0x1b8] sm:$0xff]
        %v5527 = vld [vmem:[%s376 + $0x1c0] sm:$0xff]
        %v5528 = vld [vmem:[%s376 + $0x1c8] sm:$0xff]
        %v5529 = vld [vmem:[%s376 + $0x1d0] sm:$0xff]
        %v5530 = vld [vmem:[%s376 + $0x1d8] sm:$0xff]
        %v5531 = vld [vmem:[%s376 + $0x1e0] sm:$0xff]
        %v5532 = vld [vmem:[%s376 + $0x1e8] sm:$0xff]
        %v5533 = vld [vmem:[%s376 + $0x1f0] sm:$0xff]
        %v5534 = vld [vmem:[%s376 + $0x1f8] sm:$0xff]
        %v5535 = vpack.c.bf16 %v5514, %v5514
        %v5552 = vunpack.c.l.b16 %v5519
        %v5553 = vunpack.c.h.b16 %v5519
        %v5554 = vunpack.c.l.b16 %v5520
        %v5555 = vunpack.c.h.b16 %v5520
        %v5556 = vunpack.c.l.b16 %v5521
        %v5557 = vunpack.c.h.b16 %v5521
        %v5558 = vunpack.c.l.b16 %v5522
        %v5559 = vunpack.c.h.b16 %v5522
        %v5560 = vunpack.c.l.b16 %v5523
        %v5561 = vunpack.c.h.b16 %v5523
        %v5562 = vunpack.c.l.b16 %v5524
        %v5563 = vunpack.c.h.b16 %v5524
        %v5564 = vunpack.c.l.b16 %v5525
        %v5565 = vunpack.c.h.b16 %v5525
        %v5566 = vunpack.c.l.b16 %v5526
        %v5567 = vunpack.c.h.b16 %v5526
        %v5568 = vunpack.c.l.b16 %v5527
        %v5569 = vunpack.c.h.b16 %v5527
        %v5570 = vunpack.c.l.b16 %v5528
        %v5571 = vunpack.c.h.b16 %v5528
        %v5572 = vunpack.c.l.b16 %v5529
        %v5573 = vunpack.c.h.b16 %v5529
        %v5574 = vunpack.c.l.b16 %v5530
        %v5575 = vunpack.c.h.b16 %v5530
        %v5576 = vunpack.c.l.b16 %v5531
        %v5577 = vunpack.c.h.b16 %v5531
        %v5578 = vunpack.c.l.b16 %v5532
        %v5579 = vunpack.c.h.b16 %v5532
        %v5580 = vunpack.c.l.b16 %v5533
        %v5581 = vunpack.c.h.b16 %v5533
        %v5582 = vunpack.c.l.b16 %v5534
        %v5583 = vunpack.c.h.b16 %v5534
        %v5584 = vpack.c.b16 %v5556, %v5552
        %v5585 = vpack.c.b16 %v5557, %v5553
        %v5586 = vpack.c.b16 %v5558, %v5554
        %v5587 = vpack.c.b16 %v5559, %v5555
        %v5588 = vpack.c.b16 %v5564, %v5560
        %v5589 = vpack.c.b16 %v5565, %v5561
        %v5590 = vpack.c.b16 %v5566, %v5562
        %v5591 = vpack.c.b16 %v5567, %v5563
        %v5592 = vpack.c.b16 %v5572, %v5568
        %v5593 = vpack.c.b16 %v5573, %v5569
        %v5594 = vpack.c.b16 %v5574, %v5570
        %v5595 = vpack.c.b16 %v5575, %v5571
        %v5596 = vpack.c.b16 %v5580, %v5576
        %v5597 = vpack.c.b16 %v5581, %v5577
        %v5598 = vpack.c.b16 %v5582, %v5578
        %v5599 = vpack.c.b16 %v5583, %v5579
        %v5617 = vsel %vm4844, %v5535, 0
        %5619 = vmatprep.subr.bf16.mxu0 %v5585
        %5620 = vmatpush1.bf16.msra.mxu0 %v5584
        %5621 = vmatprep.subr.bf16.mxu0 %v5589
        %5622 = vmatpush1.bf16.msra.mxu0 %v5588
        %5623 = vmatprep.subr.bf16.mxu0 %v5593
        %5624 = vmatpush1.bf16.msra.mxu0 %v5592
        %5625 = vmatprep.subr.bf16.mxu0 %v5597
        %5626 = vmatpush1.bf16.msra.mxu0 %v5596
        %5627 = vmatprep.subr.bf16.mxu0 0
        %5628 = vmatpush1.bf16.msra.mxu0 0
        %5629 = vmatprep.subr.bf16.mxu0 0
        %5630 = vmatpush1.bf16.msra.mxu0 0
        %5631 = vmatprep.subr.bf16.mxu0 0
        %5632 = vmatpush1.bf16.msra.mxu0 0
        %5633 = vmatprep.subr.bf16.mxu0 0
        %5634 = vmatpush1.bf16.msra.mxu0 0
        %5635 = vmatprep.subr.bf16.mxu0 0
        %5636 = vmatpush1.bf16.msra.mxu0 0
        %5637 = vmatprep.subr.bf16.mxu0 0
        %5638 = vmatpush1.bf16.msra.mxu0 0
        %5639 = vmatprep.subr.bf16.mxu0 0
        %5640 = vmatpush1.bf16.msra.mxu0 0
        %5641 = vmatprep.subr.bf16.mxu0 0
        %5642 = vmatpush1.bf16.msra.mxu0 0
        %5643 = vmatprep.subr.bf16.mxu0 0
        %5644 = vmatpush1.bf16.msra.mxu0 0
        %5645 = vmatprep.subr.bf16.mxu0 0
        %5646 = vmatpush1.bf16.msra.mxu0 0
        %5647 = vmatprep.subr.bf16.mxu0 0
        %5648 = vmatpush1.bf16.msra.mxu0 0
        %5649 = vmatprep.subr.bf16.mxu0 0
        %5650 = vmatpush1.bf16.msra.mxu0 0
        %5651 = vmatprep.mubr.bf16.mxu0 0
        %5652 = vmatmul.mubr.bf16.gmra.mrb[0].mxu0 %v5617
        %v5653 = vpop.f32.mrb[0].mxu0
        %v5654 = vadd.f32 0.0, %v5653
        %v5655 = vpop.f32.mrb[0].mxu0
        %v5656 = vadd.f32 0.0, %v5655
        %v5657 = vpop.f32.mrb[0].mxu0
        %v5658 = vpop.f32.mrb[0].mxu0
        %5659 = vdwg.mxu0
        %5660 = vmatprep.subr.bf16.mxu0 %v5587
        %5661 = vmatpush1.bf16.msra.mxu0 %v5586
        %5662 = vmatprep.subr.bf16.mxu0 %v5591
        %5663 = vmatpush1.bf16.msra.mxu0 %v5590
        %5664 = vmatprep.subr.bf16.mxu0 %v5595
        %5665 = vmatpush1.bf16.msra.mxu0 %v5594
        %5666 = vmatprep.subr.bf16.mxu0 %v5599
        %5667 = vmatpush1.bf16.msra.mxu0 %v5598
        %5668 = vmatprep.subr.bf16.mxu0 0
        %5669 = vmatpush1.bf16.msra.mxu0 0
        %5670 = vmatprep.subr.bf16.mxu0 0
        %5671 = vmatpush1.bf16.msra.mxu0 0
        %5672 = vmatprep.subr.bf16.mxu0 0
        %5673 = vmatpush1.bf16.msra.mxu0 0
        %5674 = vmatprep.subr.bf16.mxu0 0
        %5675 = vmatpush1.bf16.msra.mxu0 0
        %5676 = vmatprep.subr.bf16.mxu0 0
        %5677 = vmatpush1.bf16.msra.mxu0 0
        %5678 = vmatprep.subr.bf16.mxu0 0
        %5679 = vmatpush1.bf16.msra.mxu0 0
        %5680 = vmatprep.subr.bf16.mxu0 0
        %5681 = vmatpush1.bf16.msra.mxu0 0
        %5682 = vmatprep.subr.bf16.mxu0 0
        %5683 = vmatpush1.bf16.msra.mxu0 0
        %5684 = vmatprep.subr.bf16.mxu0 0
        %5685 = vmatpush1.bf16.msra.mxu0 0
        %5686 = vmatprep.subr.bf16.mxu0 0
        %5687 = vmatpush1.bf16.msra.mxu0 0
        %5688 = vmatprep.subr.bf16.mxu0 0
        %5689 = vmatpush1.bf16.msra.mxu0 0
        %5690 = vmatprep.subr.bf16.mxu0 0
        %5691 = vmatpush1.bf16.msra.mxu0 0
        %5692 = vmatprep.mubr.bf16.mxu0 0
        %5693 = vmatmul.mubr.bf16.gmra.mrb[0].mxu0 %v5617
        %v5694 = vpop.f32.mrb[0].mxu0
        %v5695 = vadd.f32 0.0, %v5694
        %v5696 = vpop.f32.mrb[0].mxu0
        %v5697 = vadd.f32 0.0, %v5696
        %v5698 = vpop.f32.mrb[0].mxu0
        %v5699 = vpop.f32.mrb[0].mxu0
        %5700 = vdwg.mxu0
        %v5705 = vcombine.low %v5654, %v5656
        %v5706 = vcombine.low %v5695, %v5697
        %v5708 = vunpack.c.l.s4 1983009808
        %v5709 = vunpack.c.0.s8 %v5708
        %v5710 = vlaneseq
        %v5711 = vshrl.u32 %v5710, 7
        %v5712 = vsub.s32 %v5709, %v5711
        %v5713 = vrot.slane %v5705, %v5712
        %v5715 = vunpack.c.l.s4 1983009808
        %v5716 = vunpack.c.0.s8 %v5715
        %v5717 = vlaneseq
        %v5718 = vshrl.u32 %v5717, 7
        %v5719 = vsub.s32 %v5716, %v5718
        %v5720 = vrot.slane %v5706, %v5719
        %v5721 = vcombine.low %v5713, %v5720
        %v5723 = vadd.f32 %v5466, %v5721
        %s5724 = sadd.s32 %s4651, 4
        %v5725 = vstv %s5724
        %v5726 = vadd.s32 %v4636, %v5725
        %5727 = vset.pattern.permute.xlu0 0
        %5728 = vperm.xlu0 %5727, %v5726
        %v5729 = vpop.permute.xlu0 %5728
        %vm5730 = vcmp.eq.s32.totalorder %v4635, %v5729
        %v5731 = vsel %vm5730, 1.0, 0.0
        %v5732 = vpack.c.bf16 %v5731, %v5731
        %v5734 = vsel %vm4699, %v5732, 0
        %5736 = vmatprep.subr.bf16.mxu0 0
        %5737 = vmatpush1.bf16.msra.mxu0 %v4686
        %5738 = vmatprep.subr.bf16.mxu0 0
        %5739 = vmatpush1.bf16.msra.mxu0 %v4687
        %5740 = vmatprep.subr.bf16.mxu0 0
        %5741 = vmatpush1.bf16.msra.mxu0 %v4688
        %5742 = vmatprep.subr.bf16.mxu0 0
        %5743 = vmatpush1.bf16.msra.mxu0 %v4689
        %5744 = vmatprep.subr.bf16.mxu0 0
        %5745 = vmatpush1.bf16.msra.mxu0 %v4690
        %5746 = vmatprep.subr.bf16.mxu0 0
        %5747 = vmatpush1.bf16.msra.mxu0 %v4691
        %5748 = vmatprep.subr.bf16.mxu0 0
        %5749 = vmatpush1.bf16.msra.mxu0 %v4705
        %5750 = vmatprep.subr.bf16.mxu0 0
        %5751 = vmatpush1.bf16.msra.mxu0 0
        %5752 = vmatprep.subr.bf16.mxu0 0
        %5753 = vmatpush1.bf16.msra.mxu0 0
        %5754 = vmatprep.subr.bf16.mxu0 0
        %5755 = vmatpush1.bf16.msra.mxu0 0
        %5756 = vmatprep.subr.bf16.mxu0 0
        %5757 = vmatpush1.bf16.msra.mxu0 0
        %5758 = vmatprep.subr.bf16.mxu0 0
        %5759 = vmatpush1.bf16.msra.mxu0 0
        %5760 = vmatprep.subr.bf16.mxu0 0
        %5761 = vmatpush1.bf16.msra.mxu0 0
        %5762 = vmatprep.subr.bf16.mxu0 0
        %5763 = vmatpush1.bf16.msra.mxu0 0
        %5764 = vmatprep.subr.bf16.mxu0 0
        %5765 = vmatpush1.bf16.msra.mxu0 0
        %5766 = vmatprep.subr.bf16.mxu0 0
        %5767 = vmatpush1.bf16.msra.mxu0 0
        %5768 = vmatprep.mubr.bf16.mxu0 0
        %5769 = vmatmul.mubr.bf16.gmra.mrb[0].mxu0 %v5734
        %v5770 = vpop.f32.mrb[0].mxu0
        %v5771 = vadd.f32 0.0, %v5770
        %v5772 = vpop.f32.mrb[0].mxu0
        %v5773 = vpop.f32.mrb[0].mxu0
        %v5774 = vpop.f32.mrb[0].mxu0
        %5775 = vdwg.mxu0
        %v5776 = vld [vmem:[%s376 + $0x200] sm:$0xff]
        %v5777 = vld [vmem:[%s376 + $0x208] sm:$0xff]
        %v5778 = vld [vmem:[%s376 + $0x210] sm:$0xff]
        %v5779 = vld [vmem:[%s376 + $0x218] sm:$0xff]
        %v5780 = vld [vmem:[%s376 + $0x220] sm:$0xff]
        %v5781 = vld [vmem:[%s376 + $0x228] sm:$0xff]
        %v5782 = vld [vmem:[%s376 + $0x230] sm:$0xff]
        %v5783 = vld [vmem:[%s376 + $0x238] sm:$0xff]
        %v5784 = vld [vmem:[%s376 + $0x240] sm:$0xff]
        %v5785 = vld [vmem:[%s376 + $0x248] sm:$0xff]
        %v5786 = vld [vmem:[%s376 + $0x250] sm:$0xff]
        %v5787 = vld [vmem:[%s376 + $0x258] sm:$0xff]
        %v5788 = vld [vmem:[%s376 + $0x260] sm:$0xff]
        %v5789 = vld [vmem:[%s376 + $0x268] sm:$0xff]
        %v5790 = vld [vmem:[%s376 + $0x270] sm:$0xff]
        %v5791 = vld [vmem:[%s376 + $0x278] sm:$0xff]
        %v5792 = vpack.c.bf16 %v5771, %v5771
        %v5809 = vunpack.c.l.b16 %v5776
        %v5810 = vunpack.c.h.b16 %v5776
        %v5811 = vunpack.c.l.b16 %v5777
        %v5812 = vunpack.c.h.b16 %v5777
        %v5813 = vunpack.c.l.b16 %v5778
        %v5814 = vunpack.c.h.b16 %v5778
        %v5815 = vunpack.c.l.b16 %v5779
        %v5816 = vunpack.c.h.b16 %v5779
        %v5817 = vunpack.c.l.b16 %v5780
        %v5818 = vunpack.c.h.b16 %v5780
        %v5819 = vunpack.c.l.b16 %v5781
        %v5820 = vunpack.c.h.b16 %v5781
        %v5821 = vunpack.c.l.b16 %v5782
        %v5822 = vunpack.c.h.b16 %v5782
        %v5823 = vunpack.c.l.b16 %v5783
        %v5824 = vunpack.c.h.b16 %v5783
        %v5825 = vunpack.c.l.b16 %v5784
        %v5826 = vunpack.c.h.b16 %v5784
        %v5827 = vunpack.c.l.b16 %v5785
        %v5828 = vunpack.c.h.b16 %v5785
        %v5829 = vunpack.c.l.b16 %v5786
        %v5830 = vunpack.c.h.b16 %v5786
        %v5831 = vunpack.c.l.b16 %v5787
        %v5832 = vunpack.c.h.b16 %v5787
        %v5833 = vunpack.c.l.b16 %v5788
        %v5834 = vunpack.c.h.b16 %v5788
        %v5835 = vunpack.c.l.b16 %v5789
        %v5836 = vunpack.c.h.b16 %v5789
        %v5837 = vunpack.c.l.b16 %v5790
        %v5838 = vunpack.c.h.b16 %v5790
        %v5839 = vunpack.c.l.b16 %v5791
        %v5840 = vunpack.c.h.b16 %v5791
        %v5841 = vpack.c.b16 %v5813, %v5809
        %v5842 = vpack.c.b16 %v5814, %v5810
        %v5843 = vpack.c.b16 %v5815, %v5811
        %v5844 = vpack.c.b16 %v5816, %v5812
        %v5845 = vpack.c.b16 %v5821, %v5817
        %v5846 = vpack.c.b16 %v5822, %v5818
        %v5847 = vpack.c.b16 %v5823, %v5819
        %v5848 = vpack.c.b16 %v5824, %v5820
        %v5849 = vpack.c.b16 %v5829, %v5825
        %v5850 = vpack.c.b16 %v5830, %v5826
        %v5851 = vpack.c.b16 %v5831, %v5827
        %v5852 = vpack.c.b16 %v5832, %v5828
        %v5853 = vpack.c.b16 %v5837, %v5833
        %v5854 = vpack.c.b16 %v5838, %v5834
        %v5855 = vpack.c.b16 %v5839, %v5835
        %v5856 = vpack.c.b16 %v5840, %v5836
        %v5874 = vsel %vm4844, %v5792, 0
        %5876 = vmatprep.subr.bf16.mxu0 %v5842
        %5877 = vmatpush1.bf16.msra.mxu0 %v5841
        %5878 = vmatprep.subr.bf16.mxu0 %v5846
        %5879 = vmatpush1.bf16.msra.mxu0 %v5845
        %5880 = vmatprep.subr.bf16.mxu0 %v5850
        %5881 = vmatpush1.bf16.msra.mxu0 %v5849
        %5882 = vmatprep.subr.bf16.mxu0 %v5854
        %5883 = vmatpush1.bf16.msra.mxu0 %v5853
        %5884 = vmatprep.subr.bf16.mxu0 0
        %5885 = vmatpush1.bf16.msra.mxu0 0
        %5886 = vmatprep.subr.bf16.mxu0 0
        %5887 = vmatpush1.bf16.msra.mxu0 0
        %5888 = vmatprep.subr.bf16.mxu0 0
        %5889 = vmatpush1.bf16.msra.mxu0 0
        %5890 = vmatprep.subr.bf16.mxu0 0
        %5891 = vmatpush1.bf16.msra.mxu0 0
        %5892 = vmatprep.subr.bf16.mxu0 0
        %5893 = vmatpush1.bf16.msra.mxu0 0
        %5894 = vmatprep.subr.bf16.mxu0 0
        %5895 = vmatpush1.bf16.msra.mxu0 0
        %5896 = vmatprep.subr.bf16.mxu0 0
        %5897 = vmatpush1.bf16.msra.mxu0 0
        %5898 = vmatprep.subr.bf16.mxu0 0
        %5899 = vmatpush1.bf16.msra.mxu0 0
        %5900 = vmatprep.subr.bf16.mxu0 0
        %5901 = vmatpush1.bf16.msra.mxu0 0
        %5902 = vmatprep.subr.bf16.mxu0 0
        %5903 = vmatpush1.bf16.msra.mxu0 0
        %5904 = vmatprep.subr.bf16.mxu0 0
        %5905 = vmatpush1.bf16.msra.mxu0 0
        %5906 = vmatprep.subr.bf16.mxu0 0
        %5907 = vmatpush1.bf16.msra.mxu0 0
        %5908 = vmatprep.mubr.bf16.mxu0 0
        %5909 = vmatmul.mubr.bf16.gmra.mrb[0].mxu0 %v5874
        %v5910 = vpop.f32.mrb[0].mxu0
        %v5911 = vadd.f32 0.0, %v5910
        %v5912 = vpop.f32.mrb[0].mxu0
        %v5913 = vadd.f32 0.0, %v5912
        %v5914 = vpop.f32.mrb[0].mxu0
        %v5915 = vpop.f32.mrb[0].mxu0
        %5916 = vdwg.mxu0
        %5917 = vmatprep.subr.bf16.mxu0 %v5844
        %5918 = vmatpush1.bf16.msra.mxu0 %v5843
        %5919 = vmatprep.subr.bf16.mxu0 %v5848
        %5920 = vmatpush1.bf16.msra.mxu0 %v5847
        %5921 = vmatprep.subr.bf16.mxu0 %v5852
        %5922 = vmatpush1.bf16.msra.mxu0 %v5851
        %5923 = vmatprep.subr.bf16.mxu0 %v5856
        %5924 = vmatpush1.bf16.msra.mxu0 %v5855
        %5925 = vmatprep.subr.bf16.mxu0 0
        %5926 = vmatpush1.bf16.msra.mxu0 0
        %5927 = vmatprep.subr.bf16.mxu0 0
        %5928 = vmatpush1.bf16.msra.mxu0 0
        %5929 = vmatprep.subr.bf16.mxu0 0
        %5930 = vmatpush1.bf16.msra.mxu0 0
        %5931 = vmatprep.subr.bf16.mxu0 0
        %5932 = vmatpush1.bf16.msra.mxu0 0
        %5933 = vmatprep.subr.bf16.mxu0 0
        %5934 = vmatpush1.bf16.msra.mxu0 0
        %5935 = vmatprep.subr.bf16.mxu0 0
        %5936 = vmatpush1.bf16.msra.mxu0 0
        %5937 = vmatprep.subr.bf16.mxu0 0
        %5938 = vmatpush1.bf16.msra.mxu0 0
        %5939 = vmatprep.subr.bf16.mxu0 0
        %5940 = vmatpush1.bf16.msra.mxu0 0
        %5941 = vmatprep.subr.bf16.mxu0 0
        %5942 = vmatpush1.bf16.msra.mxu0 0
        %5943 = vmatprep.subr.bf16.mxu0 0
        %5944 = vmatpush1.bf16.msra.mxu0 0
        %5945 = vmatprep.subr.bf16.mxu0 0
        %5946 = vmatpush1.bf16.msra.mxu0 0
        %5947 = vmatprep.subr.bf16.mxu0 0
        %5948 = vmatpush1.bf16.msra.mxu0 0
        %5949 = vmatprep.mubr.bf16.mxu0 0
        %5950 = vmatmul.mubr.bf16.gmra.mrb[0].mxu0 %v5874
        %v5951 = vpop.f32.mrb[0].mxu0
        %v5952 = vadd.f32 0.0, %v5951
        %v5953 = vpop.f32.mrb[0].mxu0
        %v5954 = vadd.f32 0.0, %v5953
        %v5955 = vpop.f32.mrb[0].mxu0
        %v5956 = vpop.f32.mrb[0].mxu0
        %5957 = vdwg.mxu0
        %v5962 = vcombine.low %v5911, %v5913
        %v5963 = vcombine.low %v5952, %v5954
        %v5965 = vunpack.c.l.s4 1983009808
        %v5966 = vunpack.c.0.s8 %v5965
        %v5967 = vlaneseq
        %v5968 = vshrl.u32 %v5967, 7
        %v5969 = vsub.s32 %v5966, %v5968
        %v5970 = vrot.slane %v5962, %v5969
        %v5972 = vunpack.c.l.s4 1983009808
        %v5973 = vunpack.c.0.s8 %v5972
        %v5974 = vlaneseq
        %v5975 = vshrl.u32 %v5974, 7
        %v5976 = vsub.s32 %v5973, %v5975
        %v5977 = vrot.slane %v5963, %v5976
        %v5978 = vcombine.low %v5970, %v5977
        %v5980 = vadd.f32 %v5723, %v5978
        %s5981 = sadd.s32 %s4651, 5
        %v5982 = vstv %s5981
        %v5983 = vadd.s32 %v4636, %v5982
        %5984 = vset.pattern.permute.xlu0 0
        %5985 = vperm.xlu0 %5984, %v5983
        %v5986 = vpop.permute.xlu0 %5985
        %vm5987 = vcmp.eq.s32.totalorder %v4635, %v5986
        %v5988 = vsel %vm5987, 1.0, 0.0
        %v5989 = vpack.c.bf16 %v5988, %v5988
        %v5991 = vsel %vm4699, %v5989, 0
        %5993 = vmatprep.subr.bf16.mxu0 0
        %5994 = vmatpush1.bf16.msra.mxu0 %v4686
        %5995 = vmatprep.subr.bf16.mxu0 0
        %5996 = vmatpush1.bf16.msra.mxu0 %v4687
        %5997 = vmatprep.subr.bf16.mxu0 0
        %5998 = vmatpush1.bf16.msra.mxu0 %v4688
        %5999 = vmatprep.subr.bf16.mxu0 0
        %6000 = vmatpush1.bf16.msra.mxu0 %v4689
        %6001 = vmatprep.subr.bf16.mxu0 0
        %6002 = vmatpush1.bf16.msra.mxu0 %v4690
        %6003 = vmatprep.subr.bf16.mxu0 0
        %6004 = vmatpush1.bf16.msra.mxu0 %v4691
        %6005 = vmatprep.subr.bf16.mxu0 0
        %6006 = vmatpush1.bf16.msra.mxu0 %v4705
        %6007 = vmatprep.subr.bf16.mxu0 0
        %6008 = vmatpush1.bf16.msra.mxu0 0
        %6009 = vmatprep.subr.bf16.mxu0 0
        %6010 = vmatpush1.bf16.msra.mxu0 0
        %6011 = vmatprep.subr.bf16.mxu0 0
        %6012 = vmatpush1.bf16.msra.mxu0 0
        %6013 = vmatprep.subr.bf16.mxu0 0
        %6014 = vmatpush1.bf16.msra.mxu0 0
        %6015 = vmatprep.subr.bf16.mxu0 0
        %6016 = vmatpush1.bf16.msra.mxu0 0
        %6017 = vmatprep.subr.bf16.mxu0 0
        %6018 = vmatpush1.bf16.msra.mxu0 0
        %6019 = vmatprep.subr.bf16.mxu0 0
        %6020 = vmatpush1.bf16.msra.mxu0 0
        %6021 = vmatprep.subr.bf16.mxu0 0
        %6022 = vmatpush1.bf16.msra.mxu0 0
        %6023 = vmatprep.subr.bf16.mxu0 0
        %6024 = vmatpush1.bf16.msra.mxu0 0
        %6025 = vmatprep.mubr.bf16.mxu0 0
        %6026 = vmatmul.mubr.bf16.gmra.mrb[0].mxu0 %v5991
        %v6027 = vpop.f32.mrb[0].mxu0
        %v6028 = vadd.f32 0.0, %v6027
        %v6029 = vpop.f32.mrb[0].mxu0
        %v6030 = vpop.f32.mrb[0].mxu0
        %v6031 = vpop.f32.mrb[0].mxu0
        %6032 = vdwg.mxu0
        %v6033 = vld [vmem:[%s376 + $0x280] sm:$0xff]
        %v6034 = vld [vmem:[%s376 + $0x288] sm:$0xff]
        %v6035 = vld [vmem:[%s376 + $0x290] sm:$0xff]
        %v6036 = vld [vmem:[%s376 + $0x298] sm:$0xff]
        %v6037 = vld [vmem:[%s376 + $0x2a0] sm:$0xff]
        %v6038 = vld [vmem:[%s376 + $0x2a8] sm:$0xff]
        %v6039 = vld [vmem:[%s376 + $0x2b0] sm:$0xff]
        %v6040 = vld [vmem:[%s376 + $0x2b8] sm:$0xff]
        %v6041 = vld [vmem:[%s376 + $0x2c0] sm:$0xff]
        %v6042 = vld [vmem:[%s376 + $0x2c8] sm:$0xff]
        %v6043 = vld [vmem:[%s376 + $0x2d0] sm:$0xff]
        %v6044 = vld [vmem:[%s376 + $0x2d8] sm:$0xff]
        %v6045 = vld [vmem:[%s376 + $0x2e0] sm:$0xff]
        %v6046 = vld [vmem:[%s376 + $0x2e8] sm:$0xff]
        %v6047 = vld [vmem:[%s376 + $0x2f0] sm:$0xff]
        %v6048 = vld [vmem:[%s376 + $0x2f8] sm:$0xff]
        %v6049 = vpack.c.bf16 %v6028, %v6028
        %v6066 = vunpack.c.l.b16 %v6033
        %v6067 = vunpack.c.h.b16 %v6033
        %v6068 = vunpack.c.l.b16 %v6034
        %v6069 = vunpack.c.h.b16 %v6034
        %v6070 = vunpack.c.l.b16 %v6035
        %v6071 = vunpack.c.h.b16 %v6035
        %v6072 = vunpack.c.l.b16 %v6036
        %v6073 = vunpack.c.h.b16 %v6036
        %v6074 = vunpack.c.l.b16 %v6037
        %v6075 = vunpack.c.h.b16 %v6037
        %v6076 = vunpack.c.l.b16 %v6038
        %v6077 = vunpack.c.h.b16 %v6038
        %v6078 = vunpack.c.l.b16 %v6039
        %v6079 = vunpack.c.h.b16 %v6039
        %v6080 = vunpack.c.l.b16 %v6040
        %v6081 = vunpack.c.h.b16 %v6040
        %v6082 = vunpack.c.l.b16 %v6041
        %v6083 = vunpack.c.h.b16 %v6041
        %v6084 = vunpack.c.l.b16 %v6042
        %v6085 = vunpack.c.h.b16 %v6042
        %v6086 = vunpack.c.l.b16 %v6043
        %v6087 = vunpack.c.h.b16 %v6043
        %v6088 = vunpack.c.l.b16 %v6044
        %v6089 = vunpack.c.h.b16 %v6044
        %v6090 = vunpack.c.l.b16 %v6045
        %v6091 = vunpack.c.h.b16 %v6045
        %v6092 = vunpack.c.l.b16 %v6046
        %v6093 = vunpack.c.h.b16 %v6046
        %v6094 = vunpack.c.l.b16 %v6047
        %v6095 = vunpack.c.h.b16 %v6047
        %v6096 = vunpack.c.l.b16 %v6048
        %v6097 = vunpack.c.h.b16 %v6048
        %v6098 = vpack.c.b16 %v6070, %v6066
        %v6099 = vpack.c.b16 %v6071, %v6067
        %v6100 = vpack.c.b16 %v6072, %v6068
        %v6101 = vpack.c.b16 %v6073, %v6069
        %v6102 = vpack.c.b16 %v6078, %v6074
        %v6103 = vpack.c.b16 %v6079, %v6075
        %v6104 = vpack.c.b16 %v6080, %v6076
        %v6105 = vpack.c.b16 %v6081, %v6077
        %v6106 = vpack.c.b16 %v6086, %v6082
        %v6107 = vpack.c.b16 %v6087, %v6083
        %v6108 = vpack.c.b16 %v6088, %v6084
        %v6109 = vpack.c.b16 %v6089, %v6085
        %v6110 = vpack.c.b16 %v6094, %v6090
        %v6111 = vpack.c.b16 %v6095, %v6091
        %v6112 = vpack.c.b16 %v6096, %v6092
        %v6113 = vpack.c.b16 %v6097, %v6093
        %v6131 = vsel %vm4844, %v6049, 0
        %6133 = vmatprep.subr.bf16.mxu0 %v6099
        %6134 = vmatpush1.bf16.msra.mxu0 %v6098
        %6135 = vmatprep.subr.bf16.mxu0 %v6103
        %6136 = vmatpush1.bf16.msra.mxu0 %v6102
        %6137 = vmatprep.subr.bf16.mxu0 %v6107
        %6138 = vmatpush1.bf16.msra.mxu0 %v6106
        %6139 = vmatprep.subr.bf16.mxu0 %v6111
        %6140 = vmatpush1.bf16.msra.mxu0 %v6110
        %6141 = vmatprep.subr.bf16.mxu0 0
        %6142 = vmatpush1.bf16.msra.mxu0 0
        %6143 = vmatprep.subr.bf16.mxu0 0
        %6144 = vmatpush1.bf16.msra.mxu0 0
        %6145 = vmatprep.subr.bf16.mxu0 0
        %6146 = vmatpush1.bf16.msra.mxu0 0
        %6147 = vmatprep.subr.bf16.mxu0 0
        %6148 = vmatpush1.bf16.msra.mxu0 0
        %6149 = vmatprep.subr.bf16.mxu0 0
        %6150 = vmatpush1.bf16.msra.mxu0 0
        %6151 = vmatprep.subr.bf16.mxu0 0
        %6152 = vmatpush1.bf16.msra.mxu0 0
        %6153 = vmatprep.subr.bf16.mxu0 0
        %6154 = vmatpush1.bf16.msra.mxu0 0
        %6155 = vmatprep.subr.bf16.mxu0 0
        %6156 = vmatpush1.bf16.msra.mxu0 0
        %6157 = vmatprep.subr.bf16.mxu0 0
        %6158 = vmatpush1.bf16.msra.mxu0 0
        %6159 = vmatprep.subr.bf16.mxu0 0
        %6160 = vmatpush1.bf16.msra.mxu0 0
        %6161 = vmatprep.subr.bf16.mxu0 0
        %6162 = vmatpush1.bf16.msra.mxu0 0
        %6163 = vmatprep.subr.bf16.mxu0 0
        %6164 = vmatpush1.bf16.msra.mxu0 0
        %6165 = vmatprep.mubr.bf16.mxu0 0
        %6166 = vmatmul.mubr.bf16.gmra.mrb[0].mxu0 %v6131
        %v6167 = vpop.f32.mrb[0].mxu0
        %v6168 = vadd.f32 0.0, %v6167
        %v6169 = vpop.f32.mrb[0].mxu0
        %v6170 = vadd.f32 0.0, %v6169
        %v6171 = vpop.f32.mrb[0].mxu0
        %v6172 = vpop.f32.mrb[0].mxu0
        %6173 = vdwg.mxu0
        %6174 = vmatprep.subr.bf16.mxu0 %v6101
        %6175 = vmatpush1.bf16.msra.mxu0 %v6100
        %6176 = vmatprep.subr.bf16.mxu0 %v6105
        %6177 = vmatpush1.bf16.msra.mxu0 %v6104
        %6178 = vmatprep.subr.bf16.mxu0 %v6109
        %6179 = vmatpush1.bf16.msra.mxu0 %v6108
        %6180 = vmatprep.subr.bf16.mxu0 %v6113
        %6181 = vmatpush1.bf16.msra.mxu0 %v6112
        %6182 = vmatprep.subr.bf16.mxu0 0
        %6183 = vmatpush1.bf16.msra.mxu0 0
        %6184 = vmatprep.subr.bf16.mxu0 0
        %6185 = vmatpush1.bf16.msra.mxu0 0
        %6186 = vmatprep.subr.bf16.mxu0 0
        %6187 = vmatpush1.bf16.msra.mxu0 0
        %6188 = vmatprep.subr.bf16.mxu0 0
        %6189 = vmatpush1.bf16.msra.mxu0 0
        %6190 = vmatprep.subr.bf16.mxu0 0
        %6191 = vmatpush1.bf16.msra.mxu0 0
        %6192 = vmatprep.subr.bf16.mxu0 0
        %6193 = vmatpush1.bf16.msra.mxu0 0
        %6194 = vmatprep.subr.bf16.mxu0 0
        %6195 = vmatpush1.bf16.msra.mxu0 0
        %6196 = vmatprep.subr.bf16.mxu0 0
        %6197 = vmatpush1.bf16.msra.mxu0 0
        %6198 = vmatprep.subr.bf16.mxu0 0
        %6199 = vmatpush1.bf16.msra.mxu0 0
        %6200 = vmatprep.subr.bf16.mxu0 0
        %6201 = vmatpush1.bf16.msra.mxu0 0
        %6202 = vmatprep.subr.bf16.mxu0 0
        %6203 = vmatpush1.bf16.msra.mxu0 0
        %6204 = vmatprep.subr.bf16.mxu0 0
        %6205 = vmatpush1.bf16.msra.mxu0 0
        %6206 = vmatprep.mubr.bf16.mxu0 0
        %6207 = vmatmul.mubr.bf16.gmra.mrb[0].mxu0 %v6131
        %v6208 = vpop.f32.mrb[0].mxu0
        %v6209 = vadd.f32 0.0, %v6208
        %v6210 = vpop.f32.mrb[0].mxu0
        %v6211 = vadd.f32 0.0, %v6210
        %v6212 = vpop.f32.mrb[0].mxu0
        %v6213 = vpop.f32.mrb[0].mxu0
        %6214 = vdwg.mxu0
        %v6219 = vcombine.low %v6168, %v6170
        %v6220 = vcombine.low %v6209, %v6211
        %v6222 = vunpack.c.l.s4 1983009808
        %v6223 = vunpack.c.0.s8 %v6222
        %v6224 = vlaneseq
        %v6225 = vshrl.u32 %v6224, 7
        %v6226 = vsub.s32 %v6223, %v6225
        %v6227 = vrot.slane %v6219, %v6226
        %v6229 = vunpack.c.l.s4 1983009808
        %v6230 = vunpack.c.0.s8 %v6229
        %v6231 = vlaneseq
        %v6232 = vshrl.u32 %v6231, 7
        %v6233 = vsub.s32 %v6230, %v6232
        %v6234 = vrot.slane %v6220, %v6233
        %v6235 = vcombine.low %v6227, %v6234
        %v6237 = vadd.f32 %v5980, %v6235
        %s6238 = sadd.s32 %s4651, 6
        %v6239 = vstv %s6238
        %v6240 = vadd.s32 %v4636, %v6239
        %6241 = vset.pattern.permute.xlu0 0
        %6242 = vperm.xlu0 %6241, %v6240
        %v6243 = vpop.permute.xlu0 %6242
        %vm6244 = vcmp.eq.s32.totalorder %v4635, %v6243
        %v6245 = vsel %vm6244, 1.0, 0.0
        %v6246 = vpack.c.bf16 %v6245, %v6245
        %v6248 = vsel %vm4699, %v6246, 0
        %6250 = vmatprep.subr.bf16.mxu0 0
        %6251 = vmatpush1.bf16.msra.mxu0 %v4686
        %6252 = vmatprep.subr.bf16.mxu0 0
        %6253 = vmatpush1.bf16.msra.mxu0 %v4687
        %6254 = vmatprep.subr.bf16.mxu0 0
        %6255 = vmatpush1.bf16.msra.mxu0 %v4688
        %6256 = vmatprep.subr.bf16.mxu0 0
        %6257 = vmatpush1.bf16.msra.mxu0 %v4689
        %6258 = vmatprep.subr.bf16.mxu0 0
        %6259 = vmatpush1.bf16.msra.mxu0 %v4690
        %6260 = vmatprep.subr.bf16.mxu0 0
        %6261 = vmatpush1.bf16.msra.mxu0 %v4691
        %6262 = vmatprep.subr.bf16.mxu0 0
        %6263 = vmatpush1.bf16.msra.mxu0 %v4705
        %6264 = vmatprep.subr.bf16.mxu0 0
        %6265 = vmatpush1.bf16.msra.mxu0 0
        %6266 = vmatprep.subr.bf16.mxu0 0
        %6267 = vmatpush1.bf16.msra.mxu0 0
        %6268 = vmatprep.subr.bf16.mxu0 0
        %6269 = vmatpush1.bf16.msra.mxu0 0
        %6270 = vmatprep.subr.bf16.mxu0 0
        %6271 = vmatpush1.bf16.msra.mxu0 0
        %6272 = vmatprep.subr.bf16.mxu0 0
        %6273 = vmatpush1.bf16.msra.mxu0 0
        %6274 = vmatprep.subr.bf16.mxu0 0
        %6275 = vmatpush1.bf16.msra.mxu0 0
        %6276 = vmatprep.subr.bf16.mxu0 0
        %6277 = vmatpush1.bf16.msra.mxu0 0
        %6278 = vmatprep.subr.bf16.mxu0 0
        %6279 = vmatpush1.bf16.msra.mxu0 0
        %6280 = vmatprep.subr.bf16.mxu0 0
        %6281 = vmatpush1.bf16.msra.mxu0 0
        %6282 = vmatprep.mubr.bf16.mxu0 0
        %6283 = vmatmul.mubr.bf16.gmra.mrb[0].mxu0 %v6248
        %v6284 = vpop.f32.mrb[0].mxu0
        %v6285 = vadd.f32 0.0, %v6284
        %v6286 = vpop.f32.mrb[0].mxu0
        %v6287 = vpop.f32.mrb[0].mxu0
        %v6288 = vpop.f32.mrb[0].mxu0
        %6289 = vdwg.mxu0
        %v6290 = vld [vmem:[%s376 + $0x300] sm:$0xff]
        %v6291 = vld [vmem:[%s376 + $0x308] sm:$0xff]
        %v6292 = vld [vmem:[%s376 + $0x310] sm:$0xff]
        %v6293 = vld [vmem:[%s376 + $0x318] sm:$0xff]
        %v6294 = vld [vmem:[%s376 + $0x320] sm:$0xff]
        %v6295 = vld [vmem:[%s376 + $0x328] sm:$0xff]
        %v6296 = vld [vmem:[%s376 + $0x330] sm:$0xff]
        %v6297 = vld [vmem:[%s376 + $0x338] sm:$0xff]
        %v6298 = vld [vmem:[%s376 + $0x340] sm:$0xff]
        %v6299 = vld [vmem:[%s376 + $0x348] sm:$0xff]
        %v6300 = vld [vmem:[%s376 + $0x350] sm:$0xff]
        %v6301 = vld [vmem:[%s376 + $0x358] sm:$0xff]
        %v6302 = vld [vmem:[%s376 + $0x360] sm:$0xff]
        %v6303 = vld [vmem:[%s376 + $0x368] sm:$0xff]
        %v6304 = vld [vmem:[%s376 + $0x370] sm:$0xff]
        %v6305 = vld [vmem:[%s376 + $0x378] sm:$0xff]
        %v6306 = vpack.c.bf16 %v6285, %v6285
        %v6323 = vunpack.c.l.b16 %v6290
        %v6324 = vunpack.c.h.b16 %v6290
        %v6325 = vunpack.c.l.b16 %v6291
        %v6326 = vunpack.c.h.b16 %v6291
        %v6327 = vunpack.c.l.b16 %v6292
        %v6328 = vunpack.c.h.b16 %v6292
        %v6329 = vunpack.c.l.b16 %v6293
        %v6330 = vunpack.c.h.b16 %v6293
        %v6331 = vunpack.c.l.b16 %v6294
        %v6332 = vunpack.c.h.b16 %v6294
        %v6333 = vunpack.c.l.b16 %v6295
        %v6334 = vunpack.c.h.b16 %v6295
        %v6335 = vunpack.c.l.b16 %v6296
        %v6336 = vunpack.c.h.b16 %v6296
        %v6337 = vunpack.c.l.b16 %v6297
        %v6338 = vunpack.c.h.b16 %v6297
        %v6339 = vunpack.c.l.b16 %v6298
        %v6340 = vunpack.c.h.b16 %v6298
        %v6341 = vunpack.c.l.b16 %v6299
        %v6342 = vunpack.c.h.b16 %v6299
        %v6343 = vunpack.c.l.b16 %v6300
        %v6344 = vunpack.c.h.b16 %v6300
        %v6345 = vunpack.c.l.b16 %v6301
        %v6346 = vunpack.c.h.b16 %v6301
        %v6347 = vunpack.c.l.b16 %v6302
        %v6348 = vunpack.c.h.b16 %v6302
        %v6349 = vunpack.c.l.b16 %v6303
        %v6350 = vunpack.c.h.b16 %v6303
        %v6351 = vunpack.c.l.b16 %v6304
        %v6352 = vunpack.c.h.b16 %v6304
        %v6353 = vunpack.c.l.b16 %v6305
        %v6354 = vunpack.c.h.b16 %v6305
        %v6355 = vpack.c.b16 %v6327, %v6323
        %v6356 = vpack.c.b16 %v6328, %v6324
        %v6357 = vpack.c.b16 %v6329, %v6325
        %v6358 = vpack.c.b16 %v6330, %v6326
        %v6359 = vpack.c.b16 %v6335, %v6331
        %v6360 = vpack.c.b16 %v6336, %v6332
        %v6361 = vpack.c.b16 %v6337, %v6333
        %v6362 = vpack.c.b16 %v6338, %v6334
        %v6363 = vpack.c.b16 %v6343, %v6339
        %v6364 = vpack.c.b16 %v6344, %v6340
        %v6365 = vpack.c.b16 %v6345, %v6341
        %v6366 = vpack.c.b16 %v6346, %v6342
        %v6367 = vpack.c.b16 %v6351, %v6347
        %v6368 = vpack.c.b16 %v6352, %v6348
        %v6369 = vpack.c.b16 %v6353, %v6349
        %v6370 = vpack.c.b16 %v6354, %v6350
        %v6388 = vsel %vm4844, %v6306, 0
        %6390 = vmatprep.subr.bf16.mxu0 %v6356
        %6391 = vmatpush1.bf16.msra.mxu0 %v6355
        %6392 = vmatprep.subr.bf16.mxu0 %v6360
        %6393 = vmatpush1.bf16.msra.mxu0 %v6359
        %6394 = vmatprep.subr.bf16.mxu0 %v6364
        %6395 = vmatpush1.bf16.msra.mxu0 %v6363
        %6396 = vmatprep.subr.bf16.mxu0 %v6368
        %6397 = vmatpush1.bf16.msra.mxu0 %v6367
        %6398 = vmatprep.subr.bf16.mxu0 0
        %6399 = vmatpush1.bf16.msra.mxu0 0
        %6400 = vmatprep.subr.bf16.mxu0 0
        %6401 = vmatpush1.bf16.msra.mxu0 0
        %6402 = vmatprep.subr.bf16.mxu0 0
        %6403 = vmatpush1.bf16.msra.mxu0 0
        %6404 = vmatprep.subr.bf16.mxu0 0
        %6405 = vmatpush1.bf16.msra.mxu0 0
        %6406 = vmatprep.subr.bf16.mxu0 0
        %6407 = vmatpush1.bf16.msra.mxu0 0
        %6408 = vmatprep.subr.bf16.mxu0 0
        %6409 = vmatpush1.bf16.msra.mxu0 0
        %6410 = vmatprep.subr.bf16.mxu0 0
        %6411 = vmatpush1.bf16.msra.mxu0 0
        %6412 = vmatprep.subr.bf16.mxu0 0
        %6413 = vmatpush1.bf16.msra.mxu0 0
        %6414 = vmatprep.subr.bf16.mxu0 0
        %6415 = vmatpush1.bf16.msra.mxu0 0
        %6416 = vmatprep.subr.bf16.mxu0 0
        %6417 = vmatpush1.bf16.msra.mxu0 0
        %6418 = vmatprep.subr.bf16.mxu0 0
        %6419 = vmatpush1.bf16.msra.mxu0 0
        %6420 = vmatprep.subr.bf16.mxu0 0
        %6421 = vmatpush1.bf16.msra.mxu0 0
        %6422 = vmatprep.mubr.bf16.mxu0 0
        %6423 = vmatmul.mubr.bf16.gmra.mrb[0].mxu0 %v6388
        %v6424 = vpop.f32.mrb[0].mxu0
        %v6425 = vadd.f32 0.0, %v6424
        %v6426 = vpop.f32.mrb[0].mxu0
        %v6427 = vadd.f32 0.0, %v6426
        %v6428 = vpop.f32.mrb[0].mxu0
        %v6429 = vpop.f32.mrb[0].mxu0
        %6430 = vdwg.mxu0
        %6431 = vmatprep.subr.bf16.mxu0 %v6358
        %6432 = vmatpush1.bf16.msra.mxu0 %v6357
        %6433 = vmatprep.subr.bf16.mxu0 %v6362
        %6434 = vmatpush1.bf16.msra.mxu0 %v6361
        %6435 = vmatprep.subr.bf16.mxu0 %v6366
        %6436 = vmatpush1.bf16.msra.mxu0 %v6365
        %6437 = vmatprep.subr.bf16.mxu0 %v6370
        %6438 = vmatpush1.bf16.msra.mxu0 %v6369
        %6439 = vmatprep.subr.bf16.mxu0 0
        %6440 = vmatpush1.bf16.msra.mxu0 0
        %6441 = vmatprep.subr.bf16.mxu0 0
        %6442 = vmatpush1.bf16.msra.mxu0 0
        %6443 = vmatprep.subr.bf16.mxu0 0
        %6444 = vmatpush1.bf16.msra.mxu0 0
        %6445 = vmatprep.subr.bf16.mxu0 0
        %6446 = vmatpush1.bf16.msra.mxu0 0
        %6447 = vmatprep.subr.bf16.mxu0 0
        %6448 = vmatpush1.bf16.msra.mxu0 0
        %6449 = vmatprep.subr.bf16.mxu0 0
        %6450 = vmatpush1.bf16.msra.mxu0 0
        %6451 = vmatprep.subr.bf16.mxu0 0
        %6452 = vmatpush1.bf16.msra.mxu0 0
        %6453 = vmatprep.subr.bf16.mxu0 0
        %6454 = vmatpush1.bf16.msra.mxu0 0
        %6455 = vmatprep.subr.bf16.mxu0 0
        %6456 = vmatpush1.bf16.msra.mxu0 0
        %6457 = vmatprep.subr.bf16.mxu0 0
        %6458 = vmatpush1.bf16.msra.mxu0 0
        %6459 = vmatprep.subr.bf16.mxu0 0
        %6460 = vmatpush1.bf16.msra.mxu0 0
        %6461 = vmatprep.subr.bf16.mxu0 0
        %6462 = vmatpush1.bf16.msra.mxu0 0
        %6463 = vmatprep.mubr.bf16.mxu0 0
        %6464 = vmatmul.mubr.bf16.gmra.mrb[0].mxu0 %v6388
        %v6465 = vpop.f32.mrb[0].mxu0
        %v6466 = vadd.f32 0.0, %v6465
        %v6467 = vpop.f32.mrb[0].mxu0
        %v6468 = vadd.f32 0.0, %v6467
        %v6469 = vpop.f32.mrb[0].mxu0
        %v6470 = vpop.f32.mrb[0].mxu0
        %6471 = vdwg.mxu0
        %v6476 = vcombine.low %v6425, %v6427
        %v6477 = vcombine.low %v6466, %v6468
        %v6479 = vunpack.c.l.s4 1983009808
        %v6480 = vunpack.c.0.s8 %v6479
        %v6481 = vlaneseq
        %v6482 = vshrl.u32 %v6481, 7
        %v6483 = vsub.s32 %v6480, %v6482
        %v6484 = vrot.slane %v6476, %v6483
        %v6486 = vunpack.c.l.s4 1983009808
        %v6487 = vunpack.c.0.s8 %v6486
        %v6488 = vlaneseq
        %v6489 = vshrl.u32 %v6488, 7
        %v6490 = vsub.s32 %v6487, %v6489
        %v6491 = vrot.slane %v6477, %v6490
        %v6492 = vcombine.low %v6484, %v6491
        %v6494 = vadd.f32 %v6237, %v6492
        %6495 = vst [vmem:[#allocation3] sm:$0xff] %v6494
        %p6496 = scmp.eq.s32.totalorder %s23, 6
        // Predicated region
        $region69: #{forward.3} parent=63 // pred_check
          %p6497 = pneg %p6496
        $region70: #{forward.3} parent=63 // pred_check_branch
          %6499 = sbr.rel (%p6497) target = $region72
        $region71: #{forward.3} parent=63 // pred_region
          %v6500 = vld [vmem:[#allocation3] sm:$0xff]
          %v6501 = vmax.f32 %v6500, 0.0
          %v6502 = vld [vmem:[%s9] sm:$0xff]
          %v6503 = vld [vmem:[%s9 + $0x8] sm:$0xff]
          %v6504 = vld [vmem:[%s9 + $0x10] sm:$0xff]
          %v6505 = vld [vmem:[%s9 + $0x18] sm:$0xff]
          %v6506 = vld [vmem:[%s9 + $0x20] sm:$0xff]
          %v6507 = vld [vmem:[%s9 + $0x28] sm:$0xff]
          %v6508 = vld [vmem:[%s9 + $0x30] sm:$0xff]
          %v6509 = vld [vmem:[%s9 + $0x38] sm:$0xff]
          %v6510 = vld [vmem:[%s9 + $0x40] sm:$0xff]
          %v6511 = vld [vmem:[%s9 + $0x48] sm:$0xff]
          %v6512 = vld [vmem:[%s9 + $0x50] sm:$0xff]
          %v6513 = vld [vmem:[%s9 + $0x58] sm:$0xff]
          %v6514 = vld [vmem:[%s9 + $0x60] sm:$0xff]
          %v6515 = vld [vmem:[%s9 + $0x68] sm:$0xff]
          %v6516 = vld [vmem:[%s9 + $0x70] sm:$0xff]
          %v6517 = vld [vmem:[%s9 + $0x78] sm:$0xff]
          %v6518 = vld [vmem:[%s9 + $0x80] sm:$0xff]
          %v6519 = vld [vmem:[%s9 + $0x88] sm:$0xff]
          %v6520 = vld [vmem:[%s9 + $0x90] sm:$0xff]
          %v6521 = vld [vmem:[%s9 + $0x98] sm:$0xff]
          %v6522 = vld [vmem:[%s9 + $0xa0] sm:$0xff]
          %v6523 = vld [vmem:[%s9 + $0xa8] sm:$0xff]
          %v6524 = vld [vmem:[%s9 + $0xb0] sm:$0xff]
          %v6525 = vld [vmem:[%s9 + $0xb8] sm:$0xff]
          %v6526 = vld [vmem:[%s9 + $0xc0] sm:$0xff]
          %v6527 = vld [vmem:[%s9 + $0xc8] sm:$0xff]
          %v6528 = vld [vmem:[%s9 + $0xd0] sm:$0xff]
          %v6529 = vld [vmem:[%s9 + $0xd8] sm:$0xff]
          %v6530 = vld [vmem:[%s9 + $0xe0] sm:$0xff]
          %v6531 = vld [vmem:[%s9 + $0xe8] sm:$0xff]
          %v6532 = vld [vmem:[%s9 + $0xf0] sm:$0xff]
          %v6533 = vld [vmem:[%s9 + $0xf8] sm:$0xff]
          %v6534 = vld [vmem:[%s9 + $0x100] sm:$0xff]
          %v6535 = vld [vmem:[%s9 + $0x108] sm:$0xff]
          %v6536 = vld [vmem:[%s9 + $0x110] sm:$0xff]
          %v6537 = vld [vmem:[%s9 + $0x118] sm:$0xff]
          %v6538 = vld [vmem:[%s9 + $0x120] sm:$0xff]
          %v6539 = vld [vmem:[%s9 + $0x128] sm:$0xff]
          %v6540 = vld [vmem:[%s9 + $0x130] sm:$0xff]
          %v6541 = vld [vmem:[%s9 + $0x138] sm:$0xff]
          %v6542 = vld [vmem:[%s9 + $0x140] sm:$0xff]
          %v6543 = vld [vmem:[%s9 + $0x148] sm:$0xff]
          %v6544 = vld [vmem:[%s9 + $0x150] sm:$0xff]
          %v6545 = vld [vmem:[%s9 + $0x158] sm:$0xff]
          %v6546 = vld [vmem:[%s9 + $0x160] sm:$0xff]
          %v6547 = vld [vmem:[%s9 + $0x168] sm:$0xff]
          %v6548 = vld [vmem:[%s9 + $0x170] sm:$0xff]
          %v6549 = vld [vmem:[%s9 + $0x178] sm:$0xff]
          %v6550 = vld [vmem:[%s9 + $0x180] sm:$0xff]
          %v6551 = vld [vmem:[%s9 + $0x188] sm:$0xff]
          %v6552 = vld [vmem:[%s9 + $0x190] sm:$0xff]
          %v6553 = vld [vmem:[%s9 + $0x198] sm:$0xff]
          %v6554 = vld [vmem:[%s9 + $0x1a0] sm:$0xff]
          %v6555 = vld [vmem:[%s9 + $0x1a8] sm:$0xff]
          %v6556 = vld [vmem:[%s9 + $0x1b0] sm:$0xff]
          %v6557 = vld [vmem:[%s9 + $0x1b8] sm:$0xff]
          %v6558 = vld [vmem:[%s9 + $0x1c0] sm:$0xff]
          %v6559 = vld [vmem:[%s9 + $0x1c8] sm:$0xff]
          %v6560 = vld [vmem:[%s9 + $0x1d0] sm:$0xff]
          %v6561 = vld [vmem:[%s9 + $0x1d8] sm:$0xff]
          %v6562 = vld [vmem:[%s9 + $0x1e0] sm:$0xff]
          %v6563 = vld [vmem:[%s9 + $0x1e8] sm:$0xff]
          %v6564 = vld [vmem:[%s9 + $0x1f0] sm:$0xff]
          %v6565 = vld [vmem:[%s9 + $0x1f8] sm:$0xff]
          %v6566 = vld [vmem:[%s10] sm:$0x1]
          %v6568 = vlaneseq
          %v6569 = vshrl.u32 %v6568, 7
          %v6570 = vsub.s32 0, %v6569
          %v6571 = vrot.slane %v6566, %v6570
          %v6574 = vcombine.high %v6501, %v6501
          %v6576 = vunpack.c.l.s4 1983009808
          %v6577 = vunpack.c.0.s8 %v6576
          %v6578 = vlaneseq
          %v6579 = vshrl.u32 %v6578, 7
          %v6580 = vsub.s32 %v6577, %v6579
          %v6581 = vrot.slane %v6501, %v6580
          %v6583 = vunpack.c.l.s4 1983009808
          %v6584 = vunpack.c.0.s8 %v6583
          %v6585 = vlaneseq
          %v6586 = vshrl.u32 %v6585, 7
          %v6587 = vsub.s32 %v6584, %v6586
          %v6588 = vrot.slane %v6574, %v6587
          %v6589 = vcombine.high %v6581, %v6581
          %v6590 = vcombine.high %v6588, %v6588
          %6595 = vmatprep.subr.mxu0 0.0
          %6596 = vmatpush1.msra.mxu0 %v6502
          %6597 = vmatprep.subr.mxu0 0.0
          %6598 = vmatpush1.msra.mxu0 %v6503
          %6599 = vmatprep.subr.mxu0 0.0
          %6600 = vmatpush1.msra.mxu0 %v6504
          %6601 = vmatprep.subr.mxu0 0.0
          %6602 = vmatpush1.msra.mxu0 %v6505
          %6603 = vmatprep.subr.mxu0 0.0
          %6604 = vmatpush1.msra.mxu0 %v6506
          %6605 = vmatprep.subr.mxu0 0.0
          %6606 = vmatpush1.msra.mxu0 %v6507
          %6607 = vmatprep.subr.mxu0 0.0
          %6608 = vmatpush1.msra.mxu0 %v6508
          %6609 = vmatprep.subr.mxu0 0.0
          %6610 = vmatpush1.msra.mxu0 %v6509
          %6611 = vmatprep.subr.mxu0 0.0
          %6612 = vmatpush1.msra.mxu0 %v6510
          %6613 = vmatprep.subr.mxu0 0.0
          %6614 = vmatpush1.msra.mxu0 %v6511
          %6615 = vmatprep.subr.mxu0 0.0
          %6616 = vmatpush1.msra.mxu0 %v6512
          %6617 = vmatprep.subr.mxu0 0.0
          %6618 = vmatpush1.msra.mxu0 %v6513
          %6619 = vmatprep.subr.mxu0 0.0
          %6620 = vmatpush1.msra.mxu0 %v6514
          %6621 = vmatprep.subr.mxu0 0.0
          %6622 = vmatpush1.msra.mxu0 %v6515
          %6623 = vmatprep.subr.mxu0 0.0
          %6624 = vmatpush1.msra.mxu0 %v6516
          %6625 = vmatprep.subr.mxu0 0.0
          %6626 = vmatpush1.msra.mxu0 %v6517
          %6627 = vmatprep.subr.mxu0 0.0
          %6628 = vmatpush1.msra.mxu0 %v6518
          %6629 = vmatprep.subr.mxu0 0.0
          %6630 = vmatpush1.msra.mxu0 %v6519
          %6631 = vmatprep.subr.mxu0 0.0
          %6632 = vmatpush1.msra.mxu0 %v6520
          %6633 = vmatprep.subr.mxu0 0.0
          %6634 = vmatpush1.msra.mxu0 %v6521
          %6635 = vmatprep.subr.mxu0 0.0
          %6636 = vmatpush1.msra.mxu0 %v6522
          %6637 = vmatprep.subr.mxu0 0.0
          %6638 = vmatpush1.msra.mxu0 %v6523
          %6639 = vmatprep.subr.mxu0 0.0
          %6640 = vmatpush1.msra.mxu0 %v6524
          %6641 = vmatprep.subr.mxu0 0.0
          %6642 = vmatpush1.msra.mxu0 %v6525
          %6643 = vmatprep.subr.mxu0 0.0
          %6644 = vmatpush1.msra.mxu0 %v6526
          %6645 = vmatprep.subr.mxu0 0.0
          %6646 = vmatpush1.msra.mxu0 %v6527
          %6647 = vmatprep.subr.mxu0 0.0
          %6648 = vmatpush1.msra.mxu0 %v6528
          %6649 = vmatprep.subr.mxu0 0.0
          %6650 = vmatpush1.msra.mxu0 %v6529
          %6651 = vmatprep.subr.mxu0 0.0
          %6652 = vmatpush1.msra.mxu0 %v6530
          %6653 = vmatprep.subr.mxu0 0.0
          %6654 = vmatpush1.msra.mxu0 %v6531
          %6655 = vmatprep.subr.mxu0 0.0
          %6656 = vmatpush1.msra.mxu0 %v6532
          %6657 = vmatprep.subr.mxu0 0.0
          %6658 = vmatpush1.msra.mxu0 %v6533
          %6659 = vmatprep.mubr.f32.mxu0 %v6589
          %6660 = vmatmul.mubr.f32.gmra.mrb[0].mxu0 %v6581
          %v6661 = vpop.f32.mrb[0].mxu0
          %v6662 = vadd.f32 %v6571, %v6661
          %v6663 = vpop.f32.mrb[0].mxu0
          %6664 = vdwg.mxu0
          %6665 = vmatprep.subr.mxu0 0.0
          %6666 = vmatpush1.msra.mxu0 %v6534
          %6667 = vmatprep.subr.mxu0 0.0
          %6668 = vmatpush1.msra.mxu0 %v6535
          %6669 = vmatprep.subr.mxu0 0.0
          %6670 = vmatpush1.msra.mxu0 %v6536
          %6671 = vmatprep.subr.mxu0 0.0
          %6672 = vmatpush1.msra.mxu0 %v6537
          %6673 = vmatprep.subr.mxu0 0.0
          %6674 = vmatpush1.msra.mxu0 %v6538
          %6675 = vmatprep.subr.mxu0 0.0
          %6676 = vmatpush1.msra.mxu0 %v6539
          %6677 = vmatprep.subr.mxu0 0.0
          %6678 = vmatpush1.msra.mxu0 %v6540
          %6679 = vmatprep.subr.mxu0 0.0
          %6680 = vmatpush1.msra.mxu0 %v6541
          %6681 = vmatprep.subr.mxu0 0.0
          %6682 = vmatpush1.msra.mxu0 %v6542
          %6683 = vmatprep.subr.mxu0 0.0
          %6684 = vmatpush1.msra.mxu0 %v6543
          %6685 = vmatprep.subr.mxu0 0.0
          %6686 = vmatpush1.msra.mxu0 %v6544
          %6687 = vmatprep.subr.mxu0 0.0
          %6688 = vmatpush1.msra.mxu0 %v6545
          %6689 = vmatprep.subr.mxu0 0.0
          %6690 = vmatpush1.msra.mxu0 %v6546
          %6691 = vmatprep.subr.mxu0 0.0
          %6692 = vmatpush1.msra.mxu0 %v6547
          %6693 = vmatprep.subr.mxu0 0.0
          %6694 = vmatpush1.msra.mxu0 %v6548
          %6695 = vmatprep.subr.mxu0 0.0
          %6696 = vmatpush1.msra.mxu0 %v6549
          %6697 = vmatprep.subr.mxu0 0.0
          %6698 = vmatpush1.msra.mxu0 %v6550
          %6699 = vmatprep.subr.mxu0 0.0
          %6700 = vmatpush1.msra.mxu0 %v6551
          %6701 = vmatprep.subr.mxu0 0.0
          %6702 = vmatpush1.msra.mxu0 %v6552
          %6703 = vmatprep.subr.mxu0 0.0
          %6704 = vmatpush1.msra.mxu0 %v6553
          %6705 = vmatprep.subr.mxu0 0.0
          %6706 = vmatpush1.msra.mxu0 %v6554
          %6707 = vmatprep.subr.mxu0 0.0
          %6708 = vmatpush1.msra.mxu0 %v6555
          %6709 = vmatprep.subr.mxu0 0.0
          %6710 = vmatpush1.msra.mxu0 %v6556
          %6711 = vmatprep.subr.mxu0 0.0
          %6712 = vmatpush1.msra.mxu0 %v6557
          %6713 = vmatprep.subr.mxu0 0.0
          %6714 = vmatpush1.msra.mxu0 %v6558
          %6715 = vmatprep.subr.mxu0 0.0
          %6716 = vmatpush1.msra.mxu0 %v6559
          %6717 = vmatprep.subr.mxu0 0.0
          %6718 = vmatpush1.msra.mxu0 %v6560
          %6719 = vmatprep.subr.mxu0 0.0
          %6720 = vmatpush1.msra.mxu0 %v6561
          %6721 = vmatprep.subr.mxu0 0.0
          %6722 = vmatpush1.msra.mxu0 %v6562
          %6723 = vmatprep.subr.mxu0 0.0
          %6724 = vmatpush1.msra.mxu0 %v6563
          %6725 = vmatprep.subr.mxu0 0.0
          %6726 = vmatpush1.msra.mxu0 %v6564
          %6727 = vmatprep.subr.mxu0 0.0
          %6728 = vmatpush1.msra.mxu0 %v6565
          %6729 = vmatprep.mubr.f32.mxu0 %v6590
          %6730 = vmatmul.mubr.f32.gmra.mrb[0].mxu0 %v6588
          %v6731 = vpop.f32.mrb[0].mxu0
          %v6732 = vadd.f32 %v6662, %v6731
          %v6733 = vpop.f32.mrb[0].mxu0
          %6734 = vdwg.mxu0
          %vm6735 = vcmask 33792
          %6736 = vst.msk [vmem:[#allocation4] sm:$0x3] %vm6735, %v6732
        $region72: #{forward.3} parent=63 // pred_fallthru
          _
        // Predicated region
        $region73: #{forward.3} parent=63 // pred_check
          %p6737 = pneg %p272
        $region74: #{forward.3} parent=63 // pred_check_branch
          %6739 = sbr.rel (%p6737) target = $region76
        $region75: #{forward.3} parent=63 // pred_region
          %s6741 = ssub.s32 32, 32
          %6742 = vsyncadd [#allocation5], %s6741
          %s6744 = sshll.u32 [#allocation4], 4
          %s6745 = int_to_ptr.vmem [resolvable:$true] %s6744
          %6747 = dma.vmem_to_hbm [thread:$0]  %s6745, 32, %s11, [#allocation5]
        $region76: #{forward.3} parent=63 // pred_fallthru
          _
        // Predicated region
        $region77: #{forward.3} parent=63 // pred_check
          %p6748 = pneg %p272
        $region78: #{forward.3} parent=63 // pred_check_branch
          %6750 = sbr.rel (%p6748) target = $region80
        $region79: #{forward.3} parent=63 // pred_region
          %6751 = dma.done [#allocation5], 32
        $region80: #{forward.3} parent=63 // pred_fallthru
          _
      $region64: #{forward.3} parent=5 // pred_fallthru
        _
      %p6752 = scmp.le.s32.totalorder 2, %s18
      // Predicated region
      $region81: #{forward.3} parent=5 // pred_check
        %p6753 = pneg %p6752
      $region82: #{forward.3} parent=5 // pred_check_branch
        %6755 = sbr.rel (%p6753) target = $region84
      $region83: #{forward.3} parent=5 // pred_region
        %s6756 = ssub.s32 %s18, 2
      $region84: #{forward.3} parent=5 // pred_fallthru
        _
    $region6: #{forward.3} parent=1 // loop_footer
      %s22 = sadd.s32 1, %s18
    $region7: #{forward.3} parent=1 // loop_footer_branch
      %17 = sbr.rel target = $region3
    $region8: #{forward.3} parent=1 // loop_exit
      _
    %6757 = vsyncpa [#allocation5], 1
    %s6758 = scalar_lea.sflag [#allocation5], 1
    %6759 = vsyncpa %s6758, 1

</llo_original>
